<compile_context>
chip_gen: v6e
topology: v6e:2x2x1
jax: 0.10.0
libtpu: 0.0.40
codegen_flags: <defaults>
</compile_context>

<pallas_src>
import jax
import jax.numpy as jnp
import numpy as np
from jax.experimental import pallas as pl
from jax.experimental.pallas import tpu as pltpu

_BLOCK_B = 8   # images per grid step (batch is padded up to a multiple of this)


# --------------------------------------------------------------------------- #
#                               kernel helpers                                 #
# --------------------------------------------------------------------------- #
def _zero_border(scr, pad, hi, wi):
    """Zero only the padding border of a (Hp, Wp, B, C) activation scratch."""
    hp, wp, bb, c = scr.shape
    dt = scr.dtype
    nbot = hp - pad - hi
    nrgt = wp - pad - wi
    scr[pl.ds(0, pad), :, :, :] = jnp.zeros((pad, wp, bb, c), dt)
    scr[pl.ds(pad + hi, nbot), :, :, :] = jnp.zeros((nbot, wp, bb, c), dt)
    scr[pl.ds(pad, hi), pl.ds(0, pad), :, :] = jnp.zeros((hi, pad, bb, c), dt)
    scr[pl.ds(pad, hi), pl.ds(pad + wi, nrgt), :, :] = jnp.zeros((hi, nrgt, bb, c), dt)


def _im2col_s2(src_ref, patch_ref, kh, kw):
    """Stride-2 im2col: (Hp,Wp,B,C) scratch -> (Ho,Wo,B,KH*KW*C) patch scratch.

    Only KH*KW plane extractions; NO strided ref reads: each plane is a
    contiguous slice of 2*Ho rows (ref) / 2*Wo cols (value) followed by a
    leading-dim reshape + parity-0 select (rows dh, dh+2, ... / cols dw, dw+2, ...).
    Requires Hp >= kh-1 + 2*Ho and Wp >= kw-1 + 2*Wo (scratches sized for it).
    """
    hp, wp, bb, c = src_ref.shape
    ho, wo = patch_ref.shape[0], patch_ref.shape[1]
    for dh in range(kh):
        band = src_ref[pl.ds(dh, 2 * ho), :, :, :]              # (2Ho, Wp, B, C)
        band = band.reshape(ho, 2, wp, bb, c)[:, 0]              # rows dh + 2*oh
        for dw in range(kw):
            tap = band[:, dw:dw + 2 * wo]                        # (Ho, 2Wo, B, C)
            tap = tap.reshape(ho, wo, 2, bb, c)[:, :, 0]         # cols dw + 2*ow
            patch_ref[:, :, :, pl.ds((dh * kw + dw) * c, c)] = tap


def _matmul_bias_relu(patch, w_ref, b_ref):
    """(M, K) f32 patch -> bf16 MXU matmul -> f32 bias + ReLU epilogue."""
    acc = jnp.dot(patch.astype(jnp.bfloat16), w_ref[...],
                  preferred_element_type=jnp.float32)
    return jnp.maximum(acc + b_ref[...], 0.0)


# ------------------------------ fused kernel -------------------------------- #
def _fused_kernel(p1_ref, w1_ref, b1_ref, w2_ref, b2_ref, w3_ref, b3_ref,
                  w4_ref, b4_ref, o_ref, s2, s3, p2, p3, pfc):
    bb = o_ref.shape[0]

    # ---- conv1 + ReLU: layer-1 im2col arrives pre-packed as (14*14*B, 25) ----
    a1 = _matmul_bias_relu(p1_ref[0], w1_ref, b1_ref)            # (1568, 8) f32

    # ---- conv2 + ReLU ----
    _zero_border(s2, 1, 14, 14)
    s2[pl.ds(1, 14), pl.ds(1, 14), :, :] = a1.reshape(14, 14, bb, 8)
    _im2col_s2(s2, p2, 3, 3)
    a2 = _matmul_bias_relu(p2[...].reshape(7 * 7 * bb, 72), w2_ref, b2_ref)

    # ---- conv3 + ReLU ----
    _zero_border(s3, 1, 7, 7)
    s3[pl.ds(1, 7), pl.ds(1, 7), :, :] = a2.reshape(7, 7, bb, 16)
    _im2col_s2(s3, p3, 3, 3)
    a3 = _matmul_bias_relu(p3[...].reshape(4 * 4 * bb, 144), w3_ref, b3_ref)
    a3 = a3.reshape(4, 4, bb, 32)                                 # (oh, ow, b, c)

    # ---- conv4 + ReLU, fused with the NCHW flatten --------------------------
    # conv4 (4x4x32 -> 2x2x32, s2, p1) is expressed as a dense (512, 128) matrix
    # whose columns are already in PyTorch flatten order (f = c*4 + oh*2 + ow),
    # so the output store is a full 128-lane unmasked vst.
    for hi in range(4):
        for wi in range(4):
            pfc[:, pl.ds((hi * 4 + wi) * 32, 32)] = a3[hi, wi]
    a4 = _matmul_bias_relu(pfc[...], w4_ref, b4_ref)              # (B, 128) f32
    # F.avg_pool2d(x, 1) is an identity op - nothing to do.
    o_ref[...] = a4


def _fused_forward(p1, wm1, b1, wm2, b2, wm3, b3, wfc, bfc, *, nb, block_b):
    m1 = 14 * 14 * block_b
    const = lambda i: (0, 0)     # weights/biases: same block every step
    return pl.pallas_call(
        _fused_kernel,
        out_shape=jax.ShapeDtypeStruct((nb * block_b, 128), jnp.float32),
        grid=(nb,),
        in_specs=[
            pl.BlockSpec((1, m1, 25), lambda i: (i, 0, 0)),       # layer-1 patches
            pl.BlockSpec((25, 8), const),    pl.BlockSpec((1, 8), const),
            pl.BlockSpec((72, 16), const),   pl.BlockSpec((1, 16), const),
            pl.BlockSpec((144, 32), const),  pl.BlockSpec((1, 32), const),
            pl.BlockSpec((512, 128), const), pl.BlockSpec((1, 128), const),
        ],
        out_specs=pl.BlockSpec((block_b, 128), lambda i: (i, 0)),
        scratch_shapes=[
            # padded-activation scratches (Hp, Wp, B, C); s3 is 10x10 (not 9x9)
            # so the contiguous 2*Ho row/col bands stay in bounds - the extra
            # zero row/col is never selected by the parity trick.
            pltpu.VMEM((16, 16, block_b, 8), jnp.float32),    # conv2 padded input
            pltpu.VMEM((10, 10, block_b, 16), jnp.float32),   # conv3 padded input
            # im2col patch scratches (Ho, Wo, B, KH*KW*C)
            pltpu.VMEM((7, 7, block_b, 72), jnp.float32),
            pltpu.VMEM((4, 4, block_b, 144), jnp.float32),
            pltpu.VMEM((block_b, 512), jnp.float32),          # conv4-as-FC patch
        ],
        compiler_params=pltpu.CompilerParams(
            dimension_semantics=("parallel",),   # shard batch blocks over TCs
            vmem_limit_bytes=32 * 1024 * 1024,
        ),
    )(p1, wm1, b1, wm2, b2, wm3, b3, wfc, bfc)


# --------------------------- parameter preparation -------------------------- #
def _build_conv4_fc(w4, b4):
    """Fold conv4 (4x4x32 -> 2x2x32, s2, p1) + the NCHW flatten into one dense
    (512, 128) matrix.  Input index = (hi*4+wi)*32 + cin;  output column
    = cout*4 + (oh*2+ow)  == PyTorch's flatten feature index."""
    w4 = np.asarray(w4, np.float32)          # (cout, cin, kh, kw) = (32,32,3,3)
    b4 = np.asarray(b4, np.float32)          # (32,)
    wfc = np.zeros((4 * 4 * 32, 2 * 2 * 32), np.float32)
    bfc = np.zeros((2 * 2 * 32,), np.float32)
    for oh in range(2):
        for ow in range(2):
            pos = oh * 2 + ow
            for dh in range(3):
                for dw in range(3):
                    hi = 2 * oh + dh - 1
                    wi = 2 * ow + dw - 1
                    if 0 <= hi < 4 and 0 <= wi < 4:
                        r0 = (hi * 4 + wi) * 32
                        # wfc[r0 + cin, cout*4 + pos] = w4[cout, cin, dh, dw]
                        wfc[r0:r0 + 32, pos::4] = w4[:, :, dh, dw].T
            bfc[pos::4] = b4
    return (jnp.asarray(wfc, jnp.bfloat16),
            jnp.asarray(bfc.reshape(1, -1), jnp.float32))


def prepare_params(params):
    """One-time conversion of PyTorch-layout conv params to matmul-ready form."""
    prepped = []
    for name in ("conv1", "conv2", "conv3"):
        w, b = params[name]
        co, ci, kh, kw = w.shape
        # column order (dh, dw, cin) matches the in-kernel patch construction
        wmat = jnp.transpose(w, (2, 3, 1, 0)).reshape(kh * kw * ci, co)
        prepped.append(wmat.astype(jnp.bfloat16))
        prepped.append(b.reshape(1, co).astype(jnp.float32))
    wfc, bfc = _build_conv4_fc(*params["conv4"])
    prepped.extend([wfc, bfc])
    return tuple(prepped)


# ------------------------------- full network ------------------------------- #
@jax.jit
def fashion_mnist_net(x_nchw, prepped):
    n = x_nchw.shape[0]
    nb = -(-n // _BLOCK_B)
    n_pad = nb * _BLOCK_B
    x = x_nchw.reshape(n, 28, 28).astype(jnp.float32)     # Cin == 1
    if n_pad != n:
        x = jnp.concatenate([x, jnp.zeros((n_pad - n, 28, 28), jnp.float32)], 0)
    # Layer-1 im2col in XLA (reads the HBM input anyway, ~10 KB/image of extra
    # traffic) arranged as (nb, 14*14*B, 25) with M order (oh, ow, b).
    xp = jnp.pad(x, ((0, 0), (2, 2), (2, 2)))              # (n_pad, 32, 32)
    taps = [xp[:, dh:dh + 28:2, dw:dw + 28:2]
            for dh in range(5) for dw in range(5)]
    p1 = jnp.stack(taps, axis=-1)                          # (n_pad, 14, 14, 25)
    p1 = p1.reshape(nb, _BLOCK_B, 14, 14, 25).transpose(0, 2, 3, 1, 4)
    p1 = p1.reshape(nb, 14 * 14 * _BLOCK_B, 25)
    out = _fused_forward(p1, *prepped, nb=nb, block_b=_BLOCK_B)   # (n_pad, 128)
    return out[:n]


# ------------------------- pure-JAX reference (check) ------------------------ #
def _reference_forward(x, params):
    def conv(x, w, b, stride, pad):
        y = jax.lax.conv_general_dilated(
            x, w, window_strides=(stride, stride),
            padding=((pad, pad), (pad, pad)),
            dimension_numbers=("NCHW", "OIHW", "NCHW"))
        return jax.nn.relu(y + b.reshape(1, -1, 1, 1))
    x = conv(x, *params["conv1"], 2, 2)
    x = conv(x, *params["conv2"], 2, 1)
    x = conv(x, *params["conv3"], 2, 1)
    x = conv(x, *params["conv4"], 2, 1)
    return x.reshape(x.shape[0], -1)        # avg_pool2d(x,1) is identity


# ------------------------- deterministic parameters ------------------------- #
def init_conv(key, cout, cin, kh, kw):
    # mimic PyTorch default Conv2d init: U(-1/sqrt(fan_in), 1/sqrt(fan_in))
    k_w, k_b = jax.random.split(key)
    bound = 1.0 / ((cin * kh * kw) ** 0.5)
    w = jax.random.uniform(k_w, (cout, cin, kh, kw), jnp.float32, -bound, bound)
    b = jax.random.uniform(k_b, (cout,), jnp.float32, -bound, bound)
    return w, b


if __name__ == "__main__":
    key = jax.random.PRNGKey(0)
    k_x, k1, k2, k3, k4 = jax.random.split(key, 5)
    params = {
        "conv1": init_conv(k1, 8, 1, 5, 5),
        "conv2": init_conv(k2, 16, 8, 3, 3),
        "conv3": init_conv(k3, 32, 16, 3, 3),
        "conv4": init_conv(k4, 32, 32, 3, 3),
        # fc1 (Linear(32, 10)) exists in __init__ but is never used in forward()
    }
    prepped = prepare_params(params)

    # FashionMNIST-shaped input: batch=2, 1 channel, 28x28
    x = jax.random.normal(k_x, (2, 1, 28, 28), jnp.float32)

    out = jax.block_until_ready(fashion_mnist_net(x, prepped))
    assert out.shape == (2, 128), out.shape
    assert out.dtype == jnp.float32

    ref = _reference_forward(x, params)
    assert bool(jnp.allclose(out, ref, atol=5e-2, rtol=5e-2)), \
        float(jnp.max(jnp.abs(out - ref)))
    print("KERNEL_OK")
</pallas_src>

<mosaic_0001>
module attributes {stable_mosaic.version = 11 : i64} {
  func.func @_fused_kernel(%arg0: i32, %arg1: memref<1x1568x25xf32, #tpu.memory_space<vmem>>, %arg2: memref<25x8xbf16, #tpu.memory_space<vmem>>, %arg3: memref<1x8xf32, #tpu.memory_space<vmem>>, %arg4: memref<72x16xbf16, #tpu.memory_space<vmem>>, %arg5: memref<1x16xf32, #tpu.memory_space<vmem>>, %arg6: memref<144x32xbf16, #tpu.memory_space<vmem>>, %arg7: memref<1x32xf32, #tpu.memory_space<vmem>>, %arg8: memref<512x128xbf16, #tpu.memory_space<vmem>>, %arg9: memref<1x128xf32, #tpu.memory_space<vmem>>, %arg10: memref<8x128xf32, #tpu.memory_space<vmem>>, %arg11: memref<16x16x8x8xf32, #tpu.memory_space<vmem>>, %arg12: memref<10x10x8x16xf32, #tpu.memory_space<vmem>>, %arg13: memref<7x7x8x72xf32, #tpu.memory_space<vmem>>, %arg14: memref<4x4x8x144xf32, #tpu.memory_space<vmem>>, %arg15: memref<8x512xf32, #tpu.memory_space<vmem>>) attributes {dimension_semantics = [#tpu.dimension_semantics<parallel>], iteration_bounds = array<i64: 1>, scalar_prefetch = 0 : i64, scratch_operands = 5 : i64, tpu.core_type = #tpu.core_type<tc>, window_params = [{transform_indices = @transform_0, window_bounds = array<i64: 1, 1568, 25>}, {pipeline_mode = #tpu.pipeline_mode<synchronous>, transform_indices = @transform_1, window_bounds = array<i64: 25, 8>}, {pipeline_mode = #tpu.pipeline_mode<synchronous>, transform_indices = @transform_2, window_bounds = array<i64: 1, 8>}, {pipeline_mode = #tpu.pipeline_mode<synchronous>, transform_indices = @transform_3, window_bounds = array<i64: 72, 16>}, {pipeline_mode = #tpu.pipeline_mode<synchronous>, transform_indices = @transform_4, window_bounds = array<i64: 1, 16>}, {pipeline_mode = #tpu.pipeline_mode<synchronous>, transform_indices = @transform_5, window_bounds = array<i64: 144, 32>}, {pipeline_mode = #tpu.pipeline_mode<synchronous>, transform_indices = @transform_6, window_bounds = array<i64: 1, 32>}, {pipeline_mode = #tpu.pipeline_mode<synchronous>, transform_indices = @transform_7, window_bounds = array<i64: 512, 128>}, {pipeline_mode = #tpu.pipeline_mode<synchronous>, transform_indices = @transform_8, window_bounds = array<i64: 1, 128>}, {transform_indices = @transform_9, window_bounds = array<i64: 8, 128>}]} {
    %c0 = arith.constant 0 : index
    %c0_0 = arith.constant 0 : index
    %c0_1 = arith.constant 0 : index
    %0 = vector.load %arg1[%c0, %c0_0, %c0_1] : memref<1x1568x25xf32, #tpu.memory_space<vmem>>, vector<1x1568x25xf32>
    %1 = vector.shape_cast %0 : vector<1x1568x25xf32> to vector<1568x25xf32>
    %2 = arith.truncf %1 : vector<1568x25xf32> to vector<1568x25xbf16>
    %c0_2 = arith.constant 0 : index
    %c0_3 = arith.constant 0 : index
    %3 = vector.load %arg2[%c0_2, %c0_3] : memref<25x8xbf16, #tpu.memory_space<vmem>>, vector<25x8xbf16>
    %cst = arith.constant dense<0.000000e+00> : vector<1568x8xf32>
    %4 = tpu.matmul %2, %3, %cst {dimension_numbers = #tpu.dot_dimension_numbers<[1], [0], [0], [1], [0, 0, 1, 1], [], []>} : vector<1568x25xbf16>, vector<25x8xbf16>, vector<1568x8xf32> -> vector<1568x8xf32>
    %c0_4 = arith.constant 0 : index
    %c0_5 = arith.constant 0 : index
    %5 = vector.load %arg3[%c0_4, %c0_5] : memref<1x8xf32, #tpu.memory_space<vmem>>, vector<1x8xf32>
    %6 = vector.broadcast %5 : vector<1x8xf32> to vector<1568x8xf32>
    %7 = arith.addf %4, %6 : vector<1568x8xf32>
    %cst_6 = arith.constant 0.000000e+00 : f32
    %8 = vector.broadcast %cst_6 : f32 to vector<1568x8xf32>
    %9 = arith.maximumf %7, %8 : vector<1568x8xf32>
    %cst_7 = arith.constant 0.000000e+00 : f32
    %10 = vector.broadcast %cst_7 : f32 to vector<1x16x8x8xf32>
    %c0_8 = arith.constant 0 : index
    %c0_9 = arith.constant 0 : index
    %c0_10 = arith.constant 0 : index
    %c0_11 = arith.constant 0 : index
    %11 = vector.load %arg11[%c0_8, %c0_9, %c0_10, %c0_11] : memref<16x16x8x8xf32, #tpu.memory_space<vmem>>, vector<1x16x8x8xf32>
    tpu.vector_store %arg11[%c0_8, %c0_9, %c0_10, %c0_11], %10 {strides = array<i32>} : memref<16x16x8x8xf32, #tpu.memory_space<vmem>>, vector<1x16x8x8xf32>,
    %cst_12 = arith.constant 0.000000e+00 : f32
    %12 = vector.broadcast %cst_12 : f32 to vector<1x16x8x8xf32>
    %c15 = arith.constant 15 : index
    %c0_13 = arith.constant 0 : index
    %c0_14 = arith.constant 0 : index
    %c0_15 = arith.constant 0 : index
    %13 = vector.load %arg11[%c15, %c0_13, %c0_14, %c0_15] : memref<16x16x8x8xf32, #tpu.memory_space<vmem>>, vector<1x16x8x8xf32>
    tpu.vector_store %arg11[%c15, %c0_13, %c0_14, %c0_15], %12 {strides = array<i32>} : memref<16x16x8x8xf32, #tpu.memory_space<vmem>>, vector<1x16x8x8xf32>,
    %cst_16 = arith.constant 0.000000e+00 : f32
    %14 = vector.broadcast %cst_16 : f32 to vector<14x1x8x8xf32>
    %c1 = arith.constant 1 : index
    %c0_17 = arith.constant 0 : index
    %c0_18 = arith.constant 0 : index
    %c0_19 = arith.constant 0 : index
    %15 = vector.load %arg11[%c1, %c0_17, %c0_18, %c0_19] : memref<16x16x8x8xf32, #tpu.memory_space<vmem>>, vector<14x1x8x8xf32>
    tpu.vector_store %arg11[%c1, %c0_17, %c0_18, %c0_19], %14 {strides = array<i32>} : memref<16x16x8x8xf32, #tpu.memory_space<vmem>>, vector<14x1x8x8xf32>,
    %cst_20 = arith.constant 0.000000e+00 : f32
    %16 = vector.broadcast %cst_20 : f32 to vector<14x1x8x8xf32>
    %c1_21 = arith.constant 1 : index
    %c15_22 = arith.constant 15 : index
    %c0_23 = arith.constant 0 : index
    %c0_24 = arith.constant 0 : index
    %17 = vector.load %arg11[%c1_21, %c15_22, %c0_23, %c0_24] : memref<16x16x8x8xf32, #tpu.memory_space<vmem>>, vector<14x1x8x8xf32>
    tpu.vector_store %arg11[%c1_21, %c15_22, %c0_23, %c0_24], %16 {strides = array<i32>} : memref<16x16x8x8xf32, #tpu.memory_space<vmem>>, vector<14x1x8x8xf32>,
    %18 = vector.shape_cast %9 : vector<1568x8xf32> to vector<14x14x8x8xf32>
    %c1_25 = arith.constant 1 : index
    %c1_26 = arith.constant 1 : index
    %c0_27 = arith.constant 0 : index
    %c0_28 = arith.constant 0 : index
    %19 = vector.load %arg11[%c1_25, %c1_26, %c0_27, %c0_28] : memref<16x16x8x8xf32, #tpu.memory_space<vmem>>, vector<14x14x8x8xf32>
    tpu.vector_store %arg11[%c1_25, %c1_26, %c0_27, %c0_28], %18 {strides = array<i32>} : memref<16x16x8x8xf32, #tpu.memory_space<vmem>>, vector<14x14x8x8xf32>,
    %c0_29 = arith.constant 0 : index
    %c0_30 = arith.constant 0 : index
    %c0_31 = arith.constant 0 : index
    %c0_32 = arith.constant 0 : index
    %20 = vector.load %arg11[%c0_29, %c0_30, %c0_31, %c0_32] : memref<16x16x8x8xf32, #tpu.memory_space<vmem>>, vector<14x16x8x8xf32>
    %21 = vector.shape_cast %20 : vector<14x16x8x8xf32> to vector<7x2x16x8x8xf32>
    %22 = vector.extract_strided_slice %21 {offsets = [0, 0, 0, 0, 0], sizes = [7, 1, 16, 8, 8], strides = [1, 1, 1, 1, 1]} : vector<7x2x16x8x8xf32> to vector<7x1x16x8x8xf32>
    %23 = vector.shape_cast %22 : vector<7x1x16x8x8xf32> to vector<7x16x8x8xf32>
    %24 = vector.extract_strided_slice %23 {offsets = [0, 0, 0, 0], sizes = [7, 14, 8, 8], strides = [1, 1, 1, 1]} : vector<7x16x8x8xf32> to vector<7x14x8x8xf32>
    %25 = vector.shape_cast %24 : vector<7x14x8x8xf32> to vector<7x7x2x8x8xf32>
    %26 = vector.extract_strided_slice %25 {offsets = [0, 0, 0, 0, 0], sizes = [7, 7, 1, 8, 8], strides = [1, 1, 1, 1, 1]} : vector<7x7x2x8x8xf32> to vector<7x7x1x8x8xf32>
    %27 = vector.shape_cast %26 : vector<7x7x1x8x8xf32> to vector<7x7x8x8xf32>
    %c0_33 = arith.constant 0 : index
    %c0_34 = arith.constant 0 : index
    %c0_35 = arith.constant 0 : index
    %c0_36 = arith.constant 0 : index
    %28 = vector.load %arg13[%c0_33, %c0_34, %c0_35, %c0_36] : memref<7x7x8x72xf32, #tpu.memory_space<vmem>>, vector<7x7x8x8xf32>
    tpu.vector_store %arg13[%c0_33, %c0_34, %c0_35, %c0_36], %27 {strides = array<i32>} : memref<7x7x8x72xf32, #tpu.memory_space<vmem>>, vector<7x7x8x8xf32>,
    %29 = vector.extract_strided_slice %23 {offsets = [0, 1, 0, 0], sizes = [7, 14, 8, 8], strides = [1, 1, 1, 1]} : vector<7x16x8x8xf32> to vector<7x14x8x8xf32>
    %30 = vector.shape_cast %29 : vector<7x14x8x8xf32> to vector<7x7x2x8x8xf32>
    %31 = vector.extract_strided_slice %30 {offsets = [0, 0, 0, 0, 0], sizes = [7, 7, 1, 8, 8], strides = [1, 1, 1, 1, 1]} : vector<7x7x2x8x8xf32> to vector<7x7x1x8x8xf32>
    %32 = vector.shape_cast %31 : vector<7x7x1x8x8xf32> to vector<7x7x8x8xf32>
    %c0_37 = arith.constant 0 : index
    %c0_38 = arith.constant 0 : index
    %c0_39 = arith.constant 0 : index
    %c8 = arith.constant 8 : index
    %33 = vector.load %arg13[%c0_37, %c0_38, %c0_39, %c8] : memref<7x7x8x72xf32, #tpu.memory_space<vmem>>, vector<7x7x8x8xf32>
    tpu.vector_store %arg13[%c0_37, %c0_38, %c0_39, %c8], %32 {strides = array<i32>} : memref<7x7x8x72xf32, #tpu.memory_space<vmem>>, vector<7x7x8x8xf32>,
    %34 = vector.extract_strided_slice %23 {offsets = [0, 2, 0, 0], sizes = [7, 14, 8, 8], strides = [1, 1, 1, 1]} : vector<7x16x8x8xf32> to vector<7x14x8x8xf32>
    %35 = vector.shape_cast %34 : vector<7x14x8x8xf32> to vector<7x7x2x8x8xf32>
    %36 = vector.extract_strided_slice %35 {offsets = [0, 0, 0, 0, 0], sizes = [7, 7, 1, 8, 8], strides = [1, 1, 1, 1, 1]} : vector<7x7x2x8x8xf32> to vector<7x7x1x8x8xf32>
    %37 = vector.shape_cast %36 : vector<7x7x1x8x8xf32> to vector<7x7x8x8xf32>
    %c0_40 = arith.constant 0 : index
    %c0_41 = arith.constant 0 : index
    %c0_42 = arith.constant 0 : index
    %c16 = arith.constant 16 : index
    %38 = vector.load %arg13[%c0_40, %c0_41, %c0_42, %c16] : memref<7x7x8x72xf32, #tpu.memory_space<vmem>>, vector<7x7x8x8xf32>
    tpu.vector_store %arg13[%c0_40, %c0_41, %c0_42, %c16], %37 {strides = array<i32>} : memref<7x7x8x72xf32, #tpu.memory_space<vmem>>, vector<7x7x8x8xf32>,
    %c1_43 = arith.constant 1 : index
    %c0_44 = arith.constant 0 : index
    %c0_45 = arith.constant 0 : index
    %c0_46 = arith.constant 0 : index
    %39 = vector.load %arg11[%c1_43, %c0_44, %c0_45, %c0_46] : memref<16x16x8x8xf32, #tpu.memory_space<vmem>>, vector<14x16x8x8xf32>
    %40 = vector.shape_cast %39 : vector<14x16x8x8xf32> to vector<7x2x16x8x8xf32>
    %41 = vector.extract_strided_slice %40 {offsets = [0, 0, 0, 0, 0], sizes = [7, 1, 16, 8, 8], strides = [1, 1, 1, 1, 1]} : vector<7x2x16x8x8xf32> to vector<7x1x16x8x8xf32>
    %42 = vector.shape_cast %41 : vector<7x1x16x8x8xf32> to vector<7x16x8x8xf32>
    %43 = vector.extract_strided_slice %42 {offsets = [0, 0, 0, 0], sizes = [7, 14, 8, 8], strides = [1, 1, 1, 1]} : vector<7x16x8x8xf32> to vector<7x14x8x8xf32>
    %44 = vector.shape_cast %43 : vector<7x14x8x8xf32> to vector<7x7x2x8x8xf32>
    %45 = vector.extract_strided_slice %44 {offsets = [0, 0, 0, 0, 0], sizes = [7, 7, 1, 8, 8], strides = [1, 1, 1, 1, 1]} : vector<7x7x2x8x8xf32> to vector<7x7x1x8x8xf32>
    %46 = vector.shape_cast %45 : vector<7x7x1x8x8xf32> to vector<7x7x8x8xf32>
    %c0_47 = arith.constant 0 : index
    %c0_48 = arith.constant 0 : index
    %c0_49 = arith.constant 0 : index
    %c24 = arith.constant 24 : index
    %47 = vector.load %arg13[%c0_47, %c0_48, %c0_49, %c24] : memref<7x7x8x72xf32, #tpu.memory_space<vmem>>, vector<7x7x8x8xf32>
    tpu.vector_store %arg13[%c0_47, %c0_48, %c0_49, %c24], %46 {strides = array<i32>} : memref<7x7x8x72xf32, #tpu.memory_space<vmem>>, vector<7x7x8x8xf32>,
    %48 = vector.extract_strided_slice %42 {offsets = [0, 1, 0, 0], sizes = [7, 14, 8, 8], strides = [1, 1, 1, 1]} : vector<7x16x8x8xf32> to vector<7x14x8x8xf32>
    %49 = vector.shape_cast %48 : vector<7x14x8x8xf32> to vector<7x7x2x8x8xf32>
    %50 = vector.extract_strided_slice %49 {offsets = [0, 0, 0, 0, 0], sizes = [7, 7, 1, 8, 8], strides = [1, 1, 1, 1, 1]} : vector<7x7x2x8x8xf32> to vector<7x7x1x8x8xf32>
    %51 = vector.shape_cast %50 : vector<7x7x1x8x8xf32> to vector<7x7x8x8xf32>
    %c0_50 = arith.constant 0 : index
    %c0_51 = arith.constant 0 : index
    %c0_52 = arith.constant 0 : index
    %c32 = arith.constant 32 : index
    %52 = vector.load %arg13[%c0_50, %c0_51, %c0_52, %c32] : memref<7x7x8x72xf32, #tpu.memory_space<vmem>>, vector<7x7x8x8xf32>
    tpu.vector_store %arg13[%c0_50, %c0_51, %c0_52, %c32], %51 {strides = array<i32>} : memref<7x7x8x72xf32, #tpu.memory_space<vmem>>, vector<7x7x8x8xf32>,
    %53 = vector.extract_strided_slice %42 {offsets = [0, 2, 0, 0], sizes = [7, 14, 8, 8], strides = [1, 1, 1, 1]} : vector<7x16x8x8xf32> to vector<7x14x8x8xf32>
    %54 = vector.shape_cast %53 : vector<7x14x8x8xf32> to vector<7x7x2x8x8xf32>
    %55 = vector.extract_strided_slice %54 {offsets = [0, 0, 0, 0, 0], sizes = [7, 7, 1, 8, 8], strides = [1, 1, 1, 1, 1]} : vector<7x7x2x8x8xf32> to vector<7x7x1x8x8xf32>
    %56 = vector.shape_cast %55 : vector<7x7x1x8x8xf32> to vector<7x7x8x8xf32>
    %c0_53 = arith.constant 0 : index
    %c0_54 = arith.constant 0 : index
    %c0_55 = arith.constant 0 : index
    %c40 = arith.constant 40 : index
    %57 = vector.load %arg13[%c0_53, %c0_54, %c0_55, %c40] : memref<7x7x8x72xf32, #tpu.memory_space<vmem>>, vector<7x7x8x8xf32>
    tpu.vector_store %arg13[%c0_53, %c0_54, %c0_55, %c40], %56 {strides = array<i32>} : memref<7x7x8x72xf32, #tpu.memory_space<vmem>>, vector<7x7x8x8xf32>,
    %c2 = arith.constant 2 : index
    %c0_56 = arith.constant 0 : index
    %c0_57 = arith.constant 0 : index
    %c0_58 = arith.constant 0 : index
    %58 = vector.load %arg11[%c2, %c0_56, %c0_57, %c0_58] : memref<16x16x8x8xf32, #tpu.memory_space<vmem>>, vector<14x16x8x8xf32>
    %59 = vector.shape_cast %58 : vector<14x16x8x8xf32> to vector<7x2x16x8x8xf32>
    %60 = vector.extract_strided_slice %59 {offsets = [0, 0, 0, 0, 0], sizes = [7, 1, 16, 8, 8], strides = [1, 1, 1, 1, 1]} : vector<7x2x16x8x8xf32> to vector<7x1x16x8x8xf32>
    %61 = vector.shape_cast %60 : vector<7x1x16x8x8xf32> to vector<7x16x8x8xf32>
    %62 = vector.extract_strided_slice %61 {offsets = [0, 0, 0, 0], sizes = [7, 14, 8, 8], strides = [1, 1, 1, 1]} : vector<7x16x8x8xf32> to vector<7x14x8x8xf32>
    %63 = vector.shape_cast %62 : vector<7x14x8x8xf32> to vector<7x7x2x8x8xf32>
    %64 = vector.extract_strided_slice %63 {offsets = [0, 0, 0, 0, 0], sizes = [7, 7, 1, 8, 8], strides = [1, 1, 1, 1, 1]} : vector<7x7x2x8x8xf32> to vector<7x7x1x8x8xf32>
    %65 = vector.shape_cast %64 : vector<7x7x1x8x8xf32> to vector<7x7x8x8xf32>
    %c0_59 = arith.constant 0 : index
    %c0_60 = arith.constant 0 : index
    %c0_61 = arith.constant 0 : index
    %c48 = arith.constant 48 : index
    %66 = vector.load %arg13[%c0_59, %c0_60, %c0_61, %c48] : memref<7x7x8x72xf32, #tpu.memory_space<vmem>>, vector<7x7x8x8xf32>
    tpu.vector_store %arg13[%c0_59, %c0_60, %c0_61, %c48], %65 {strides = array<i32>} : memref<7x7x8x72xf32, #tpu.memory_space<vmem>>, vector<7x7x8x8xf32>,
    %67 = vector.extract_strided_slice %61 {offsets = [0, 1, 0, 0], sizes = [7, 14, 8, 8], strides = [1, 1, 1, 1]} : vector<7x16x8x8xf32> to vector<7x14x8x8xf32>
    %68 = vector.shape_cast %67 : vector<7x14x8x8xf32> to vector<7x7x2x8x8xf32>
    %69 = vector.extract_strided_slice %68 {offsets = [0, 0, 0, 0, 0], sizes = [7, 7, 1, 8, 8], strides = [1, 1, 1, 1, 1]} : vector<7x7x2x8x8xf32> to vector<7x7x1x8x8xf32>
    %70 = vector.shape_cast %69 : vector<7x7x1x8x8xf32> to vector<7x7x8x8xf32>
    %c0_62 = arith.constant 0 : index
    %c0_63 = arith.constant 0 : index
    %c0_64 = arith.constant 0 : index
    %c56 = arith.constant 56 : index
    %71 = vector.load %arg13[%c0_62, %c0_63, %c0_64, %c56] : memref<7x7x8x72xf32, #tpu.memory_space<vmem>>, vector<7x7x8x8xf32>
    tpu.vector_store %arg13[%c0_62, %c0_63, %c0_64, %c56], %70 {strides = array<i32>} : memref<7x7x8x72xf32, #tpu.memory_space<vmem>>, vector<7x7x8x8xf32>,
    %72 = vector.extract_strided_slice %61 {offsets = [0, 2, 0, 0], sizes = [7, 14, 8, 8], strides = [1, 1, 1, 1]} : vector<7x16x8x8xf32> to vector<7x14x8x8xf32>
    %73 = vector.shape_cast %72 : vector<7x14x8x8xf32> to vector<7x7x2x8x8xf32>
    %74 = vector.extract_strided_slice %73 {offsets = [0, 0, 0, 0, 0], sizes = [7, 7, 1, 8, 8], strides = [1, 1, 1, 1, 1]} : vector<7x7x2x8x8xf32> to vector<7x7x1x8x8xf32>
    %75 = vector.shape_cast %74 : vector<7x7x1x8x8xf32> to vector<7x7x8x8xf32>
    %c0_65 = arith.constant 0 : index
    %c0_66 = arith.constant 0 : index
    %c0_67 = arith.constant 0 : index
    %c64 = arith.constant 64 : index
    %76 = vector.load %arg13[%c0_65, %c0_66, %c0_67, %c64] : memref<7x7x8x72xf32, #tpu.memory_space<vmem>>, vector<7x7x8x8xf32>
    tpu.vector_store %arg13[%c0_65, %c0_66, %c0_67, %c64], %75 {strides = array<i32>} : memref<7x7x8x72xf32, #tpu.memory_space<vmem>>, vector<7x7x8x8xf32>,
    %c0_68 = arith.constant 0 : index
    %c0_69 = arith.constant 0 : index
    %c0_70 = arith.constant 0 : index
    %c0_71 = arith.constant 0 : index
    %77 = vector.load %arg13[%c0_68, %c0_69, %c0_70, %c0_71] : memref<7x7x8x72xf32, #tpu.memory_space<vmem>>, vector<7x7x8x72xf32>
    %78 = vector.shape_cast %77 : vector<7x7x8x72xf32> to vector<392x72xf32>
    %79 = arith.truncf %78 : vector<392x72xf32> to vector<392x72xbf16>
    %c0_72 = arith.constant 0 : index
    %c0_73 = arith.constant 0 : index
    %80 = vector.load %arg4[%c0_72, %c0_73] : memref<72x16xbf16, #tpu.memory_space<vmem>>, vector<72x16xbf16>
    %cst_74 = arith.constant dense<0.000000e+00> : vector<392x16xf32>
    %81 = tpu.matmul %79, %80, %cst_74 {dimension_numbers = #tpu.dot_dimension_numbers<[1], [0], [0], [1], [0, 0, 1, 1], [], []>} : vector<392x72xbf16>, vector<72x16xbf16>, vector<392x16xf32> -> vector<392x16xf32>
    %c0_75 = arith.constant 0 : index
    %c0_76 = arith.constant 0 : index
    %82 = vector.load %arg5[%c0_75, %c0_76] : memref<1x16xf32, #tpu.memory_space<vmem>>, vector<1x16xf32>
    %83 = vector.broadcast %82 : vector<1x16xf32> to vector<392x16xf32>
    %84 = arith.addf %81, %83 : vector<392x16xf32>
    %cst_77 = arith.constant 0.000000e+00 : f32
    %85 = vector.broadcast %cst_77 : f32 to vector<392x16xf32>
    %86 = arith.maximumf %84, %85 : vector<392x16xf32>
    %cst_78 = arith.constant 0.000000e+00 : f32
    %87 = vector.broadcast %cst_78 : f32 to vector<1x10x8x16xf32>
    %c0_79 = arith.constant 0 : index
    %c0_80 = arith.constant 0 : index
    %c0_81 = arith.constant 0 : index
    %c0_82 = arith.constant 0 : index
    %88 = vector.load %arg12[%c0_79, %c0_80, %c0_81, %c0_82] : memref<10x10x8x16xf32, #tpu.memory_space<vmem>>, vector<1x10x8x16xf32>
    tpu.vector_store %arg12[%c0_79, %c0_80, %c0_81, %c0_82], %87 {strides = array<i32>} : memref<10x10x8x16xf32, #tpu.memory_space<vmem>>, vector<1x10x8x16xf32>,
    %cst_83 = arith.constant 0.000000e+00 : f32
    %89 = vector.broadcast %cst_83 : f32 to vector<2x10x8x16xf32>
    %c8_84 = arith.constant 8 : index
    %c0_85 = arith.constant 0 : index
    %c0_86 = arith.constant 0 : index
    %c0_87 = arith.constant 0 : index
    %90 = vector.load %arg12[%c8_84, %c0_85, %c0_86, %c0_87] : memref<10x10x8x16xf32, #tpu.memory_space<vmem>>, vector<2x10x8x16xf32>
    tpu.vector_store %arg12[%c8_84, %c0_85, %c0_86, %c0_87], %89 {strides = array<i32>} : memref<10x10x8x16xf32, #tpu.memory_space<vmem>>, vector<2x10x8x16xf32>,
    %cst_88 = arith.constant 0.000000e+00 : f32
    %91 = vector.broadcast %cst_88 : f32 to vector<7x1x8x16xf32>
    %c1_89 = arith.constant 1 : index
    %c0_90 = arith.constant 0 : index
    %c0_91 = arith.constant 0 : index
    %c0_92 = arith.constant 0 : index
    %92 = vector.load %arg12[%c1_89, %c0_90, %c0_91, %c0_92] : memref<10x10x8x16xf32, #tpu.memory_space<vmem>>, vector<7x1x8x16xf32>
    tpu.vector_store %arg12[%c1_89, %c0_90, %c0_91, %c0_92], %91 {strides = array<i32>} : memref<10x10x8x16xf32, #tpu.memory_space<vmem>>, vector<7x1x8x16xf32>,
    %cst_93 = arith.constant 0.000000e+00 : f32
    %93 = vector.broadcast %cst_93 : f32 to vector<7x2x8x16xf32>
    %c1_94 = arith.constant 1 : index
    %c8_95 = arith.constant 8 : index
    %c0_96 = arith.constant 0 : index
    %c0_97 = arith.constant 0 : index
    %94 = vector.load %arg12[%c1_94, %c8_95, %c0_96, %c0_97] : memref<10x10x8x16xf32, #tpu.memory_space<vmem>>, vector<7x2x8x16xf32>
    tpu.vector_store %arg12[%c1_94, %c8_95, %c0_96, %c0_97], %93 {strides = array<i32>} : memref<10x10x8x16xf32, #tpu.memory_space<vmem>>, vector<7x2x8x16xf32>,
    %95 = vector.shape_cast %86 : vector<392x16xf32> to vector<7x7x8x16xf32>
    %c1_98 = arith.constant 1 : index
    %c1_99 = arith.constant 1 : index
    %c0_100 = arith.constant 0 : index
    %c0_101 = arith.constant 0 : index
    %96 = vector.load %arg12[%c1_98, %c1_99, %c0_100, %c0_101] : memref<10x10x8x16xf32, #tpu.memory_space<vmem>>, vector<7x7x8x16xf32>
    tpu.vector_store %arg12[%c1_98, %c1_99, %c0_100, %c0_101], %95 {strides = array<i32>} : memref<10x10x8x16xf32, #tpu.memory_space<vmem>>, vector<7x7x8x16xf32>,
    %c0_102 = arith.constant 0 : index
    %c0_103 = arith.constant 0 : index
    %c0_104 = arith.constant 0 : index
    %c0_105 = arith.constant 0 : index
    %97 = vector.load %arg12[%c0_102, %c0_103, %c0_104, %c0_105] : memref<10x10x8x16xf32, #tpu.memory_space<vmem>>, vector<8x10x8x16xf32>
    %98 = vector.shape_cast %97 : vector<8x10x8x16xf32> to vector<4x2x10x8x16xf32>
    %99 = vector.extract_strided_slice %98 {offsets = [0, 0, 0, 0, 0], sizes = [4, 1, 10, 8, 16], strides = [1, 1, 1, 1, 1]} : vector<4x2x10x8x16xf32> to vector<4x1x10x8x16xf32>
    %100 = vector.shape_cast %99 : vector<4x1x10x8x16xf32> to vector<4x10x8x16xf32>
    %101 = vector.extract_strided_slice %100 {offsets = [0, 0, 0, 0], sizes = [4, 8, 8, 16], strides = [1, 1, 1, 1]} : vector<4x10x8x16xf32> to vector<4x8x8x16xf32>
    %102 = vector.shape_cast %101 : vector<4x8x8x16xf32> to vector<4x4x2x8x16xf32>
    %103 = vector.extract_strided_slice %102 {offsets = [0, 0, 0, 0, 0], sizes = [4, 4, 1, 8, 16], strides = [1, 1, 1, 1, 1]} : vector<4x4x2x8x16xf32> to vector<4x4x1x8x16xf32>
    %104 = vector.shape_cast %103 : vector<4x4x1x8x16xf32> to vector<4x4x8x16xf32>
    %c0_106 = arith.constant 0 : index
    %c0_107 = arith.constant 0 : index
    %c0_108 = arith.constant 0 : index
    %c0_109 = arith.constant 0 : index
    %105 = vector.load %arg14[%c0_106, %c0_107, %c0_108, %c0_109] : memref<4x4x8x144xf32, #tpu.memory_space<vmem>>, vector<4x4x8x16xf32>
    tpu.vector_store %arg14[%c0_106, %c0_107, %c0_108, %c0_109], %104 {strides = array<i32>} : memref<4x4x8x144xf32, #tpu.memory_space<vmem>>, vector<4x4x8x16xf32>,
    %106 = vector.extract_strided_slice %100 {offsets = [0, 1, 0, 0], sizes = [4, 8, 8, 16], strides = [1, 1, 1, 1]} : vector<4x10x8x16xf32> to vector<4x8x8x16xf32>
    %107 = vector.shape_cast %106 : vector<4x8x8x16xf32> to vector<4x4x2x8x16xf32>
    %108 = vector.extract_strided_slice %107 {offsets = [0, 0, 0, 0, 0], sizes = [4, 4, 1, 8, 16], strides = [1, 1, 1, 1, 1]} : vector<4x4x2x8x16xf32> to vector<4x4x1x8x16xf32>
    %109 = vector.shape_cast %108 : vector<4x4x1x8x16xf32> to vector<4x4x8x16xf32>
    %c0_110 = arith.constant 0 : index
    %c0_111 = arith.constant 0 : index
    %c0_112 = arith.constant 0 : index
    %c16_113 = arith.constant 16 : index
    %110 = vector.load %arg14[%c0_110, %c0_111, %c0_112, %c16_113] : memref<4x4x8x144xf32, #tpu.memory_space<vmem>>, vector<4x4x8x16xf32>
    tpu.vector_store %arg14[%c0_110, %c0_111, %c0_112, %c16_113], %109 {strides = array<i32>} : memref<4x4x8x144xf32, #tpu.memory_space<vmem>>, vector<4x4x8x16xf32>,
    %111 = vector.extract_strided_slice %100 {offsets = [0, 2, 0, 0], sizes = [4, 8, 8, 16], strides = [1, 1, 1, 1]} : vector<4x10x8x16xf32> to vector<4x8x8x16xf32>
    %112 = vector.shape_cast %111 : vector<4x8x8x16xf32> to vector<4x4x2x8x16xf32>
    %113 = vector.extract_strided_slice %112 {offsets = [0, 0, 0, 0, 0], sizes = [4, 4, 1, 8, 16], strides = [1, 1, 1, 1, 1]} : vector<4x4x2x8x16xf32> to vector<4x4x1x8x16xf32>
    %114 = vector.shape_cast %113 : vector<4x4x1x8x16xf32> to vector<4x4x8x16xf32>
    %c0_114 = arith.constant 0 : index
    %c0_115 = arith.constant 0 : index
    %c0_116 = arith.constant 0 : index
    %c32_117 = arith.constant 32 : index
    %115 = vector.load %arg14[%c0_114, %c0_115, %c0_116, %c32_117] : memref<4x4x8x144xf32, #tpu.memory_space<vmem>>, vector<4x4x8x16xf32>
    tpu.vector_store %arg14[%c0_114, %c0_115, %c0_116, %c32_117], %114 {strides = array<i32>} : memref<4x4x8x144xf32, #tpu.memory_space<vmem>>, vector<4x4x8x16xf32>,
    %c1_118 = arith.constant 1 : index
    %c0_119 = arith.constant 0 : index
    %c0_120 = arith.constant 0 : index
    %c0_121 = arith.constant 0 : index
    %116 = vector.load %arg12[%c1_118, %c0_119, %c0_120, %c0_121] : memref<10x10x8x16xf32, #tpu.memory_space<vmem>>, vector<8x10x8x16xf32>
    %117 = vector.shape_cast %116 : vector<8x10x8x16xf32> to vector<4x2x10x8x16xf32>
    %118 = vector.extract_strided_slice %117 {offsets = [0, 0, 0, 0, 0], sizes = [4, 1, 10, 8, 16], strides = [1, 1, 1, 1, 1]} : vector<4x2x10x8x16xf32> to vector<4x1x10x8x16xf32>
    %119 = vector.shape_cast %118 : vector<4x1x10x8x16xf32> to vector<4x10x8x16xf32>
    %120 = vector.extract_strided_slice %119 {offsets = [0, 0, 0, 0], sizes = [4, 8, 8, 16], strides = [1, 1, 1, 1]} : vector<4x10x8x16xf32> to vector<4x8x8x16xf32>
    %121 = vector.shape_cast %120 : vector<4x8x8x16xf32> to vector<4x4x2x8x16xf32>
    %122 = vector.extract_strided_slice %121 {offsets = [0, 0, 0, 0, 0], sizes = [4, 4, 1, 8, 16], strides = [1, 1, 1, 1, 1]} : vector<4x4x2x8x16xf32> to vector<4x4x1x8x16xf32>
    %123 = vector.shape_cast %122 : vector<4x4x1x8x16xf32> to vector<4x4x8x16xf32>
    %c0_122 = arith.constant 0 : index
    %c0_123 = arith.constant 0 : index
    %c0_124 = arith.constant 0 : index
    %c48_125 = arith.constant 48 : index
    %124 = vector.load %arg14[%c0_122, %c0_123, %c0_124, %c48_125] : memref<4x4x8x144xf32, #tpu.memory_space<vmem>>, vector<4x4x8x16xf32>
    tpu.vector_store %arg14[%c0_122, %c0_123, %c0_124, %c48_125], %123 {strides = array<i32>} : memref<4x4x8x144xf32, #tpu.memory_space<vmem>>, vector<4x4x8x16xf32>,
    %125 = vector.extract_strided_slice %119 {offsets = [0, 1, 0, 0], sizes = [4, 8, 8, 16], strides = [1, 1, 1, 1]} : vector<4x10x8x16xf32> to vector<4x8x8x16xf32>
    %126 = vector.shape_cast %125 : vector<4x8x8x16xf32> to vector<4x4x2x8x16xf32>
    %127 = vector.extract_strided_slice %126 {offsets = [0, 0, 0, 0, 0], sizes = [4, 4, 1, 8, 16], strides = [1, 1, 1, 1, 1]} : vector<4x4x2x8x16xf32> to vector<4x4x1x8x16xf32>
    %128 = vector.shape_cast %127 : vector<4x4x1x8x16xf32> to vector<4x4x8x16xf32>
    %c0_126 = arith.constant 0 : index
    %c0_127 = arith.constant 0 : index
    %c0_128 = arith.constant 0 : index
    %c64_129 = arith.constant 64 : index
    %129 = vector.load %arg14[%c0_126, %c0_127, %c0_128, %c64_129] : memref<4x4x8x144xf32, #tpu.memory_space<vmem>>, vector<4x4x8x16xf32>
    tpu.vector_store %arg14[%c0_126, %c0_127, %c0_128, %c64_129], %128 {strides = array<i32>} : memref<4x4x8x144xf32, #tpu.memory_space<vmem>>, vector<4x4x8x16xf32>,
    %130 = vector.extract_strided_slice %119 {offsets = [0, 2, 0, 0], sizes = [4, 8, 8, 16], strides = [1, 1, 1, 1]} : vector<4x10x8x16xf32> to vector<4x8x8x16xf32>
    %131 = vector.shape_cast %130 : vector<4x8x8x16xf32> to vector<4x4x2x8x16xf32>
    %132 = vector.extract_strided_slice %131 {offsets = [0, 0, 0, 0, 0], sizes = [4, 4, 1, 8, 16], strides = [1, 1, 1, 1, 1]} : vector<4x4x2x8x16xf32> to vector<4x4x1x8x16xf32>
    %133 = vector.shape_cast %132 : vector<4x4x1x8x16xf32> to vector<4x4x8x16xf32>
    %c0_130 = arith.constant 0 : index
    %c0_131 = arith.constant 0 : index
    %c0_132 = arith.constant 0 : index
    %c80 = arith.constant 80 : index
    %134 = vector.load %arg14[%c0_130, %c0_131, %c0_132, %c80] : memref<4x4x8x144xf32, #tpu.memory_space<vmem>>, vector<4x4x8x16xf32>
    tpu.vector_store %arg14[%c0_130, %c0_131, %c0_132, %c80], %133 {strides = array<i32>} : memref<4x4x8x144xf32, #tpu.memory_space<vmem>>, vector<4x4x8x16xf32>,
    %c2_133 = arith.constant 2 : index
    %c0_134 = arith.constant 0 : index
    %c0_135 = arith.constant 0 : index
    %c0_136 = arith.constant 0 : index
    %135 = vector.load %arg12[%c2_133, %c0_134, %c0_135, %c0_136] : memref<10x10x8x16xf32, #tpu.memory_space<vmem>>, vector<8x10x8x16xf32>
    %136 = vector.shape_cast %135 : vector<8x10x8x16xf32> to vector<4x2x10x8x16xf32>
    %137 = vector.extract_strided_slice %136 {offsets = [0, 0, 0, 0, 0], sizes = [4, 1, 10, 8, 16], strides = [1, 1, 1, 1, 1]} : vector<4x2x10x8x16xf32> to vector<4x1x10x8x16xf32>
    %138 = vector.shape_cast %137 : vector<4x1x10x8x16xf32> to vector<4x10x8x16xf32>
    %139 = vector.extract_strided_slice %138 {offsets = [0, 0, 0, 0], sizes = [4, 8, 8, 16], strides = [1, 1, 1, 1]} : vector<4x10x8x16xf32> to vector<4x8x8x16xf32>
    %140 = vector.shape_cast %139 : vector<4x8x8x16xf32> to vector<4x4x2x8x16xf32>
    %141 = vector.extract_strided_slice %140 {offsets = [0, 0, 0, 0, 0], sizes = [4, 4, 1, 8, 16], strides = [1, 1, 1, 1, 1]} : vector<4x4x2x8x16xf32> to vector<4x4x1x8x16xf32>
    %142 = vector.shape_cast %141 : vector<4x4x1x8x16xf32> to vector<4x4x8x16xf32>
    %c0_137 = arith.constant 0 : index
    %c0_138 = arith.constant 0 : index
    %c0_139 = arith.constant 0 : index
    %c96 = arith.constant 96 : index
    %143 = vector.load %arg14[%c0_137, %c0_138, %c0_139, %c96] : memref<4x4x8x144xf32, #tpu.memory_space<vmem>>, vector<4x4x8x16xf32>
    tpu.vector_store %arg14[%c0_137, %c0_138, %c0_139, %c96], %142 {strides = array<i32>} : memref<4x4x8x144xf32, #tpu.memory_space<vmem>>, vector<4x4x8x16xf32>,
    %144 = vector.extract_strided_slice %138 {offsets = [0, 1, 0, 0], sizes = [4, 8, 8, 16], strides = [1, 1, 1, 1]} : vector<4x10x8x16xf32> to vector<4x8x8x16xf32>
    %145 = vector.shape_cast %144 : vector<4x8x8x16xf32> to vector<4x4x2x8x16xf32>
    %146 = vector.extract_strided_slice %145 {offsets = [0, 0, 0, 0, 0], sizes = [4, 4, 1, 8, 16], strides = [1, 1, 1, 1, 1]} : vector<4x4x2x8x16xf32> to vector<4x4x1x8x16xf32>
    %147 = vector.shape_cast %146 : vector<4x4x1x8x16xf32> to vector<4x4x8x16xf32>
    %c0_140 = arith.constant 0 : index
    %c0_141 = arith.constant 0 : index
    %c0_142 = arith.constant 0 : index
    %c112 = arith.constant 112 : index
    %148 = vector.load %arg14[%c0_140, %c0_141, %c0_142, %c112] : memref<4x4x8x144xf32, #tpu.memory_space<vmem>>, vector<4x4x8x16xf32>
    tpu.vector_store %arg14[%c0_140, %c0_141, %c0_142, %c112], %147 {strides = array<i32>} : memref<4x4x8x144xf32, #tpu.memory_space<vmem>>, vector<4x4x8x16xf32>,
    %149 = vector.extract_strided_slice %138 {offsets = [0, 2, 0, 0], sizes = [4, 8, 8, 16], strides = [1, 1, 1, 1]} : vector<4x10x8x16xf32> to vector<4x8x8x16xf32>
    %150 = vector.shape_cast %149 : vector<4x8x8x16xf32> to vector<4x4x2x8x16xf32>
    %151 = vector.extract_strided_slice %150 {offsets = [0, 0, 0, 0, 0], sizes = [4, 4, 1, 8, 16], strides = [1, 1, 1, 1, 1]} : vector<4x4x2x8x16xf32> to vector<4x4x1x8x16xf32>
    %152 = vector.shape_cast %151 : vector<4x4x1x8x16xf32> to vector<4x4x8x16xf32>
    %c0_143 = arith.constant 0 : index
    %c0_144 = arith.constant 0 : index
    %c0_145 = arith.constant 0 : index
    %c128 = arith.constant 128 : index
    %153 = vector.load %arg14[%c0_143, %c0_144, %c0_145, %c128] : memref<4x4x8x144xf32, #tpu.memory_space<vmem>>, vector<4x4x8x16xf32>
    tpu.vector_store %arg14[%c0_143, %c0_144, %c0_145, %c128], %152 {strides = array<i32>} : memref<4x4x8x144xf32, #tpu.memory_space<vmem>>, vector<4x4x8x16xf32>,
    %c0_146 = arith.constant 0 : index
    %c0_147 = arith.constant 0 : index
    %c0_148 = arith.constant 0 : index
    %c0_149 = arith.constant 0 : index
    %154 = vector.load %arg14[%c0_146, %c0_147, %c0_148, %c0_149] : memref<4x4x8x144xf32, #tpu.memory_space<vmem>>, vector<4x4x8x144xf32>
    %155 = vector.shape_cast %154 : vector<4x4x8x144xf32> to vector<128x144xf32>
    %156 = arith.truncf %155 : vector<128x144xf32> to vector<128x144xbf16>
    %c0_150 = arith.constant 0 : index
    %c0_151 = arith.constant 0 : index
    %157 = vector.load %arg6[%c0_150, %c0_151] : memref<144x32xbf16, #tpu.memory_space<vmem>>, vector<144x32xbf16>
    %cst_152 = arith.constant dense<0.000000e+00> : vector<128x32xf32>
    %158 = tpu.matmul %156, %157, %cst_152 {dimension_numbers = #tpu.dot_dimension_numbers<[1], [0], [0], [1], [0, 0, 1, 1], [], []>} : vector<128x144xbf16>, vector<144x32xbf16>, vector<128x32xf32> -> vector<128x32xf32>
    %c0_153 = arith.constant 0 : index
    %c0_154 = arith.constant 0 : index
    %159 = vector.load %arg7[%c0_153, %c0_154] : memref<1x32xf32, #tpu.memory_space<vmem>>, vector<1x32xf32>
    %160 = vector.broadcast %159 : vector<1x32xf32> to vector<128x32xf32>
    %161 = arith.addf %158, %160 : vector<128x32xf32>
    %cst_155 = arith.constant 0.000000e+00 : f32
    %162 = vector.broadcast %cst_155 : f32 to vector<128x32xf32>
    %163 = arith.maximumf %161, %162 : vector<128x32xf32>
    %164 = vector.shape_cast %163 : vector<128x32xf32> to vector<4x4x8x32xf32>
    %165 = vector.extract_strided_slice %164 {offsets = [0, 0, 0, 0], sizes = [1, 1, 8, 32], strides = [1, 1, 1, 1]} : vector<4x4x8x32xf32> to vector<1x1x8x32xf32>
    %166 = vector.shape_cast %165 : vector<1x1x8x32xf32> to vector<8x32xf32>
    %c0_156 = arith.constant 0 : index
    %c0_157 = arith.constant 0 : index
    %167 = vector.load %arg15[%c0_156, %c0_157] : memref<8x512xf32, #tpu.memory_space<vmem>>, vector<8x32xf32>
    tpu.vector_store %arg15[%c0_156, %c0_157], %166 {strides = array<i32>} : memref<8x512xf32, #tpu.memory_space<vmem>>, vector<8x32xf32>,
    %168 = vector.extract_strided_slice %164 {offsets = [0, 1, 0, 0], sizes = [1, 1, 8, 32], strides = [1, 1, 1, 1]} : vector<4x4x8x32xf32> to vector<1x1x8x32xf32>
    %169 = vector.shape_cast %168 : vector<1x1x8x32xf32> to vector<8x32xf32>
    %c0_158 = arith.constant 0 : index
    %c32_159 = arith.constant 32 : index
    %170 = vector.load %arg15[%c0_158, %c32_159] : memref<8x512xf32, #tpu.memory_space<vmem>>, vector<8x32xf32>
    tpu.vector_store %arg15[%c0_158, %c32_159], %169 {strides = array<i32>} : memref<8x512xf32, #tpu.memory_space<vmem>>, vector<8x32xf32>,
    %171 = vector.extract_strided_slice %164 {offsets = [0, 2, 0, 0], sizes = [1, 1, 8, 32], strides = [1, 1, 1, 1]} : vector<4x4x8x32xf32> to vector<1x1x8x32xf32>
    %172 = vector.shape_cast %171 : vector<1x1x8x32xf32> to vector<8x32xf32>
    %c0_160 = arith.constant 0 : index
    %c64_161 = arith.constant 64 : index
    %173 = vector.load %arg15[%c0_160, %c64_161] : memref<8x512xf32, #tpu.memory_space<vmem>>, vector<8x32xf32>
    tpu.vector_store %arg15[%c0_160, %c64_161], %172 {strides = array<i32>} : memref<8x512xf32, #tpu.memory_space<vmem>>, vector<8x32xf32>,
    %174 = vector.extract_strided_slice %164 {offsets = [0, 3, 0, 0], sizes = [1, 1, 8, 32], strides = [1, 1, 1, 1]} : vector<4x4x8x32xf32> to vector<1x1x8x32xf32>
    %175 = vector.shape_cast %174 : vector<1x1x8x32xf32> to vector<8x32xf32>
    %c0_162 = arith.constant 0 : index
    %c96_163 = arith.constant 96 : index
    %176 = vector.load %arg15[%c0_162, %c96_163] : memref<8x512xf32, #tpu.memory_space<vmem>>, vector<8x32xf32>
    tpu.vector_store %arg15[%c0_162, %c96_163], %175 {strides = array<i32>} : memref<8x512xf32, #tpu.memory_space<vmem>>, vector<8x32xf32>,
    %177 = vector.extract_strided_slice %164 {offsets = [1, 0, 0, 0], sizes = [1, 1, 8, 32], strides = [1, 1, 1, 1]} : vector<4x4x8x32xf32> to vector<1x1x8x32xf32>
    %178 = vector.shape_cast %177 : vector<1x1x8x32xf32> to vector<8x32xf32>
    %c0_164 = arith.constant 0 : index
    %c128_165 = arith.constant 128 : index
    %179 = vector.load %arg15[%c0_164, %c128_165] : memref<8x512xf32, #tpu.memory_space<vmem>>, vector<8x32xf32>
    tpu.vector_store %arg15[%c0_164, %c128_165], %178 {strides = array<i32>} : memref<8x512xf32, #tpu.memory_space<vmem>>, vector<8x32xf32>,
    %180 = vector.extract_strided_slice %164 {offsets = [1, 1, 0, 0], sizes = [1, 1, 8, 32], strides = [1, 1, 1, 1]} : vector<4x4x8x32xf32> to vector<1x1x8x32xf32>
    %181 = vector.shape_cast %180 : vector<1x1x8x32xf32> to vector<8x32xf32>
    %c0_166 = arith.constant 0 : index
    %c160 = arith.constant 160 : index
    %182 = vector.load %arg15[%c0_166, %c160] : memref<8x512xf32, #tpu.memory_space<vmem>>, vector<8x32xf32>
    tpu.vector_store %arg15[%c0_166, %c160], %181 {strides = array<i32>} : memref<8x512xf32, #tpu.memory_space<vmem>>, vector<8x32xf32>,
    %183 = vector.extract_strided_slice %164 {offsets = [1, 2, 0, 0], sizes = [1, 1, 8, 32], strides = [1, 1, 1, 1]} : vector<4x4x8x32xf32> to vector<1x1x8x32xf32>
    %184 = vector.shape_cast %183 : vector<1x1x8x32xf32> to vector<8x32xf32>
    %c0_167 = arith.constant 0 : index
    %c192 = arith.constant 192 : index
    %185 = vector.load %arg15[%c0_167, %c192] : memref<8x512xf32, #tpu.memory_space<vmem>>, vector<8x32xf32>
    tpu.vector_store %arg15[%c0_167, %c192], %184 {strides = array<i32>} : memref<8x512xf32, #tpu.memory_space<vmem>>, vector<8x32xf32>,
    %186 = vector.extract_strided_slice %164 {offsets = [1, 3, 0, 0], sizes = [1, 1, 8, 32], strides = [1, 1, 1, 1]} : vector<4x4x8x32xf32> to vector<1x1x8x32xf32>
    %187 = vector.shape_cast %186 : vector<1x1x8x32xf32> to vector<8x32xf32>
    %c0_168 = arith.constant 0 : index
    %c224 = arith.constant 224 : index
    %188 = vector.load %arg15[%c0_168, %c224] : memref<8x512xf32, #tpu.memory_space<vmem>>, vector<8x32xf32>
    tpu.vector_store %arg15[%c0_168, %c224], %187 {strides = array<i32>} : memref<8x512xf32, #tpu.memory_space<vmem>>, vector<8x32xf32>,
    %189 = vector.extract_strided_slice %164 {offsets = [2, 0, 0, 0], sizes = [1, 1, 8, 32], strides = [1, 1, 1, 1]} : vector<4x4x8x32xf32> to vector<1x1x8x32xf32>
    %190 = vector.shape_cast %189 : vector<1x1x8x32xf32> to vector<8x32xf32>
    %c0_169 = arith.constant 0 : index
    %c256 = arith.constant 256 : index
    %191 = vector.load %arg15[%c0_169, %c256] : memref<8x512xf32, #tpu.memory_space<vmem>>, vector<8x32xf32>
    tpu.vector_store %arg15[%c0_169, %c256], %190 {strides = array<i32>} : memref<8x512xf32, #tpu.memory_space<vmem>>, vector<8x32xf32>,
    %192 = vector.extract_strided_slice %164 {offsets = [2, 1, 0, 0], sizes = [1, 1, 8, 32], strides = [1, 1, 1, 1]} : vector<4x4x8x32xf32> to vector<1x1x8x32xf32>
    %193 = vector.shape_cast %192 : vector<1x1x8x32xf32> to vector<8x32xf32>
    %c0_170 = arith.constant 0 : index
    %c288 = arith.constant 288 : index
    %194 = vector.load %arg15[%c0_170, %c288] : memref<8x512xf32, #tpu.memory_space<vmem>>, vector<8x32xf32>
    tpu.vector_store %arg15[%c0_170, %c288], %193 {strides = array<i32>} : memref<8x512xf32, #tpu.memory_space<vmem>>, vector<8x32xf32>,
    %195 = vector.extract_strided_slice %164 {offsets = [2, 2, 0, 0], sizes = [1, 1, 8, 32], strides = [1, 1, 1, 1]} : vector<4x4x8x32xf32> to vector<1x1x8x32xf32>
    %196 = vector.shape_cast %195 : vector<1x1x8x32xf32> to vector<8x32xf32>
    %c0_171 = arith.constant 0 : index
    %c320 = arith.constant 320 : index
    %197 = vector.load %arg15[%c0_171, %c320] : memref<8x512xf32, #tpu.memory_space<vmem>>, vector<8x32xf32>
    tpu.vector_store %arg15[%c0_171, %c320], %196 {strides = array<i32>} : memref<8x512xf32, #tpu.memory_space<vmem>>, vector<8x32xf32>,
    %198 = vector.extract_strided_slice %164 {offsets = [2, 3, 0, 0], sizes = [1, 1, 8, 32], strides = [1, 1, 1, 1]} : vector<4x4x8x32xf32> to vector<1x1x8x32xf32>
    %199 = vector.shape_cast %198 : vector<1x1x8x32xf32> to vector<8x32xf32>
    %c0_172 = arith.constant 0 : index
    %c352 = arith.constant 352 : index
    %200 = vector.load %arg15[%c0_172, %c352] : memref<8x512xf32, #tpu.memory_space<vmem>>, vector<8x32xf32>
    tpu.vector_store %arg15[%c0_172, %c352], %199 {strides = array<i32>} : memref<8x512xf32, #tpu.memory_space<vmem>>, vector<8x32xf32>,
    %201 = vector.extract_strided_slice %164 {offsets = [3, 0, 0, 0], sizes = [1, 1, 8, 32], strides = [1, 1, 1, 1]} : vector<4x4x8x32xf32> to vector<1x1x8x32xf32>
    %202 = vector.shape_cast %201 : vector<1x1x8x32xf32> to vector<8x32xf32>
    %c0_173 = arith.constant 0 : index
    %c384 = arith.constant 384 : index
    %203 = vector.load %arg15[%c0_173, %c384] : memref<8x512xf32, #tpu.memory_space<vmem>>, vector<8x32xf32>
    tpu.vector_store %arg15[%c0_173, %c384], %202 {strides = array<i32>} : memref<8x512xf32, #tpu.memory_space<vmem>>, vector<8x32xf32>,
    %204 = vector.extract_strided_slice %164 {offsets = [3, 1, 0, 0], sizes = [1, 1, 8, 32], strides = [1, 1, 1, 1]} : vector<4x4x8x32xf32> to vector<1x1x8x32xf32>
    %205 = vector.shape_cast %204 : vector<1x1x8x32xf32> to vector<8x32xf32>
    %c0_174 = arith.constant 0 : index
    %c416 = arith.constant 416 : index
    %206 = vector.load %arg15[%c0_174, %c416] : memref<8x512xf32, #tpu.memory_space<vmem>>, vector<8x32xf32>
    tpu.vector_store %arg15[%c0_174, %c416], %205 {strides = array<i32>} : memref<8x512xf32, #tpu.memory_space<vmem>>, vector<8x32xf32>,
    %207 = vector.extract_strided_slice %164 {offsets = [3, 2, 0, 0], sizes = [1, 1, 8, 32], strides = [1, 1, 1, 1]} : vector<4x4x8x32xf32> to vector<1x1x8x32xf32>
    %208 = vector.shape_cast %207 : vector<1x1x8x32xf32> to vector<8x32xf32>
    %c0_175 = arith.constant 0 : index
    %c448 = arith.constant 448 : index
    %209 = vector.load %arg15[%c0_175, %c448] : memref<8x512xf32, #tpu.memory_space<vmem>>, vector<8x32xf32>
    tpu.vector_store %arg15[%c0_175, %c448], %208 {strides = array<i32>} : memref<8x512xf32, #tpu.memory_space<vmem>>, vector<8x32xf32>,
    %210 = vector.extract_strided_slice %164 {offsets = [3, 3, 0, 0], sizes = [1, 1, 8, 32], strides = [1, 1, 1, 1]} : vector<4x4x8x32xf32> to vector<1x1x8x32xf32>
    %211 = vector.shape_cast %210 : vector<1x1x8x32xf32> to vector<8x32xf32>
    %c0_176 = arith.constant 0 : index
    %c480 = arith.constant 480 : index
    %212 = vector.load %arg15[%c0_176, %c480] : memref<8x512xf32, #tpu.memory_space<vmem>>, vector<8x32xf32>
    tpu.vector_store %arg15[%c0_176, %c480], %211 {strides = array<i32>} : memref<8x512xf32, #tpu.memory_space<vmem>>, vector<8x32xf32>,
    %c0_177 = arith.constant 0 : index
    %c0_178 = arith.constant 0 : index
    %213 = vector.load %arg15[%c0_177, %c0_178] : memref<8x512xf32, #tpu.memory_space<vmem>>, vector<8x512xf32>
    %214 = arith.truncf %213 : vector<8x512xf32> to vector<8x512xbf16>
    %c0_179 = arith.constant 0 : index
    %c0_180 = arith.constant 0 : index
    %215 = vector.load %arg8[%c0_179, %c0_180] : memref<512x128xbf16, #tpu.memory_space<vmem>>, vector<512x128xbf16>
    %cst_181 = arith.constant dense<0.000000e+00> : vector<8x128xf32>
    %216 = tpu.matmul %214, %215, %cst_181 {dimension_numbers = #tpu.dot_dimension_numbers<[1], [0], [0], [1], [0, 0, 1, 1], [], []>} : vector<8x512xbf16>, vector<512x128xbf16>, vector<8x128xf32> -> vector<8x128xf32>
    %c0_182 = arith.constant 0 : index
    %c0_183 = arith.constant 0 : index
    %217 = vector.load %arg9[%c0_182, %c0_183] : memref<1x128xf32, #tpu.memory_space<vmem>>, vector<1x128xf32>
    %218 = vector.broadcast %217 : vector<1x128xf32> to vector<8x128xf32>
    %219 = arith.addf %216, %218 : vector<8x128xf32>
    %cst_184 = arith.constant 0.000000e+00 : f32
    %220 = vector.broadcast %cst_184 : f32 to vector<8x128xf32>
    %221 = arith.maximumf %219, %220 : vector<8x128xf32>
    %c0_185 = arith.constant 0 : index
    %c0_186 = arith.constant 0 : index
    %222 = vector.load %arg10[%c0_185, %c0_186] : memref<8x128xf32, #tpu.memory_space<vmem>>, vector<8x128xf32>
    tpu.vector_store %arg10[%c0_185, %c0_186], %221 {strides = array<i32>} : memref<8x128xf32, #tpu.memory_space<vmem>>, vector<8x128xf32>,
    return
  }
  func.func @transform_0(%arg0: i32) -> (i32, i32, i32) {
    %c0_i32 = arith.constant 0 : i32
    %c0_i32_0 = arith.constant 0 : i32
    %c0_i32_1 = arith.constant 0 : i32
    return %arg0, %c0_i32, %c0_i32_0 : i32, i32, i32
  }
  func.func @transform_1(%arg0: i32) -> (i32, i32) {
    %c0_i32 = arith.constant 0 : i32
    %c0_i32_0 = arith.constant 0 : i32
    %c0_i32_1 = arith.constant 0 : i32
    return %c0_i32, %c0_i32_0 : i32, i32
  }
  func.func @transform_2(%arg0: i32) -> (i32, i32) {
    %c0_i32 = arith.constant 0 : i32
    %c0_i32_0 = arith.constant 0 : i32
    %c0_i32_1 = arith.constant 0 : i32
    return %c0_i32, %c0_i32_0 : i32, i32
  }
  func.func @transform_3(%arg0: i32) -> (i32, i32) {
    %c0_i32 = arith.constant 0 : i32
    %c0_i32_0 = arith.constant 0 : i32
    %c0_i32_1 = arith.constant 0 : i32
    return %c0_i32, %c0_i32_0 : i32, i32
  }
  func.func @transform_4(%arg0: i32) -> (i32, i32) {
    %c0_i32 = arith.constant 0 : i32
    %c0_i32_0 = arith.constant 0 : i32
    %c0_i32_1 = arith.constant 0 : i32
    return %c0_i32, %c0_i32_0 : i32, i32
  }
  func.func @transform_5(%arg0: i32) -> (i32, i32) {
    %c0_i32 = arith.constant 0 : i32
    %c0_i32_0 = arith.constant 0 : i32
    %c0_i32_1 = arith.constant 0 : i32
    return %c0_i32, %c0_i32_0 : i32, i32
  }
  func.func @transform_6(%arg0: i32) -> (i32, i32) {
    %c0_i32 = arith.constant 0 : i32
    %c0_i32_0 = arith.constant 0 : i32
    %c0_i32_1 = arith.constant 0 : i32
    return %c0_i32, %c0_i32_0 : i32, i32
  }
  func.func @transform_7(%arg0: i32) -> (i32, i32) {
    %c0_i32 = arith.constant 0 : i32
    %c0_i32_0 = arith.constant 0 : i32
    %c0_i32_1 = arith.constant 0 : i32
    return %c0_i32, %c0_i32_0 : i32, i32
  }
  func.func @transform_8(%arg0: i32) -> (i32, i32) {
    %c0_i32 = arith.constant 0 : i32
    %c0_i32_0 = arith.constant 0 : i32
    %c0_i32_1 = arith.constant 0 : i32
    return %c0_i32, %c0_i32_0 : i32, i32
  }
  func.func @transform_9(%arg0: i32) -> (i32, i32) {
    %c0_i32 = arith.constant 0 : i32
    %c0_i32_0 = arith.constant 0 : i32
    return %arg0, %c0_i32 : i32, i32
  }
}

</mosaic_0001>

<llo_original>
// kernel: fashion_mnist_net.1
$region0: #{fashion_mnist_net.1}
  #allocation0 [shape = 'u32[]', space=smem, size = 0x4, offset = 0x4, fixed_abs, tag = 'smem constant byte address 0x4 - core index']
  #allocation1 [shape = 'u32[144,128]{1,0:T(1,128)}', space=vmem, size = 0x12000, scoped, tag = 'internal scratch']
  #allocation2 [shape = 'f32[16,16,8,8]{3,2,1,0:T(8,128)}', space=vmem, size = 0x100000, scoped, tag = 'scratch operand']
  #allocation3 [shape = 'f32[10,10,8,16]{3,2,1,0:T(8,128)}', space=vmem, size = 0x64000, scoped, tag = 'scratch operand']
  #allocation4 [shape = 'f32[7,7,8,72]{3,2,1,0:T(8,128)}', space=vmem, size = 0x31000, scoped, tag = 'scratch operand']
  #allocation5 [shape = 'f32[4,4,8,144]{3,2,1,0:T(8,128)}', space=vmem, size = 0x20000, scoped, tag = 'scratch operand']
  #allocation6 [shape = 'f32[8,512]{1,0:T(8,128)}', space=vmem, size = 0x4000, scoped, tag = 'scratch operand']
  %s0 = inlined_call_operand.vmem [shape: f32[1,1568,25], index: 0, kind: input, shape index: {}]
  %s1 = inlined_call_operand.vmem [shape: bf16[25,8], index: 1, kind: input, shape index: {}]
  %s2 = inlined_call_operand.vmem [shape: f32[1,8], index: 2, kind: input, shape index: {}]
  %s3 = inlined_call_operand.vmem [shape: bf16[72,16], index: 3, kind: input, shape index: {}]
  %s4 = inlined_call_operand.vmem [shape: f32[1,16], index: 4, kind: input, shape index: {}]
  %s5 = inlined_call_operand.vmem [shape: bf16[144,32], index: 5, kind: input, shape index: {}]
  %s6 = inlined_call_operand.vmem [shape: f32[1,32], index: 6, kind: input, shape index: {}]
  %s7 = inlined_call_operand.vmem [shape: bf16[512,128], index: 7, kind: input, shape index: {}]
  %s8 = inlined_call_operand.vmem [shape: f32[1,128], index: 8, kind: input, shape index: {}]
  %s9 = inlined_call_operand.vmem [shape: f32[8,128], index: 9, kind: output, shape index: {}]
  %s10 = sld [smem:[#allocation0]]
  $region46: #{fashion_mnist_net.1} parent=0
    _
  %s12 = ssub.s32 1, %s10
  %s13 = scalar_select 0, %s12, %s10
  // Predicated region
  $region2: #{fashion_mnist_net.1} parent=0 // pred_check
    _
  $region3: #{fashion_mnist_net.1} parent=0 // pred_check_branch
    %15 = sbr.rel (0) target = $region5
  $region4: #{fashion_mnist_net.1} parent=0 // pred_region
    _
  $region5: #{fashion_mnist_net.1} parent=0 // pred_fallthru
    _
  // Predicated region
  $region6: #{fashion_mnist_net.1} parent=0 // pred_check
    _
  $region7: #{fashion_mnist_net.1} parent=0 // pred_check_branch
    %17 = sbr.rel (0) target = $region9
  $region8: #{fashion_mnist_net.1} parent=0 // pred_region
    _
  $region9: #{fashion_mnist_net.1} parent=0 // pred_fallthru
    _
  // Predicated region
  $region10: #{fashion_mnist_net.1} parent=0 // pred_check
    _
  $region11: #{fashion_mnist_net.1} parent=0 // pred_check_branch
    %19 = sbr.rel (0) target = $region13
  $region12: #{fashion_mnist_net.1} parent=0 // pred_region
    _
  $region13: #{fashion_mnist_net.1} parent=0 // pred_fallthru
    _
  // Predicated region
  $region14: #{fashion_mnist_net.1} parent=0 // pred_check
    _
  $region15: #{fashion_mnist_net.1} parent=0 // pred_check_branch
    %21 = sbr.rel (0) target = $region17
  $region16: #{fashion_mnist_net.1} parent=0 // pred_region
    _
  $region17: #{fashion_mnist_net.1} parent=0 // pred_fallthru
    _
  // Predicated region
  $region18: #{fashion_mnist_net.1} parent=0 // pred_check
    _
  $region19: #{fashion_mnist_net.1} parent=0 // pred_check_branch
    %23 = sbr.rel (0) target = $region21
  $region20: #{fashion_mnist_net.1} parent=0 // pred_region
    _
  $region21: #{fashion_mnist_net.1} parent=0 // pred_fallthru
    _
  // Predicated region
  $region22: #{fashion_mnist_net.1} parent=0 // pred_check
    _
  $region23: #{fashion_mnist_net.1} parent=0 // pred_check_branch
    %25 = sbr.rel (0) target = $region25
  $region24: #{fashion_mnist_net.1} parent=0 // pred_region
    _
  $region25: #{fashion_mnist_net.1} parent=0 // pred_fallthru
    _
  // Predicated region
  $region26: #{fashion_mnist_net.1} parent=0 // pred_check
    _
  $region27: #{fashion_mnist_net.1} parent=0 // pred_check_branch
    %27 = sbr.rel (0) target = $region29
  $region28: #{fashion_mnist_net.1} parent=0 // pred_region
    _
  $region29: #{fashion_mnist_net.1} parent=0 // pred_fallthru
    _
  // Predicated region
  $region30: #{fashion_mnist_net.1} parent=0 // pred_check
    _
  $region31: #{fashion_mnist_net.1} parent=0 // pred_check_branch
    %29 = sbr.rel (0) target = $region33
  $region32: #{fashion_mnist_net.1} parent=0 // pred_region
    _
  $region33: #{fashion_mnist_net.1} parent=0 // pred_fallthru
    _
  // Predicated region
  $region34: #{fashion_mnist_net.1} parent=0 // pred_check
    _
  $region35: #{fashion_mnist_net.1} parent=0 // pred_check_branch
    %31 = sbr.rel (0) target = $region37
  $region36: #{fashion_mnist_net.1} parent=0 // pred_region
    _
  $region37: #{fashion_mnist_net.1} parent=0 // pred_fallthru
    _
  %v33 = vld [vmem:[%s0] sm:$0xff]
  %v34 = vld [vmem:[%s0 + $0x8] sm:$0xff]
  %v35 = vld [vmem:[%s0 + $0x10] sm:$0xff]
  %v36 = vld [vmem:[%s0 + $0x18] sm:$0xff]
  %v37 = vld [vmem:[%s0 + $0x20] sm:$0xff]
  %v38 = vld [vmem:[%s0 + $0x28] sm:$0xff]
  %v39 = vld [vmem:[%s0 + $0x30] sm:$0xff]
  %v40 = vld [vmem:[%s0 + $0x38] sm:$0xff]
  %v41 = vld [vmem:[%s0 + $0x40] sm:$0xff]
  %v42 = vld [vmem:[%s0 + $0x48] sm:$0xff]
  %v43 = vld [vmem:[%s0 + $0x50] sm:$0xff]
  %v44 = vld [vmem:[%s0 + $0x58] sm:$0xff]
  %v45 = vld [vmem:[%s0 + $0x60] sm:$0xff]
  %v46 = vld [vmem:[%s0 + $0x68] sm:$0xff]
  %v47 = vld [vmem:[%s0 + $0x70] sm:$0xff]
  %v48 = vld [vmem:[%s0 + $0x78] sm:$0xff]
  %v49 = vld [vmem:[%s0 + $0x80] sm:$0xff]
  %v50 = vld [vmem:[%s0 + $0x88] sm:$0xff]
  %v51 = vld [vmem:[%s0 + $0x90] sm:$0xff]
  %v52 = vld [vmem:[%s0 + $0x98] sm:$0xff]
  %v53 = vld [vmem:[%s0 + $0xa0] sm:$0xff]
  %v54 = vld [vmem:[%s0 + $0xa8] sm:$0xff]
  %v55 = vld [vmem:[%s0 + $0xb0] sm:$0xff]
  %v56 = vld [vmem:[%s0 + $0xb8] sm:$0xff]
  %v57 = vld [vmem:[%s0 + $0xc0] sm:$0xff]
  %v58 = vld [vmem:[%s0 + $0xc8] sm:$0xff]
  %v59 = vld [vmem:[%s0 + $0xd0] sm:$0xff]
  %v60 = vld [vmem:[%s0 + $0xd8] sm:$0xff]
  %v61 = vld [vmem:[%s0 + $0xe0] sm:$0xff]
  %v62 = vld [vmem:[%s0 + $0xe8] sm:$0xff]
  %v63 = vld [vmem:[%s0 + $0xf0] sm:$0xff]
  %v64 = vld [vmem:[%s0 + $0xf8] sm:$0xff]
  %v65 = vld [vmem:[%s0 + $0x100] sm:$0xff]
  %v66 = vld [vmem:[%s0 + $0x108] sm:$0xff]
  %v67 = vld [vmem:[%s0 + $0x110] sm:$0xff]
  %v68 = vld [vmem:[%s0 + $0x118] sm:$0xff]
  %v69 = vld [vmem:[%s0 + $0x120] sm:$0xff]
  %v70 = vld [vmem:[%s0 + $0x128] sm:$0xff]
  %v71 = vld [vmem:[%s0 + $0x130] sm:$0xff]
  %v72 = vld [vmem:[%s0 + $0x138] sm:$0xff]
  %v73 = vld [vmem:[%s0 + $0x140] sm:$0xff]
  %v74 = vld [vmem:[%s0 + $0x148] sm:$0xff]
  %v75 = vld [vmem:[%s0 + $0x150] sm:$0xff]
  %v76 = vld [vmem:[%s0 + $0x158] sm:$0xff]
  %v77 = vld [vmem:[%s0 + $0x160] sm:$0xff]
  %v78 = vld [vmem:[%s0 + $0x168] sm:$0xff]
  %v79 = vld [vmem:[%s0 + $0x170] sm:$0xff]
  %v80 = vld [vmem:[%s0 + $0x178] sm:$0xff]
  %v81 = vld [vmem:[%s0 + $0x180] sm:$0xff]
  %v82 = vld [vmem:[%s0 + $0x188] sm:$0xff]
  %v83 = vld [vmem:[%s0 + $0x190] sm:$0xff]
  %v84 = vld [vmem:[%s0 + $0x198] sm:$0xff]
  %v85 = vld [vmem:[%s0 + $0x1a0] sm:$0xff]
  %v86 = vld [vmem:[%s0 + $0x1a8] sm:$0xff]
  %v87 = vld [vmem:[%s0 + $0x1b0] sm:$0xff]
  %v88 = vld [vmem:[%s0 + $0x1b8] sm:$0xff]
  %v89 = vld [vmem:[%s0 + $0x1c0] sm:$0xff]
  %v90 = vld [vmem:[%s0 + $0x1c8] sm:$0xff]
  %v91 = vld [vmem:[%s0 + $0x1d0] sm:$0xff]
  %v92 = vld [vmem:[%s0 + $0x1d8] sm:$0xff]
  %v93 = vld [vmem:[%s0 + $0x1e0] sm:$0xff]
  %v94 = vld [vmem:[%s0 + $0x1e8] sm:$0xff]
  %v95 = vld [vmem:[%s0 + $0x1f0] sm:$0xff]
  %v96 = vld [vmem:[%s0 + $0x1f8] sm:$0xff]
  %v97 = vld [vmem:[%s0 + $0x200] sm:$0xff]
  %v98 = vld [vmem:[%s0 + $0x208] sm:$0xff]
  %v99 = vld [vmem:[%s0 + $0x210] sm:$0xff]
  %v100 = vld [vmem:[%s0 + $0x218] sm:$0xff]
  %v101 = vld [vmem:[%s0 + $0x220] sm:$0xff]
  %v102 = vld [vmem:[%s0 + $0x228] sm:$0xff]
  %v103 = vld [vmem:[%s0 + $0x230] sm:$0xff]
  %v104 = vld [vmem:[%s0 + $0x238] sm:$0xff]
  %v105 = vld [vmem:[%s0 + $0x240] sm:$0xff]
  %v106 = vld [vmem:[%s0 + $0x248] sm:$0xff]
  %v107 = vld [vmem:[%s0 + $0x250] sm:$0xff]
  %v108 = vld [vmem:[%s0 + $0x258] sm:$0xff]
  %v109 = vld [vmem:[%s0 + $0x260] sm:$0xff]
  %v110 = vld [vmem:[%s0 + $0x268] sm:$0xff]
  %v111 = vld [vmem:[%s0 + $0x270] sm:$0xff]
  %v112 = vld [vmem:[%s0 + $0x278] sm:$0xff]
  %v113 = vld [vmem:[%s0 + $0x280] sm:$0xff]
  %v114 = vld [vmem:[%s0 + $0x288] sm:$0xff]
  %v115 = vld [vmem:[%s0 + $0x290] sm:$0xff]
  %v116 = vld [vmem:[%s0 + $0x298] sm:$0xff]
  %v117 = vld [vmem:[%s0 + $0x2a0] sm:$0xff]
  %v118 = vld [vmem:[%s0 + $0x2a8] sm:$0xff]
  %v119 = vld [vmem:[%s0 + $0x2b0] sm:$0xff]
  %v120 = vld [vmem:[%s0 + $0x2b8] sm:$0xff]
  %v121 = vld [vmem:[%s0 + $0x2c0] sm:$0xff]
  %v122 = vld [vmem:[%s0 + $0x2c8] sm:$0xff]
  %v123 = vld [vmem:[%s0 + $0x2d0] sm:$0xff]
  %v124 = vld [vmem:[%s0 + $0x2d8] sm:$0xff]
  %v125 = vld [vmem:[%s0 + $0x2e0] sm:$0xff]
  %v126 = vld [vmem:[%s0 + $0x2e8] sm:$0xff]
  %v127 = vld [vmem:[%s0 + $0x2f0] sm:$0xff]
  %v128 = vld [vmem:[%s0 + $0x2f8] sm:$0xff]
  %v129 = vld [vmem:[%s0 + $0x300] sm:$0xff]
  %v130 = vld [vmem:[%s0 + $0x308] sm:$0xff]
  %v131 = vld [vmem:[%s0 + $0x310] sm:$0xff]
  %v132 = vld [vmem:[%s0 + $0x318] sm:$0xff]
  %v133 = vld [vmem:[%s0 + $0x320] sm:$0xff]
  %v134 = vld [vmem:[%s0 + $0x328] sm:$0xff]
  %v135 = vld [vmem:[%s0 + $0x330] sm:$0xff]
  %v136 = vld [vmem:[%s0 + $0x338] sm:$0xff]
  %v137 = vld [vmem:[%s0 + $0x340] sm:$0xff]
  %v138 = vld [vmem:[%s0 + $0x348] sm:$0xff]
  %v139 = vld [vmem:[%s0 + $0x350] sm:$0xff]
  %v140 = vld [vmem:[%s0 + $0x358] sm:$0xff]
  %v141 = vld [vmem:[%s0 + $0x360] sm:$0xff]
  %v142 = vld [vmem:[%s0 + $0x368] sm:$0xff]
  %v143 = vld [vmem:[%s0 + $0x370] sm:$0xff]
  %v144 = vld [vmem:[%s0 + $0x378] sm:$0xff]
  %v145 = vld [vmem:[%s0 + $0x380] sm:$0xff]
  %v146 = vld [vmem:[%s0 + $0x388] sm:$0xff]
  %v147 = vld [vmem:[%s0 + $0x390] sm:$0xff]
  %v148 = vld [vmem:[%s0 + $0x398] sm:$0xff]
  %v149 = vld [vmem:[%s0 + $0x3a0] sm:$0xff]
  %v150 = vld [vmem:[%s0 + $0x3a8] sm:$0xff]
  %v151 = vld [vmem:[%s0 + $0x3b0] sm:$0xff]
  %v152 = vld [vmem:[%s0 + $0x3b8] sm:$0xff]
  %v153 = vld [vmem:[%s0 + $0x3c0] sm:$0xff]
  %v154 = vld [vmem:[%s0 + $0x3c8] sm:$0xff]
  %v155 = vld [vmem:[%s0 + $0x3d0] sm:$0xff]
  %v156 = vld [vmem:[%s0 + $0x3d8] sm:$0xff]
  %v157 = vld [vmem:[%s0 + $0x3e0] sm:$0xff]
  %v158 = vld [vmem:[%s0 + $0x3e8] sm:$0xff]
  %v159 = vld [vmem:[%s0 + $0x3f0] sm:$0xff]
  %v160 = vld [vmem:[%s0 + $0x3f8] sm:$0xff]
  %v161 = vld [vmem:[%s0 + $0x400] sm:$0xff]
  %v162 = vld [vmem:[%s0 + $0x408] sm:$0xff]
  %v163 = vld [vmem:[%s0 + $0x410] sm:$0xff]
  %v164 = vld [vmem:[%s0 + $0x418] sm:$0xff]
  %v165 = vld [vmem:[%s0 + $0x420] sm:$0xff]
  %v166 = vld [vmem:[%s0 + $0x428] sm:$0xff]
  %v167 = vld [vmem:[%s0 + $0x430] sm:$0xff]
  %v168 = vld [vmem:[%s0 + $0x438] sm:$0xff]
  %v169 = vld [vmem:[%s0 + $0x440] sm:$0xff]
  %v170 = vld [vmem:[%s0 + $0x448] sm:$0xff]
  %v171 = vld [vmem:[%s0 + $0x450] sm:$0xff]
  %v172 = vld [vmem:[%s0 + $0x458] sm:$0xff]
  %v173 = vld [vmem:[%s0 + $0x460] sm:$0xff]
  %v174 = vld [vmem:[%s0 + $0x468] sm:$0xff]
  %v175 = vld [vmem:[%s0 + $0x470] sm:$0xff]
  %v176 = vld [vmem:[%s0 + $0x478] sm:$0xff]
  %v177 = vld [vmem:[%s0 + $0x480] sm:$0xff]
  %v178 = vld [vmem:[%s0 + $0x488] sm:$0xff]
  %v179 = vld [vmem:[%s0 + $0x490] sm:$0xff]
  %v180 = vld [vmem:[%s0 + $0x498] sm:$0xff]
  %v181 = vld [vmem:[%s0 + $0x4a0] sm:$0xff]
  %v182 = vld [vmem:[%s0 + $0x4a8] sm:$0xff]
  %v183 = vld [vmem:[%s0 + $0x4b0] sm:$0xff]
  %v184 = vld [vmem:[%s0 + $0x4b8] sm:$0xff]
  %v185 = vld [vmem:[%s0 + $0x4c0] sm:$0xff]
  %v186 = vld [vmem:[%s0 + $0x4c8] sm:$0xff]
  %v187 = vld [vmem:[%s0 + $0x4d0] sm:$0xff]
  %v188 = vld [vmem:[%s0 + $0x4d8] sm:$0xff]
  %v189 = vld [vmem:[%s0 + $0x4e0] sm:$0xff]
  %v190 = vld [vmem:[%s0 + $0x4e8] sm:$0xff]
  %v191 = vld [vmem:[%s0 + $0x4f0] sm:$0xff]
  %v192 = vld [vmem:[%s0 + $0x4f8] sm:$0xff]
  %v193 = vld [vmem:[%s0 + $0x500] sm:$0xff]
  %v194 = vld [vmem:[%s0 + $0x508] sm:$0xff]
  %v195 = vld [vmem:[%s0 + $0x510] sm:$0xff]
  %v196 = vld [vmem:[%s0 + $0x518] sm:$0xff]
  %v197 = vld [vmem:[%s0 + $0x520] sm:$0xff]
  %v198 = vld [vmem:[%s0 + $0x528] sm:$0xff]
  %v199 = vld [vmem:[%s0 + $0x530] sm:$0xff]
  %v200 = vld [vmem:[%s0 + $0x538] sm:$0xff]
  %v201 = vld [vmem:[%s0 + $0x540] sm:$0xff]
  %v202 = vld [vmem:[%s0 + $0x548] sm:$0xff]
  %v203 = vld [vmem:[%s0 + $0x550] sm:$0xff]
  %v204 = vld [vmem:[%s0 + $0x558] sm:$0xff]
  %v205 = vld [vmem:[%s0 + $0x560] sm:$0xff]
  %v206 = vld [vmem:[%s0 + $0x568] sm:$0xff]
  %v207 = vld [vmem:[%s0 + $0x570] sm:$0xff]
  %v208 = vld [vmem:[%s0 + $0x578] sm:$0xff]
  %v209 = vld [vmem:[%s0 + $0x580] sm:$0xff]
  %v210 = vld [vmem:[%s0 + $0x588] sm:$0xff]
  %v211 = vld [vmem:[%s0 + $0x590] sm:$0xff]
  %v212 = vld [vmem:[%s0 + $0x598] sm:$0xff]
  %v213 = vld [vmem:[%s0 + $0x5a0] sm:$0xff]
  %v214 = vld [vmem:[%s0 + $0x5a8] sm:$0xff]
  %v215 = vld [vmem:[%s0 + $0x5b0] sm:$0xff]
  %v216 = vld [vmem:[%s0 + $0x5b8] sm:$0xff]
  %v217 = vld [vmem:[%s0 + $0x5c0] sm:$0xff]
  %v218 = vld [vmem:[%s0 + $0x5c8] sm:$0xff]
  %v219 = vld [vmem:[%s0 + $0x5d0] sm:$0xff]
  %v220 = vld [vmem:[%s0 + $0x5d8] sm:$0xff]
  %v221 = vld [vmem:[%s0 + $0x5e0] sm:$0xff]
  %v222 = vld [vmem:[%s0 + $0x5e8] sm:$0xff]
  %v223 = vld [vmem:[%s0 + $0x5f0] sm:$0xff]
  %v224 = vld [vmem:[%s0 + $0x5f8] sm:$0xff]
  %v225 = vld [vmem:[%s0 + $0x600] sm:$0xff]
  %v226 = vld [vmem:[%s0 + $0x608] sm:$0xff]
  %v227 = vld [vmem:[%s0 + $0x610] sm:$0xff]
  %v228 = vld [vmem:[%s0 + $0x618] sm:$0xff]
  %v229 = vpack.c.bf16 %v34, %v33
  %v230 = vpack.c.bf16 %v36, %v35
  %v231 = vpack.c.bf16 %v38, %v37
  %v232 = vpack.c.bf16 %v40, %v39
  %v233 = vpack.c.bf16 %v42, %v41
  %v234 = vpack.c.bf16 %v44, %v43
  %v235 = vpack.c.bf16 %v46, %v45
  %v236 = vpack.c.bf16 %v48, %v47
  %v237 = vpack.c.bf16 %v50, %v49
  %v238 = vpack.c.bf16 %v52, %v51
  %v239 = vpack.c.bf16 %v54, %v53
  %v240 = vpack.c.bf16 %v56, %v55
  %v241 = vpack.c.bf16 %v58, %v57
  %v242 = vpack.c.bf16 %v60, %v59
  %v243 = vpack.c.bf16 %v62, %v61
  %v244 = vpack.c.bf16 %v64, %v63
  %v245 = vpack.c.bf16 %v66, %v65
  %v246 = vpack.c.bf16 %v68, %v67
  %v247 = vpack.c.bf16 %v70, %v69
  %v248 = vpack.c.bf16 %v72, %v71
  %v249 = vpack.c.bf16 %v74, %v73
  %v250 = vpack.c.bf16 %v76, %v75
  %v251 = vpack.c.bf16 %v78, %v77
  %v252 = vpack.c.bf16 %v80, %v79
  %v253 = vpack.c.bf16 %v82, %v81
  %v254 = vpack.c.bf16 %v84, %v83
  %v255 = vpack.c.bf16 %v86, %v85
  %v256 = vpack.c.bf16 %v88, %v87
  %v257 = vpack.c.bf16 %v90, %v89
  %v258 = vpack.c.bf16 %v92, %v91
  %v259 = vpack.c.bf16 %v94, %v93
  %v260 = vpack.c.bf16 %v96, %v95
  %v261 = vpack.c.bf16 %v98, %v97
  %v262 = vpack.c.bf16 %v100, %v99
  %v263 = vpack.c.bf16 %v102, %v101
  %v264 = vpack.c.bf16 %v104, %v103
  %v265 = vpack.c.bf16 %v106, %v105
  %v266 = vpack.c.bf16 %v108, %v107
  %v267 = vpack.c.bf16 %v110, %v109
  %v268 = vpack.c.bf16 %v112, %v111
  %v269 = vpack.c.bf16 %v114, %v113
  %v270 = vpack.c.bf16 %v116, %v115
  %v271 = vpack.c.bf16 %v118, %v117
  %v272 = vpack.c.bf16 %v120, %v119
  %v273 = vpack.c.bf16 %v122, %v121
  %v274 = vpack.c.bf16 %v124, %v123
  %v275 = vpack.c.bf16 %v126, %v125
  %v276 = vpack.c.bf16 %v128, %v127
  %v277 = vpack.c.bf16 %v130, %v129
  %v278 = vpack.c.bf16 %v132, %v131
  %v279 = vpack.c.bf16 %v134, %v133
  %v280 = vpack.c.bf16 %v136, %v135
  %v281 = vpack.c.bf16 %v138, %v137
  %v282 = vpack.c.bf16 %v140, %v139
  %v283 = vpack.c.bf16 %v142, %v141
  %v284 = vpack.c.bf16 %v144, %v143
  %v285 = vpack.c.bf16 %v146, %v145
  %v286 = vpack.c.bf16 %v148, %v147
  %v287 = vpack.c.bf16 %v150, %v149
  %v288 = vpack.c.bf16 %v152, %v151
  %v289 = vpack.c.bf16 %v154, %v153
  %v290 = vpack.c.bf16 %v156, %v155
  %v291 = vpack.c.bf16 %v158, %v157
  %v292 = vpack.c.bf16 %v160, %v159
  %v293 = vpack.c.bf16 %v162, %v161
  %v294 = vpack.c.bf16 %v164, %v163
  %v295 = vpack.c.bf16 %v166, %v165
  %v296 = vpack.c.bf16 %v168, %v167
  %v297 = vpack.c.bf16 %v170, %v169
  %v298 = vpack.c.bf16 %v172, %v171
  %v299 = vpack.c.bf16 %v174, %v173
  %v300 = vpack.c.bf16 %v176, %v175
  %v301 = vpack.c.bf16 %v178, %v177
  %v302 = vpack.c.bf16 %v180, %v179
  %v303 = vpack.c.bf16 %v182, %v181
  %v304 = vpack.c.bf16 %v184, %v183
  %v305 = vpack.c.bf16 %v186, %v185
  %v306 = vpack.c.bf16 %v188, %v187
  %v307 = vpack.c.bf16 %v190, %v189
  %v308 = vpack.c.bf16 %v192, %v191
  %v309 = vpack.c.bf16 %v194, %v193
  %v310 = vpack.c.bf16 %v196, %v195
  %v311 = vpack.c.bf16 %v198, %v197
  %v312 = vpack.c.bf16 %v200, %v199
  %v313 = vpack.c.bf16 %v202, %v201
  %v314 = vpack.c.bf16 %v204, %v203
  %v315 = vpack.c.bf16 %v206, %v205
  %v316 = vpack.c.bf16 %v208, %v207
  %v317 = vpack.c.bf16 %v210, %v209
  %v318 = vpack.c.bf16 %v212, %v211
  %v319 = vpack.c.bf16 %v214, %v213
  %v320 = vpack.c.bf16 %v216, %v215
  %v321 = vpack.c.bf16 %v218, %v217
  %v322 = vpack.c.bf16 %v220, %v219
  %v323 = vpack.c.bf16 %v222, %v221
  %v324 = vpack.c.bf16 %v224, %v223
  %v325 = vpack.c.bf16 %v226, %v225
  %v326 = vpack.c.bf16 %v228, %v227
  %v327 = vld [vmem:[%s1] sm:$0xf]
  %v328 = vld [vmem:[%s1 + $0x4] sm:$0xf]
  %v329 = vld [vmem:[%s1 + $0x8] sm:$0xf]
  %v330 = vld [vmem:[%s1 + $0xc] sm:$0x1]
  %v331 = vld [vmem:[%s2] sm:$0x1]
  %v333 = vlaneseq
  %v334 = vshrl.u32 %v333, 7
  %v335 = vsub.s32 0, %v334
  %v336 = vrot.slane %v331, %v335
  %v342 = vunpack.c.l.b16 %v327
  %v343 = vunpack.c.l.b16 %v328
  %v344 = vunpack.c.l.b16 %v329
  %v345 = vunpack.c.l.b16 %v330
  %v346 = vpack.c.b16 %v343, %v342
  %v347 = vpack.c.b16 %v345, %v344
  %vm349 = vcmask 203776
  %v351 = vsel %vm349, %v229, 0
  %v354 = vsel %vm349, %v230, 0
  %v357 = vsel %vm349, %v231, 0
  %v360 = vsel %vm349, %v232, 0
  %v363 = vsel %vm349, %v233, 0
  %v366 = vsel %vm349, %v234, 0
  %v369 = vsel %vm349, %v235, 0
  %v372 = vsel %vm349, %v236, 0
  %v375 = vsel %vm349, %v237, 0
  %v378 = vsel %vm349, %v238, 0
  %v381 = vsel %vm349, %v239, 0
  %v384 = vsel %vm349, %v240, 0
  %v387 = vsel %vm349, %v241, 0
  %v390 = vsel %vm349, %v242, 0
  %v393 = vsel %vm349, %v243, 0
  %v396 = vsel %vm349, %v244, 0
  %v399 = vsel %vm349, %v245, 0
  %v402 = vsel %vm349, %v246, 0
  %v405 = vsel %vm349, %v247, 0
  %v408 = vsel %vm349, %v248, 0
  %v411 = vsel %vm349, %v249, 0
  %v414 = vsel %vm349, %v250, 0
  %v417 = vsel %vm349, %v251, 0
  %v420 = vsel %vm349, %v252, 0
  %v423 = vsel %vm349, %v253, 0
  %v426 = vsel %vm349, %v254, 0
  %v429 = vsel %vm349, %v255, 0
  %v432 = vsel %vm349, %v256, 0
  %v435 = vsel %vm349, %v257, 0
  %v438 = vsel %vm349, %v258, 0
  %v441 = vsel %vm349, %v259, 0
  %v444 = vsel %vm349, %v260, 0
  %v447 = vsel %vm349, %v261, 0
  %v450 = vsel %vm349, %v262, 0
  %v453 = vsel %vm349, %v263, 0
  %v456 = vsel %vm349, %v264, 0
  %v459 = vsel %vm349, %v265, 0
  %v462 = vsel %vm349, %v266, 0
  %v465 = vsel %vm349, %v267, 0
  %v468 = vsel %vm349, %v268, 0
  %v471 = vsel %vm349, %v269, 0
  %v474 = vsel %vm349, %v270, 0
  %v477 = vsel %vm349, %v271, 0
  %v480 = vsel %vm349, %v272, 0
  %v483 = vsel %vm349, %v273, 0
  %v486 = vsel %vm349, %v274, 0
  %v489 = vsel %vm349, %v275, 0
  %v492 = vsel %vm349, %v276, 0
  %v495 = vsel %vm349, %v277, 0
  %v498 = vsel %vm349, %v278, 0
  %v501 = vsel %vm349, %v279, 0
  %v504 = vsel %vm349, %v280, 0
  %v507 = vsel %vm349, %v281, 0
  %v510 = vsel %vm349, %v282, 0
  %v513 = vsel %vm349, %v283, 0
  %v516 = vsel %vm349, %v284, 0
  %v519 = vsel %vm349, %v285, 0
  %v522 = vsel %vm349, %v286, 0
  %v525 = vsel %vm349, %v287, 0
  %v528 = vsel %vm349, %v288, 0
  %v531 = vsel %vm349, %v289, 0
  %v534 = vsel %vm349, %v290, 0
  %v537 = vsel %vm349, %v291, 0
  %v540 = vsel %vm349, %v292, 0
  %v543 = vsel %vm349, %v293, 0
  %v546 = vsel %vm349, %v294, 0
  %v549 = vsel %vm349, %v295, 0
  %v552 = vsel %vm349, %v296, 0
  %v555 = vsel %vm349, %v297, 0
  %v558 = vsel %vm349, %v298, 0
  %v561 = vsel %vm349, %v299, 0
  %v564 = vsel %vm349, %v300, 0
  %v567 = vsel %vm349, %v301, 0
  %v570 = vsel %vm349, %v302, 0
  %v573 = vsel %vm349, %v303, 0
  %v576 = vsel %vm349, %v304, 0
  %v579 = vsel %vm349, %v305, 0
  %v582 = vsel %vm349, %v306, 0
  %v585 = vsel %vm349, %v307, 0
  %v588 = vsel %vm349, %v308, 0
  %v591 = vsel %vm349, %v309, 0
  %v594 = vsel %vm349, %v310, 0
  %v597 = vsel %vm349, %v311, 0
  %v600 = vsel %vm349, %v312, 0
  %v603 = vsel %vm349, %v313, 0
  %v606 = vsel %vm349, %v314, 0
  %v609 = vsel %vm349, %v315, 0
  %v612 = vsel %vm349, %v316, 0
  %v615 = vsel %vm349, %v317, 0
  %v618 = vsel %vm349, %v318, 0
  %v621 = vsel %vm349, %v319, 0
  %v624 = vsel %vm349, %v320, 0
  %v627 = vsel %vm349, %v321, 0
  %v630 = vsel %vm349, %v322, 0
  %v633 = vsel %vm349, %v323, 0
  %v636 = vsel %vm349, %v324, 0
  %v639 = vsel %vm349, %v325, 0
  %v642 = vsel %vm349, %v326, 0
  %vm644 = vcmask 1043456
  %vm645 = vcmask 1044480
  %v646 = vsel %vm644, 4294967295, 65535
  %v647 = vsel %vm645, %v646, 0
  %v649 = vand.u32 %v347, %v647
  %651 = vmatprep.subr.bf16.mxu0 0
  %652 = vmatpush1.bf16.msra.mxu0 0
  %653 = vmatprep.subr.bf16.mxu0 0
  %654 = vmatpush1.bf16.msra.mxu0 0
  %655 = vmatprep.subr.bf16.mxu0 0
  %656 = vmatpush1.bf16.msra.mxu0 0
  %657 = vmatprep.subr.bf16.mxu0 0
  %658 = vmatpush1.bf16.msra.mxu0 0
  %659 = vmatprep.subr.bf16.mxu0 0
  %660 = vmatpush1.bf16.msra.mxu0 0
  %661 = vmatprep.subr.bf16.mxu0 0
  %662 = vmatpush1.bf16.msra.mxu0 0
  %663 = vmatprep.subr.bf16.mxu0 0
  %664 = vmatpush1.bf16.msra.mxu0 %v649
  %665 = vmatprep.subr.bf16.mxu0 0
  %666 = vmatpush1.bf16.msra.mxu0 %v346
  %667 = vmatprep.subr.bf16.mxu0 0
  %668 = vmatpush2.bf16.msra.mxu0 0
  %669 = vmatprep.subr.bf16.mxu0 0
  %670 = vmatpush2.bf16.msra.mxu0 0
  %671 = vmatprep.subr.bf16.mxu0 0
  %672 = vmatpush2.bf16.msra.mxu0 0
  %673 = vmatprep.subr.bf16.mxu0 0
  %674 = vmatpush2.bf16.msra.mxu0 0
  %675 = vmatprep.subr.bf16.mxu0 0
  %676 = vmatpush2.bf16.msra.mxu0 0
  %677 = vmatprep.subr.bf16.mxu0 0
  %678 = vmatpush2.bf16.msra.mxu0 0
  %679 = vmatprep.subr.bf16.mxu0 0
  %680 = vmatpush2.bf16.msra.mxu0 0
  %681 = vmatprep.subr.bf16.mxu0 0
  %682 = vmatpush2.bf16.msra.mxu0 0
  %683 = vmatprep.mubr.bf16.mxu0 0
  %684 = vmatmul.mubr.bf16.gmra.mxu0 %v351
  %v685 = vpop.f32.mrf.mxu0
  %v686 = vadd.f32 %v336, %v685
  %v687 = vpop.f32.mrf.mxu0
  %v688 = vpop.f32.mrf.mxu0
  %v689 = vadd.f32 %v336, %v688
  %v690 = vpop.f32.mrf.mxu0
  %691 = vmatprep.mubr.bf16.mxu0 0
  %692 = vmatmul.mubr.bf16.gmra.mxu0 %v354
  %v693 = vpop.f32.mrf.mxu0
  %v694 = vadd.f32 %v336, %v693
  %v695 = vpop.f32.mrf.mxu0
  %v696 = vpop.f32.mrf.mxu0
  %v697 = vadd.f32 %v336, %v696
  %v698 = vpop.f32.mrf.mxu0
  %699 = vmatprep.mubr.bf16.mxu0 0
  %700 = vmatmul.mubr.bf16.gmra.mxu0 %v357
  %v701 = vpop.f32.mrf.mxu0
  %v702 = vadd.f32 %v336, %v701
  %v703 = vpop.f32.mrf.mxu0
  %v704 = vpop.f32.mrf.mxu0
  %v705 = vadd.f32 %v336, %v704
  %v706 = vpop.f32.mrf.mxu0
  %707 = vmatprep.mubr.bf16.mxu0 0
  %708 = vmatmul.mubr.bf16.gmra.mxu0 %v360
  %v709 = vpop.f32.mrf.mxu0
  %v710 = vadd.f32 %v336, %v709
  %v711 = vpop.f32.mrf.mxu0
  %v712 = vpop.f32.mrf.mxu0
  %v713 = vadd.f32 %v336, %v712
  %v714 = vpop.f32.mrf.mxu0
  %715 = vmatprep.mubr.bf16.mxu0 0
  %716 = vmatmul.mubr.bf16.gmra.mxu0 %v363
  %v717 = vpop.f32.mrf.mxu0
  %v718 = vadd.f32 %v336, %v717
  %v719 = vpop.f32.mrf.mxu0
  %v720 = vpop.f32.mrf.mxu0
  %v721 = vadd.f32 %v336, %v720
  %v722 = vpop.f32.mrf.mxu0
  %723 = vmatprep.mubr.bf16.mxu0 0
  %724 = vmatmul.mubr.bf16.gmra.mxu0 %v366
  %v725 = vpop.f32.mrf.mxu0
  %v726 = vadd.f32 %v336, %v725
  %v727 = vpop.f32.mrf.mxu0
  %v728 = vpop.f32.mrf.mxu0
  %v729 = vadd.f32 %v336, %v728
  %v730 = vpop.f32.mrf.mxu0
  %731 = vmatprep.mubr.bf16.mxu0 0
  %732 = vmatmul.mubr.bf16.gmra.mxu0 %v369
  %v733 = vpop.f32.mrf.mxu0
  %v734 = vadd.f32 %v336, %v733
  %v735 = vpop.f32.mrf.mxu0
  %v736 = vpop.f32.mrf.mxu0
  %v737 = vadd.f32 %v336, %v736
  %v738 = vpop.f32.mrf.mxu0
  %739 = vmatprep.mubr.bf16.mxu0 0
  %740 = vmatmul.mubr.bf16.gmra.mxu0 %v372
  %v741 = vpop.f32.mrf.mxu0
  %v742 = vadd.f32 %v336, %v741
  %v743 = vpop.f32.mrf.mxu0
  %v744 = vpop.f32.mrf.mxu0
  %v745 = vadd.f32 %v336, %v744
  %v746 = vpop.f32.mrf.mxu0
  %747 = vmatprep.mubr.bf16.mxu0 0
  %748 = vmatmul.mubr.bf16.gmra.mxu0 %v375
  %v749 = vpop.f32.mrf.mxu0
  %v750 = vadd.f32 %v336, %v749
  %v751 = vpop.f32.mrf.mxu0
  %v752 = vpop.f32.mrf.mxu0
  %v753 = vadd.f32 %v336, %v752
  %v754 = vpop.f32.mrf.mxu0
  %755 = vmatprep.mubr.bf16.mxu0 0
  %756 = vmatmul.mubr.bf16.gmra.mxu0 %v378
  %v757 = vpop.f32.mrf.mxu0
  %v758 = vadd.f32 %v336, %v757
  %v759 = vpop.f32.mrf.mxu0
  %v760 = vpop.f32.mrf.mxu0
  %v761 = vadd.f32 %v336, %v760
  %v762 = vpop.f32.mrf.mxu0
  %763 = vmatprep.mubr.bf16.mxu0 0
  %764 = vmatmul.mubr.bf16.gmra.mxu0 %v381
  %v765 = vpop.f32.mrf.mxu0
  %v766 = vadd.f32 %v336, %v765
  %v767 = vpop.f32.mrf.mxu0
  %v768 = vpop.f32.mrf.mxu0
  %v769 = vadd.f32 %v336, %v768
  %v770 = vpop.f32.mrf.mxu0
  %771 = vmatprep.mubr.bf16.mxu0 0
  %772 = vmatmul.mubr.bf16.gmra.mxu0 %v384
  %v773 = vpop.f32.mrf.mxu0
  %v774 = vadd.f32 %v336, %v773
  %v775 = vpop.f32.mrf.mxu0
  %v776 = vpop.f32.mrf.mxu0
  %v777 = vadd.f32 %v336, %v776
  %v778 = vpop.f32.mrf.mxu0
  %779 = vmatprep.mubr.bf16.mxu0 0
  %780 = vmatmul.mubr.bf16.gmra.mxu0 %v387
  %v781 = vpop.f32.mrf.mxu0
  %v782 = vadd.f32 %v336, %v781
  %v783 = vpop.f32.mrf.mxu0
  %v784 = vpop.f32.mrf.mxu0
  %v785 = vadd.f32 %v336, %v784
  %v786 = vpop.f32.mrf.mxu0
  %787 = vmatprep.mubr.bf16.mxu0 0
  %788 = vmatmul.mubr.bf16.gmra.mxu0 %v390
  %v789 = vpop.f32.mrf.mxu0
  %v790 = vadd.f32 %v336, %v789
  %v791 = vpop.f32.mrf.mxu0
  %v792 = vpop.f32.mrf.mxu0
  %v793 = vadd.f32 %v336, %v792
  %v794 = vpop.f32.mrf.mxu0
  %795 = vmatprep.mubr.bf16.mxu0 0
  %796 = vmatmul.mubr.bf16.gmra.mxu0 %v393
  %v797 = vpop.f32.mrf.mxu0
  %v798 = vadd.f32 %v336, %v797
  %v799 = vpop.f32.mrf.mxu0
  %v800 = vpop.f32.mrf.mxu0
  %v801 = vadd.f32 %v336, %v800
  %v802 = vpop.f32.mrf.mxu0
  %803 = vmatprep.mubr.bf16.mxu0 0
  %804 = vmatmul.mubr.bf16.gmra.mxu0 %v396
  %v805 = vpop.f32.mrf.mxu0
  %v806 = vadd.f32 %v336, %v805
  %v807 = vpop.f32.mrf.mxu0
  %v808 = vpop.f32.mrf.mxu0
  %v809 = vadd.f32 %v336, %v808
  %v810 = vpop.f32.mrf.mxu0
  %811 = vmatprep.mubr.bf16.mxu0 0
  %812 = vmatmul.mubr.bf16.gmra.mxu0 %v399
  %v813 = vpop.f32.mrf.mxu0
  %v814 = vadd.f32 %v336, %v813
  %v815 = vpop.f32.mrf.mxu0
  %v816 = vpop.f32.mrf.mxu0
  %v817 = vadd.f32 %v336, %v816
  %v818 = vpop.f32.mrf.mxu0
  %819 = vmatprep.mubr.bf16.mxu0 0
  %820 = vmatmul.mubr.bf16.gmra.mxu0 %v402
  %v821 = vpop.f32.mrf.mxu0
  %v822 = vadd.f32 %v336, %v821
  %v823 = vpop.f32.mrf.mxu0
  %v824 = vpop.f32.mrf.mxu0
  %v825 = vadd.f32 %v336, %v824
  %v826 = vpop.f32.mrf.mxu0
  %827 = vmatprep.mubr.bf16.mxu0 0
  %828 = vmatmul.mubr.bf16.gmra.mxu0 %v405
  %v829 = vpop.f32.mrf.mxu0
  %v830 = vadd.f32 %v336, %v829
  %v831 = vpop.f32.mrf.mxu0
  %v832 = vpop.f32.mrf.mxu0
  %v833 = vadd.f32 %v336, %v832
  %v834 = vpop.f32.mrf.mxu0
  %835 = vmatprep.mubr.bf16.mxu0 0
  %836 = vmatmul.mubr.bf16.gmra.mxu0 %v408
  %v837 = vpop.f32.mrf.mxu0
  %v838 = vadd.f32 %v336, %v837
  %v839 = vpop.f32.mrf.mxu0
  %v840 = vpop.f32.mrf.mxu0
  %v841 = vadd.f32 %v336, %v840
  %v842 = vpop.f32.mrf.mxu0
  %843 = vmatprep.mubr.bf16.mxu0 0
  %844 = vmatmul.mubr.bf16.gmra.mxu0 %v411
  %v845 = vpop.f32.mrf.mxu0
  %v846 = vadd.f32 %v336, %v845
  %v847 = vpop.f32.mrf.mxu0
  %v848 = vpop.f32.mrf.mxu0
  %v849 = vadd.f32 %v336, %v848
  %v850 = vpop.f32.mrf.mxu0
  %851 = vmatprep.mubr.bf16.mxu0 0
  %852 = vmatmul.mubr.bf16.gmra.mxu0 %v414
  %v853 = vpop.f32.mrf.mxu0
  %v854 = vadd.f32 %v336, %v853
  %v855 = vpop.f32.mrf.mxu0
  %v856 = vpop.f32.mrf.mxu0
  %v857 = vadd.f32 %v336, %v856
  %v858 = vpop.f32.mrf.mxu0
  %859 = vmatprep.mubr.bf16.mxu0 0
  %860 = vmatmul.mubr.bf16.gmra.mxu0 %v417
  %v861 = vpop.f32.mrf.mxu0
  %v862 = vadd.f32 %v336, %v861
  %v863 = vpop.f32.mrf.mxu0
  %v864 = vpop.f32.mrf.mxu0
  %v865 = vadd.f32 %v336, %v864
  %v866 = vpop.f32.mrf.mxu0
  %867 = vmatprep.mubr.bf16.mxu0 0
  %868 = vmatmul.mubr.bf16.gmra.mxu0 %v420
  %v869 = vpop.f32.mrf.mxu0
  %v870 = vadd.f32 %v336, %v869
  %v871 = vpop.f32.mrf.mxu0
  %v872 = vpop.f32.mrf.mxu0
  %v873 = vadd.f32 %v336, %v872
  %v874 = vpop.f32.mrf.mxu0
  %875 = vmatprep.mubr.bf16.mxu0 0
  %876 = vmatmul.mubr.bf16.gmra.mxu0 %v423
  %v877 = vpop.f32.mrf.mxu0
  %v878 = vadd.f32 %v336, %v877
  %v879 = vpop.f32.mrf.mxu0
  %v880 = vpop.f32.mrf.mxu0
  %v881 = vadd.f32 %v336, %v880
  %v882 = vpop.f32.mrf.mxu0
  %883 = vmatprep.mubr.bf16.mxu0 0
  %884 = vmatmul.mubr.bf16.gmra.mxu0 %v426
  %v885 = vpop.f32.mrf.mxu0
  %v886 = vadd.f32 %v336, %v885
  %v887 = vpop.f32.mrf.mxu0
  %v888 = vpop.f32.mrf.mxu0
  %v889 = vadd.f32 %v336, %v888
  %v890 = vpop.f32.mrf.mxu0
  %891 = vmatprep.mubr.bf16.mxu0 0
  %892 = vmatmul.mubr.bf16.gmra.mxu0 %v429
  %v893 = vpop.f32.mrf.mxu0
  %v894 = vadd.f32 %v336, %v893
  %v895 = vpop.f32.mrf.mxu0
  %v896 = vpop.f32.mrf.mxu0
  %v897 = vadd.f32 %v336, %v896
  %v898 = vpop.f32.mrf.mxu0
  %899 = vmatprep.mubr.bf16.mxu0 0
  %900 = vmatmul.mubr.bf16.gmra.mxu0 %v432
  %v901 = vpop.f32.mrf.mxu0
  %v902 = vadd.f32 %v336, %v901
  %v903 = vpop.f32.mrf.mxu0
  %v904 = vpop.f32.mrf.mxu0
  %v905 = vadd.f32 %v336, %v904
  %v906 = vpop.f32.mrf.mxu0
  %907 = vmatprep.mubr.bf16.mxu0 0
  %908 = vmatmul.mubr.bf16.gmra.mxu0 %v435
  %v909 = vpop.f32.mrf.mxu0
  %v910 = vadd.f32 %v336, %v909
  %v911 = vpop.f32.mrf.mxu0
  %v912 = vpop.f32.mrf.mxu0
  %v913 = vadd.f32 %v336, %v912
  %v914 = vpop.f32.mrf.mxu0
  %915 = vmatprep.mubr.bf16.mxu0 0
  %916 = vmatmul.mubr.bf16.gmra.mxu0 %v438
  %v917 = vpop.f32.mrf.mxu0
  %v918 = vadd.f32 %v336, %v917
  %v919 = vpop.f32.mrf.mxu0
  %v920 = vpop.f32.mrf.mxu0
  %v921 = vadd.f32 %v336, %v920
  %v922 = vpop.f32.mrf.mxu0
  %923 = vmatprep.mubr.bf16.mxu0 0
  %924 = vmatmul.mubr.bf16.gmra.mxu0 %v441
  %v925 = vpop.f32.mrf.mxu0
  %v926 = vadd.f32 %v336, %v925
  %v927 = vpop.f32.mrf.mxu0
  %v928 = vpop.f32.mrf.mxu0
  %v929 = vadd.f32 %v336, %v928
  %v930 = vpop.f32.mrf.mxu0
  %931 = vmatprep.mubr.bf16.mxu0 0
  %932 = vmatmul.mubr.bf16.gmra.mxu0 %v444
  %v933 = vpop.f32.mrf.mxu0
  %v934 = vadd.f32 %v336, %v933
  %v935 = vpop.f32.mrf.mxu0
  %v936 = vpop.f32.mrf.mxu0
  %v937 = vadd.f32 %v336, %v936
  %v938 = vpop.f32.mrf.mxu0
  %939 = vmatprep.mubr.bf16.mxu0 0
  %940 = vmatmul.mubr.bf16.gmra.mxu0 %v447
  %v941 = vpop.f32.mrf.mxu0
  %v942 = vadd.f32 %v336, %v941
  %v943 = vpop.f32.mrf.mxu0
  %v944 = vpop.f32.mrf.mxu0
  %v945 = vadd.f32 %v336, %v944
  %v946 = vpop.f32.mrf.mxu0
  %947 = vmatprep.mubr.bf16.mxu0 0
  %948 = vmatmul.mubr.bf16.gmra.mxu0 %v450
  %v949 = vpop.f32.mrf.mxu0
  %v950 = vadd.f32 %v336, %v949
  %v951 = vpop.f32.mrf.mxu0
  %v952 = vpop.f32.mrf.mxu0
  %v953 = vadd.f32 %v336, %v952
  %v954 = vpop.f32.mrf.mxu0
  %955 = vmatprep.mubr.bf16.mxu0 0
  %956 = vmatmul.mubr.bf16.gmra.mxu0 %v453
  %v957 = vpop.f32.mrf.mxu0
  %v958 = vadd.f32 %v336, %v957
  %v959 = vpop.f32.mrf.mxu0
  %v960 = vpop.f32.mrf.mxu0
  %v961 = vadd.f32 %v336, %v960
  %v962 = vpop.f32.mrf.mxu0
  %963 = vmatprep.mubr.bf16.mxu0 0
  %964 = vmatmul.mubr.bf16.gmra.mxu0 %v456
  %v965 = vpop.f32.mrf.mxu0
  %v966 = vadd.f32 %v336, %v965
  %v967 = vpop.f32.mrf.mxu0
  %v968 = vpop.f32.mrf.mxu0
  %v969 = vadd.f32 %v336, %v968
  %v970 = vpop.f32.mrf.mxu0
  %971 = vmatprep.mubr.bf16.mxu0 0
  %972 = vmatmul.mubr.bf16.gmra.mxu0 %v459
  %v973 = vpop.f32.mrf.mxu0
  %v974 = vadd.f32 %v336, %v973
  %v975 = vpop.f32.mrf.mxu0
  %v976 = vpop.f32.mrf.mxu0
  %v977 = vadd.f32 %v336, %v976
  %v978 = vpop.f32.mrf.mxu0
  %979 = vmatprep.mubr.bf16.mxu0 0
  %980 = vmatmul.mubr.bf16.gmra.mxu0 %v462
  %v981 = vpop.f32.mrf.mxu0
  %v982 = vadd.f32 %v336, %v981
  %v983 = vpop.f32.mrf.mxu0
  %v984 = vpop.f32.mrf.mxu0
  %v985 = vadd.f32 %v336, %v984
  %v986 = vpop.f32.mrf.mxu0
  %987 = vmatprep.mubr.bf16.mxu0 0
  %988 = vmatmul.mubr.bf16.gmra.mxu0 %v465
  %v989 = vpop.f32.mrf.mxu0
  %v990 = vadd.f32 %v336, %v989
  %v991 = vpop.f32.mrf.mxu0
  %v992 = vpop.f32.mrf.mxu0
  %v993 = vadd.f32 %v336, %v992
  %v994 = vpop.f32.mrf.mxu0
  %995 = vmatprep.mubr.bf16.mxu0 0
  %996 = vmatmul.mubr.bf16.gmra.mxu0 %v468
  %v997 = vpop.f32.mrf.mxu0
  %v998 = vadd.f32 %v336, %v997
  %v999 = vpop.f32.mrf.mxu0
  %v1000 = vpop.f32.mrf.mxu0
  %v1001 = vadd.f32 %v336, %v1000
  %v1002 = vpop.f32.mrf.mxu0
  %1003 = vmatprep.mubr.bf16.mxu0 0
  %1004 = vmatmul.mubr.bf16.gmra.mxu0 %v471
  %v1005 = vpop.f32.mrf.mxu0
  %v1006 = vadd.f32 %v336, %v1005
  %v1007 = vpop.f32.mrf.mxu0
  %v1008 = vpop.f32.mrf.mxu0
  %v1009 = vadd.f32 %v336, %v1008
  %v1010 = vpop.f32.mrf.mxu0
  %1011 = vmatprep.mubr.bf16.mxu0 0
  %1012 = vmatmul.mubr.bf16.gmra.mxu0 %v474
  %v1013 = vpop.f32.mrf.mxu0
  %v1014 = vadd.f32 %v336, %v1013
  %v1015 = vpop.f32.mrf.mxu0
  %v1016 = vpop.f32.mrf.mxu0
  %v1017 = vadd.f32 %v336, %v1016
  %v1018 = vpop.f32.mrf.mxu0
  %1019 = vmatprep.mubr.bf16.mxu0 0
  %1020 = vmatmul.mubr.bf16.gmra.mxu0 %v477
  %v1021 = vpop.f32.mrf.mxu0
  %v1022 = vadd.f32 %v336, %v1021
  %v1023 = vpop.f32.mrf.mxu0
  %v1024 = vpop.f32.mrf.mxu0
  %v1025 = vadd.f32 %v336, %v1024
  %v1026 = vpop.f32.mrf.mxu0
  %1027 = vmatprep.mubr.bf16.mxu0 0
  %1028 = vmatmul.mubr.bf16.gmra.mxu0 %v480
  %v1029 = vpop.f32.mrf.mxu0
  %v1030 = vadd.f32 %v336, %v1029
  %v1031 = vpop.f32.mrf.mxu0
  %v1032 = vpop.f32.mrf.mxu0
  %v1033 = vadd.f32 %v336, %v1032
  %v1034 = vpop.f32.mrf.mxu0
  %1035 = vmatprep.mubr.bf16.mxu0 0
  %1036 = vmatmul.mubr.bf16.gmra.mxu0 %v483
  %v1037 = vpop.f32.mrf.mxu0
  %v1038 = vadd.f32 %v336, %v1037
  %v1039 = vpop.f32.mrf.mxu0
  %v1040 = vpop.f32.mrf.mxu0
  %v1041 = vadd.f32 %v336, %v1040
  %v1042 = vpop.f32.mrf.mxu0
  %1043 = vmatprep.mubr.bf16.mxu0 0
  %1044 = vmatmul.mubr.bf16.gmra.mxu0 %v486
  %v1045 = vpop.f32.mrf.mxu0
  %v1046 = vadd.f32 %v336, %v1045
  %v1047 = vpop.f32.mrf.mxu0
  %v1048 = vpop.f32.mrf.mxu0
  %v1049 = vadd.f32 %v336, %v1048
  %v1050 = vpop.f32.mrf.mxu0
  %1051 = vmatprep.mubr.bf16.mxu0 0
  %1052 = vmatmul.mubr.bf16.gmra.mxu0 %v489
  %v1053 = vpop.f32.mrf.mxu0
  %v1054 = vadd.f32 %v336, %v1053
  %v1055 = vpop.f32.mrf.mxu0
  %v1056 = vpop.f32.mrf.mxu0
  %v1057 = vadd.f32 %v336, %v1056
  %v1058 = vpop.f32.mrf.mxu0
  %1059 = vmatprep.mubr.bf16.mxu0 0
  %1060 = vmatmul.mubr.bf16.gmra.mxu0 %v492
  %v1061 = vpop.f32.mrf.mxu0
  %v1062 = vadd.f32 %v336, %v1061
  %v1063 = vpop.f32.mrf.mxu0
  %v1064 = vpop.f32.mrf.mxu0
  %v1065 = vadd.f32 %v336, %v1064
  %v1066 = vpop.f32.mrf.mxu0
  %1067 = vmatprep.mubr.bf16.mxu0 0
  %1068 = vmatmul.mubr.bf16.gmra.mxu0 %v495
  %v1069 = vpop.f32.mrf.mxu0
  %v1070 = vadd.f32 %v336, %v1069
  %v1071 = vpop.f32.mrf.mxu0
  %v1072 = vpop.f32.mrf.mxu0
  %v1073 = vadd.f32 %v336, %v1072
  %v1074 = vpop.f32.mrf.mxu0
  %1075 = vmatprep.mubr.bf16.mxu0 0
  %1076 = vmatmul.mubr.bf16.gmra.mxu0 %v498
  %v1077 = vpop.f32.mrf.mxu0
  %v1078 = vadd.f32 %v336, %v1077
  %v1079 = vpop.f32.mrf.mxu0
  %v1080 = vpop.f32.mrf.mxu0
  %v1081 = vadd.f32 %v336, %v1080
  %v1082 = vpop.f32.mrf.mxu0
  %1083 = vmatprep.mubr.bf16.mxu0 0
  %1084 = vmatmul.mubr.bf16.gmra.mxu0 %v501
  %v1085 = vpop.f32.mrf.mxu0
  %v1086 = vadd.f32 %v336, %v1085
  %v1087 = vpop.f32.mrf.mxu0
  %v1088 = vpop.f32.mrf.mxu0
  %v1089 = vadd.f32 %v336, %v1088
  %v1090 = vpop.f32.mrf.mxu0
  %1091 = vmatprep.mubr.bf16.mxu0 0
  %1092 = vmatmul.mubr.bf16.gmra.mxu0 %v504
  %v1093 = vpop.f32.mrf.mxu0
  %v1094 = vadd.f32 %v336, %v1093
  %v1095 = vpop.f32.mrf.mxu0
  %v1096 = vpop.f32.mrf.mxu0
  %v1097 = vadd.f32 %v336, %v1096
  %v1098 = vpop.f32.mrf.mxu0
  %1099 = vmatprep.mubr.bf16.mxu0 0
  %1100 = vmatmul.mubr.bf16.gmra.mxu0 %v507
  %v1101 = vpop.f32.mrf.mxu0
  %v1102 = vadd.f32 %v336, %v1101
  %v1103 = vpop.f32.mrf.mxu0
  %v1104 = vpop.f32.mrf.mxu0
  %v1105 = vadd.f32 %v336, %v1104
  %v1106 = vpop.f32.mrf.mxu0
  %1107 = vmatprep.mubr.bf16.mxu0 0
  %1108 = vmatmul.mubr.bf16.gmra.mxu0 %v510
  %v1109 = vpop.f32.mrf.mxu0
  %v1110 = vadd.f32 %v336, %v1109
  %v1111 = vpop.f32.mrf.mxu0
  %v1112 = vpop.f32.mrf.mxu0
  %v1113 = vadd.f32 %v336, %v1112
  %v1114 = vpop.f32.mrf.mxu0
  %1115 = vmatprep.mubr.bf16.mxu0 0
  %1116 = vmatmul.mubr.bf16.gmra.mxu0 %v513
  %v1117 = vpop.f32.mrf.mxu0
  %v1118 = vadd.f32 %v336, %v1117
  %v1119 = vpop.f32.mrf.mxu0
  %v1120 = vpop.f32.mrf.mxu0
  %v1121 = vadd.f32 %v336, %v1120
  %v1122 = vpop.f32.mrf.mxu0
  %1123 = vmatprep.mubr.bf16.mxu0 0
  %1124 = vmatmul.mubr.bf16.gmra.mxu0 %v516
  %v1125 = vpop.f32.mrf.mxu0
  %v1126 = vadd.f32 %v336, %v1125
  %v1127 = vpop.f32.mrf.mxu0
  %v1128 = vpop.f32.mrf.mxu0
  %v1129 = vadd.f32 %v336, %v1128
  %v1130 = vpop.f32.mrf.mxu0
  %1131 = vmatprep.mubr.bf16.mxu0 0
  %1132 = vmatmul.mubr.bf16.gmra.mxu0 %v519
  %v1133 = vpop.f32.mrf.mxu0
  %v1134 = vadd.f32 %v336, %v1133
  %v1135 = vpop.f32.mrf.mxu0
  %v1136 = vpop.f32.mrf.mxu0
  %v1137 = vadd.f32 %v336, %v1136
  %v1138 = vpop.f32.mrf.mxu0
  %1139 = vmatprep.mubr.bf16.mxu0 0
  %1140 = vmatmul.mubr.bf16.gmra.mxu0 %v522
  %v1141 = vpop.f32.mrf.mxu0
  %v1142 = vadd.f32 %v336, %v1141
  %v1143 = vpop.f32.mrf.mxu0
  %v1144 = vpop.f32.mrf.mxu0
  %v1145 = vadd.f32 %v336, %v1144
  %v1146 = vpop.f32.mrf.mxu0
  %1147 = vmatprep.mubr.bf16.mxu0 0
  %1148 = vmatmul.mubr.bf16.gmra.mxu0 %v525
  %v1149 = vpop.f32.mrf.mxu0
  %v1150 = vadd.f32 %v336, %v1149
  %v1151 = vpop.f32.mrf.mxu0
  %v1152 = vpop.f32.mrf.mxu0
  %v1153 = vadd.f32 %v336, %v1152
  %v1154 = vpop.f32.mrf.mxu0
  %1155 = vmatprep.mubr.bf16.mxu0 0
  %1156 = vmatmul.mubr.bf16.gmra.mxu0 %v528
  %v1157 = vpop.f32.mrf.mxu0
  %v1158 = vadd.f32 %v336, %v1157
  %v1159 = vpop.f32.mrf.mxu0
  %v1160 = vpop.f32.mrf.mxu0
  %v1161 = vadd.f32 %v336, %v1160
  %v1162 = vpop.f32.mrf.mxu0
  %1163 = vmatprep.mubr.bf16.mxu0 0
  %1164 = vmatmul.mubr.bf16.gmra.mxu0 %v531
  %v1165 = vpop.f32.mrf.mxu0
  %v1166 = vadd.f32 %v336, %v1165
  %v1167 = vpop.f32.mrf.mxu0
  %v1168 = vpop.f32.mrf.mxu0
  %v1169 = vadd.f32 %v336, %v1168
  %v1170 = vpop.f32.mrf.mxu0
  %1171 = vmatprep.mubr.bf16.mxu0 0
  %1172 = vmatmul.mubr.bf16.gmra.mxu0 %v534
  %v1173 = vpop.f32.mrf.mxu0
  %v1174 = vadd.f32 %v336, %v1173
  %v1175 = vpop.f32.mrf.mxu0
  %v1176 = vpop.f32.mrf.mxu0
  %v1177 = vadd.f32 %v336, %v1176
  %v1178 = vpop.f32.mrf.mxu0
  %1179 = vmatprep.mubr.bf16.mxu0 0
  %1180 = vmatmul.mubr.bf16.gmra.mxu0 %v537
  %v1181 = vpop.f32.mrf.mxu0
  %v1182 = vadd.f32 %v336, %v1181
  %v1183 = vpop.f32.mrf.mxu0
  %v1184 = vpop.f32.mrf.mxu0
  %v1185 = vadd.f32 %v336, %v1184
  %v1186 = vpop.f32.mrf.mxu0
  %1187 = vmatprep.mubr.bf16.mxu0 0
  %1188 = vmatmul.mubr.bf16.gmra.mxu0 %v540
  %v1189 = vpop.f32.mrf.mxu0
  %v1190 = vadd.f32 %v336, %v1189
  %v1191 = vpop.f32.mrf.mxu0
  %v1192 = vpop.f32.mrf.mxu0
  %v1193 = vadd.f32 %v336, %v1192
  %v1194 = vpop.f32.mrf.mxu0
  %1195 = vmatprep.mubr.bf16.mxu0 0
  %1196 = vmatmul.mubr.bf16.gmra.mxu0 %v543
  %v1197 = vpop.f32.mrf.mxu0
  %v1198 = vadd.f32 %v336, %v1197
  %v1199 = vpop.f32.mrf.mxu0
  %v1200 = vpop.f32.mrf.mxu0
  %v1201 = vadd.f32 %v336, %v1200
  %v1202 = vpop.f32.mrf.mxu0
  %1203 = vmatprep.mubr.bf16.mxu0 0
  %1204 = vmatmul.mubr.bf16.gmra.mxu0 %v546
  %v1205 = vpop.f32.mrf.mxu0
  %v1206 = vadd.f32 %v336, %v1205
  %v1207 = vpop.f32.mrf.mxu0
  %v1208 = vpop.f32.mrf.mxu0
  %v1209 = vadd.f32 %v336, %v1208
  %v1210 = vpop.f32.mrf.mxu0
  %1211 = vmatprep.mubr.bf16.mxu0 0
  %1212 = vmatmul.mubr.bf16.gmra.mxu0 %v549
  %v1213 = vpop.f32.mrf.mxu0
  %v1214 = vadd.f32 %v336, %v1213
  %v1215 = vpop.f32.mrf.mxu0
  %v1216 = vpop.f32.mrf.mxu0
  %v1217 = vadd.f32 %v336, %v1216
  %v1218 = vpop.f32.mrf.mxu0
  %1219 = vmatprep.mubr.bf16.mxu0 0
  %1220 = vmatmul.mubr.bf16.gmra.mxu0 %v552
  %v1221 = vpop.f32.mrf.mxu0
  %v1222 = vadd.f32 %v336, %v1221
  %v1223 = vpop.f32.mrf.mxu0
  %v1224 = vpop.f32.mrf.mxu0
  %v1225 = vadd.f32 %v336, %v1224
  %v1226 = vpop.f32.mrf.mxu0
  %1227 = vmatprep.mubr.bf16.mxu0 0
  %1228 = vmatmul.mubr.bf16.gmra.mxu0 %v555
  %v1229 = vpop.f32.mrf.mxu0
  %v1230 = vadd.f32 %v336, %v1229
  %v1231 = vpop.f32.mrf.mxu0
  %v1232 = vpop.f32.mrf.mxu0
  %v1233 = vadd.f32 %v336, %v1232
  %v1234 = vpop.f32.mrf.mxu0
  %1235 = vmatprep.mubr.bf16.mxu0 0
  %1236 = vmatmul.mubr.bf16.gmra.mxu0 %v558
  %v1237 = vpop.f32.mrf.mxu0
  %v1238 = vadd.f32 %v336, %v1237
  %v1239 = vpop.f32.mrf.mxu0
  %v1240 = vpop.f32.mrf.mxu0
  %v1241 = vadd.f32 %v336, %v1240
  %v1242 = vpop.f32.mrf.mxu0
  %1243 = vmatprep.mubr.bf16.mxu0 0
  %1244 = vmatmul.mubr.bf16.gmra.mxu0 %v561
  %v1245 = vpop.f32.mrf.mxu0
  %v1246 = vadd.f32 %v336, %v1245
  %v1247 = vpop.f32.mrf.mxu0
  %v1248 = vpop.f32.mrf.mxu0
  %v1249 = vadd.f32 %v336, %v1248
  %v1250 = vpop.f32.mrf.mxu0
  %1251 = vmatprep.mubr.bf16.mxu0 0
  %1252 = vmatmul.mubr.bf16.gmra.mxu0 %v564
  %v1253 = vpop.f32.mrf.mxu0
  %v1254 = vadd.f32 %v336, %v1253
  %v1255 = vpop.f32.mrf.mxu0
  %v1256 = vpop.f32.mrf.mxu0
  %v1257 = vadd.f32 %v336, %v1256
  %v1258 = vpop.f32.mrf.mxu0
  %1259 = vmatprep.mubr.bf16.mxu0 0
  %1260 = vmatmul.mubr.bf16.gmra.mxu0 %v567
  %v1261 = vpop.f32.mrf.mxu0
  %v1262 = vadd.f32 %v336, %v1261
  %v1263 = vpop.f32.mrf.mxu0
  %v1264 = vpop.f32.mrf.mxu0
  %v1265 = vadd.f32 %v336, %v1264
  %v1266 = vpop.f32.mrf.mxu0
  %1267 = vmatprep.mubr.bf16.mxu0 0
  %1268 = vmatmul.mubr.bf16.gmra.mxu0 %v570
  %v1269 = vpop.f32.mrf.mxu0
  %v1270 = vadd.f32 %v336, %v1269
  %v1271 = vpop.f32.mrf.mxu0
  %v1272 = vpop.f32.mrf.mxu0
  %v1273 = vadd.f32 %v336, %v1272
  %v1274 = vpop.f32.mrf.mxu0
  %1275 = vmatprep.mubr.bf16.mxu0 0
  %1276 = vmatmul.mubr.bf16.gmra.mxu0 %v573
  %v1277 = vpop.f32.mrf.mxu0
  %v1278 = vadd.f32 %v336, %v1277
  %v1279 = vpop.f32.mrf.mxu0
  %v1280 = vpop.f32.mrf.mxu0
  %v1281 = vadd.f32 %v336, %v1280
  %v1282 = vpop.f32.mrf.mxu0
  %1283 = vmatprep.mubr.bf16.mxu0 0
  %1284 = vmatmul.mubr.bf16.gmra.mxu0 %v576
  %v1285 = vpop.f32.mrf.mxu0
  %v1286 = vadd.f32 %v336, %v1285
  %v1287 = vpop.f32.mrf.mxu0
  %v1288 = vpop.f32.mrf.mxu0
  %v1289 = vadd.f32 %v336, %v1288
  %v1290 = vpop.f32.mrf.mxu0
  %1291 = vmatprep.mubr.bf16.mxu0 0
  %1292 = vmatmul.mubr.bf16.gmra.mxu0 %v579
  %v1293 = vpop.f32.mrf.mxu0
  %v1294 = vadd.f32 %v336, %v1293
  %v1295 = vpop.f32.mrf.mxu0
  %v1296 = vpop.f32.mrf.mxu0
  %v1297 = vadd.f32 %v336, %v1296
  %v1298 = vpop.f32.mrf.mxu0
  %1299 = vmatprep.mubr.bf16.mxu0 0
  %1300 = vmatmul.mubr.bf16.gmra.mxu0 %v582
  %v1301 = vpop.f32.mrf.mxu0
  %v1302 = vadd.f32 %v336, %v1301
  %v1303 = vpop.f32.mrf.mxu0
  %v1304 = vpop.f32.mrf.mxu0
  %v1305 = vadd.f32 %v336, %v1304
  %v1306 = vpop.f32.mrf.mxu0
  %1307 = vmatprep.mubr.bf16.mxu0 0
  %1308 = vmatmul.mubr.bf16.gmra.mxu0 %v585
  %v1309 = vpop.f32.mrf.mxu0
  %v1310 = vadd.f32 %v336, %v1309
  %v1311 = vpop.f32.mrf.mxu0
  %v1312 = vpop.f32.mrf.mxu0
  %v1313 = vadd.f32 %v336, %v1312
  %v1314 = vpop.f32.mrf.mxu0
  %1315 = vmatprep.mubr.bf16.mxu0 0
  %1316 = vmatmul.mubr.bf16.gmra.mxu0 %v588
  %v1317 = vpop.f32.mrf.mxu0
  %v1318 = vadd.f32 %v336, %v1317
  %v1319 = vpop.f32.mrf.mxu0
  %v1320 = vpop.f32.mrf.mxu0
  %v1321 = vadd.f32 %v336, %v1320
  %v1322 = vpop.f32.mrf.mxu0
  %1323 = vmatprep.mubr.bf16.mxu0 0
  %1324 = vmatmul.mubr.bf16.gmra.mxu0 %v591
  %v1325 = vpop.f32.mrf.mxu0
  %v1326 = vadd.f32 %v336, %v1325
  %v1327 = vpop.f32.mrf.mxu0
  %v1328 = vpop.f32.mrf.mxu0
  %v1329 = vadd.f32 %v336, %v1328
  %v1330 = vpop.f32.mrf.mxu0
  %1331 = vmatprep.mubr.bf16.mxu0 0
  %1332 = vmatmul.mubr.bf16.gmra.mxu0 %v594
  %v1333 = vpop.f32.mrf.mxu0
  %v1334 = vadd.f32 %v336, %v1333
  %v1335 = vpop.f32.mrf.mxu0
  %v1336 = vpop.f32.mrf.mxu0
  %v1337 = vadd.f32 %v336, %v1336
  %v1338 = vpop.f32.mrf.mxu0
  %1339 = vmatprep.mubr.bf16.mxu0 0
  %1340 = vmatmul.mubr.bf16.gmra.mxu0 %v597
  %v1341 = vpop.f32.mrf.mxu0
  %v1342 = vadd.f32 %v336, %v1341
  %v1343 = vpop.f32.mrf.mxu0
  %v1344 = vpop.f32.mrf.mxu0
  %v1345 = vadd.f32 %v336, %v1344
  %v1346 = vpop.f32.mrf.mxu0
  %1347 = vmatprep.mubr.bf16.mxu0 0
  %1348 = vmatmul.mubr.bf16.gmra.mxu0 %v600
  %v1349 = vpop.f32.mrf.mxu0
  %v1350 = vadd.f32 %v336, %v1349
  %v1351 = vpop.f32.mrf.mxu0
  %v1352 = vpop.f32.mrf.mxu0
  %v1353 = vadd.f32 %v336, %v1352
  %v1354 = vpop.f32.mrf.mxu0
  %1355 = vmatprep.mubr.bf16.mxu0 0
  %1356 = vmatmul.mubr.bf16.gmra.mxu0 %v603
  %v1357 = vpop.f32.mrf.mxu0
  %v1358 = vadd.f32 %v336, %v1357
  %v1359 = vpop.f32.mrf.mxu0
  %v1360 = vpop.f32.mrf.mxu0
  %v1361 = vadd.f32 %v336, %v1360
  %v1362 = vpop.f32.mrf.mxu0
  %1363 = vmatprep.mubr.bf16.mxu0 0
  %1364 = vmatmul.mubr.bf16.gmra.mxu0 %v606
  %v1365 = vpop.f32.mrf.mxu0
  %v1366 = vadd.f32 %v336, %v1365
  %v1367 = vpop.f32.mrf.mxu0
  %v1368 = vpop.f32.mrf.mxu0
  %v1369 = vadd.f32 %v336, %v1368
  %v1370 = vpop.f32.mrf.mxu0
  %1371 = vmatprep.mubr.bf16.mxu0 0
  %1372 = vmatmul.mubr.bf16.gmra.mxu0 %v609
  %v1373 = vpop.f32.mrf.mxu0
  %v1374 = vadd.f32 %v336, %v1373
  %v1375 = vpop.f32.mrf.mxu0
  %v1376 = vpop.f32.mrf.mxu0
  %v1377 = vadd.f32 %v336, %v1376
  %v1378 = vpop.f32.mrf.mxu0
  %1379 = vmatprep.mubr.bf16.mxu0 0
  %1380 = vmatmul.mubr.bf16.gmra.mxu0 %v612
  %v1381 = vpop.f32.mrf.mxu0
  %v1382 = vadd.f32 %v336, %v1381
  %v1383 = vpop.f32.mrf.mxu0
  %v1384 = vpop.f32.mrf.mxu0
  %v1385 = vadd.f32 %v336, %v1384
  %v1386 = vpop.f32.mrf.mxu0
  %1387 = vmatprep.mubr.bf16.mxu0 0
  %1388 = vmatmul.mubr.bf16.gmra.mxu0 %v615
  %v1389 = vpop.f32.mrf.mxu0
  %v1390 = vadd.f32 %v336, %v1389
  %v1391 = vpop.f32.mrf.mxu0
  %v1392 = vpop.f32.mrf.mxu0
  %v1393 = vadd.f32 %v336, %v1392
  %v1394 = vpop.f32.mrf.mxu0
  %1395 = vmatprep.mubr.bf16.mxu0 0
  %1396 = vmatmul.mubr.bf16.gmra.mxu0 %v618
  %v1397 = vpop.f32.mrf.mxu0
  %v1398 = vadd.f32 %v336, %v1397
  %v1399 = vpop.f32.mrf.mxu0
  %v1400 = vpop.f32.mrf.mxu0
  %v1401 = vadd.f32 %v336, %v1400
  %v1402 = vpop.f32.mrf.mxu0
  %1403 = vmatprep.mubr.bf16.mxu0 0
  %1404 = vmatmul.mubr.bf16.gmra.mxu0 %v621
  %v1405 = vpop.f32.mrf.mxu0
  %v1406 = vadd.f32 %v336, %v1405
  %v1407 = vpop.f32.mrf.mxu0
  %v1408 = vpop.f32.mrf.mxu0
  %v1409 = vadd.f32 %v336, %v1408
  %v1410 = vpop.f32.mrf.mxu0
  %1411 = vmatprep.mubr.bf16.mxu0 0
  %1412 = vmatmul.mubr.bf16.gmra.mxu0 %v624
  %v1413 = vpop.f32.mrf.mxu0
  %v1414 = vadd.f32 %v336, %v1413
  %v1415 = vpop.f32.mrf.mxu0
  %v1416 = vpop.f32.mrf.mxu0
  %v1417 = vadd.f32 %v336, %v1416
  %v1418 = vpop.f32.mrf.mxu0
  %1419 = vmatprep.mubr.bf16.mxu0 0
  %1420 = vmatmul.mubr.bf16.gmra.mxu0 %v627
  %v1421 = vpop.f32.mrf.mxu0
  %v1422 = vadd.f32 %v336, %v1421
  %v1423 = vpop.f32.mrf.mxu0
  %v1424 = vpop.f32.mrf.mxu0
  %v1425 = vadd.f32 %v336, %v1424
  %v1426 = vpop.f32.mrf.mxu0
  %1427 = vmatprep.mubr.bf16.mxu0 0
  %1428 = vmatmul.mubr.bf16.gmra.mxu0 %v630
  %v1429 = vpop.f32.mrf.mxu0
  %v1430 = vadd.f32 %v336, %v1429
  %v1431 = vpop.f32.mrf.mxu0
  %v1432 = vpop.f32.mrf.mxu0
  %v1433 = vadd.f32 %v336, %v1432
  %v1434 = vpop.f32.mrf.mxu0
  %1435 = vmatprep.mubr.bf16.mxu0 0
  %1436 = vmatmul.mubr.bf16.gmra.mxu0 %v633
  %v1437 = vpop.f32.mrf.mxu0
  %v1438 = vadd.f32 %v336, %v1437
  %v1439 = vpop.f32.mrf.mxu0
  %v1440 = vpop.f32.mrf.mxu0
  %v1441 = vadd.f32 %v336, %v1440
  %v1442 = vpop.f32.mrf.mxu0
  %1443 = vmatprep.mubr.bf16.mxu0 0
  %1444 = vmatmul.mubr.bf16.gmra.mxu0 %v636
  %v1445 = vpop.f32.mrf.mxu0
  %v1446 = vadd.f32 %v336, %v1445
  %v1447 = vpop.f32.mrf.mxu0
  %v1448 = vpop.f32.mrf.mxu0
  %v1449 = vadd.f32 %v336, %v1448
  %v1450 = vpop.f32.mrf.mxu0
  %1451 = vmatprep.mubr.bf16.mxu0 0
  %1452 = vmatmul.mubr.bf16.gmra.mxu0 %v639
  %v1453 = vpop.f32.mrf.mxu0
  %v1454 = vadd.f32 %v336, %v1453
  %v1455 = vpop.f32.mrf.mxu0
  %v1456 = vpop.f32.mrf.mxu0
  %v1457 = vadd.f32 %v336, %v1456
  %v1458 = vpop.f32.mrf.mxu0
  %1459 = vmatprep.mubr.bf16.mxu0 0
  %1460 = vmatmul.mubr.bf16.gmra.mxu0 %v642
  %v1461 = vpop.f32.mrf.mxu0
  %v1462 = vadd.f32 %v336, %v1461
  %v1463 = vpop.f32.mrf.mxu0
  %v1464 = vpop.f32.mrf.mxu0
  %v1465 = vadd.f32 %v336, %v1464
  %v1466 = vpop.f32.mrf.mxu0
  %1467 = vdwg.mxu0
  %v1468 = vmax.f32 %v686, 0.0
  %v1469 = vmax.f32 %v689, 0.0
  %v1470 = vmax.f32 %v694, 0.0
  %v1471 = vmax.f32 %v697, 0.0
  %v1472 = vmax.f32 %v702, 0.0
  %v1473 = vmax.f32 %v705, 0.0
  %v1474 = vmax.f32 %v710, 0.0
  %v1475 = vmax.f32 %v713, 0.0
  %v1476 = vmax.f32 %v718, 0.0
  %v1477 = vmax.f32 %v721, 0.0
  %v1478 = vmax.f32 %v726, 0.0
  %v1479 = vmax.f32 %v729, 0.0
  %v1480 = vmax.f32 %v734, 0.0
  %v1481 = vmax.f32 %v737, 0.0
  %v1482 = vmax.f32 %v742, 0.0
  %v1483 = vmax.f32 %v745, 0.0
  %v1484 = vmax.f32 %v750, 0.0
  %v1485 = vmax.f32 %v753, 0.0
  %v1486 = vmax.f32 %v758, 0.0
  %v1487 = vmax.f32 %v761, 0.0
  %v1488 = vmax.f32 %v766, 0.0
  %v1489 = vmax.f32 %v769, 0.0
  %v1490 = vmax.f32 %v774, 0.0
  %v1491 = vmax.f32 %v777, 0.0
  %v1492 = vmax.f32 %v782, 0.0
  %v1493 = vmax.f32 %v785, 0.0
  %v1494 = vmax.f32 %v790, 0.0
  %v1495 = vmax.f32 %v793, 0.0
  %v1496 = vmax.f32 %v798, 0.0
  %v1497 = vmax.f32 %v801, 0.0
  %v1498 = vmax.f32 %v806, 0.0
  %v1499 = vmax.f32 %v809, 0.0
  %v1500 = vmax.f32 %v814, 0.0
  %v1501 = vmax.f32 %v817, 0.0
  %v1502 = vmax.f32 %v822, 0.0
  %v1503 = vmax.f32 %v825, 0.0
  %v1504 = vmax.f32 %v830, 0.0
  %v1505 = vmax.f32 %v833, 0.0
  %v1506 = vmax.f32 %v838, 0.0
  %v1507 = vmax.f32 %v841, 0.0
  %v1508 = vmax.f32 %v846, 0.0
  %v1509 = vmax.f32 %v849, 0.0
  %v1510 = vmax.f32 %v854, 0.0
  %v1511 = vmax.f32 %v857, 0.0
  %v1512 = vmax.f32 %v862, 0.0
  %v1513 = vmax.f32 %v865, 0.0
  %v1514 = vmax.f32 %v870, 0.0
  %v1515 = vmax.f32 %v873, 0.0
  %v1516 = vmax.f32 %v878, 0.0
  %v1517 = vmax.f32 %v881, 0.0
  %v1518 = vmax.f32 %v886, 0.0
  %v1519 = vmax.f32 %v889, 0.0
  %v1520 = vmax.f32 %v894, 0.0
  %v1521 = vmax.f32 %v897, 0.0
  %v1522 = vmax.f32 %v902, 0.0
  %v1523 = vmax.f32 %v905, 0.0
  %v1524 = vmax.f32 %v910, 0.0
  %v1525 = vmax.f32 %v913, 0.0
  %v1526 = vmax.f32 %v918, 0.0
  %v1527 = vmax.f32 %v921, 0.0
  %v1528 = vmax.f32 %v926, 0.0
  %v1529 = vmax.f32 %v929, 0.0
  %v1530 = vmax.f32 %v934, 0.0
  %v1531 = vmax.f32 %v937, 0.0
  %v1532 = vmax.f32 %v942, 0.0
  %v1533 = vmax.f32 %v945, 0.0
  %v1534 = vmax.f32 %v950, 0.0
  %v1535 = vmax.f32 %v953, 0.0
  %v1536 = vmax.f32 %v958, 0.0
  %v1537 = vmax.f32 %v961, 0.0
  %v1538 = vmax.f32 %v966, 0.0
  %v1539 = vmax.f32 %v969, 0.0
  %v1540 = vmax.f32 %v974, 0.0
  %v1541 = vmax.f32 %v977, 0.0
  %v1542 = vmax.f32 %v982, 0.0
  %v1543 = vmax.f32 %v985, 0.0
  %v1544 = vmax.f32 %v990, 0.0
  %v1545 = vmax.f32 %v993, 0.0
  %v1546 = vmax.f32 %v998, 0.0
  %v1547 = vmax.f32 %v1001, 0.0
  %v1548 = vmax.f32 %v1006, 0.0
  %v1549 = vmax.f32 %v1009, 0.0
  %v1550 = vmax.f32 %v1014, 0.0
  %v1551 = vmax.f32 %v1017, 0.0
  %v1552 = vmax.f32 %v1022, 0.0
  %v1553 = vmax.f32 %v1025, 0.0
  %v1554 = vmax.f32 %v1030, 0.0
  %v1555 = vmax.f32 %v1033, 0.0
  %v1556 = vmax.f32 %v1038, 0.0
  %v1557 = vmax.f32 %v1041, 0.0
  %v1558 = vmax.f32 %v1046, 0.0
  %v1559 = vmax.f32 %v1049, 0.0
  %v1560 = vmax.f32 %v1054, 0.0
  %v1561 = vmax.f32 %v1057, 0.0
  %v1562 = vmax.f32 %v1062, 0.0
  %v1563 = vmax.f32 %v1065, 0.0
  %v1564 = vmax.f32 %v1070, 0.0
  %v1565 = vmax.f32 %v1073, 0.0
  %v1566 = vmax.f32 %v1078, 0.0
  %v1567 = vmax.f32 %v1081, 0.0
  %v1568 = vmax.f32 %v1086, 0.0
  %v1569 = vmax.f32 %v1089, 0.0
  %v1570 = vmax.f32 %v1094, 0.0
  %v1571 = vmax.f32 %v1097, 0.0
  %v1572 = vmax.f32 %v1102, 0.0
  %v1573 = vmax.f32 %v1105, 0.0
  %v1574 = vmax.f32 %v1110, 0.0
  %v1575 = vmax.f32 %v1113, 0.0
  %v1576 = vmax.f32 %v1118, 0.0
  %v1577 = vmax.f32 %v1121, 0.0
  %v1578 = vmax.f32 %v1126, 0.0
  %v1579 = vmax.f32 %v1129, 0.0
  %v1580 = vmax.f32 %v1134, 0.0
  %v1581 = vmax.f32 %v1137, 0.0
  %v1582 = vmax.f32 %v1142, 0.0
  %v1583 = vmax.f32 %v1145, 0.0
  %v1584 = vmax.f32 %v1150, 0.0
  %v1585 = vmax.f32 %v1153, 0.0
  %v1586 = vmax.f32 %v1158, 0.0
  %v1587 = vmax.f32 %v1161, 0.0
  %v1588 = vmax.f32 %v1166, 0.0
  %v1589 = vmax.f32 %v1169, 0.0
  %v1590 = vmax.f32 %v1174, 0.0
  %v1591 = vmax.f32 %v1177, 0.0
  %v1592 = vmax.f32 %v1182, 0.0
  %v1593 = vmax.f32 %v1185, 0.0
  %v1594 = vmax.f32 %v1190, 0.0
  %v1595 = vmax.f32 %v1193, 0.0
  %v1596 = vmax.f32 %v1198, 0.0
  %v1597 = vmax.f32 %v1201, 0.0
  %v1598 = vmax.f32 %v1206, 0.0
  %v1599 = vmax.f32 %v1209, 0.0
  %v1600 = vmax.f32 %v1214, 0.0
  %v1601 = vmax.f32 %v1217, 0.0
  %v1602 = vmax.f32 %v1222, 0.0
  %v1603 = vmax.f32 %v1225, 0.0
  %v1604 = vmax.f32 %v1230, 0.0
  %v1605 = vmax.f32 %v1233, 0.0
  %v1606 = vmax.f32 %v1238, 0.0
  %v1607 = vmax.f32 %v1241, 0.0
  %v1608 = vmax.f32 %v1246, 0.0
  %v1609 = vmax.f32 %v1249, 0.0
  %v1610 = vmax.f32 %v1254, 0.0
  %v1611 = vmax.f32 %v1257, 0.0
  %v1612 = vmax.f32 %v1262, 0.0
  %v1613 = vmax.f32 %v1265, 0.0
  %v1614 = vmax.f32 %v1270, 0.0
  %v1615 = vmax.f32 %v1273, 0.0
  %v1616 = vmax.f32 %v1278, 0.0
  %v1617 = vmax.f32 %v1281, 0.0
  %v1618 = vmax.f32 %v1286, 0.0
  %v1619 = vmax.f32 %v1289, 0.0
  %v1620 = vmax.f32 %v1294, 0.0
  %v1621 = vmax.f32 %v1297, 0.0
  %v1622 = vmax.f32 %v1302, 0.0
  %v1623 = vmax.f32 %v1305, 0.0
  %v1624 = vmax.f32 %v1310, 0.0
  %v1625 = vmax.f32 %v1313, 0.0
  %v1626 = vmax.f32 %v1318, 0.0
  %v1627 = vmax.f32 %v1321, 0.0
  %v1628 = vmax.f32 %v1326, 0.0
  %v1629 = vmax.f32 %v1329, 0.0
  %v1630 = vmax.f32 %v1334, 0.0
  %v1631 = vmax.f32 %v1337, 0.0
  %v1632 = vmax.f32 %v1342, 0.0
  %v1633 = vmax.f32 %v1345, 0.0
  %v1634 = vmax.f32 %v1350, 0.0
  %v1635 = vmax.f32 %v1353, 0.0
  %v1636 = vmax.f32 %v1358, 0.0
  %v1637 = vmax.f32 %v1361, 0.0
  %v1638 = vmax.f32 %v1366, 0.0
  %v1639 = vmax.f32 %v1369, 0.0
  %v1640 = vmax.f32 %v1374, 0.0
  %v1641 = vmax.f32 %v1377, 0.0
  %v1642 = vmax.f32 %v1382, 0.0
  %v1643 = vmax.f32 %v1385, 0.0
  %v1644 = vmax.f32 %v1390, 0.0
  %v1645 = vmax.f32 %v1393, 0.0
  %v1646 = vmax.f32 %v1398, 0.0
  %v1647 = vmax.f32 %v1401, 0.0
  %v1648 = vmax.f32 %v1406, 0.0
  %v1649 = vmax.f32 %v1409, 0.0
  %v1650 = vmax.f32 %v1414, 0.0
  %v1651 = vmax.f32 %v1417, 0.0
  %v1652 = vmax.f32 %v1422, 0.0
  %v1653 = vmax.f32 %v1425, 0.0
  %v1654 = vmax.f32 %v1430, 0.0
  %v1655 = vmax.f32 %v1433, 0.0
  %v1656 = vmax.f32 %v1438, 0.0
  %v1657 = vmax.f32 %v1441, 0.0
  %v1658 = vmax.f32 %v1446, 0.0
  %v1659 = vmax.f32 %v1449, 0.0
  %v1660 = vmax.f32 %v1454, 0.0
  %v1661 = vmax.f32 %v1457, 0.0
  %v1662 = vmax.f32 %v1462, 0.0
  %v1663 = vmax.f32 %v1465, 0.0
  %vm1664 = vcmask 64512
  %1665 = vst.msk [vmem:[#allocation2] sm:$0xff] %vm1664, 0.0
  %1666 = vst.msk [vmem:[#allocation2 + $0x8] sm:$0xff] %vm1664, 0.0
  %1667 = vst.msk [vmem:[#allocation2 + $0x10] sm:$0xff] %vm1664, 0.0
  %1668 = vst.msk [vmem:[#allocation2 + $0x18] sm:$0xff] %vm1664, 0.0
  %1669 = vst.msk [vmem:[#allocation2 + $0x20] sm:$0xff] %vm1664, 0.0
  %1670 = vst.msk [vmem:[#allocation2 + $0x28] sm:$0xff] %vm1664, 0.0
  %1671 = vst.msk [vmem:[#allocation2 + $0x30] sm:$0xff] %vm1664, 0.0
  %1672 = vst.msk [vmem:[#allocation2 + $0x38] sm:$0xff] %vm1664, 0.0
  %1673 = vst.msk [vmem:[#allocation2 + $0x40] sm:$0xff] %vm1664, 0.0
  %1674 = vst.msk [vmem:[#allocation2 + $0x48] sm:$0xff] %vm1664, 0.0
  %1675 = vst.msk [vmem:[#allocation2 + $0x50] sm:$0xff] %vm1664, 0.0
  %1676 = vst.msk [vmem:[#allocation2 + $0x58] sm:$0xff] %vm1664, 0.0
  %1677 = vst.msk [vmem:[#allocation2 + $0x60] sm:$0xff] %vm1664, 0.0
  %1678 = vst.msk [vmem:[#allocation2 + $0x68] sm:$0xff] %vm1664, 0.0
  %1679 = vst.msk [vmem:[#allocation2 + $0x70] sm:$0xff] %vm1664, 0.0
  %1680 = vst.msk [vmem:[#allocation2 + $0x78] sm:$0xff] %vm1664, 0.0
  %s1681 = scalar_lea.vmem [#allocation2], 1920
  %1682 = vst.msk [vmem:[%s1681] sm:$0xff] %vm1664, 0.0
  %1683 = vst.msk [vmem:[%s1681 + $0x8] sm:$0xff] %vm1664, 0.0
  %1684 = vst.msk [vmem:[%s1681 + $0x10] sm:$0xff] %vm1664, 0.0
  %1685 = vst.msk [vmem:[%s1681 + $0x18] sm:$0xff] %vm1664, 0.0
  %1686 = vst.msk [vmem:[%s1681 + $0x20] sm:$0xff] %vm1664, 0.0
  %1687 = vst.msk [vmem:[%s1681 + $0x28] sm:$0xff] %vm1664, 0.0
  %1688 = vst.msk [vmem:[%s1681 + $0x30] sm:$0xff] %vm1664, 0.0
  %1689 = vst.msk [vmem:[%s1681 + $0x38] sm:$0xff] %vm1664, 0.0
  %1690 = vst.msk [vmem:[%s1681 + $0x40] sm:$0xff] %vm1664, 0.0
  %1691 = vst.msk [vmem:[%s1681 + $0x48] sm:$0xff] %vm1664, 0.0
  %1692 = vst.msk [vmem:[%s1681 + $0x50] sm:$0xff] %vm1664, 0.0
  %1693 = vst.msk [vmem:[%s1681 + $0x58] sm:$0xff] %vm1664, 0.0
  %1694 = vst.msk [vmem:[%s1681 + $0x60] sm:$0xff] %vm1664, 0.0
  %1695 = vst.msk [vmem:[%s1681 + $0x68] sm:$0xff] %vm1664, 0.0
  %1696 = vst.msk [vmem:[%s1681 + $0x70] sm:$0xff] %vm1664, 0.0
  %1697 = vst.msk [vmem:[%s1681 + $0x78] sm:$0xff] %vm1664, 0.0
  %s1698 = scalar_lea.vmem [#allocation2], 128
  %1699 = vst.msk [vmem:[%s1698] sm:$0xff] %vm1664, 0.0
  %1700 = vst.msk [vmem:[%s1698 + $0x80] sm:$0xff] %vm1664, 0.0
  %1701 = vst.msk [vmem:[%s1698 + $0x100] sm:$0xff] %vm1664, 0.0
  %1702 = vst.msk [vmem:[%s1698 + $0x180] sm:$0xff] %vm1664, 0.0
  %1703 = vst.msk [vmem:[%s1698 + $0x200] sm:$0xff] %vm1664, 0.0
  %1704 = vst.msk [vmem:[%s1698 + $0x280] sm:$0xff] %vm1664, 0.0
  %1705 = vst.msk [vmem:[%s1698 + $0x300] sm:$0xff] %vm1664, 0.0
  %1706 = vst.msk [vmem:[%s1698 + $0x380] sm:$0xff] %vm1664, 0.0
  %1707 = vst.msk [vmem:[%s1698 + $0x400] sm:$0xff] %vm1664, 0.0
  %1708 = vst.msk [vmem:[%s1698 + $0x480] sm:$0xff] %vm1664, 0.0
  %1709 = vst.msk [vmem:[%s1698 + $0x500] sm:$0xff] %vm1664, 0.0
  %1710 = vst.msk [vmem:[%s1698 + $0x580] sm:$0xff] %vm1664, 0.0
  %1711 = vst.msk [vmem:[%s1698 + $0x600] sm:$0xff] %vm1664, 0.0
  %1712 = vst.msk [vmem:[%s1698 + $0x680] sm:$0xff] %vm1664, 0.0
  %s1713 = scalar_lea.vmem [#allocation2], 248
  %1714 = vst.msk [vmem:[%s1713] sm:$0xff] %vm1664, 0.0
  %1715 = vst.msk [vmem:[%s1713 + $0x80] sm:$0xff] %vm1664, 0.0
  %1716 = vst.msk [vmem:[%s1713 + $0x100] sm:$0xff] %vm1664, 0.0
  %1717 = vst.msk [vmem:[%s1713 + $0x180] sm:$0xff] %vm1664, 0.0
  %1718 = vst.msk [vmem:[%s1713 + $0x200] sm:$0xff] %vm1664, 0.0
  %1719 = vst.msk [vmem:[%s1713 + $0x280] sm:$0xff] %vm1664, 0.0
  %1720 = vst.msk [vmem:[%s1713 + $0x300] sm:$0xff] %vm1664, 0.0
  %1721 = vst.msk [vmem:[%s1713 + $0x380] sm:$0xff] %vm1664, 0.0
  %1722 = vst.msk [vmem:[%s1713 + $0x400] sm:$0xff] %vm1664, 0.0
  %1723 = vst.msk [vmem:[%s1713 + $0x480] sm:$0xff] %vm1664, 0.0
  %1724 = vst.msk [vmem:[%s1713 + $0x500] sm:$0xff] %vm1664, 0.0
  %1725 = vst.msk [vmem:[%s1713 + $0x580] sm:$0xff] %vm1664, 0.0
  %1726 = vst.msk [vmem:[%s1713 + $0x600] sm:$0xff] %vm1664, 0.0
  %1727 = vst.msk [vmem:[%s1713 + $0x680] sm:$0xff] %vm1664, 0.0
  %s1728 = scalar_lea.vmem [#allocation2], 136
  %1729 = vst.msk [vmem:[%s1728] sm:$0xff] %vm1664, %v1468
  %1730 = vst.msk [vmem:[%s1728 + $0x8] sm:$0xff] %vm1664, %v1469
  %1731 = vst.msk [vmem:[%s1728 + $0x10] sm:$0xff] %vm1664, %v1470
  %1732 = vst.msk [vmem:[%s1728 + $0x18] sm:$0xff] %vm1664, %v1471
  %1733 = vst.msk [vmem:[%s1728 + $0x20] sm:$0xff] %vm1664, %v1472
  %1734 = vst.msk [vmem:[%s1728 + $0x28] sm:$0xff] %vm1664, %v1473
  %1735 = vst.msk [vmem:[%s1728 + $0x30] sm:$0xff] %vm1664, %v1474
  %1736 = vst.msk [vmem:[%s1728 + $0x38] sm:$0xff] %vm1664, %v1475
  %1737 = vst.msk [vmem:[%s1728 + $0x40] sm:$0xff] %vm1664, %v1476
  %1738 = vst.msk [vmem:[%s1728 + $0x48] sm:$0xff] %vm1664, %v1477
  %1739 = vst.msk [vmem:[%s1728 + $0x50] sm:$0xff] %vm1664, %v1478
  %1740 = vst.msk [vmem:[%s1728 + $0x58] sm:$0xff] %vm1664, %v1479
  %1741 = vst.msk [vmem:[%s1728 + $0x60] sm:$0xff] %vm1664, %v1480
  %1742 = vst.msk [vmem:[%s1728 + $0x68] sm:$0xff] %vm1664, %v1481
  %1743 = vst.msk [vmem:[%s1728 + $0x80] sm:$0xff] %vm1664, %v1482
  %1744 = vst.msk [vmem:[%s1728 + $0x88] sm:$0xff] %vm1664, %v1483
  %1745 = vst.msk [vmem:[%s1728 + $0x90] sm:$0xff] %vm1664, %v1484
  %1746 = vst.msk [vmem:[%s1728 + $0x98] sm:$0xff] %vm1664, %v1485
  %1747 = vst.msk [vmem:[%s1728 + $0xa0] sm:$0xff] %vm1664, %v1486
  %1748 = vst.msk [vmem:[%s1728 + $0xa8] sm:$0xff] %vm1664, %v1487
  %1749 = vst.msk [vmem:[%s1728 + $0xb0] sm:$0xff] %vm1664, %v1488
  %1750 = vst.msk [vmem:[%s1728 + $0xb8] sm:$0xff] %vm1664, %v1489
  %1751 = vst.msk [vmem:[%s1728 + $0xc0] sm:$0xff] %vm1664, %v1490
  %1752 = vst.msk [vmem:[%s1728 + $0xc8] sm:$0xff] %vm1664, %v1491
  %1753 = vst.msk [vmem:[%s1728 + $0xd0] sm:$0xff] %vm1664, %v1492
  %1754 = vst.msk [vmem:[%s1728 + $0xd8] sm:$0xff] %vm1664, %v1493
  %1755 = vst.msk [vmem:[%s1728 + $0xe0] sm:$0xff] %vm1664, %v1494
  %1756 = vst.msk [vmem:[%s1728 + $0xe8] sm:$0xff] %vm1664, %v1495
  %1757 = vst.msk [vmem:[%s1728 + $0x100] sm:$0xff] %vm1664, %v1496
  %1758 = vst.msk [vmem:[%s1728 + $0x108] sm:$0xff] %vm1664, %v1497
  %1759 = vst.msk [vmem:[%s1728 + $0x110] sm:$0xff] %vm1664, %v1498
  %1760 = vst.msk [vmem:[%s1728 + $0x118] sm:$0xff] %vm1664, %v1499
  %1761 = vst.msk [vmem:[%s1728 + $0x120] sm:$0xff] %vm1664, %v1500
  %1762 = vst.msk [vmem:[%s1728 + $0x128] sm:$0xff] %vm1664, %v1501
  %1763 = vst.msk [vmem:[%s1728 + $0x130] sm:$0xff] %vm1664, %v1502
  %1764 = vst.msk [vmem:[%s1728 + $0x138] sm:$0xff] %vm1664, %v1503
  %1765 = vst.msk [vmem:[%s1728 + $0x140] sm:$0xff] %vm1664, %v1504
  %1766 = vst.msk [vmem:[%s1728 + $0x148] sm:$0xff] %vm1664, %v1505
  %1767 = vst.msk [vmem:[%s1728 + $0x150] sm:$0xff] %vm1664, %v1506
  %1768 = vst.msk [vmem:[%s1728 + $0x158] sm:$0xff] %vm1664, %v1507
  %1769 = vst.msk [vmem:[%s1728 + $0x160] sm:$0xff] %vm1664, %v1508
  %1770 = vst.msk [vmem:[%s1728 + $0x168] sm:$0xff] %vm1664, %v1509
  %1771 = vst.msk [vmem:[%s1728 + $0x180] sm:$0xff] %vm1664, %v1510
  %1772 = vst.msk [vmem:[%s1728 + $0x188] sm:$0xff] %vm1664, %v1511
  %1773 = vst.msk [vmem:[%s1728 + $0x190] sm:$0xff] %vm1664, %v1512
  %1774 = vst.msk [vmem:[%s1728 + $0x198] sm:$0xff] %vm1664, %v1513
  %1775 = vst.msk [vmem:[%s1728 + $0x1a0] sm:$0xff] %vm1664, %v1514
  %1776 = vst.msk [vmem:[%s1728 + $0x1a8] sm:$0xff] %vm1664, %v1515
  %1777 = vst.msk [vmem:[%s1728 + $0x1b0] sm:$0xff] %vm1664, %v1516
  %1778 = vst.msk [vmem:[%s1728 + $0x1b8] sm:$0xff] %vm1664, %v1517
  %1779 = vst.msk [vmem:[%s1728 + $0x1c0] sm:$0xff] %vm1664, %v1518
  %1780 = vst.msk [vmem:[%s1728 + $0x1c8] sm:$0xff] %vm1664, %v1519
  %1781 = vst.msk [vmem:[%s1728 + $0x1d0] sm:$0xff] %vm1664, %v1520
  %1782 = vst.msk [vmem:[%s1728 + $0x1d8] sm:$0xff] %vm1664, %v1521
  %1783 = vst.msk [vmem:[%s1728 + $0x1e0] sm:$0xff] %vm1664, %v1522
  %1784 = vst.msk [vmem:[%s1728 + $0x1e8] sm:$0xff] %vm1664, %v1523
  %1785 = vst.msk [vmem:[%s1728 + $0x200] sm:$0xff] %vm1664, %v1524
  %1786 = vst.msk [vmem:[%s1728 + $0x208] sm:$0xff] %vm1664, %v1525
  %1787 = vst.msk [vmem:[%s1728 + $0x210] sm:$0xff] %vm1664, %v1526
  %1788 = vst.msk [vmem:[%s1728 + $0x218] sm:$0xff] %vm1664, %v1527
  %1789 = vst.msk [vmem:[%s1728 + $0x220] sm:$0xff] %vm1664, %v1528
  %1790 = vst.msk [vmem:[%s1728 + $0x228] sm:$0xff] %vm1664, %v1529
  %1791 = vst.msk [vmem:[%s1728 + $0x230] sm:$0xff] %vm1664, %v1530
  %1792 = vst.msk [vmem:[%s1728 + $0x238] sm:$0xff] %vm1664, %v1531
  %1793 = vst.msk [vmem:[%s1728 + $0x240] sm:$0xff] %vm1664, %v1532
  %1794 = vst.msk [vmem:[%s1728 + $0x248] sm:$0xff] %vm1664, %v1533
  %1795 = vst.msk [vmem:[%s1728 + $0x250] sm:$0xff] %vm1664, %v1534
  %1796 = vst.msk [vmem:[%s1728 + $0x258] sm:$0xff] %vm1664, %v1535
  %1797 = vst.msk [vmem:[%s1728 + $0x260] sm:$0xff] %vm1664, %v1536
  %1798 = vst.msk [vmem:[%s1728 + $0x268] sm:$0xff] %vm1664, %v1537
  %1799 = vst.msk [vmem:[%s1728 + $0x280] sm:$0xff] %vm1664, %v1538
  %1800 = vst.msk [vmem:[%s1728 + $0x288] sm:$0xff] %vm1664, %v1539
  %1801 = vst.msk [vmem:[%s1728 + $0x290] sm:$0xff] %vm1664, %v1540
  %1802 = vst.msk [vmem:[%s1728 + $0x298] sm:$0xff] %vm1664, %v1541
  %1803 = vst.msk [vmem:[%s1728 + $0x2a0] sm:$0xff] %vm1664, %v1542
  %1804 = vst.msk [vmem:[%s1728 + $0x2a8] sm:$0xff] %vm1664, %v1543
  %1805 = vst.msk [vmem:[%s1728 + $0x2b0] sm:$0xff] %vm1664, %v1544
  %1806 = vst.msk [vmem:[%s1728 + $0x2b8] sm:$0xff] %vm1664, %v1545
  %1807 = vst.msk [vmem:[%s1728 + $0x2c0] sm:$0xff] %vm1664, %v1546
  %1808 = vst.msk [vmem:[%s1728 + $0x2c8] sm:$0xff] %vm1664, %v1547
  %1809 = vst.msk [vmem:[%s1728 + $0x2d0] sm:$0xff] %vm1664, %v1548
  %1810 = vst.msk [vmem:[%s1728 + $0x2d8] sm:$0xff] %vm1664, %v1549
  %1811 = vst.msk [vmem:[%s1728 + $0x2e0] sm:$0xff] %vm1664, %v1550
  %1812 = vst.msk [vmem:[%s1728 + $0x2e8] sm:$0xff] %vm1664, %v1551
  %1813 = vst.msk [vmem:[%s1728 + $0x300] sm:$0xff] %vm1664, %v1552
  %1814 = vst.msk [vmem:[%s1728 + $0x308] sm:$0xff] %vm1664, %v1553
  %1815 = vst.msk [vmem:[%s1728 + $0x310] sm:$0xff] %vm1664, %v1554
  %1816 = vst.msk [vmem:[%s1728 + $0x318] sm:$0xff] %vm1664, %v1555
  %1817 = vst.msk [vmem:[%s1728 + $0x320] sm:$0xff] %vm1664, %v1556
  %1818 = vst.msk [vmem:[%s1728 + $0x328] sm:$0xff] %vm1664, %v1557
  %1819 = vst.msk [vmem:[%s1728 + $0x330] sm:$0xff] %vm1664, %v1558
  %1820 = vst.msk [vmem:[%s1728 + $0x338] sm:$0xff] %vm1664, %v1559
  %1821 = vst.msk [vmem:[%s1728 + $0x340] sm:$0xff] %vm1664, %v1560
  %1822 = vst.msk [vmem:[%s1728 + $0x348] sm:$0xff] %vm1664, %v1561
  %1823 = vst.msk [vmem:[%s1728 + $0x350] sm:$0xff] %vm1664, %v1562
  %1824 = vst.msk [vmem:[%s1728 + $0x358] sm:$0xff] %vm1664, %v1563
  %1825 = vst.msk [vmem:[%s1728 + $0x360] sm:$0xff] %vm1664, %v1564
  %1826 = vst.msk [vmem:[%s1728 + $0x368] sm:$0xff] %vm1664, %v1565
  %1827 = vst.msk [vmem:[%s1728 + $0x380] sm:$0xff] %vm1664, %v1566
  %1828 = vst.msk [vmem:[%s1728 + $0x388] sm:$0xff] %vm1664, %v1567
  %1829 = vst.msk [vmem:[%s1728 + $0x390] sm:$0xff] %vm1664, %v1568
  %1830 = vst.msk [vmem:[%s1728 + $0x398] sm:$0xff] %vm1664, %v1569
  %1831 = vst.msk [vmem:[%s1728 + $0x3a0] sm:$0xff] %vm1664, %v1570
  %1832 = vst.msk [vmem:[%s1728 + $0x3a8] sm:$0xff] %vm1664, %v1571
  %1833 = vst.msk [vmem:[%s1728 + $0x3b0] sm:$0xff] %vm1664, %v1572
  %1834 = vst.msk [vmem:[%s1728 + $0x3b8] sm:$0xff] %vm1664, %v1573
  %1835 = vst.msk [vmem:[%s1728 + $0x3c0] sm:$0xff] %vm1664, %v1574
  %1836 = vst.msk [vmem:[%s1728 + $0x3c8] sm:$0xff] %vm1664, %v1575
  %1837 = vst.msk [vmem:[%s1728 + $0x3d0] sm:$0xff] %vm1664, %v1576
  %1838 = vst.msk [vmem:[%s1728 + $0x3d8] sm:$0xff] %vm1664, %v1577
  %1839 = vst.msk [vmem:[%s1728 + $0x3e0] sm:$0xff] %vm1664, %v1578
  %1840 = vst.msk [vmem:[%s1728 + $0x3e8] sm:$0xff] %vm1664, %v1579
  %1841 = vst.msk [vmem:[%s1728 + $0x400] sm:$0xff] %vm1664, %v1580
  %1842 = vst.msk [vmem:[%s1728 + $0x408] sm:$0xff] %vm1664, %v1581
  %1843 = vst.msk [vmem:[%s1728 + $0x410] sm:$0xff] %vm1664, %v1582
  %1844 = vst.msk [vmem:[%s1728 + $0x418] sm:$0xff] %vm1664, %v1583
  %1845 = vst.msk [vmem:[%s1728 + $0x420] sm:$0xff] %vm1664, %v1584
  %1846 = vst.msk [vmem:[%s1728 + $0x428] sm:$0xff] %vm1664, %v1585
  %1847 = vst.msk [vmem:[%s1728 + $0x430] sm:$0xff] %vm1664, %v1586
  %1848 = vst.msk [vmem:[%s1728 + $0x438] sm:$0xff] %vm1664, %v1587
  %1849 = vst.msk [vmem:[%s1728 + $0x440] sm:$0xff] %vm1664, %v1588
  %1850 = vst.msk [vmem:[%s1728 + $0x448] sm:$0xff] %vm1664, %v1589
  %1851 = vst.msk [vmem:[%s1728 + $0x450] sm:$0xff] %vm1664, %v1590
  %1852 = vst.msk [vmem:[%s1728 + $0x458] sm:$0xff] %vm1664, %v1591
  %1853 = vst.msk [vmem:[%s1728 + $0x460] sm:$0xff] %vm1664, %v1592
  %1854 = vst.msk [vmem:[%s1728 + $0x468] sm:$0xff] %vm1664, %v1593
  %1855 = vst.msk [vmem:[%s1728 + $0x480] sm:$0xff] %vm1664, %v1594
  %1856 = vst.msk [vmem:[%s1728 + $0x488] sm:$0xff] %vm1664, %v1595
  %1857 = vst.msk [vmem:[%s1728 + $0x490] sm:$0xff] %vm1664, %v1596
  %1858 = vst.msk [vmem:[%s1728 + $0x498] sm:$0xff] %vm1664, %v1597
  %1859 = vst.msk [vmem:[%s1728 + $0x4a0] sm:$0xff] %vm1664, %v1598
  %1860 = vst.msk [vmem:[%s1728 + $0x4a8] sm:$0xff] %vm1664, %v1599
  %1861 = vst.msk [vmem:[%s1728 + $0x4b0] sm:$0xff] %vm1664, %v1600
  %1862 = vst.msk [vmem:[%s1728 + $0x4b8] sm:$0xff] %vm1664, %v1601
  %1863 = vst.msk [vmem:[%s1728 + $0x4c0] sm:$0xff] %vm1664, %v1602
  %1864 = vst.msk [vmem:[%s1728 + $0x4c8] sm:$0xff] %vm1664, %v1603
  %1865 = vst.msk [vmem:[%s1728 + $0x4d0] sm:$0xff] %vm1664, %v1604
  %1866 = vst.msk [vmem:[%s1728 + $0x4d8] sm:$0xff] %vm1664, %v1605
  %1867 = vst.msk [vmem:[%s1728 + $0x4e0] sm:$0xff] %vm1664, %v1606
  %1868 = vst.msk [vmem:[%s1728 + $0x4e8] sm:$0xff] %vm1664, %v1607
  %1869 = vst.msk [vmem:[%s1728 + $0x500] sm:$0xff] %vm1664, %v1608
  %1870 = vst.msk [vmem:[%s1728 + $0x508] sm:$0xff] %vm1664, %v1609
  %1871 = vst.msk [vmem:[%s1728 + $0x510] sm:$0xff] %vm1664, %v1610
  %1872 = vst.msk [vmem:[%s1728 + $0x518] sm:$0xff] %vm1664, %v1611
  %1873 = vst.msk [vmem:[%s1728 + $0x520] sm:$0xff] %vm1664, %v1612
  %1874 = vst.msk [vmem:[%s1728 + $0x528] sm:$0xff] %vm1664, %v1613
  %1875 = vst.msk [vmem:[%s1728 + $0x530] sm:$0xff] %vm1664, %v1614
  %1876 = vst.msk [vmem:[%s1728 + $0x538] sm:$0xff] %vm1664, %v1615
  %1877 = vst.msk [vmem:[%s1728 + $0x540] sm:$0xff] %vm1664, %v1616
  %1878 = vst.msk [vmem:[%s1728 + $0x548] sm:$0xff] %vm1664, %v1617
  %1879 = vst.msk [vmem:[%s1728 + $0x550] sm:$0xff] %vm1664, %v1618
  %1880 = vst.msk [vmem:[%s1728 + $0x558] sm:$0xff] %vm1664, %v1619
  %1881 = vst.msk [vmem:[%s1728 + $0x560] sm:$0xff] %vm1664, %v1620
  %1882 = vst.msk [vmem:[%s1728 + $0x568] sm:$0xff] %vm1664, %v1621
  %1883 = vst.msk [vmem:[%s1728 + $0x580] sm:$0xff] %vm1664, %v1622
  %1884 = vst.msk [vmem:[%s1728 + $0x588] sm:$0xff] %vm1664, %v1623
  %1885 = vst.msk [vmem:[%s1728 + $0x590] sm:$0xff] %vm1664, %v1624
  %1886 = vst.msk [vmem:[%s1728 + $0x598] sm:$0xff] %vm1664, %v1625
  %1887 = vst.msk [vmem:[%s1728 + $0x5a0] sm:$0xff] %vm1664, %v1626
  %1888 = vst.msk [vmem:[%s1728 + $0x5a8] sm:$0xff] %vm1664, %v1627
  %1889 = vst.msk [vmem:[%s1728 + $0x5b0] sm:$0xff] %vm1664, %v1628
  %1890 = vst.msk [vmem:[%s1728 + $0x5b8] sm:$0xff] %vm1664, %v1629
  %1891 = vst.msk [vmem:[%s1728 + $0x5c0] sm:$0xff] %vm1664, %v1630
  %1892 = vst.msk [vmem:[%s1728 + $0x5c8] sm:$0xff] %vm1664, %v1631
  %1893 = vst.msk [vmem:[%s1728 + $0x5d0] sm:$0xff] %vm1664, %v1632
  %1894 = vst.msk [vmem:[%s1728 + $0x5d8] sm:$0xff] %vm1664, %v1633
  %1895 = vst.msk [vmem:[%s1728 + $0x5e0] sm:$0xff] %vm1664, %v1634
  %1896 = vst.msk [vmem:[%s1728 + $0x5e8] sm:$0xff] %vm1664, %v1635
  %1897 = vst.msk [vmem:[%s1728 + $0x600] sm:$0xff] %vm1664, %v1636
  %1898 = vst.msk [vmem:[%s1728 + $0x608] sm:$0xff] %vm1664, %v1637
  %1899 = vst.msk [vmem:[%s1728 + $0x610] sm:$0xff] %vm1664, %v1638
  %1900 = vst.msk [vmem:[%s1728 + $0x618] sm:$0xff] %vm1664, %v1639
  %1901 = vst.msk [vmem:[%s1728 + $0x620] sm:$0xff] %vm1664, %v1640
  %1902 = vst.msk [vmem:[%s1728 + $0x628] sm:$0xff] %vm1664, %v1641
  %1903 = vst.msk [vmem:[%s1728 + $0x630] sm:$0xff] %vm1664, %v1642
  %1904 = vst.msk [vmem:[%s1728 + $0x638] sm:$0xff] %vm1664, %v1643
  %1905 = vst.msk [vmem:[%s1728 + $0x640] sm:$0xff] %vm1664, %v1644
  %1906 = vst.msk [vmem:[%s1728 + $0x648] sm:$0xff] %vm1664, %v1645
  %1907 = vst.msk [vmem:[%s1728 + $0x650] sm:$0xff] %vm1664, %v1646
  %1908 = vst.msk [vmem:[%s1728 + $0x658] sm:$0xff] %vm1664, %v1647
  %1909 = vst.msk [vmem:[%s1728 + $0x660] sm:$0xff] %vm1664, %v1648
  %1910 = vst.msk [vmem:[%s1728 + $0x668] sm:$0xff] %vm1664, %v1649
  %1911 = vst.msk [vmem:[%s1728 + $0x680] sm:$0xff] %vm1664, %v1650
  %1912 = vst.msk [vmem:[%s1728 + $0x688] sm:$0xff] %vm1664, %v1651
  %1913 = vst.msk [vmem:[%s1728 + $0x690] sm:$0xff] %vm1664, %v1652
  %1914 = vst.msk [vmem:[%s1728 + $0x698] sm:$0xff] %vm1664, %v1653
  %1915 = vst.msk [vmem:[%s1728 + $0x6a0] sm:$0xff] %vm1664, %v1654
  %1916 = vst.msk [vmem:[%s1728 + $0x6a8] sm:$0xff] %vm1664, %v1655
  %1917 = vst.msk [vmem:[%s1728 + $0x6b0] sm:$0xff] %vm1664, %v1656
  %1918 = vst.msk [vmem:[%s1728 + $0x6b8] sm:$0xff] %vm1664, %v1657
  %1919 = vst.msk [vmem:[%s1728 + $0x6c0] sm:$0xff] %vm1664, %v1658
  %1920 = vst.msk [vmem:[%s1728 + $0x6c8] sm:$0xff] %vm1664, %v1659
  %1921 = vst.msk [vmem:[%s1728 + $0x6d0] sm:$0xff] %vm1664, %v1660
  %1922 = vst.msk [vmem:[%s1728 + $0x6d8] sm:$0xff] %vm1664, %v1661
  %1923 = vst.msk [vmem:[%s1728 + $0x6e0] sm:$0xff] %vm1664, %v1662
  %1924 = vst.msk [vmem:[%s1728 + $0x6e8] sm:$0xff] %vm1664, %v1663
  %v1925 = vld [vmem:[#allocation2] sm:$0xff]
  %v1926 = vld [vmem:[#allocation2 + $0x8] sm:$0xff]
  %v1927 = vld [vmem:[#allocation2 + $0x10] sm:$0xff]
  %v1928 = vld [vmem:[#allocation2 + $0x18] sm:$0xff]
  %v1929 = vld [vmem:[#allocation2 + $0x20] sm:$0xff]
  %v1930 = vld [vmem:[#allocation2 + $0x28] sm:$0xff]
  %v1931 = vld [vmem:[#allocation2 + $0x30] sm:$0xff]
  %v1932 = vld [vmem:[#allocation2 + $0x38] sm:$0xff]
  %v1933 = vld [vmem:[#allocation2 + $0x40] sm:$0xff]
  %v1934 = vld [vmem:[#allocation2 + $0x48] sm:$0xff]
  %v1935 = vld [vmem:[#allocation2 + $0x50] sm:$0xff]
  %v1936 = vld [vmem:[#allocation2 + $0x58] sm:$0xff]
  %v1937 = vld [vmem:[#allocation2 + $0x60] sm:$0xff]
  %v1938 = vld [vmem:[#allocation2 + $0x68] sm:$0xff]
  %v1939 = vld [vmem:[#allocation2 + $0x70] sm:$0xff]
  %v1940 = vld [vmem:[#allocation2 + $0x100] sm:$0xff]
  %v1941 = vld [vmem:[#allocation2 + $0x108] sm:$0xff]
  %v1942 = vld [vmem:[#allocation2 + $0x110] sm:$0xff]
  %v1943 = vld [vmem:[#allocation2 + $0x118] sm:$0xff]
  %v1944 = vld [vmem:[#allocation2 + $0x120] sm:$0xff]
  %v1945 = vld [vmem:[#allocation2 + $0x128] sm:$0xff]
  %v1946 = vld [vmem:[#allocation2 + $0x130] sm:$0xff]
  %v1947 = vld [vmem:[#allocation2 + $0x138] sm:$0xff]
  %v1948 = vld [vmem:[#allocation2 + $0x140] sm:$0xff]
  %v1949 = vld [vmem:[#allocation2 + $0x148] sm:$0xff]
  %v1950 = vld [vmem:[#allocation2 + $0x150] sm:$0xff]
  %v1951 = vld [vmem:[#allocation2 + $0x158] sm:$0xff]
  %v1952 = vld [vmem:[#allocation2 + $0x160] sm:$0xff]
  %v1953 = vld [vmem:[#allocation2 + $0x168] sm:$0xff]
  %v1954 = vld [vmem:[#allocation2 + $0x170] sm:$0xff]
  %v1955 = vld [vmem:[#allocation2 + $0x200] sm:$0xff]
  %v1956 = vld [vmem:[#allocation2 + $0x208] sm:$0xff]
  %v1957 = vld [vmem:[#allocation2 + $0x210] sm:$0xff]
  %v1958 = vld [vmem:[#allocation2 + $0x218] sm:$0xff]
  %v1959 = vld [vmem:[#allocation2 + $0x220] sm:$0xff]
  %v1960 = vld [vmem:[#allocation2 + $0x228] sm:$0xff]
  %v1961 = vld [vmem:[#allocation2 + $0x230] sm:$0xff]
  %v1962 = vld [vmem:[#allocation2 + $0x238] sm:$0xff]
  %v1963 = vld [vmem:[#allocation2 + $0x240] sm:$0xff]
  %v1964 = vld [vmem:[#allocation2 + $0x248] sm:$0xff]
  %v1965 = vld [vmem:[#allocation2 + $0x250] sm:$0xff]
  %v1966 = vld [vmem:[#allocation2 + $0x258] sm:$0xff]
  %v1967 = vld [vmem:[#allocation2 + $0x260] sm:$0xff]
  %v1968 = vld [vmem:[#allocation2 + $0x268] sm:$0xff]
  %v1969 = vld [vmem:[#allocation2 + $0x270] sm:$0xff]
  %v1970 = vld [vmem:[#allocation2 + $0x300] sm:$0xff]
  %v1971 = vld [vmem:[#allocation2 + $0x308] sm:$0xff]
  %v1972 = vld [vmem:[#allocation2 + $0x310] sm:$0xff]
  %v1973 = vld [vmem:[#allocation2 + $0x318] sm:$0xff]
  %v1974 = vld [vmem:[#allocation2 + $0x320] sm:$0xff]
  %v1975 = vld [vmem:[#allocation2 + $0x328] sm:$0xff]
  %v1976 = vld [vmem:[#allocation2 + $0x330] sm:$0xff]
  %v1977 = vld [vmem:[#allocation2 + $0x338] sm:$0xff]
  %v1978 = vld [vmem:[#allocation2 + $0x340] sm:$0xff]
  %v1979 = vld [vmem:[#allocation2 + $0x348] sm:$0xff]
  %v1980 = vld [vmem:[#allocation2 + $0x350] sm:$0xff]
  %v1981 = vld [vmem:[#allocation2 + $0x358] sm:$0xff]
  %v1982 = vld [vmem:[#allocation2 + $0x360] sm:$0xff]
  %v1983 = vld [vmem:[#allocation2 + $0x368] sm:$0xff]
  %v1984 = vld [vmem:[#allocation2 + $0x370] sm:$0xff]
  %v1985 = vld [vmem:[#allocation2 + $0x400] sm:$0xff]
  %v1986 = vld [vmem:[#allocation2 + $0x408] sm:$0xff]
  %v1987 = vld [vmem:[#allocation2 + $0x410] sm:$0xff]
  %v1988 = vld [vmem:[#allocation2 + $0x418] sm:$0xff]
  %v1989 = vld [vmem:[#allocation2 + $0x420] sm:$0xff]
  %v1990 = vld [vmem:[#allocation2 + $0x428] sm:$0xff]
  %v1991 = vld [vmem:[#allocation2 + $0x430] sm:$0xff]
  %v1992 = vld [vmem:[#allocation2 + $0x438] sm:$0xff]
  %v1993 = vld [vmem:[#allocation2 + $0x440] sm:$0xff]
  %v1994 = vld [vmem:[#allocation2 + $0x448] sm:$0xff]
  %v1995 = vld [vmem:[#allocation2 + $0x450] sm:$0xff]
  %v1996 = vld [vmem:[#allocation2 + $0x458] sm:$0xff]
  %v1997 = vld [vmem:[#allocation2 + $0x460] sm:$0xff]
  %v1998 = vld [vmem:[#allocation2 + $0x468] sm:$0xff]
  %v1999 = vld [vmem:[#allocation2 + $0x470] sm:$0xff]
  %v2000 = vld [vmem:[#allocation2 + $0x500] sm:$0xff]
  %v2001 = vld [vmem:[#allocation2 + $0x508] sm:$0xff]
  %v2002 = vld [vmem:[#allocation2 + $0x510] sm:$0xff]
  %v2003 = vld [vmem:[#allocation2 + $0x518] sm:$0xff]
  %v2004 = vld [vmem:[#allocation2 + $0x520] sm:$0xff]
  %v2005 = vld [vmem:[#allocation2 + $0x528] sm:$0xff]
  %v2006 = vld [vmem:[#allocation2 + $0x530] sm:$0xff]
  %v2007 = vld [vmem:[#allocation2 + $0x538] sm:$0xff]
  %v2008 = vld [vmem:[#allocation2 + $0x540] sm:$0xff]
  %v2009 = vld [vmem:[#allocation2 + $0x548] sm:$0xff]
  %v2010 = vld [vmem:[#allocation2 + $0x550] sm:$0xff]
  %v2011 = vld [vmem:[#allocation2 + $0x558] sm:$0xff]
  %v2012 = vld [vmem:[#allocation2 + $0x560] sm:$0xff]
  %v2013 = vld [vmem:[#allocation2 + $0x568] sm:$0xff]
  %v2014 = vld [vmem:[#allocation2 + $0x570] sm:$0xff]
  %v2015 = vld [vmem:[#allocation2 + $0x600] sm:$0xff]
  %v2016 = vld [vmem:[#allocation2 + $0x608] sm:$0xff]
  %v2017 = vld [vmem:[#allocation2 + $0x610] sm:$0xff]
  %v2018 = vld [vmem:[#allocation2 + $0x618] sm:$0xff]
  %v2019 = vld [vmem:[#allocation2 + $0x620] sm:$0xff]
  %v2020 = vld [vmem:[#allocation2 + $0x628] sm:$0xff]
  %v2021 = vld [vmem:[#allocation2 + $0x630] sm:$0xff]
  %v2022 = vld [vmem:[#allocation2 + $0x638] sm:$0xff]
  %v2023 = vld [vmem:[#allocation2 + $0x640] sm:$0xff]
  %v2024 = vld [vmem:[#allocation2 + $0x648] sm:$0xff]
  %v2025 = vld [vmem:[#allocation2 + $0x650] sm:$0xff]
  %v2026 = vld [vmem:[#allocation2 + $0x658] sm:$0xff]
  %v2027 = vld [vmem:[#allocation2 + $0x660] sm:$0xff]
  %v2028 = vld [vmem:[#allocation2 + $0x668] sm:$0xff]
  %v2029 = vld [vmem:[#allocation2 + $0x670] sm:$0xff]
  %2030 = vst.msk [vmem:[#allocation4] sm:$0xff] %vm1664, %v1925
  %2031 = vst.msk [vmem:[#allocation4 + $0x8] sm:$0xff] %vm1664, %v1927
  %2032 = vst.msk [vmem:[#allocation4 + $0x10] sm:$0xff] %vm1664, %v1929
  %2033 = vst.msk [vmem:[#allocation4 + $0x18] sm:$0xff] %vm1664, %v1931
  %2034 = vst.msk [vmem:[#allocation4 + $0x20] sm:$0xff] %vm1664, %v1933
  %2035 = vst.msk [vmem:[#allocation4 + $0x28] sm:$0xff] %vm1664, %v1935
  %2036 = vst.msk [vmem:[#allocation4 + $0x30] sm:$0xff] %vm1664, %v1937
  %2037 = vst.msk [vmem:[#allocation4 + $0x38] sm:$0xff] %vm1664, %v1940
  %2038 = vst.msk [vmem:[#allocation4 + $0x40] sm:$0xff] %vm1664, %v1942
  %2039 = vst.msk [vmem:[#allocation4 + $0x48] sm:$0xff] %vm1664, %v1944
  %2040 = vst.msk [vmem:[#allocation4 + $0x50] sm:$0xff] %vm1664, %v1946
  %2041 = vst.msk [vmem:[#allocation4 + $0x58] sm:$0xff] %vm1664, %v1948
  %2042 = vst.msk [vmem:[#allocation4 + $0x60] sm:$0xff] %vm1664, %v1950
  %2043 = vst.msk [vmem:[#allocation4 + $0x68] sm:$0xff] %vm1664, %v1952
  %2044 = vst.msk [vmem:[#allocation4 + $0x70] sm:$0xff] %vm1664, %v1955
  %2045 = vst.msk [vmem:[#allocation4 + $0x78] sm:$0xff] %vm1664, %v1957
  %2046 = vst.msk [vmem:[#allocation4 + $0x80] sm:$0xff] %vm1664, %v1959
  %2047 = vst.msk [vmem:[#allocation4 + $0x88] sm:$0xff] %vm1664, %v1961
  %2048 = vst.msk [vmem:[#allocation4 + $0x90] sm:$0xff] %vm1664, %v1963
  %2049 = vst.msk [vmem:[#allocation4 + $0x98] sm:$0xff] %vm1664, %v1965
  %2050 = vst.msk [vmem:[#allocation4 + $0xa0] sm:$0xff] %vm1664, %v1967
  %2051 = vst.msk [vmem:[#allocation4 + $0xa8] sm:$0xff] %vm1664, %v1970
  %2052 = vst.msk [vmem:[#allocation4 + $0xb0] sm:$0xff] %vm1664, %v1972
  %2053 = vst.msk [vmem:[#allocation4 + $0xb8] sm:$0xff] %vm1664, %v1974
  %2054 = vst.msk [vmem:[#allocation4 + $0xc0] sm:$0xff] %vm1664, %v1976
  %2055 = vst.msk [vmem:[#allocation4 + $0xc8] sm:$0xff] %vm1664, %v1978
  %2056 = vst.msk [vmem:[#allocation4 + $0xd0] sm:$0xff] %vm1664, %v1980
  %2057 = vst.msk [vmem:[#allocation4 + $0xd8] sm:$0xff] %vm1664, %v1982
  %2058 = vst.msk [vmem:[#allocation4 + $0xe0] sm:$0xff] %vm1664, %v1985
  %2059 = vst.msk [vmem:[#allocation4 + $0xe8] sm:$0xff] %vm1664, %v1987
  %2060 = vst.msk [vmem:[#allocation4 + $0xf0] sm:$0xff] %vm1664, %v1989
  %2061 = vst.msk [vmem:[#allocation4 + $0xf8] sm:$0xff] %vm1664, %v1991
  %2062 = vst.msk [vmem:[#allocation4 + $0x100] sm:$0xff] %vm1664, %v1993
  %2063 = vst.msk [vmem:[#allocation4 + $0x108] sm:$0xff] %vm1664, %v1995
  %2064 = vst.msk [vmem:[#allocation4 + $0x110] sm:$0xff] %vm1664, %v1997
  %2065 = vst.msk [vmem:[#allocation4 + $0x118] sm:$0xff] %vm1664, %v2000
  %2066 = vst.msk [vmem:[#allocation4 + $0x120] sm:$0xff] %vm1664, %v2002
  %2067 = vst.msk [vmem:[#allocation4 + $0x128] sm:$0xff] %vm1664, %v2004
  %2068 = vst.msk [vmem:[#allocation4 + $0x130] sm:$0xff] %vm1664, %v2006
  %2069 = vst.msk [vmem:[#allocation4 + $0x138] sm:$0xff] %vm1664, %v2008
  %2070 = vst.msk [vmem:[#allocation4 + $0x140] sm:$0xff] %vm1664, %v2010
  %2071 = vst.msk [vmem:[#allocation4 + $0x148] sm:$0xff] %vm1664, %v2012
  %2072 = vst.msk [vmem:[#allocation4 + $0x150] sm:$0xff] %vm1664, %v2015
  %2073 = vst.msk [vmem:[#allocation4 + $0x158] sm:$0xff] %vm1664, %v2017
  %2074 = vst.msk [vmem:[#allocation4 + $0x160] sm:$0xff] %vm1664, %v2019
  %2075 = vst.msk [vmem:[#allocation4 + $0x168] sm:$0xff] %vm1664, %v2021
  %2076 = vst.msk [vmem:[#allocation4 + $0x170] sm:$0xff] %vm1664, %v2023
  %2077 = vst.msk [vmem:[#allocation4 + $0x178] sm:$0xff] %vm1664, %v2025
  %2078 = vst.msk [vmem:[#allocation4 + $0x180] sm:$0xff] %vm1664, %v2027
  %2128 = vrot.lane.b32.xlu0 %v1926, 8
  %v2129 = vpop.permute.xlu0 %2128
  %2130 = vrot.lane.b32.xlu0 %v1928, 8
  %v2131 = vpop.permute.xlu0 %2130
  %2132 = vrot.lane.b32.xlu0 %v1930, 8
  %v2133 = vpop.permute.xlu0 %2132
  %2134 = vrot.lane.b32.xlu0 %v1932, 8
  %v2135 = vpop.permute.xlu0 %2134
  %2136 = vrot.lane.b32.xlu0 %v1934, 8
  %v2137 = vpop.permute.xlu0 %2136
  %2138 = vrot.lane.b32.xlu0 %v1936, 8
  %v2139 = vpop.permute.xlu0 %2138
  %2140 = vrot.lane.b32.xlu0 %v1938, 8
  %v2141 = vpop.permute.xlu0 %2140
  %2142 = vrot.lane.b32.xlu0 %v1941, 8
  %v2143 = vpop.permute.xlu0 %2142
  %2144 = vrot.lane.b32.xlu0 %v1943, 8
  %v2145 = vpop.permute.xlu0 %2144
  %2146 = vrot.lane.b32.xlu0 %v1945, 8
  %v2147 = vpop.permute.xlu0 %2146
  %2148 = vrot.lane.b32.xlu0 %v1947, 8
  %v2149 = vpop.permute.xlu0 %2148
  %2150 = vrot.lane.b32.xlu0 %v1949, 8
  %v2151 = vpop.permute.xlu0 %2150
  %2152 = vrot.lane.b32.xlu0 %v1951, 8
  %v2153 = vpop.permute.xlu0 %2152
  %2154 = vrot.lane.b32.xlu0 %v1953, 8
  %v2155 = vpop.permute.xlu0 %2154
  %2156 = vrot.lane.b32.xlu0 %v1956, 8
  %v2157 = vpop.permute.xlu0 %2156
  %2158 = vrot.lane.b32.xlu0 %v1958, 8
  %v2159 = vpop.permute.xlu0 %2158
  %2160 = vrot.lane.b32.xlu0 %v1960, 8
  %v2161 = vpop.permute.xlu0 %2160
  %2162 = vrot.lane.b32.xlu0 %v1962, 8
  %v2163 = vpop.permute.xlu0 %2162
  %2164 = vrot.lane.b32.xlu0 %v1964, 8
  %v2165 = vpop.permute.xlu0 %2164
  %2166 = vrot.lane.b32.xlu0 %v1966, 8
  %v2167 = vpop.permute.xlu0 %2166
  %2168 = vrot.lane.b32.xlu0 %v1968, 8
  %v2169 = vpop.permute.xlu0 %2168
  %2170 = vrot.lane.b32.xlu0 %v1971, 8
  %v2171 = vpop.permute.xlu0 %2170
  %2172 = vrot.lane.b32.xlu0 %v1973, 8
  %v2173 = vpop.permute.xlu0 %2172
  %2174 = vrot.lane.b32.xlu0 %v1975, 8
  %v2175 = vpop.permute.xlu0 %2174
  %2176 = vrot.lane.b32.xlu0 %v1977, 8
  %v2177 = vpop.permute.xlu0 %2176
  %2178 = vrot.lane.b32.xlu0 %v1979, 8
  %v2179 = vpop.permute.xlu0 %2178
  %2180 = vrot.lane.b32.xlu0 %v1981, 8
  %v2181 = vpop.permute.xlu0 %2180
  %2182 = vrot.lane.b32.xlu0 %v1983, 8
  %v2183 = vpop.permute.xlu0 %2182
  %2184 = vrot.lane.b32.xlu0 %v1986, 8
  %v2185 = vpop.permute.xlu0 %2184
  %2186 = vrot.lane.b32.xlu0 %v1988, 8
  %v2187 = vpop.permute.xlu0 %2186
  %2188 = vrot.lane.b32.xlu0 %v1990, 8
  %v2189 = vpop.permute.xlu0 %2188
  %2190 = vrot.lane.b32.xlu0 %v1992, 8
  %v2191 = vpop.permute.xlu0 %2190
  %2192 = vrot.lane.b32.xlu0 %v1994, 8
  %v2193 = vpop.permute.xlu0 %2192
  %2194 = vrot.lane.b32.xlu0 %v1996, 8
  %v2195 = vpop.permute.xlu0 %2194
  %2196 = vrot.lane.b32.xlu0 %v1998, 8
  %v2197 = vpop.permute.xlu0 %2196
  %2198 = vrot.lane.b32.xlu0 %v2001, 8
  %v2199 = vpop.permute.xlu0 %2198
  %2200 = vrot.lane.b32.xlu0 %v2003, 8
  %v2201 = vpop.permute.xlu0 %2200
  %2202 = vrot.lane.b32.xlu0 %v2005, 8
  %v2203 = vpop.permute.xlu0 %2202
  %2204 = vrot.lane.b32.xlu0 %v2007, 8
  %v2205 = vpop.permute.xlu0 %2204
  %2206 = vrot.lane.b32.xlu0 %v2009, 8
  %v2207 = vpop.permute.xlu0 %2206
  %2208 = vrot.lane.b32.xlu0 %v2011, 8
  %v2209 = vpop.permute.xlu0 %2208
  %2210 = vrot.lane.b32.xlu0 %v2013, 8
  %v2211 = vpop.permute.xlu0 %2210
  %2212 = vrot.lane.b32.xlu0 %v2016, 8
  %v2213 = vpop.permute.xlu0 %2212
  %2214 = vrot.lane.b32.xlu0 %v2018, 8
  %v2215 = vpop.permute.xlu0 %2214
  %2216 = vrot.lane.b32.xlu0 %v2020, 8
  %v2217 = vpop.permute.xlu0 %2216
  %2218 = vrot.lane.b32.xlu0 %v2022, 8
  %v2219 = vpop.permute.xlu0 %2218
  %2220 = vrot.lane.b32.xlu0 %v2024, 8
  %v2221 = vpop.permute.xlu0 %2220
  %2222 = vrot.lane.b32.xlu0 %v2026, 8
  %v2223 = vpop.permute.xlu0 %2222
  %2224 = vrot.lane.b32.xlu0 %v2028, 8
  %v2225 = vpop.permute.xlu0 %2224
  %vm2275 = vcmask 130112
  %2276 = vst.msk [vmem:[#allocation4] sm:$0xff] %vm2275, %v2129
  %2277 = vst.msk [vmem:[#allocation4 + $0x8] sm:$0xff] %vm2275, %v2131
  %2278 = vst.msk [vmem:[#allocation4 + $0x10] sm:$0xff] %vm2275, %v2133
  %2279 = vst.msk [vmem:[#allocation4 + $0x18] sm:$0xff] %vm2275, %v2135
  %2280 = vst.msk [vmem:[#allocation4 + $0x20] sm:$0xff] %vm2275, %v2137
  %2281 = vst.msk [vmem:[#allocation4 + $0x28] sm:$0xff] %vm2275, %v2139
  %2282 = vst.msk [vmem:[#allocation4 + $0x30] sm:$0xff] %vm2275, %v2141
  %2283 = vst.msk [vmem:[#allocation4 + $0x38] sm:$0xff] %vm2275, %v2143
  %2284 = vst.msk [vmem:[#allocation4 + $0x40] sm:$0xff] %vm2275, %v2145
  %2285 = vst.msk [vmem:[#allocation4 + $0x48] sm:$0xff] %vm2275, %v2147
  %2286 = vst.msk [vmem:[#allocation4 + $0x50] sm:$0xff] %vm2275, %v2149
  %2287 = vst.msk [vmem:[#allocation4 + $0x58] sm:$0xff] %vm2275, %v2151
  %2288 = vst.msk [vmem:[#allocation4 + $0x60] sm:$0xff] %vm2275, %v2153
  %2289 = vst.msk [vmem:[#allocation4 + $0x68] sm:$0xff] %vm2275, %v2155
  %2290 = vst.msk [vmem:[#allocation4 + $0x70] sm:$0xff] %vm2275, %v2157
  %2291 = vst.msk [vmem:[#allocation4 + $0x78] sm:$0xff] %vm2275, %v2159
  %2292 = vst.msk [vmem:[#allocation4 + $0x80] sm:$0xff] %vm2275, %v2161
  %2293 = vst.msk [vmem:[#allocation4 + $0x88] sm:$0xff] %vm2275, %v2163
  %2294 = vst.msk [vmem:[#allocation4 + $0x90] sm:$0xff] %vm2275, %v2165
  %2295 = vst.msk [vmem:[#allocation4 + $0x98] sm:$0xff] %vm2275, %v2167
  %2296 = vst.msk [vmem:[#allocation4 + $0xa0] sm:$0xff] %vm2275, %v2169
  %2297 = vst.msk [vmem:[#allocation4 + $0xa8] sm:$0xff] %vm2275, %v2171
  %2298 = vst.msk [vmem:[#allocation4 + $0xb0] sm:$0xff] %vm2275, %v2173
  %2299 = vst.msk [vmem:[#allocation4 + $0xb8] sm:$0xff] %vm2275, %v2175
  %2300 = vst.msk [vmem:[#allocation4 + $0xc0] sm:$0xff] %vm2275, %v2177
  %2301 = vst.msk [vmem:[#allocation4 + $0xc8] sm:$0xff] %vm2275, %v2179
  %2302 = vst.msk [vmem:[#allocation4 + $0xd0] sm:$0xff] %vm2275, %v2181
  %2303 = vst.msk [vmem:[#allocation4 + $0xd8] sm:$0xff] %vm2275, %v2183
  %2304 = vst.msk [vmem:[#allocation4 + $0xe0] sm:$0xff] %vm2275, %v2185
  %2305 = vst.msk [vmem:[#allocation4 + $0xe8] sm:$0xff] %vm2275, %v2187
  %2306 = vst.msk [vmem:[#allocation4 + $0xf0] sm:$0xff] %vm2275, %v2189
  %2307 = vst.msk [vmem:[#allocation4 + $0xf8] sm:$0xff] %vm2275, %v2191
  %2308 = vst.msk [vmem:[#allocation4 + $0x100] sm:$0xff] %vm2275, %v2193
  %2309 = vst.msk [vmem:[#allocation4 + $0x108] sm:$0xff] %vm2275, %v2195
  %2310 = vst.msk [vmem:[#allocation4 + $0x110] sm:$0xff] %vm2275, %v2197
  %2311 = vst.msk [vmem:[#allocation4 + $0x118] sm:$0xff] %vm2275, %v2199
  %2312 = vst.msk [vmem:[#allocation4 + $0x120] sm:$0xff] %vm2275, %v2201
  %2313 = vst.msk [vmem:[#allocation4 + $0x128] sm:$0xff] %vm2275, %v2203
  %2314 = vst.msk [vmem:[#allocation4 + $0x130] sm:$0xff] %vm2275, %v2205
  %2315 = vst.msk [vmem:[#allocation4 + $0x138] sm:$0xff] %vm2275, %v2207
  %2316 = vst.msk [vmem:[#allocation4 + $0x140] sm:$0xff] %vm2275, %v2209
  %2317 = vst.msk [vmem:[#allocation4 + $0x148] sm:$0xff] %vm2275, %v2211
  %2318 = vst.msk [vmem:[#allocation4 + $0x150] sm:$0xff] %vm2275, %v2213
  %2319 = vst.msk [vmem:[#allocation4 + $0x158] sm:$0xff] %vm2275, %v2215
  %2320 = vst.msk [vmem:[#allocation4 + $0x160] sm:$0xff] %vm2275, %v2217
  %2321 = vst.msk [vmem:[#allocation4 + $0x168] sm:$0xff] %vm2275, %v2219
  %2322 = vst.msk [vmem:[#allocation4 + $0x170] sm:$0xff] %vm2275, %v2221
  %2323 = vst.msk [vmem:[#allocation4 + $0x178] sm:$0xff] %vm2275, %v2223
  %2324 = vst.msk [vmem:[#allocation4 + $0x180] sm:$0xff] %vm2275, %v2225
  %2374 = vrot.lane.b32.xlu0 %v1927, 16
  %v2375 = vpop.permute.xlu0 %2374
  %2376 = vrot.lane.b32.xlu0 %v1929, 16
  %v2377 = vpop.permute.xlu0 %2376
  %2378 = vrot.lane.b32.xlu0 %v1931, 16
  %v2379 = vpop.permute.xlu0 %2378
  %2380 = vrot.lane.b32.xlu0 %v1933, 16
  %v2381 = vpop.permute.xlu0 %2380
  %2382 = vrot.lane.b32.xlu0 %v1935, 16
  %v2383 = vpop.permute.xlu0 %2382
  %2384 = vrot.lane.b32.xlu0 %v1937, 16
  %v2385 = vpop.permute.xlu0 %2384
  %2386 = vrot.lane.b32.xlu0 %v1939, 16
  %v2387 = vpop.permute.xlu0 %2386
  %2388 = vrot.lane.b32.xlu0 %v1942, 16
  %v2389 = vpop.permute.xlu0 %2388
  %2390 = vrot.lane.b32.xlu0 %v1944, 16
  %v2391 = vpop.permute.xlu0 %2390
  %2392 = vrot.lane.b32.xlu0 %v1946, 16
  %v2393 = vpop.permute.xlu0 %2392
  %2394 = vrot.lane.b32.xlu0 %v1948, 16
  %v2395 = vpop.permute.xlu0 %2394
  %2396 = vrot.lane.b32.xlu0 %v1950, 16
  %v2397 = vpop.permute.xlu0 %2396
  %2398 = vrot.lane.b32.xlu0 %v1952, 16
  %v2399 = vpop.permute.xlu0 %2398
  %2400 = vrot.lane.b32.xlu0 %v1954, 16
  %v2401 = vpop.permute.xlu0 %2400
  %2402 = vrot.lane.b32.xlu0 %v1957, 16
  %v2403 = vpop.permute.xlu0 %2402
  %2404 = vrot.lane.b32.xlu0 %v1959, 16
  %v2405 = vpop.permute.xlu0 %2404
  %2406 = vrot.lane.b32.xlu0 %v1961, 16
  %v2407 = vpop.permute.xlu0 %2406
  %2408 = vrot.lane.b32.xlu0 %v1963, 16
  %v2409 = vpop.permute.xlu0 %2408
  %2410 = vrot.lane.b32.xlu0 %v1965, 16
  %v2411 = vpop.permute.xlu0 %2410
  %2412 = vrot.lane.b32.xlu0 %v1967, 16
  %v2413 = vpop.permute.xlu0 %2412
  %2414 = vrot.lane.b32.xlu0 %v1969, 16
  %v2415 = vpop.permute.xlu0 %2414
  %2416 = vrot.lane.b32.xlu0 %v1972, 16
  %v2417 = vpop.permute.xlu0 %2416
  %2418 = vrot.lane.b32.xlu0 %v1974, 16
  %v2419 = vpop.permute.xlu0 %2418
  %2420 = vrot.lane.b32.xlu0 %v1976, 16
  %v2421 = vpop.permute.xlu0 %2420
  %2422 = vrot.lane.b32.xlu0 %v1978, 16
  %v2423 = vpop.permute.xlu0 %2422
  %2424 = vrot.lane.b32.xlu0 %v1980, 16
  %v2425 = vpop.permute.xlu0 %2424
  %2426 = vrot.lane.b32.xlu0 %v1982, 16
  %v2427 = vpop.permute.xlu0 %2426
  %2428 = vrot.lane.b32.xlu0 %v1984, 16
  %v2429 = vpop.permute.xlu0 %2428
  %2430 = vrot.lane.b32.xlu0 %v1987, 16
  %v2431 = vpop.permute.xlu0 %2430
  %2432 = vrot.lane.b32.xlu0 %v1989, 16
  %v2433 = vpop.permute.xlu0 %2432
  %2434 = vrot.lane.b32.xlu0 %v1991, 16
  %v2435 = vpop.permute.xlu0 %2434
  %2436 = vrot.lane.b32.xlu0 %v1993, 16
  %v2437 = vpop.permute.xlu0 %2436
  %2438 = vrot.lane.b32.xlu0 %v1995, 16
  %v2439 = vpop.permute.xlu0 %2438
  %2440 = vrot.lane.b32.xlu0 %v1997, 16
  %v2441 = vpop.permute.xlu0 %2440
  %2442 = vrot.lane.b32.xlu0 %v1999, 16
  %v2443 = vpop.permute.xlu0 %2442
  %2444 = vrot.lane.b32.xlu0 %v2002, 16
  %v2445 = vpop.permute.xlu0 %2444
  %2446 = vrot.lane.b32.xlu0 %v2004, 16
  %v2447 = vpop.permute.xlu0 %2446
  %2448 = vrot.lane.b32.xlu0 %v2006, 16
  %v2449 = vpop.permute.xlu0 %2448
  %2450 = vrot.lane.b32.xlu0 %v2008, 16
  %v2451 = vpop.permute.xlu0 %2450
  %2452 = vrot.lane.b32.xlu0 %v2010, 16
  %v2453 = vpop.permute.xlu0 %2452
  %2454 = vrot.lane.b32.xlu0 %v2012, 16
  %v2455 = vpop.permute.xlu0 %2454
  %2456 = vrot.lane.b32.xlu0 %v2014, 16
  %v2457 = vpop.permute.xlu0 %2456
  %2458 = vrot.lane.b32.xlu0 %v2017, 16
  %v2459 = vpop.permute.xlu0 %2458
  %2460 = vrot.lane.b32.xlu0 %v2019, 16
  %v2461 = vpop.permute.xlu0 %2460
  %2462 = vrot.lane.b32.xlu0 %v2021, 16
  %v2463 = vpop.permute.xlu0 %2462
  %2464 = vrot.lane.b32.xlu0 %v2023, 16
  %v2465 = vpop.permute.xlu0 %2464
  %2466 = vrot.lane.b32.xlu0 %v2025, 16
  %v2467 = vpop.permute.xlu0 %2466
  %2468 = vrot.lane.b32.xlu0 %v2027, 16
  %v2469 = vpop.permute.xlu0 %2468
  %2470 = vrot.lane.b32.xlu0 %v2029, 16
  %v2471 = vpop.permute.xlu0 %2470
  %vm2521 = vcmask 195712
  %2522 = vst.msk [vmem:[#allocation4] sm:$0xff] %vm2521, %v2375
  %2523 = vst.msk [vmem:[#allocation4 + $0x8] sm:$0xff] %vm2521, %v2377
  %2524 = vst.msk [vmem:[#allocation4 + $0x10] sm:$0xff] %vm2521, %v2379
  %2525 = vst.msk [vmem:[#allocation4 + $0x18] sm:$0xff] %vm2521, %v2381
  %2526 = vst.msk [vmem:[#allocation4 + $0x20] sm:$0xff] %vm2521, %v2383
  %2527 = vst.msk [vmem:[#allocation4 + $0x28] sm:$0xff] %vm2521, %v2385
  %2528 = vst.msk [vmem:[#allocation4 + $0x30] sm:$0xff] %vm2521, %v2387
  %2529 = vst.msk [vmem:[#allocation4 + $0x38] sm:$0xff] %vm2521, %v2389
  %2530 = vst.msk [vmem:[#allocation4 + $0x40] sm:$0xff] %vm2521, %v2391
  %2531 = vst.msk [vmem:[#allocation4 + $0x48] sm:$0xff] %vm2521, %v2393
  %2532 = vst.msk [vmem:[#allocation4 + $0x50] sm:$0xff] %vm2521, %v2395
  %2533 = vst.msk [vmem:[#allocation4 + $0x58] sm:$0xff] %vm2521, %v2397
  %2534 = vst.msk [vmem:[#allocation4 + $0x60] sm:$0xff] %vm2521, %v2399
  %2535 = vst.msk [vmem:[#allocation4 + $0x68] sm:$0xff] %vm2521, %v2401
  %2536 = vst.msk [vmem:[#allocation4 + $0x70] sm:$0xff] %vm2521, %v2403
  %2537 = vst.msk [vmem:[#allocation4 + $0x78] sm:$0xff] %vm2521, %v2405
  %2538 = vst.msk [vmem:[#allocation4 + $0x80] sm:$0xff] %vm2521, %v2407
  %2539 = vst.msk [vmem:[#allocation4 + $0x88] sm:$0xff] %vm2521, %v2409
  %2540 = vst.msk [vmem:[#allocation4 + $0x90] sm:$0xff] %vm2521, %v2411
  %2541 = vst.msk [vmem:[#allocation4 + $0x98] sm:$0xff] %vm2521, %v2413
  %2542 = vst.msk [vmem:[#allocation4 + $0xa0] sm:$0xff] %vm2521, %v2415
  %2543 = vst.msk [vmem:[#allocation4 + $0xa8] sm:$0xff] %vm2521, %v2417
  %2544 = vst.msk [vmem:[#allocation4 + $0xb0] sm:$0xff] %vm2521, %v2419
  %2545 = vst.msk [vmem:[#allocation4 + $0xb8] sm:$0xff] %vm2521, %v2421
  %2546 = vst.msk [vmem:[#allocation4 + $0xc0] sm:$0xff] %vm2521, %v2423
  %2547 = vst.msk [vmem:[#allocation4 + $0xc8] sm:$0xff] %vm2521, %v2425
  %2548 = vst.msk [vmem:[#allocation4 + $0xd0] sm:$0xff] %vm2521, %v2427
  %2549 = vst.msk [vmem:[#allocation4 + $0xd8] sm:$0xff] %vm2521, %v2429
  %2550 = vst.msk [vmem:[#allocation4 + $0xe0] sm:$0xff] %vm2521, %v2431
  %2551 = vst.msk [vmem:[#allocation4 + $0xe8] sm:$0xff] %vm2521, %v2433
  %2552 = vst.msk [vmem:[#allocation4 + $0xf0] sm:$0xff] %vm2521, %v2435
  %2553 = vst.msk [vmem:[#allocation4 + $0xf8] sm:$0xff] %vm2521, %v2437
  %2554 = vst.msk [vmem:[#allocation4 + $0x100] sm:$0xff] %vm2521, %v2439
  %2555 = vst.msk [vmem:[#allocation4 + $0x108] sm:$0xff] %vm2521, %v2441
  %2556 = vst.msk [vmem:[#allocation4 + $0x110] sm:$0xff] %vm2521, %v2443
  %2557 = vst.msk [vmem:[#allocation4 + $0x118] sm:$0xff] %vm2521, %v2445
  %2558 = vst.msk [vmem:[#allocation4 + $0x120] sm:$0xff] %vm2521, %v2447
  %2559 = vst.msk [vmem:[#allocation4 + $0x128] sm:$0xff] %vm2521, %v2449
  %2560 = vst.msk [vmem:[#allocation4 + $0x130] sm:$0xff] %vm2521, %v2451
  %2561 = vst.msk [vmem:[#allocation4 + $0x138] sm:$0xff] %vm2521, %v2453
  %2562 = vst.msk [vmem:[#allocation4 + $0x140] sm:$0xff] %vm2521, %v2455
  %2563 = vst.msk [vmem:[#allocation4 + $0x148] sm:$0xff] %vm2521, %v2457
  %2564 = vst.msk [vmem:[#allocation4 + $0x150] sm:$0xff] %vm2521, %v2459
  %2565 = vst.msk [vmem:[#allocation4 + $0x158] sm:$0xff] %vm2521, %v2461
  %2566 = vst.msk [vmem:[#allocation4 + $0x160] sm:$0xff] %vm2521, %v2463
  %2567 = vst.msk [vmem:[#allocation4 + $0x168] sm:$0xff] %vm2521, %v2465
  %2568 = vst.msk [vmem:[#allocation4 + $0x170] sm:$0xff] %vm2521, %v2467
  %2569 = vst.msk [vmem:[#allocation4 + $0x178] sm:$0xff] %vm2521, %v2469
  %2570 = vst.msk [vmem:[#allocation4 + $0x180] sm:$0xff] %vm2521, %v2471
  %v2571 = vld [vmem:[%s1698] sm:$0xff]
  %v2572 = vld [vmem:[%s1698 + $0x8] sm:$0xff]
  %v2573 = vld [vmem:[%s1698 + $0x10] sm:$0xff]
  %v2574 = vld [vmem:[%s1698 + $0x18] sm:$0xff]
  %v2575 = vld [vmem:[%s1698 + $0x20] sm:$0xff]
  %v2576 = vld [vmem:[%s1698 + $0x28] sm:$0xff]
  %v2577 = vld [vmem:[%s1698 + $0x30] sm:$0xff]
  %v2578 = vld [vmem:[%s1698 + $0x38] sm:$0xff]
  %v2579 = vld [vmem:[%s1698 + $0x40] sm:$0xff]
  %v2580 = vld [vmem:[%s1698 + $0x48] sm:$0xff]
  %v2581 = vld [vmem:[%s1698 + $0x50] sm:$0xff]
  %v2582 = vld [vmem:[%s1698 + $0x58] sm:$0xff]
  %v2583 = vld [vmem:[%s1698 + $0x60] sm:$0xff]
  %v2584 = vld [vmem:[%s1698 + $0x68] sm:$0xff]
  %v2585 = vld [vmem:[%s1698 + $0x70] sm:$0xff]
  %v2586 = vld [vmem:[%s1698 + $0x100] sm:$0xff]
  %v2587 = vld [vmem:[%s1698 + $0x108] sm:$0xff]
  %v2588 = vld [vmem:[%s1698 + $0x110] sm:$0xff]
  %v2589 = vld [vmem:[%s1698 + $0x118] sm:$0xff]
  %v2590 = vld [vmem:[%s1698 + $0x120] sm:$0xff]
  %v2591 = vld [vmem:[%s1698 + $0x128] sm:$0xff]
  %v2592 = vld [vmem:[%s1698 + $0x130] sm:$0xff]
  %v2593 = vld [vmem:[%s1698 + $0x138] sm:$0xff]
  %v2594 = vld [vmem:[%s1698 + $0x140] sm:$0xff]
  %v2595 = vld [vmem:[%s1698 + $0x148] sm:$0xff]
  %v2596 = vld [vmem:[%s1698 + $0x150] sm:$0xff]
  %v2597 = vld [vmem:[%s1698 + $0x158] sm:$0xff]
  %v2598 = vld [vmem:[%s1698 + $0x160] sm:$0xff]
  %v2599 = vld [vmem:[%s1698 + $0x168] sm:$0xff]
  %v2600 = vld [vmem:[%s1698 + $0x170] sm:$0xff]
  %v2601 = vld [vmem:[%s1698 + $0x200] sm:$0xff]
  %v2602 = vld [vmem:[%s1698 + $0x208] sm:$0xff]
  %v2603 = vld [vmem:[%s1698 + $0x210] sm:$0xff]
  %v2604 = vld [vmem:[%s1698 + $0x218] sm:$0xff]
  %v2605 = vld [vmem:[%s1698 + $0x220] sm:$0xff]
  %v2606 = vld [vmem:[%s1698 + $0x228] sm:$0xff]
  %v2607 = vld [vmem:[%s1698 + $0x230] sm:$0xff]
  %v2608 = vld [vmem:[%s1698 + $0x238] sm:$0xff]
  %v2609 = vld [vmem:[%s1698 + $0x240] sm:$0xff]
  %v2610 = vld [vmem:[%s1698 + $0x248] sm:$0xff]
  %v2611 = vld [vmem:[%s1698 + $0x250] sm:$0xff]
  %v2612 = vld [vmem:[%s1698 + $0x258] sm:$0xff]
  %v2613 = vld [vmem:[%s1698 + $0x260] sm:$0xff]
  %v2614 = vld [vmem:[%s1698 + $0x268] sm:$0xff]
  %v2615 = vld [vmem:[%s1698 + $0x270] sm:$0xff]
  %v2616 = vld [vmem:[%s1698 + $0x300] sm:$0xff]
  %v2617 = vld [vmem:[%s1698 + $0x308] sm:$0xff]
  %v2618 = vld [vmem:[%s1698 + $0x310] sm:$0xff]
  %v2619 = vld [vmem:[%s1698 + $0x318] sm:$0xff]
  %v2620 = vld [vmem:[%s1698 + $0x320] sm:$0xff]
  %v2621 = vld [vmem:[%s1698 + $0x328] sm:$0xff]
  %v2622 = vld [vmem:[%s1698 + $0x330] sm:$0xff]
  %v2623 = vld [vmem:[%s1698 + $0x338] sm:$0xff]
  %v2624 = vld [vmem:[%s1698 + $0x340] sm:$0xff]
  %v2625 = vld [vmem:[%s1698 + $0x348] sm:$0xff]
  %v2626 = vld [vmem:[%s1698 + $0x350] sm:$0xff]
  %v2627 = vld [vmem:[%s1698 + $0x358] sm:$0xff]
  %v2628 = vld [vmem:[%s1698 + $0x360] sm:$0xff]
  %v2629 = vld [vmem:[%s1698 + $0x368] sm:$0xff]
  %v2630 = vld [vmem:[%s1698 + $0x370] sm:$0xff]
  %v2631 = vld [vmem:[%s1698 + $0x400] sm:$0xff]
  %v2632 = vld [vmem:[%s1698 + $0x408] sm:$0xff]
  %v2633 = vld [vmem:[%s1698 + $0x410] sm:$0xff]
  %v2634 = vld [vmem:[%s1698 + $0x418] sm:$0xff]
  %v2635 = vld [vmem:[%s1698 + $0x420] sm:$0xff]
  %v2636 = vld [vmem:[%s1698 + $0x428] sm:$0xff]
  %v2637 = vld [vmem:[%s1698 + $0x430] sm:$0xff]
  %v2638 = vld [vmem:[%s1698 + $0x438] sm:$0xff]
  %v2639 = vld [vmem:[%s1698 + $0x440] sm:$0xff]
  %v2640 = vld [vmem:[%s1698 + $0x448] sm:$0xff]
  %v2641 = vld [vmem:[%s1698 + $0x450] sm:$0xff]
  %v2642 = vld [vmem:[%s1698 + $0x458] sm:$0xff]
  %v2643 = vld [vmem:[%s1698 + $0x460] sm:$0xff]
  %v2644 = vld [vmem:[%s1698 + $0x468] sm:$0xff]
  %v2645 = vld [vmem:[%s1698 + $0x470] sm:$0xff]
  %v2646 = vld [vmem:[%s1698 + $0x500] sm:$0xff]
  %v2647 = vld [vmem:[%s1698 + $0x508] sm:$0xff]
  %v2648 = vld [vmem:[%s1698 + $0x510] sm:$0xff]
  %v2649 = vld [vmem:[%s1698 + $0x518] sm:$0xff]
  %v2650 = vld [vmem:[%s1698 + $0x520] sm:$0xff]
  %v2651 = vld [vmem:[%s1698 + $0x528] sm:$0xff]
  %v2652 = vld [vmem:[%s1698 + $0x530] sm:$0xff]
  %v2653 = vld [vmem:[%s1698 + $0x538] sm:$0xff]
  %v2654 = vld [vmem:[%s1698 + $0x540] sm:$0xff]
  %v2655 = vld [vmem:[%s1698 + $0x548] sm:$0xff]
  %v2656 = vld [vmem:[%s1698 + $0x550] sm:$0xff]
  %v2657 = vld [vmem:[%s1698 + $0x558] sm:$0xff]
  %v2658 = vld [vmem:[%s1698 + $0x560] sm:$0xff]
  %v2659 = vld [vmem:[%s1698 + $0x568] sm:$0xff]
  %v2660 = vld [vmem:[%s1698 + $0x570] sm:$0xff]
  %v2661 = vld [vmem:[%s1698 + $0x600] sm:$0xff]
  %v2662 = vld [vmem:[%s1698 + $0x608] sm:$0xff]
  %v2663 = vld [vmem:[%s1698 + $0x610] sm:$0xff]
  %v2664 = vld [vmem:[%s1698 + $0x618] sm:$0xff]
  %v2665 = vld [vmem:[%s1698 + $0x620] sm:$0xff]
  %v2666 = vld [vmem:[%s1698 + $0x628] sm:$0xff]
  %v2667 = vld [vmem:[%s1698 + $0x630] sm:$0xff]
  %v2668 = vld [vmem:[%s1698 + $0x638] sm:$0xff]
  %v2669 = vld [vmem:[%s1698 + $0x640] sm:$0xff]
  %v2670 = vld [vmem:[%s1698 + $0x648] sm:$0xff]
  %v2671 = vld [vmem:[%s1698 + $0x650] sm:$0xff]
  %v2672 = vld [vmem:[%s1698 + $0x658] sm:$0xff]
  %v2673 = vld [vmem:[%s1698 + $0x660] sm:$0xff]
  %v2674 = vld [vmem:[%s1698 + $0x668] sm:$0xff]
  %v2675 = vld [vmem:[%s1698 + $0x670] sm:$0xff]
  %2725 = vrot.lane.b32.xlu0 %v2571, 24
  %v2726 = vpop.permute.xlu0 %2725
  %2727 = vrot.lane.b32.xlu0 %v2573, 24
  %v2728 = vpop.permute.xlu0 %2727
  %2729 = vrot.lane.b32.xlu0 %v2575, 24
  %v2730 = vpop.permute.xlu0 %2729
  %2731 = vrot.lane.b32.xlu0 %v2577, 24
  %v2732 = vpop.permute.xlu0 %2731
  %2733 = vrot.lane.b32.xlu0 %v2579, 24
  %v2734 = vpop.permute.xlu0 %2733
  %2735 = vrot.lane.b32.xlu0 %v2581, 24
  %v2736 = vpop.permute.xlu0 %2735
  %2737 = vrot.lane.b32.xlu0 %v2583, 24
  %v2738 = vpop.permute.xlu0 %2737
  %2739 = vrot.lane.b32.xlu0 %v2586, 24
  %v2740 = vpop.permute.xlu0 %2739
  %2741 = vrot.lane.b32.xlu0 %v2588, 24
  %v2742 = vpop.permute.xlu0 %2741
  %2743 = vrot.lane.b32.xlu0 %v2590, 24
  %v2744 = vpop.permute.xlu0 %2743
  %2745 = vrot.lane.b32.xlu0 %v2592, 24
  %v2746 = vpop.permute.xlu0 %2745
  %2747 = vrot.lane.b32.xlu0 %v2594, 24
  %v2748 = vpop.permute.xlu0 %2747
  %2749 = vrot.lane.b32.xlu0 %v2596, 24
  %v2750 = vpop.permute.xlu0 %2749
  %2751 = vrot.lane.b32.xlu0 %v2598, 24
  %v2752 = vpop.permute.xlu0 %2751
  %2753 = vrot.lane.b32.xlu0 %v2601, 24
  %v2754 = vpop.permute.xlu0 %2753
  %2755 = vrot.lane.b32.xlu0 %v2603, 24
  %v2756 = vpop.permute.xlu0 %2755
  %2757 = vrot.lane.b32.xlu0 %v2605, 24
  %v2758 = vpop.permute.xlu0 %2757
  %2759 = vrot.lane.b32.xlu0 %v2607, 24
  %v2760 = vpop.permute.xlu0 %2759
  %2761 = vrot.lane.b32.xlu0 %v2609, 24
  %v2762 = vpop.permute.xlu0 %2761
  %2763 = vrot.lane.b32.xlu0 %v2611, 24
  %v2764 = vpop.permute.xlu0 %2763
  %2765 = vrot.lane.b32.xlu0 %v2613, 24
  %v2766 = vpop.permute.xlu0 %2765
  %2767 = vrot.lane.b32.xlu0 %v2616, 24
  %v2768 = vpop.permute.xlu0 %2767
  %2769 = vrot.lane.b32.xlu0 %v2618, 24
  %v2770 = vpop.permute.xlu0 %2769
  %2771 = vrot.lane.b32.xlu0 %v2620, 24
  %v2772 = vpop.permute.xlu0 %2771
  %2773 = vrot.lane.b32.xlu0 %v2622, 24
  %v2774 = vpop.permute.xlu0 %2773
  %2775 = vrot.lane.b32.xlu0 %v2624, 24
  %v2776 = vpop.permute.xlu0 %2775
  %2777 = vrot.lane.b32.xlu0 %v2626, 24
  %v2778 = vpop.permute.xlu0 %2777
  %2779 = vrot.lane.b32.xlu0 %v2628, 24
  %v2780 = vpop.permute.xlu0 %2779
  %2781 = vrot.lane.b32.xlu0 %v2631, 24
  %v2782 = vpop.permute.xlu0 %2781
  %2783 = vrot.lane.b32.xlu0 %v2633, 24
  %v2784 = vpop.permute.xlu0 %2783
  %2785 = vrot.lane.b32.xlu0 %v2635, 24
  %v2786 = vpop.permute.xlu0 %2785
  %2787 = vrot.lane.b32.xlu0 %v2637, 24
  %v2788 = vpop.permute.xlu0 %2787
  %2789 = vrot.lane.b32.xlu0 %v2639, 24
  %v2790 = vpop.permute.xlu0 %2789
  %2791 = vrot.lane.b32.xlu0 %v2641, 24
  %v2792 = vpop.permute.xlu0 %2791
  %2793 = vrot.lane.b32.xlu0 %v2643, 24
  %v2794 = vpop.permute.xlu0 %2793
  %2795 = vrot.lane.b32.xlu0 %v2646, 24
  %v2796 = vpop.permute.xlu0 %2795
  %2797 = vrot.lane.b32.xlu0 %v2648, 24
  %v2798 = vpop.permute.xlu0 %2797
  %2799 = vrot.lane.b32.xlu0 %v2650, 24
  %v2800 = vpop.permute.xlu0 %2799
  %2801 = vrot.lane.b32.xlu0 %v2652, 24
  %v2802 = vpop.permute.xlu0 %2801
  %2803 = vrot.lane.b32.xlu0 %v2654, 24
  %v2804 = vpop.permute.xlu0 %2803
  %2805 = vrot.lane.b32.xlu0 %v2656, 24
  %v2806 = vpop.permute.xlu0 %2805
  %2807 = vrot.lane.b32.xlu0 %v2658, 24
  %v2808 = vpop.permute.xlu0 %2807
  %2809 = vrot.lane.b32.xlu0 %v2661, 24
  %v2810 = vpop.permute.xlu0 %2809
  %2811 = vrot.lane.b32.xlu0 %v2663, 24
  %v2812 = vpop.permute.xlu0 %2811
  %2813 = vrot.lane.b32.xlu0 %v2665, 24
  %v2814 = vpop.permute.xlu0 %2813
  %2815 = vrot.lane.b32.xlu0 %v2667, 24
  %v2816 = vpop.permute.xlu0 %2815
  %2817 = vrot.lane.b32.xlu0 %v2669, 24
  %v2818 = vpop.permute.xlu0 %2817
  %2819 = vrot.lane.b32.xlu0 %v2671, 24
  %v2820 = vpop.permute.xlu0 %2819
  %2821 = vrot.lane.b32.xlu0 %v2673, 24
  %v2822 = vpop.permute.xlu0 %2821
  %vm2872 = vcmask 261312
  %2873 = vst.msk [vmem:[#allocation4] sm:$0xff] %vm2872, %v2726
  %2874 = vst.msk [vmem:[#allocation4 + $0x8] sm:$0xff] %vm2872, %v2728
  %2875 = vst.msk [vmem:[#allocation4 + $0x10] sm:$0xff] %vm2872, %v2730
  %2876 = vst.msk [vmem:[#allocation4 + $0x18] sm:$0xff] %vm2872, %v2732
  %2877 = vst.msk [vmem:[#allocation4 + $0x20] sm:$0xff] %vm2872, %v2734
  %2878 = vst.msk [vmem:[#allocation4 + $0x28] sm:$0xff] %vm2872, %v2736
  %2879 = vst.msk [vmem:[#allocation4 + $0x30] sm:$0xff] %vm2872, %v2738
  %2880 = vst.msk [vmem:[#allocation4 + $0x38] sm:$0xff] %vm2872, %v2740
  %2881 = vst.msk [vmem:[#allocation4 + $0x40] sm:$0xff] %vm2872, %v2742
  %2882 = vst.msk [vmem:[#allocation4 + $0x48] sm:$0xff] %vm2872, %v2744
  %2883 = vst.msk [vmem:[#allocation4 + $0x50] sm:$0xff] %vm2872, %v2746
  %2884 = vst.msk [vmem:[#allocation4 + $0x58] sm:$0xff] %vm2872, %v2748
  %2885 = vst.msk [vmem:[#allocation4 + $0x60] sm:$0xff] %vm2872, %v2750
  %2886 = vst.msk [vmem:[#allocation4 + $0x68] sm:$0xff] %vm2872, %v2752
  %2887 = vst.msk [vmem:[#allocation4 + $0x70] sm:$0xff] %vm2872, %v2754
  %2888 = vst.msk [vmem:[#allocation4 + $0x78] sm:$0xff] %vm2872, %v2756
  %2889 = vst.msk [vmem:[#allocation4 + $0x80] sm:$0xff] %vm2872, %v2758
  %2890 = vst.msk [vmem:[#allocation4 + $0x88] sm:$0xff] %vm2872, %v2760
  %2891 = vst.msk [vmem:[#allocation4 + $0x90] sm:$0xff] %vm2872, %v2762
  %2892 = vst.msk [vmem:[#allocation4 + $0x98] sm:$0xff] %vm2872, %v2764
  %2893 = vst.msk [vmem:[#allocation4 + $0xa0] sm:$0xff] %vm2872, %v2766
  %2894 = vst.msk [vmem:[#allocation4 + $0xa8] sm:$0xff] %vm2872, %v2768
  %2895 = vst.msk [vmem:[#allocation4 + $0xb0] sm:$0xff] %vm2872, %v2770
  %2896 = vst.msk [vmem:[#allocation4 + $0xb8] sm:$0xff] %vm2872, %v2772
  %2897 = vst.msk [vmem:[#allocation4 + $0xc0] sm:$0xff] %vm2872, %v2774
  %2898 = vst.msk [vmem:[#allocation4 + $0xc8] sm:$0xff] %vm2872, %v2776
  %2899 = vst.msk [vmem:[#allocation4 + $0xd0] sm:$0xff] %vm2872, %v2778
  %2900 = vst.msk [vmem:[#allocation4 + $0xd8] sm:$0xff] %vm2872, %v2780
  %2901 = vst.msk [vmem:[#allocation4 + $0xe0] sm:$0xff] %vm2872, %v2782
  %2902 = vst.msk [vmem:[#allocation4 + $0xe8] sm:$0xff] %vm2872, %v2784
  %2903 = vst.msk [vmem:[#allocation4 + $0xf0] sm:$0xff] %vm2872, %v2786
  %2904 = vst.msk [vmem:[#allocation4 + $0xf8] sm:$0xff] %vm2872, %v2788
  %2905 = vst.msk [vmem:[#allocation4 + $0x100] sm:$0xff] %vm2872, %v2790
  %2906 = vst.msk [vmem:[#allocation4 + $0x108] sm:$0xff] %vm2872, %v2792
  %2907 = vst.msk [vmem:[#allocation4 + $0x110] sm:$0xff] %vm2872, %v2794
  %2908 = vst.msk [vmem:[#allocation4 + $0x118] sm:$0xff] %vm2872, %v2796
  %2909 = vst.msk [vmem:[#allocation4 + $0x120] sm:$0xff] %vm2872, %v2798
  %2910 = vst.msk [vmem:[#allocation4 + $0x128] sm:$0xff] %vm2872, %v2800
  %2911 = vst.msk [vmem:[#allocation4 + $0x130] sm:$0xff] %vm2872, %v2802
  %2912 = vst.msk [vmem:[#allocation4 + $0x138] sm:$0xff] %vm2872, %v2804
  %2913 = vst.msk [vmem:[#allocation4 + $0x140] sm:$0xff] %vm2872, %v2806
  %2914 = vst.msk [vmem:[#allocation4 + $0x148] sm:$0xff] %vm2872, %v2808
  %2915 = vst.msk [vmem:[#allocation4 + $0x150] sm:$0xff] %vm2872, %v2810
  %2916 = vst.msk [vmem:[#allocation4 + $0x158] sm:$0xff] %vm2872, %v2812
  %2917 = vst.msk [vmem:[#allocation4 + $0x160] sm:$0xff] %vm2872, %v2814
  %2918 = vst.msk [vmem:[#allocation4 + $0x168] sm:$0xff] %vm2872, %v2816
  %2919 = vst.msk [vmem:[#allocation4 + $0x170] sm:$0xff] %vm2872, %v2818
  %2920 = vst.msk [vmem:[#allocation4 + $0x178] sm:$0xff] %vm2872, %v2820
  %2921 = vst.msk [vmem:[#allocation4 + $0x180] sm:$0xff] %vm2872, %v2822
  %2971 = vrot.lane.b32.xlu0 %v2572, 32
  %v2972 = vpop.permute.xlu0 %2971
  %2973 = vrot.lane.b32.xlu0 %v2574, 32
  %v2974 = vpop.permute.xlu0 %2973
  %2975 = vrot.lane.b32.xlu0 %v2576, 32
  %v2976 = vpop.permute.xlu0 %2975
  %2977 = vrot.lane.b32.xlu0 %v2578, 32
  %v2978 = vpop.permute.xlu0 %2977
  %2979 = vrot.lane.b32.xlu0 %v2580, 32
  %v2980 = vpop.permute.xlu0 %2979
  %2981 = vrot.lane.b32.xlu0 %v2582, 32
  %v2982 = vpop.permute.xlu0 %2981
  %2983 = vrot.lane.b32.xlu0 %v2584, 32
  %v2984 = vpop.permute.xlu0 %2983
  %2985 = vrot.lane.b32.xlu0 %v2587, 32
  %v2986 = vpop.permute.xlu0 %2985
  %2987 = vrot.lane.b32.xlu0 %v2589, 32
  %v2988 = vpop.permute.xlu0 %2987
  %2989 = vrot.lane.b32.xlu0 %v2591, 32
  %v2990 = vpop.permute.xlu0 %2989
  %2991 = vrot.lane.b32.xlu0 %v2593, 32
  %v2992 = vpop.permute.xlu0 %2991
  %2993 = vrot.lane.b32.xlu0 %v2595, 32
  %v2994 = vpop.permute.xlu0 %2993
  %2995 = vrot.lane.b32.xlu0 %v2597, 32
  %v2996 = vpop.permute.xlu0 %2995
  %2997 = vrot.lane.b32.xlu0 %v2599, 32
  %v2998 = vpop.permute.xlu0 %2997
  %2999 = vrot.lane.b32.xlu0 %v2602, 32
  %v3000 = vpop.permute.xlu0 %2999
  %3001 = vrot.lane.b32.xlu0 %v2604, 32
  %v3002 = vpop.permute.xlu0 %3001
  %3003 = vrot.lane.b32.xlu0 %v2606, 32
  %v3004 = vpop.permute.xlu0 %3003
  %3005 = vrot.lane.b32.xlu0 %v2608, 32
  %v3006 = vpop.permute.xlu0 %3005
  %3007 = vrot.lane.b32.xlu0 %v2610, 32
  %v3008 = vpop.permute.xlu0 %3007
  %3009 = vrot.lane.b32.xlu0 %v2612, 32
  %v3010 = vpop.permute.xlu0 %3009
  %3011 = vrot.lane.b32.xlu0 %v2614, 32
  %v3012 = vpop.permute.xlu0 %3011
  %3013 = vrot.lane.b32.xlu0 %v2617, 32
  %v3014 = vpop.permute.xlu0 %3013
  %3015 = vrot.lane.b32.xlu0 %v2619, 32
  %v3016 = vpop.permute.xlu0 %3015
  %3017 = vrot.lane.b32.xlu0 %v2621, 32
  %v3018 = vpop.permute.xlu0 %3017
  %3019 = vrot.lane.b32.xlu0 %v2623, 32
  %v3020 = vpop.permute.xlu0 %3019
  %3021 = vrot.lane.b32.xlu0 %v2625, 32
  %v3022 = vpop.permute.xlu0 %3021
  %3023 = vrot.lane.b32.xlu0 %v2627, 32
  %v3024 = vpop.permute.xlu0 %3023
  %3025 = vrot.lane.b32.xlu0 %v2629, 32
  %v3026 = vpop.permute.xlu0 %3025
  %3027 = vrot.lane.b32.xlu0 %v2632, 32
  %v3028 = vpop.permute.xlu0 %3027
  %3029 = vrot.lane.b32.xlu0 %v2634, 32
  %v3030 = vpop.permute.xlu0 %3029
  %3031 = vrot.lane.b32.xlu0 %v2636, 32
  %v3032 = vpop.permute.xlu0 %3031
  %3033 = vrot.lane.b32.xlu0 %v2638, 32
  %v3034 = vpop.permute.xlu0 %3033
  %3035 = vrot.lane.b32.xlu0 %v2640, 32
  %v3036 = vpop.permute.xlu0 %3035
  %3037 = vrot.lane.b32.xlu0 %v2642, 32
  %v3038 = vpop.permute.xlu0 %3037
  %3039 = vrot.lane.b32.xlu0 %v2644, 32
  %v3040 = vpop.permute.xlu0 %3039
  %3041 = vrot.lane.b32.xlu0 %v2647, 32
  %v3042 = vpop.permute.xlu0 %3041
  %3043 = vrot.lane.b32.xlu0 %v2649, 32
  %v3044 = vpop.permute.xlu0 %3043
  %3045 = vrot.lane.b32.xlu0 %v2651, 32
  %v3046 = vpop.permute.xlu0 %3045
  %3047 = vrot.lane.b32.xlu0 %v2653, 32
  %v3048 = vpop.permute.xlu0 %3047
  %3049 = vrot.lane.b32.xlu0 %v2655, 32
  %v3050 = vpop.permute.xlu0 %3049
  %3051 = vrot.lane.b32.xlu0 %v2657, 32
  %v3052 = vpop.permute.xlu0 %3051
  %3053 = vrot.lane.b32.xlu0 %v2659, 32
  %v3054 = vpop.permute.xlu0 %3053
  %3055 = vrot.lane.b32.xlu0 %v2662, 32
  %v3056 = vpop.permute.xlu0 %3055
  %3057 = vrot.lane.b32.xlu0 %v2664, 32
  %v3058 = vpop.permute.xlu0 %3057
  %3059 = vrot.lane.b32.xlu0 %v2666, 32
  %v3060 = vpop.permute.xlu0 %3059
  %3061 = vrot.lane.b32.xlu0 %v2668, 32
  %v3062 = vpop.permute.xlu0 %3061
  %3063 = vrot.lane.b32.xlu0 %v2670, 32
  %v3064 = vpop.permute.xlu0 %3063
  %3065 = vrot.lane.b32.xlu0 %v2672, 32
  %v3066 = vpop.permute.xlu0 %3065
  %3067 = vrot.lane.b32.xlu0 %v2674, 32
  %v3068 = vpop.permute.xlu0 %3067
  %vm3118 = vcmask 326912
  %3119 = vst.msk [vmem:[#allocation4] sm:$0xff] %vm3118, %v2972
  %3120 = vst.msk [vmem:[#allocation4 + $0x8] sm:$0xff] %vm3118, %v2974
  %3121 = vst.msk [vmem:[#allocation4 + $0x10] sm:$0xff] %vm3118, %v2976
  %3122 = vst.msk [vmem:[#allocation4 + $0x18] sm:$0xff] %vm3118, %v2978
  %3123 = vst.msk [vmem:[#allocation4 + $0x20] sm:$0xff] %vm3118, %v2980
  %3124 = vst.msk [vmem:[#allocation4 + $0x28] sm:$0xff] %vm3118, %v2982
  %3125 = vst.msk [vmem:[#allocation4 + $0x30] sm:$0xff] %vm3118, %v2984
  %3126 = vst.msk [vmem:[#allocation4 + $0x38] sm:$0xff] %vm3118, %v2986
  %3127 = vst.msk [vmem:[#allocation4 + $0x40] sm:$0xff] %vm3118, %v2988
  %3128 = vst.msk [vmem:[#allocation4 + $0x48] sm:$0xff] %vm3118, %v2990
  %3129 = vst.msk [vmem:[#allocation4 + $0x50] sm:$0xff] %vm3118, %v2992
  %3130 = vst.msk [vmem:[#allocation4 + $0x58] sm:$0xff] %vm3118, %v2994
  %3131 = vst.msk [vmem:[#allocation4 + $0x60] sm:$0xff] %vm3118, %v2996
  %3132 = vst.msk [vmem:[#allocation4 + $0x68] sm:$0xff] %vm3118, %v2998
  %3133 = vst.msk [vmem:[#allocation4 + $0x70] sm:$0xff] %vm3118, %v3000
  %3134 = vst.msk [vmem:[#allocation4 + $0x78] sm:$0xff] %vm3118, %v3002
  %3135 = vst.msk [vmem:[#allocation4 + $0x80] sm:$0xff] %vm3118, %v3004
  %3136 = vst.msk [vmem:[#allocation4 + $0x88] sm:$0xff] %vm3118, %v3006
  %3137 = vst.msk [vmem:[#allocation4 + $0x90] sm:$0xff] %vm3118, %v3008
  %3138 = vst.msk [vmem:[#allocation4 + $0x98] sm:$0xff] %vm3118, %v3010
  %3139 = vst.msk [vmem:[#allocation4 + $0xa0] sm:$0xff] %vm3118, %v3012
  %3140 = vst.msk [vmem:[#allocation4 + $0xa8] sm:$0xff] %vm3118, %v3014
  %3141 = vst.msk [vmem:[#allocation4 + $0xb0] sm:$0xff] %vm3118, %v3016
  %3142 = vst.msk [vmem:[#allocation4 + $0xb8] sm:$0xff] %vm3118, %v3018
  %3143 = vst.msk [vmem:[#allocation4 + $0xc0] sm:$0xff] %vm3118, %v3020
  %3144 = vst.msk [vmem:[#allocation4 + $0xc8] sm:$0xff] %vm3118, %v3022
  %3145 = vst.msk [vmem:[#allocation4 + $0xd0] sm:$0xff] %vm3118, %v3024
  %3146 = vst.msk [vmem:[#allocation4 + $0xd8] sm:$0xff] %vm3118, %v3026
  %3147 = vst.msk [vmem:[#allocation4 + $0xe0] sm:$0xff] %vm3118, %v3028
  %3148 = vst.msk [vmem:[#allocation4 + $0xe8] sm:$0xff] %vm3118, %v3030
  %3149 = vst.msk [vmem:[#allocation4 + $0xf0] sm:$0xff] %vm3118, %v3032
  %3150 = vst.msk [vmem:[#allocation4 + $0xf8] sm:$0xff] %vm3118, %v3034
  %3151 = vst.msk [vmem:[#allocation4 + $0x100] sm:$0xff] %vm3118, %v3036
  %3152 = vst.msk [vmem:[#allocation4 + $0x108] sm:$0xff] %vm3118, %v3038
  %3153 = vst.msk [vmem:[#allocation4 + $0x110] sm:$0xff] %vm3118, %v3040
  %3154 = vst.msk [vmem:[#allocation4 + $0x118] sm:$0xff] %vm3118, %v3042
  %3155 = vst.msk [vmem:[#allocation4 + $0x120] sm:$0xff] %vm3118, %v3044
  %3156 = vst.msk [vmem:[#allocation4 + $0x128] sm:$0xff] %vm3118, %v3046
  %3157 = vst.msk [vmem:[#allocation4 + $0x130] sm:$0xff] %vm3118, %v3048
  %3158 = vst.msk [vmem:[#allocation4 + $0x138] sm:$0xff] %vm3118, %v3050
  %3159 = vst.msk [vmem:[#allocation4 + $0x140] sm:$0xff] %vm3118, %v3052
  %3160 = vst.msk [vmem:[#allocation4 + $0x148] sm:$0xff] %vm3118, %v3054
  %3161 = vst.msk [vmem:[#allocation4 + $0x150] sm:$0xff] %vm3118, %v3056
  %3162 = vst.msk [vmem:[#allocation4 + $0x158] sm:$0xff] %vm3118, %v3058
  %3163 = vst.msk [vmem:[#allocation4 + $0x160] sm:$0xff] %vm3118, %v3060
  %3164 = vst.msk [vmem:[#allocation4 + $0x168] sm:$0xff] %vm3118, %v3062
  %3165 = vst.msk [vmem:[#allocation4 + $0x170] sm:$0xff] %vm3118, %v3064
  %3166 = vst.msk [vmem:[#allocation4 + $0x178] sm:$0xff] %vm3118, %v3066
  %3167 = vst.msk [vmem:[#allocation4 + $0x180] sm:$0xff] %vm3118, %v3068
  %3175 = vrot.lane.b32.xlu0 %v2573, 40
  %v3176 = vpop.permute.xlu0 %3175
  %3177 = vrot.lane.b32.xlu0 %v2575, 40
  %v3178 = vpop.permute.xlu0 %3177
  %3179 = vrot.lane.b32.xlu0 %v2577, 40
  %v3180 = vpop.permute.xlu0 %3179
  %3181 = vrot.lane.b32.xlu0 %v2579, 40
  %v3182 = vpop.permute.xlu0 %3181
  %3183 = vrot.lane.b32.xlu0 %v2581, 40
  %v3184 = vpop.permute.xlu0 %3183
  %3185 = vrot.lane.b32.xlu0 %v2583, 40
  %v3186 = vpop.permute.xlu0 %3185
  %3187 = vrot.lane.b32.xlu0 %v2585, 40
  %v3188 = vpop.permute.xlu0 %3187
  %3189 = vrot.lane.b32.xlu0 %v2588, 40
  %v3190 = vpop.permute.xlu0 %3189
  %3191 = vrot.lane.b32.xlu0 %v2590, 40
  %v3192 = vpop.permute.xlu0 %3191
  %3193 = vrot.lane.b32.xlu0 %v2592, 40
  %v3194 = vpop.permute.xlu0 %3193
  %3195 = vrot.lane.b32.xlu0 %v2594, 40
  %v3196 = vpop.permute.xlu0 %3195
  %3197 = vrot.lane.b32.xlu0 %v2596, 40
  %v3198 = vpop.permute.xlu0 %3197
  %3199 = vrot.lane.b32.xlu0 %v2598, 40
  %v3200 = vpop.permute.xlu0 %3199
  %3201 = vrot.lane.b32.xlu0 %v2600, 40
  %v3202 = vpop.permute.xlu0 %3201
  %3203 = vrot.lane.b32.xlu0 %v2603, 40
  %v3204 = vpop.permute.xlu0 %3203
  %3205 = vrot.lane.b32.xlu0 %v2605, 40
  %v3206 = vpop.permute.xlu0 %3205
  %3207 = vrot.lane.b32.xlu0 %v2607, 40
  %v3208 = vpop.permute.xlu0 %3207
  %3209 = vrot.lane.b32.xlu0 %v2609, 40
  %v3210 = vpop.permute.xlu0 %3209
  %3211 = vrot.lane.b32.xlu0 %v2611, 40
  %v3212 = vpop.permute.xlu0 %3211
  %3213 = vrot.lane.b32.xlu0 %v2613, 40
  %v3214 = vpop.permute.xlu0 %3213
  %3215 = vrot.lane.b32.xlu0 %v2615, 40
  %v3216 = vpop.permute.xlu0 %3215
  %3217 = vrot.lane.b32.xlu0 %v2618, 40
  %v3218 = vpop.permute.xlu0 %3217
  %3219 = vrot.lane.b32.xlu0 %v2620, 40
  %v3220 = vpop.permute.xlu0 %3219
  %3221 = vrot.lane.b32.xlu0 %v2622, 40
  %v3222 = vpop.permute.xlu0 %3221
  %3223 = vrot.lane.b32.xlu0 %v2624, 40
  %v3224 = vpop.permute.xlu0 %3223
  %3225 = vrot.lane.b32.xlu0 %v2626, 40
  %v3226 = vpop.permute.xlu0 %3225
  %3227 = vrot.lane.b32.xlu0 %v2628, 40
  %v3228 = vpop.permute.xlu0 %3227
  %3229 = vrot.lane.b32.xlu0 %v2630, 40
  %v3230 = vpop.permute.xlu0 %3229
  %3231 = vrot.lane.b32.xlu0 %v2633, 40
  %v3232 = vpop.permute.xlu0 %3231
  %3233 = vrot.lane.b32.xlu0 %v2635, 40
  %v3234 = vpop.permute.xlu0 %3233
  %3235 = vrot.lane.b32.xlu0 %v2637, 40
  %v3236 = vpop.permute.xlu0 %3235
  %3237 = vrot.lane.b32.xlu0 %v2639, 40
  %v3238 = vpop.permute.xlu0 %3237
  %3239 = vrot.lane.b32.xlu0 %v2641, 40
  %v3240 = vpop.permute.xlu0 %3239
  %3241 = vrot.lane.b32.xlu0 %v2643, 40
  %v3242 = vpop.permute.xlu0 %3241
  %3243 = vrot.lane.b32.xlu0 %v2645, 40
  %v3244 = vpop.permute.xlu0 %3243
  %3245 = vrot.lane.b32.xlu0 %v2648, 40
  %v3246 = vpop.permute.xlu0 %3245
  %3247 = vrot.lane.b32.xlu0 %v2650, 40
  %v3248 = vpop.permute.xlu0 %3247
  %3249 = vrot.lane.b32.xlu0 %v2652, 40
  %v3250 = vpop.permute.xlu0 %3249
  %3251 = vrot.lane.b32.xlu0 %v2654, 40
  %v3252 = vpop.permute.xlu0 %3251
  %3253 = vrot.lane.b32.xlu0 %v2656, 40
  %v3254 = vpop.permute.xlu0 %3253
  %3255 = vrot.lane.b32.xlu0 %v2658, 40
  %v3256 = vpop.permute.xlu0 %3255
  %3257 = vrot.lane.b32.xlu0 %v2660, 40
  %v3258 = vpop.permute.xlu0 %3257
  %3259 = vrot.lane.b32.xlu0 %v2663, 40
  %v3260 = vpop.permute.xlu0 %3259
  %3261 = vrot.lane.b32.xlu0 %v2665, 40
  %v3262 = vpop.permute.xlu0 %3261
  %3263 = vrot.lane.b32.xlu0 %v2667, 40
  %v3264 = vpop.permute.xlu0 %3263
  %3265 = vrot.lane.b32.xlu0 %v2669, 40
  %v3266 = vpop.permute.xlu0 %3265
  %3267 = vrot.lane.b32.xlu0 %v2671, 40
  %v3268 = vpop.permute.xlu0 %3267
  %3269 = vrot.lane.b32.xlu0 %v2673, 40
  %v3270 = vpop.permute.xlu0 %3269
  %3271 = vrot.lane.b32.xlu0 %v2675, 40
  %v3272 = vpop.permute.xlu0 %3271
  %vm3322 = vcmask 392512
  %3323 = vst.msk [vmem:[#allocation4] sm:$0xff] %vm3322, %v3176
  %3324 = vst.msk [vmem:[#allocation4 + $0x8] sm:$0xff] %vm3322, %v3178
  %3325 = vst.msk [vmem:[#allocation4 + $0x10] sm:$0xff] %vm3322, %v3180
  %3326 = vst.msk [vmem:[#allocation4 + $0x18] sm:$0xff] %vm3322, %v3182
  %3327 = vst.msk [vmem:[#allocation4 + $0x20] sm:$0xff] %vm3322, %v3184
  %3328 = vst.msk [vmem:[#allocation4 + $0x28] sm:$0xff] %vm3322, %v3186
  %3329 = vst.msk [vmem:[#allocation4 + $0x30] sm:$0xff] %vm3322, %v3188
  %3330 = vst.msk [vmem:[#allocation4 + $0x38] sm:$0xff] %vm3322, %v3190
  %3331 = vst.msk [vmem:[#allocation4 + $0x40] sm:$0xff] %vm3322, %v3192
  %3332 = vst.msk [vmem:[#allocation4 + $0x48] sm:$0xff] %vm3322, %v3194
  %3333 = vst.msk [vmem:[#allocation4 + $0x50] sm:$0xff] %vm3322, %v3196
  %3334 = vst.msk [vmem:[#allocation4 + $0x58] sm:$0xff] %vm3322, %v3198
  %3335 = vst.msk [vmem:[#allocation4 + $0x60] sm:$0xff] %vm3322, %v3200
  %3336 = vst.msk [vmem:[#allocation4 + $0x68] sm:$0xff] %vm3322, %v3202
  %3337 = vst.msk [vmem:[#allocation4 + $0x70] sm:$0xff] %vm3322, %v3204
  %3338 = vst.msk [vmem:[#allocation4 + $0x78] sm:$0xff] %vm3322, %v3206
  %3339 = vst.msk [vmem:[#allocation4 + $0x80] sm:$0xff] %vm3322, %v3208
  %3340 = vst.msk [vmem:[#allocation4 + $0x88] sm:$0xff] %vm3322, %v3210
  %3341 = vst.msk [vmem:[#allocation4 + $0x90] sm:$0xff] %vm3322, %v3212
  %3342 = vst.msk [vmem:[#allocation4 + $0x98] sm:$0xff] %vm3322, %v3214
  %3343 = vst.msk [vmem:[#allocation4 + $0xa0] sm:$0xff] %vm3322, %v3216
  %3344 = vst.msk [vmem:[#allocation4 + $0xa8] sm:$0xff] %vm3322, %v3218
  %3345 = vst.msk [vmem:[#allocation4 + $0xb0] sm:$0xff] %vm3322, %v3220
  %3346 = vst.msk [vmem:[#allocation4 + $0xb8] sm:$0xff] %vm3322, %v3222
  %3347 = vst.msk [vmem:[#allocation4 + $0xc0] sm:$0xff] %vm3322, %v3224
  %3348 = vst.msk [vmem:[#allocation4 + $0xc8] sm:$0xff] %vm3322, %v3226
  %3349 = vst.msk [vmem:[#allocation4 + $0xd0] sm:$0xff] %vm3322, %v3228
  %3350 = vst.msk [vmem:[#allocation4 + $0xd8] sm:$0xff] %vm3322, %v3230
  %3351 = vst.msk [vmem:[#allocation4 + $0xe0] sm:$0xff] %vm3322, %v3232
  %3352 = vst.msk [vmem:[#allocation4 + $0xe8] sm:$0xff] %vm3322, %v3234
  %3353 = vst.msk [vmem:[#allocation4 + $0xf0] sm:$0xff] %vm3322, %v3236
  %3354 = vst.msk [vmem:[#allocation4 + $0xf8] sm:$0xff] %vm3322, %v3238
  %3355 = vst.msk [vmem:[#allocation4 + $0x100] sm:$0xff] %vm3322, %v3240
  %3356 = vst.msk [vmem:[#allocation4 + $0x108] sm:$0xff] %vm3322, %v3242
  %3357 = vst.msk [vmem:[#allocation4 + $0x110] sm:$0xff] %vm3322, %v3244
  %3358 = vst.msk [vmem:[#allocation4 + $0x118] sm:$0xff] %vm3322, %v3246
  %3359 = vst.msk [vmem:[#allocation4 + $0x120] sm:$0xff] %vm3322, %v3248
  %3360 = vst.msk [vmem:[#allocation4 + $0x128] sm:$0xff] %vm3322, %v3250
  %3361 = vst.msk [vmem:[#allocation4 + $0x130] sm:$0xff] %vm3322, %v3252
  %3362 = vst.msk [vmem:[#allocation4 + $0x138] sm:$0xff] %vm3322, %v3254
  %3363 = vst.msk [vmem:[#allocation4 + $0x140] sm:$0xff] %vm3322, %v3256
  %3364 = vst.msk [vmem:[#allocation4 + $0x148] sm:$0xff] %vm3322, %v3258
  %3365 = vst.msk [vmem:[#allocation4 + $0x150] sm:$0xff] %vm3322, %v3260
  %3366 = vst.msk [vmem:[#allocation4 + $0x158] sm:$0xff] %vm3322, %v3262
  %3367 = vst.msk [vmem:[#allocation4 + $0x160] sm:$0xff] %vm3322, %v3264
  %3368 = vst.msk [vmem:[#allocation4 + $0x168] sm:$0xff] %vm3322, %v3266
  %3369 = vst.msk [vmem:[#allocation4 + $0x170] sm:$0xff] %vm3322, %v3268
  %3370 = vst.msk [vmem:[#allocation4 + $0x178] sm:$0xff] %vm3322, %v3270
  %3371 = vst.msk [vmem:[#allocation4 + $0x180] sm:$0xff] %vm3322, %v3272
  %s3372 = scalar_lea.vmem [#allocation2], 256
  %v3373 = vld [vmem:[%s3372] sm:$0xff]
  %v3374 = vld [vmem:[%s3372 + $0x8] sm:$0xff]
  %v3375 = vld [vmem:[%s3372 + $0x10] sm:$0xff]
  %v3376 = vld [vmem:[%s3372 + $0x18] sm:$0xff]
  %v3377 = vld [vmem:[%s3372 + $0x20] sm:$0xff]
  %v3378 = vld [vmem:[%s3372 + $0x28] sm:$0xff]
  %v3379 = vld [vmem:[%s3372 + $0x30] sm:$0xff]
  %v3380 = vld [vmem:[%s3372 + $0x38] sm:$0xff]
  %v3381 = vld [vmem:[%s3372 + $0x40] sm:$0xff]
  %v3382 = vld [vmem:[%s3372 + $0x48] sm:$0xff]
  %v3383 = vld [vmem:[%s3372 + $0x50] sm:$0xff]
  %v3384 = vld [vmem:[%s3372 + $0x58] sm:$0xff]
  %v3385 = vld [vmem:[%s3372 + $0x60] sm:$0xff]
  %v3386 = vld [vmem:[%s3372 + $0x68] sm:$0xff]
  %v3387 = vld [vmem:[%s3372 + $0x70] sm:$0xff]
  %v3388 = vld [vmem:[%s3372 + $0x100] sm:$0xff]
  %v3389 = vld [vmem:[%s3372 + $0x108] sm:$0xff]
  %v3390 = vld [vmem:[%s3372 + $0x110] sm:$0xff]
  %v3391 = vld [vmem:[%s3372 + $0x118] sm:$0xff]
  %v3392 = vld [vmem:[%s3372 + $0x120] sm:$0xff]
  %v3393 = vld [vmem:[%s3372 + $0x128] sm:$0xff]
  %v3394 = vld [vmem:[%s3372 + $0x130] sm:$0xff]
  %v3395 = vld [vmem:[%s3372 + $0x138] sm:$0xff]
  %v3396 = vld [vmem:[%s3372 + $0x140] sm:$0xff]
  %v3397 = vld [vmem:[%s3372 + $0x148] sm:$0xff]
  %v3398 = vld [vmem:[%s3372 + $0x150] sm:$0xff]
  %v3399 = vld [vmem:[%s3372 + $0x158] sm:$0xff]
  %v3400 = vld [vmem:[%s3372 + $0x160] sm:$0xff]
  %v3401 = vld [vmem:[%s3372 + $0x168] sm:$0xff]
  %v3402 = vld [vmem:[%s3372 + $0x170] sm:$0xff]
  %v3403 = vld [vmem:[%s3372 + $0x200] sm:$0xff]
  %v3404 = vld [vmem:[%s3372 + $0x208] sm:$0xff]
  %v3405 = vld [vmem:[%s3372 + $0x210] sm:$0xff]
  %v3406 = vld [vmem:[%s3372 + $0x218] sm:$0xff]
  %v3407 = vld [vmem:[%s3372 + $0x220] sm:$0xff]
  %v3408 = vld [vmem:[%s3372 + $0x228] sm:$0xff]
  %v3409 = vld [vmem:[%s3372 + $0x230] sm:$0xff]
  %v3410 = vld [vmem:[%s3372 + $0x238] sm:$0xff]
  %v3411 = vld [vmem:[%s3372 + $0x240] sm:$0xff]
  %v3412 = vld [vmem:[%s3372 + $0x248] sm:$0xff]
  %v3413 = vld [vmem:[%s3372 + $0x250] sm:$0xff]
  %v3414 = vld [vmem:[%s3372 + $0x258] sm:$0xff]
  %v3415 = vld [vmem:[%s3372 + $0x260] sm:$0xff]
  %v3416 = vld [vmem:[%s3372 + $0x268] sm:$0xff]
  %v3417 = vld [vmem:[%s3372 + $0x270] sm:$0xff]
  %v3418 = vld [vmem:[%s3372 + $0x300] sm:$0xff]
  %v3419 = vld [vmem:[%s3372 + $0x308] sm:$0xff]
  %v3420 = vld [vmem:[%s3372 + $0x310] sm:$0xff]
  %v3421 = vld [vmem:[%s3372 + $0x318] sm:$0xff]
  %v3422 = vld [vmem:[%s3372 + $0x320] sm:$0xff]
  %v3423 = vld [vmem:[%s3372 + $0x328] sm:$0xff]
  %v3424 = vld [vmem:[%s3372 + $0x330] sm:$0xff]
  %v3425 = vld [vmem:[%s3372 + $0x338] sm:$0xff]
  %v3426 = vld [vmem:[%s3372 + $0x340] sm:$0xff]
  %v3427 = vld [vmem:[%s3372 + $0x348] sm:$0xff]
  %v3428 = vld [vmem:[%s3372 + $0x350] sm:$0xff]
  %v3429 = vld [vmem:[%s3372 + $0x358] sm:$0xff]
  %v3430 = vld [vmem:[%s3372 + $0x360] sm:$0xff]
  %v3431 = vld [vmem:[%s3372 + $0x368] sm:$0xff]
  %v3432 = vld [vmem:[%s3372 + $0x370] sm:$0xff]
  %v3433 = vld [vmem:[%s3372 + $0x400] sm:$0xff]
  %v3434 = vld [vmem:[%s3372 + $0x408] sm:$0xff]
  %v3435 = vld [vmem:[%s3372 + $0x410] sm:$0xff]
  %v3436 = vld [vmem:[%s3372 + $0x418] sm:$0xff]
  %v3437 = vld [vmem:[%s3372 + $0x420] sm:$0xff]
  %v3438 = vld [vmem:[%s3372 + $0x428] sm:$0xff]
  %v3439 = vld [vmem:[%s3372 + $0x430] sm:$0xff]
  %v3440 = vld [vmem:[%s3372 + $0x438] sm:$0xff]
  %v3441 = vld [vmem:[%s3372 + $0x440] sm:$0xff]
  %v3442 = vld [vmem:[%s3372 + $0x448] sm:$0xff]
  %v3443 = vld [vmem:[%s3372 + $0x450] sm:$0xff]
  %v3444 = vld [vmem:[%s3372 + $0x458] sm:$0xff]
  %v3445 = vld [vmem:[%s3372 + $0x460] sm:$0xff]
  %v3446 = vld [vmem:[%s3372 + $0x468] sm:$0xff]
  %v3447 = vld [vmem:[%s3372 + $0x470] sm:$0xff]
  %v3448 = vld [vmem:[%s3372 + $0x500] sm:$0xff]
  %v3449 = vld [vmem:[%s3372 + $0x508] sm:$0xff]
  %v3450 = vld [vmem:[%s3372 + $0x510] sm:$0xff]
  %v3451 = vld [vmem:[%s3372 + $0x518] sm:$0xff]
  %v3452 = vld [vmem:[%s3372 + $0x520] sm:$0xff]
  %v3453 = vld [vmem:[%s3372 + $0x528] sm:$0xff]
  %v3454 = vld [vmem:[%s3372 + $0x530] sm:$0xff]
  %v3455 = vld [vmem:[%s3372 + $0x538] sm:$0xff]
  %v3456 = vld [vmem:[%s3372 + $0x540] sm:$0xff]
  %v3457 = vld [vmem:[%s3372 + $0x548] sm:$0xff]
  %v3458 = vld [vmem:[%s3372 + $0x550] sm:$0xff]
  %v3459 = vld [vmem:[%s3372 + $0x558] sm:$0xff]
  %v3460 = vld [vmem:[%s3372 + $0x560] sm:$0xff]
  %v3461 = vld [vmem:[%s3372 + $0x568] sm:$0xff]
  %v3462 = vld [vmem:[%s3372 + $0x570] sm:$0xff]
  %v3463 = vld [vmem:[%s3372 + $0x600] sm:$0xff]
  %v3464 = vld [vmem:[%s3372 + $0x608] sm:$0xff]
  %v3465 = vld [vmem:[%s3372 + $0x610] sm:$0xff]
  %v3466 = vld [vmem:[%s3372 + $0x618] sm:$0xff]
  %v3467 = vld [vmem:[%s3372 + $0x620] sm:$0xff]
  %v3468 = vld [vmem:[%s3372 + $0x628] sm:$0xff]
  %v3469 = vld [vmem:[%s3372 + $0x630] sm:$0xff]
  %v3470 = vld [vmem:[%s3372 + $0x638] sm:$0xff]
  %v3471 = vld [vmem:[%s3372 + $0x640] sm:$0xff]
  %v3472 = vld [vmem:[%s3372 + $0x648] sm:$0xff]
  %v3473 = vld [vmem:[%s3372 + $0x650] sm:$0xff]
  %v3474 = vld [vmem:[%s3372 + $0x658] sm:$0xff]
  %v3475 = vld [vmem:[%s3372 + $0x660] sm:$0xff]
  %v3476 = vld [vmem:[%s3372 + $0x668] sm:$0xff]
  %v3477 = vld [vmem:[%s3372 + $0x670] sm:$0xff]
  %3527 = vrot.lane.b32.xlu0 %v3373, 48
  %v3528 = vpop.permute.xlu0 %3527
  %3529 = vrot.lane.b32.xlu0 %v3375, 48
  %v3530 = vpop.permute.xlu0 %3529
  %3531 = vrot.lane.b32.xlu0 %v3377, 48
  %v3532 = vpop.permute.xlu0 %3531
  %3533 = vrot.lane.b32.xlu0 %v3379, 48
  %v3534 = vpop.permute.xlu0 %3533
  %3535 = vrot.lane.b32.xlu0 %v3381, 48
  %v3536 = vpop.permute.xlu0 %3535
  %3537 = vrot.lane.b32.xlu0 %v3383, 48
  %v3538 = vpop.permute.xlu0 %3537
  %3539 = vrot.lane.b32.xlu0 %v3385, 48
  %v3540 = vpop.permute.xlu0 %3539
  %3541 = vrot.lane.b32.xlu0 %v3388, 48
  %v3542 = vpop.permute.xlu0 %3541
  %3543 = vrot.lane.b32.xlu0 %v3390, 48
  %v3544 = vpop.permute.xlu0 %3543
  %3545 = vrot.lane.b32.xlu0 %v3392, 48
  %v3546 = vpop.permute.xlu0 %3545
  %3547 = vrot.lane.b32.xlu0 %v3394, 48
  %v3548 = vpop.permute.xlu0 %3547
  %3549 = vrot.lane.b32.xlu0 %v3396, 48
  %v3550 = vpop.permute.xlu0 %3549
  %3551 = vrot.lane.b32.xlu0 %v3398, 48
  %v3552 = vpop.permute.xlu0 %3551
  %3553 = vrot.lane.b32.xlu0 %v3400, 48
  %v3554 = vpop.permute.xlu0 %3553
  %3555 = vrot.lane.b32.xlu0 %v3403, 48
  %v3556 = vpop.permute.xlu0 %3555
  %3557 = vrot.lane.b32.xlu0 %v3405, 48
  %v3558 = vpop.permute.xlu0 %3557
  %3559 = vrot.lane.b32.xlu0 %v3407, 48
  %v3560 = vpop.permute.xlu0 %3559
  %3561 = vrot.lane.b32.xlu0 %v3409, 48
  %v3562 = vpop.permute.xlu0 %3561
  %3563 = vrot.lane.b32.xlu0 %v3411, 48
  %v3564 = vpop.permute.xlu0 %3563
  %3565 = vrot.lane.b32.xlu0 %v3413, 48
  %v3566 = vpop.permute.xlu0 %3565
  %3567 = vrot.lane.b32.xlu0 %v3415, 48
  %v3568 = vpop.permute.xlu0 %3567
  %3569 = vrot.lane.b32.xlu0 %v3418, 48
  %v3570 = vpop.permute.xlu0 %3569
  %3571 = vrot.lane.b32.xlu0 %v3420, 48
  %v3572 = vpop.permute.xlu0 %3571
  %3573 = vrot.lane.b32.xlu0 %v3422, 48
  %v3574 = vpop.permute.xlu0 %3573
  %3575 = vrot.lane.b32.xlu0 %v3424, 48
  %v3576 = vpop.permute.xlu0 %3575
  %3577 = vrot.lane.b32.xlu0 %v3426, 48
  %v3578 = vpop.permute.xlu0 %3577
  %3579 = vrot.lane.b32.xlu0 %v3428, 48
  %v3580 = vpop.permute.xlu0 %3579
  %3581 = vrot.lane.b32.xlu0 %v3430, 48
  %v3582 = vpop.permute.xlu0 %3581
  %3583 = vrot.lane.b32.xlu0 %v3433, 48
  %v3584 = vpop.permute.xlu0 %3583
  %3585 = vrot.lane.b32.xlu0 %v3435, 48
  %v3586 = vpop.permute.xlu0 %3585
  %3587 = vrot.lane.b32.xlu0 %v3437, 48
  %v3588 = vpop.permute.xlu0 %3587
  %3589 = vrot.lane.b32.xlu0 %v3439, 48
  %v3590 = vpop.permute.xlu0 %3589
  %3591 = vrot.lane.b32.xlu0 %v3441, 48
  %v3592 = vpop.permute.xlu0 %3591
  %3593 = vrot.lane.b32.xlu0 %v3443, 48
  %v3594 = vpop.permute.xlu0 %3593
  %3595 = vrot.lane.b32.xlu0 %v3445, 48
  %v3596 = vpop.permute.xlu0 %3595
  %3597 = vrot.lane.b32.xlu0 %v3448, 48
  %v3598 = vpop.permute.xlu0 %3597
  %3599 = vrot.lane.b32.xlu0 %v3450, 48
  %v3600 = vpop.permute.xlu0 %3599
  %3601 = vrot.lane.b32.xlu0 %v3452, 48
  %v3602 = vpop.permute.xlu0 %3601
  %3603 = vrot.lane.b32.xlu0 %v3454, 48
  %v3604 = vpop.permute.xlu0 %3603
  %3605 = vrot.lane.b32.xlu0 %v3456, 48
  %v3606 = vpop.permute.xlu0 %3605
  %3607 = vrot.lane.b32.xlu0 %v3458, 48
  %v3608 = vpop.permute.xlu0 %3607
  %3609 = vrot.lane.b32.xlu0 %v3460, 48
  %v3610 = vpop.permute.xlu0 %3609
  %3611 = vrot.lane.b32.xlu0 %v3463, 48
  %v3612 = vpop.permute.xlu0 %3611
  %3613 = vrot.lane.b32.xlu0 %v3465, 48
  %v3614 = vpop.permute.xlu0 %3613
  %3615 = vrot.lane.b32.xlu0 %v3467, 48
  %v3616 = vpop.permute.xlu0 %3615
  %3617 = vrot.lane.b32.xlu0 %v3469, 48
  %v3618 = vpop.permute.xlu0 %3617
  %3619 = vrot.lane.b32.xlu0 %v3471, 48
  %v3620 = vpop.permute.xlu0 %3619
  %3621 = vrot.lane.b32.xlu0 %v3473, 48
  %v3622 = vpop.permute.xlu0 %3621
  %3623 = vrot.lane.b32.xlu0 %v3475, 48
  %v3624 = vpop.permute.xlu0 %3623
  %vm3674 = vcmask 458112
  %3675 = vst.msk [vmem:[#allocation4] sm:$0xff] %vm3674, %v3528
  %3676 = vst.msk [vmem:[#allocation4 + $0x8] sm:$0xff] %vm3674, %v3530
  %3677 = vst.msk [vmem:[#allocation4 + $0x10] sm:$0xff] %vm3674, %v3532
  %3678 = vst.msk [vmem:[#allocation4 + $0x18] sm:$0xff] %vm3674, %v3534
  %3679 = vst.msk [vmem:[#allocation4 + $0x20] sm:$0xff] %vm3674, %v3536
  %3680 = vst.msk [vmem:[#allocation4 + $0x28] sm:$0xff] %vm3674, %v3538
  %3681 = vst.msk [vmem:[#allocation4 + $0x30] sm:$0xff] %vm3674, %v3540
  %3682 = vst.msk [vmem:[#allocation4 + $0x38] sm:$0xff] %vm3674, %v3542
  %3683 = vst.msk [vmem:[#allocation4 + $0x40] sm:$0xff] %vm3674, %v3544
  %3684 = vst.msk [vmem:[#allocation4 + $0x48] sm:$0xff] %vm3674, %v3546
  %3685 = vst.msk [vmem:[#allocation4 + $0x50] sm:$0xff] %vm3674, %v3548
  %3686 = vst.msk [vmem:[#allocation4 + $0x58] sm:$0xff] %vm3674, %v3550
  %3687 = vst.msk [vmem:[#allocation4 + $0x60] sm:$0xff] %vm3674, %v3552
  %3688 = vst.msk [vmem:[#allocation4 + $0x68] sm:$0xff] %vm3674, %v3554
  %3689 = vst.msk [vmem:[#allocation4 + $0x70] sm:$0xff] %vm3674, %v3556
  %3690 = vst.msk [vmem:[#allocation4 + $0x78] sm:$0xff] %vm3674, %v3558
  %3691 = vst.msk [vmem:[#allocation4 + $0x80] sm:$0xff] %vm3674, %v3560
  %3692 = vst.msk [vmem:[#allocation4 + $0x88] sm:$0xff] %vm3674, %v3562
  %3693 = vst.msk [vmem:[#allocation4 + $0x90] sm:$0xff] %vm3674, %v3564
  %3694 = vst.msk [vmem:[#allocation4 + $0x98] sm:$0xff] %vm3674, %v3566
  %3695 = vst.msk [vmem:[#allocation4 + $0xa0] sm:$0xff] %vm3674, %v3568
  %3696 = vst.msk [vmem:[#allocation4 + $0xa8] sm:$0xff] %vm3674, %v3570
  %3697 = vst.msk [vmem:[#allocation4 + $0xb0] sm:$0xff] %vm3674, %v3572
  %3698 = vst.msk [vmem:[#allocation4 + $0xb8] sm:$0xff] %vm3674, %v3574
  %3699 = vst.msk [vmem:[#allocation4 + $0xc0] sm:$0xff] %vm3674, %v3576
  %3700 = vst.msk [vmem:[#allocation4 + $0xc8] sm:$0xff] %vm3674, %v3578
  %3701 = vst.msk [vmem:[#allocation4 + $0xd0] sm:$0xff] %vm3674, %v3580
  %3702 = vst.msk [vmem:[#allocation4 + $0xd8] sm:$0xff] %vm3674, %v3582
  %3703 = vst.msk [vmem:[#allocation4 + $0xe0] sm:$0xff] %vm3674, %v3584
  %3704 = vst.msk [vmem:[#allocation4 + $0xe8] sm:$0xff] %vm3674, %v3586
  %3705 = vst.msk [vmem:[#allocation4 + $0xf0] sm:$0xff] %vm3674, %v3588
  %3706 = vst.msk [vmem:[#allocation4 + $0xf8] sm:$0xff] %vm3674, %v3590
  %3707 = vst.msk [vmem:[#allocation4 + $0x100] sm:$0xff] %vm3674, %v3592
  %3708 = vst.msk [vmem:[#allocation4 + $0x108] sm:$0xff] %vm3674, %v3594
  %3709 = vst.msk [vmem:[#allocation4 + $0x110] sm:$0xff] %vm3674, %v3596
  %3710 = vst.msk [vmem:[#allocation4 + $0x118] sm:$0xff] %vm3674, %v3598
  %3711 = vst.msk [vmem:[#allocation4 + $0x120] sm:$0xff] %vm3674, %v3600
  %3712 = vst.msk [vmem:[#allocation4 + $0x128] sm:$0xff] %vm3674, %v3602
  %3713 = vst.msk [vmem:[#allocation4 + $0x130] sm:$0xff] %vm3674, %v3604
  %3714 = vst.msk [vmem:[#allocation4 + $0x138] sm:$0xff] %vm3674, %v3606
  %3715 = vst.msk [vmem:[#allocation4 + $0x140] sm:$0xff] %vm3674, %v3608
  %3716 = vst.msk [vmem:[#allocation4 + $0x148] sm:$0xff] %vm3674, %v3610
  %3717 = vst.msk [vmem:[#allocation4 + $0x150] sm:$0xff] %vm3674, %v3612
  %3718 = vst.msk [vmem:[#allocation4 + $0x158] sm:$0xff] %vm3674, %v3614
  %3719 = vst.msk [vmem:[#allocation4 + $0x160] sm:$0xff] %vm3674, %v3616
  %3720 = vst.msk [vmem:[#allocation4 + $0x168] sm:$0xff] %vm3674, %v3618
  %3721 = vst.msk [vmem:[#allocation4 + $0x170] sm:$0xff] %vm3674, %v3620
  %3722 = vst.msk [vmem:[#allocation4 + $0x178] sm:$0xff] %vm3674, %v3622
  %3723 = vst.msk [vmem:[#allocation4 + $0x180] sm:$0xff] %vm3674, %v3624
  %3773 = vrot.lane.b32.xlu0 %v3374, 56
  %v3774 = vpop.permute.xlu0 %3773
  %3775 = vrot.lane.b32.xlu0 %v3376, 56
  %v3776 = vpop.permute.xlu0 %3775
  %3777 = vrot.lane.b32.xlu0 %v3378, 56
  %v3778 = vpop.permute.xlu0 %3777
  %3779 = vrot.lane.b32.xlu0 %v3380, 56
  %v3780 = vpop.permute.xlu0 %3779
  %3781 = vrot.lane.b32.xlu0 %v3382, 56
  %v3782 = vpop.permute.xlu0 %3781
  %3783 = vrot.lane.b32.xlu0 %v3384, 56
  %v3784 = vpop.permute.xlu0 %3783
  %3785 = vrot.lane.b32.xlu0 %v3386, 56
  %v3786 = vpop.permute.xlu0 %3785
  %3787 = vrot.lane.b32.xlu0 %v3389, 56
  %v3788 = vpop.permute.xlu0 %3787
  %3789 = vrot.lane.b32.xlu0 %v3391, 56
  %v3790 = vpop.permute.xlu0 %3789
  %3791 = vrot.lane.b32.xlu0 %v3393, 56
  %v3792 = vpop.permute.xlu0 %3791
  %3793 = vrot.lane.b32.xlu0 %v3395, 56
  %v3794 = vpop.permute.xlu0 %3793
  %3795 = vrot.lane.b32.xlu0 %v3397, 56
  %v3796 = vpop.permute.xlu0 %3795
  %3797 = vrot.lane.b32.xlu0 %v3399, 56
  %v3798 = vpop.permute.xlu0 %3797
  %3799 = vrot.lane.b32.xlu0 %v3401, 56
  %v3800 = vpop.permute.xlu0 %3799
  %3801 = vrot.lane.b32.xlu0 %v3404, 56
  %v3802 = vpop.permute.xlu0 %3801
  %3803 = vrot.lane.b32.xlu0 %v3406, 56
  %v3804 = vpop.permute.xlu0 %3803
  %3805 = vrot.lane.b32.xlu0 %v3408, 56
  %v3806 = vpop.permute.xlu0 %3805
  %3807 = vrot.lane.b32.xlu0 %v3410, 56
  %v3808 = vpop.permute.xlu0 %3807
  %3809 = vrot.lane.b32.xlu0 %v3412, 56
  %v3810 = vpop.permute.xlu0 %3809
  %3811 = vrot.lane.b32.xlu0 %v3414, 56
  %v3812 = vpop.permute.xlu0 %3811
  %3813 = vrot.lane.b32.xlu0 %v3416, 56
  %v3814 = vpop.permute.xlu0 %3813
  %3815 = vrot.lane.b32.xlu0 %v3419, 56
  %v3816 = vpop.permute.xlu0 %3815
  %3817 = vrot.lane.b32.xlu0 %v3421, 56
  %v3818 = vpop.permute.xlu0 %3817
  %3819 = vrot.lane.b32.xlu0 %v3423, 56
  %v3820 = vpop.permute.xlu0 %3819
  %3821 = vrot.lane.b32.xlu0 %v3425, 56
  %v3822 = vpop.permute.xlu0 %3821
  %3823 = vrot.lane.b32.xlu0 %v3427, 56
  %v3824 = vpop.permute.xlu0 %3823
  %3825 = vrot.lane.b32.xlu0 %v3429, 56
  %v3826 = vpop.permute.xlu0 %3825
  %3827 = vrot.lane.b32.xlu0 %v3431, 56
  %v3828 = vpop.permute.xlu0 %3827
  %3829 = vrot.lane.b32.xlu0 %v3434, 56
  %v3830 = vpop.permute.xlu0 %3829
  %3831 = vrot.lane.b32.xlu0 %v3436, 56
  %v3832 = vpop.permute.xlu0 %3831
  %3833 = vrot.lane.b32.xlu0 %v3438, 56
  %v3834 = vpop.permute.xlu0 %3833
  %3835 = vrot.lane.b32.xlu0 %v3440, 56
  %v3836 = vpop.permute.xlu0 %3835
  %3837 = vrot.lane.b32.xlu0 %v3442, 56
  %v3838 = vpop.permute.xlu0 %3837
  %3839 = vrot.lane.b32.xlu0 %v3444, 56
  %v3840 = vpop.permute.xlu0 %3839
  %3841 = vrot.lane.b32.xlu0 %v3446, 56
  %v3842 = vpop.permute.xlu0 %3841
  %3843 = vrot.lane.b32.xlu0 %v3449, 56
  %v3844 = vpop.permute.xlu0 %3843
  %3845 = vrot.lane.b32.xlu0 %v3451, 56
  %v3846 = vpop.permute.xlu0 %3845
  %3847 = vrot.lane.b32.xlu0 %v3453, 56
  %v3848 = vpop.permute.xlu0 %3847
  %3849 = vrot.lane.b32.xlu0 %v3455, 56
  %v3850 = vpop.permute.xlu0 %3849
  %3851 = vrot.lane.b32.xlu0 %v3457, 56
  %v3852 = vpop.permute.xlu0 %3851
  %3853 = vrot.lane.b32.xlu0 %v3459, 56
  %v3854 = vpop.permute.xlu0 %3853
  %3855 = vrot.lane.b32.xlu0 %v3461, 56
  %v3856 = vpop.permute.xlu0 %3855
  %3857 = vrot.lane.b32.xlu0 %v3464, 56
  %v3858 = vpop.permute.xlu0 %3857
  %3859 = vrot.lane.b32.xlu0 %v3466, 56
  %v3860 = vpop.permute.xlu0 %3859
  %3861 = vrot.lane.b32.xlu0 %v3468, 56
  %v3862 = vpop.permute.xlu0 %3861
  %3863 = vrot.lane.b32.xlu0 %v3470, 56
  %v3864 = vpop.permute.xlu0 %3863
  %3865 = vrot.lane.b32.xlu0 %v3472, 56
  %v3866 = vpop.permute.xlu0 %3865
  %3867 = vrot.lane.b32.xlu0 %v3474, 56
  %v3868 = vpop.permute.xlu0 %3867
  %3869 = vrot.lane.b32.xlu0 %v3476, 56
  %v3870 = vpop.permute.xlu0 %3869
  %vm3920 = vcmask 523712
  %3921 = vst.msk [vmem:[#allocation4] sm:$0xff] %vm3920, %v3774
  %3922 = vst.msk [vmem:[#allocation4 + $0x8] sm:$0xff] %vm3920, %v3776
  %3923 = vst.msk [vmem:[#allocation4 + $0x10] sm:$0xff] %vm3920, %v3778
  %3924 = vst.msk [vmem:[#allocation4 + $0x18] sm:$0xff] %vm3920, %v3780
  %3925 = vst.msk [vmem:[#allocation4 + $0x20] sm:$0xff] %vm3920, %v3782
  %3926 = vst.msk [vmem:[#allocation4 + $0x28] sm:$0xff] %vm3920, %v3784
  %3927 = vst.msk [vmem:[#allocation4 + $0x30] sm:$0xff] %vm3920, %v3786
  %3928 = vst.msk [vmem:[#allocation4 + $0x38] sm:$0xff] %vm3920, %v3788
  %3929 = vst.msk [vmem:[#allocation4 + $0x40] sm:$0xff] %vm3920, %v3790
  %3930 = vst.msk [vmem:[#allocation4 + $0x48] sm:$0xff] %vm3920, %v3792
  %3931 = vst.msk [vmem:[#allocation4 + $0x50] sm:$0xff] %vm3920, %v3794
  %3932 = vst.msk [vmem:[#allocation4 + $0x58] sm:$0xff] %vm3920, %v3796
  %3933 = vst.msk [vmem:[#allocation4 + $0x60] sm:$0xff] %vm3920, %v3798
  %3934 = vst.msk [vmem:[#allocation4 + $0x68] sm:$0xff] %vm3920, %v3800
  %3935 = vst.msk [vmem:[#allocation4 + $0x70] sm:$0xff] %vm3920, %v3802
  %3936 = vst.msk [vmem:[#allocation4 + $0x78] sm:$0xff] %vm3920, %v3804
  %3937 = vst.msk [vmem:[#allocation4 + $0x80] sm:$0xff] %vm3920, %v3806
  %3938 = vst.msk [vmem:[#allocation4 + $0x88] sm:$0xff] %vm3920, %v3808
  %3939 = vst.msk [vmem:[#allocation4 + $0x90] sm:$0xff] %vm3920, %v3810
  %3940 = vst.msk [vmem:[#allocation4 + $0x98] sm:$0xff] %vm3920, %v3812
  %3941 = vst.msk [vmem:[#allocation4 + $0xa0] sm:$0xff] %vm3920, %v3814
  %3942 = vst.msk [vmem:[#allocation4 + $0xa8] sm:$0xff] %vm3920, %v3816
  %3943 = vst.msk [vmem:[#allocation4 + $0xb0] sm:$0xff] %vm3920, %v3818
  %3944 = vst.msk [vmem:[#allocation4 + $0xb8] sm:$0xff] %vm3920, %v3820
  %3945 = vst.msk [vmem:[#allocation4 + $0xc0] sm:$0xff] %vm3920, %v3822
  %3946 = vst.msk [vmem:[#allocation4 + $0xc8] sm:$0xff] %vm3920, %v3824
  %3947 = vst.msk [vmem:[#allocation4 + $0xd0] sm:$0xff] %vm3920, %v3826
  %3948 = vst.msk [vmem:[#allocation4 + $0xd8] sm:$0xff] %vm3920, %v3828
  %3949 = vst.msk [vmem:[#allocation4 + $0xe0] sm:$0xff] %vm3920, %v3830
  %3950 = vst.msk [vmem:[#allocation4 + $0xe8] sm:$0xff] %vm3920, %v3832
  %3951 = vst.msk [vmem:[#allocation4 + $0xf0] sm:$0xff] %vm3920, %v3834
  %3952 = vst.msk [vmem:[#allocation4 + $0xf8] sm:$0xff] %vm3920, %v3836
  %3953 = vst.msk [vmem:[#allocation4 + $0x100] sm:$0xff] %vm3920, %v3838
  %3954 = vst.msk [vmem:[#allocation4 + $0x108] sm:$0xff] %vm3920, %v3840
  %3955 = vst.msk [vmem:[#allocation4 + $0x110] sm:$0xff] %vm3920, %v3842
  %3956 = vst.msk [vmem:[#allocation4 + $0x118] sm:$0xff] %vm3920, %v3844
  %3957 = vst.msk [vmem:[#allocation4 + $0x120] sm:$0xff] %vm3920, %v3846
  %3958 = vst.msk [vmem:[#allocation4 + $0x128] sm:$0xff] %vm3920, %v3848
  %3959 = vst.msk [vmem:[#allocation4 + $0x130] sm:$0xff] %vm3920, %v3850
  %3960 = vst.msk [vmem:[#allocation4 + $0x138] sm:$0xff] %vm3920, %v3852
  %3961 = vst.msk [vmem:[#allocation4 + $0x140] sm:$0xff] %vm3920, %v3854
  %3962 = vst.msk [vmem:[#allocation4 + $0x148] sm:$0xff] %vm3920, %v3856
  %3963 = vst.msk [vmem:[#allocation4 + $0x150] sm:$0xff] %vm3920, %v3858
  %3964 = vst.msk [vmem:[#allocation4 + $0x158] sm:$0xff] %vm3920, %v3860
  %3965 = vst.msk [vmem:[#allocation4 + $0x160] sm:$0xff] %vm3920, %v3862
  %3966 = vst.msk [vmem:[#allocation4 + $0x168] sm:$0xff] %vm3920, %v3864
  %3967 = vst.msk [vmem:[#allocation4 + $0x170] sm:$0xff] %vm3920, %v3866
  %3968 = vst.msk [vmem:[#allocation4 + $0x178] sm:$0xff] %vm3920, %v3868
  %3969 = vst.msk [vmem:[#allocation4 + $0x180] sm:$0xff] %vm3920, %v3870
  %3977 = vrot.lane.b32.xlu0 %v3375, 64
  %v3978 = vpop.permute.xlu0 %3977
  %3979 = vrot.lane.b32.xlu0 %v3377, 64
  %v3980 = vpop.permute.xlu0 %3979
  %3981 = vrot.lane.b32.xlu0 %v3379, 64
  %v3982 = vpop.permute.xlu0 %3981
  %3983 = vrot.lane.b32.xlu0 %v3381, 64
  %v3984 = vpop.permute.xlu0 %3983
  %3985 = vrot.lane.b32.xlu0 %v3383, 64
  %v3986 = vpop.permute.xlu0 %3985
  %3987 = vrot.lane.b32.xlu0 %v3385, 64
  %v3988 = vpop.permute.xlu0 %3987
  %3989 = vrot.lane.b32.xlu0 %v3387, 64
  %v3990 = vpop.permute.xlu0 %3989
  %3991 = vrot.lane.b32.xlu0 %v3390, 64
  %v3992 = vpop.permute.xlu0 %3991
  %3993 = vrot.lane.b32.xlu0 %v3392, 64
  %v3994 = vpop.permute.xlu0 %3993
  %3995 = vrot.lane.b32.xlu0 %v3394, 64
  %v3996 = vpop.permute.xlu0 %3995
  %3997 = vrot.lane.b32.xlu0 %v3396, 64
  %v3998 = vpop.permute.xlu0 %3997
  %3999 = vrot.lane.b32.xlu0 %v3398, 64
  %v4000 = vpop.permute.xlu0 %3999
  %4001 = vrot.lane.b32.xlu0 %v3400, 64
  %v4002 = vpop.permute.xlu0 %4001
  %4003 = vrot.lane.b32.xlu0 %v3402, 64
  %v4004 = vpop.permute.xlu0 %4003
  %4005 = vrot.lane.b32.xlu0 %v3405, 64
  %v4006 = vpop.permute.xlu0 %4005
  %4007 = vrot.lane.b32.xlu0 %v3407, 64
  %v4008 = vpop.permute.xlu0 %4007
  %4009 = vrot.lane.b32.xlu0 %v3409, 64
  %v4010 = vpop.permute.xlu0 %4009
  %4011 = vrot.lane.b32.xlu0 %v3411, 64
  %v4012 = vpop.permute.xlu0 %4011
  %4013 = vrot.lane.b32.xlu0 %v3413, 64
  %v4014 = vpop.permute.xlu0 %4013
  %4015 = vrot.lane.b32.xlu0 %v3415, 64
  %v4016 = vpop.permute.xlu0 %4015
  %4017 = vrot.lane.b32.xlu0 %v3417, 64
  %v4018 = vpop.permute.xlu0 %4017
  %4019 = vrot.lane.b32.xlu0 %v3420, 64
  %v4020 = vpop.permute.xlu0 %4019
  %4021 = vrot.lane.b32.xlu0 %v3422, 64
  %v4022 = vpop.permute.xlu0 %4021
  %4023 = vrot.lane.b32.xlu0 %v3424, 64
  %v4024 = vpop.permute.xlu0 %4023
  %4025 = vrot.lane.b32.xlu0 %v3426, 64
  %v4026 = vpop.permute.xlu0 %4025
  %4027 = vrot.lane.b32.xlu0 %v3428, 64
  %v4028 = vpop.permute.xlu0 %4027
  %4029 = vrot.lane.b32.xlu0 %v3430, 64
  %v4030 = vpop.permute.xlu0 %4029
  %4031 = vrot.lane.b32.xlu0 %v3432, 64
  %v4032 = vpop.permute.xlu0 %4031
  %4033 = vrot.lane.b32.xlu0 %v3435, 64
  %v4034 = vpop.permute.xlu0 %4033
  %4035 = vrot.lane.b32.xlu0 %v3437, 64
  %v4036 = vpop.permute.xlu0 %4035
  %4037 = vrot.lane.b32.xlu0 %v3439, 64
  %v4038 = vpop.permute.xlu0 %4037
  %4039 = vrot.lane.b32.xlu0 %v3441, 64
  %v4040 = vpop.permute.xlu0 %4039
  %4041 = vrot.lane.b32.xlu0 %v3443, 64
  %v4042 = vpop.permute.xlu0 %4041
  %4043 = vrot.lane.b32.xlu0 %v3445, 64
  %v4044 = vpop.permute.xlu0 %4043
  %4045 = vrot.lane.b32.xlu0 %v3447, 64
  %v4046 = vpop.permute.xlu0 %4045
  %4047 = vrot.lane.b32.xlu0 %v3450, 64
  %v4048 = vpop.permute.xlu0 %4047
  %4049 = vrot.lane.b32.xlu0 %v3452, 64
  %v4050 = vpop.permute.xlu0 %4049
  %4051 = vrot.lane.b32.xlu0 %v3454, 64
  %v4052 = vpop.permute.xlu0 %4051
  %4053 = vrot.lane.b32.xlu0 %v3456, 64
  %v4054 = vpop.permute.xlu0 %4053
  %4055 = vrot.lane.b32.xlu0 %v3458, 64
  %v4056 = vpop.permute.xlu0 %4055
  %4057 = vrot.lane.b32.xlu0 %v3460, 64
  %v4058 = vpop.permute.xlu0 %4057
  %4059 = vrot.lane.b32.xlu0 %v3462, 64
  %v4060 = vpop.permute.xlu0 %4059
  %4061 = vrot.lane.b32.xlu0 %v3465, 64
  %v4062 = vpop.permute.xlu0 %4061
  %4063 = vrot.lane.b32.xlu0 %v3467, 64
  %v4064 = vpop.permute.xlu0 %4063
  %4065 = vrot.lane.b32.xlu0 %v3469, 64
  %v4066 = vpop.permute.xlu0 %4065
  %4067 = vrot.lane.b32.xlu0 %v3471, 64
  %v4068 = vpop.permute.xlu0 %4067
  %4069 = vrot.lane.b32.xlu0 %v3473, 64
  %v4070 = vpop.permute.xlu0 %4069
  %4071 = vrot.lane.b32.xlu0 %v3475, 64
  %v4072 = vpop.permute.xlu0 %4071
  %4073 = vrot.lane.b32.xlu0 %v3477, 64
  %v4074 = vpop.permute.xlu0 %4073
  %vm4124 = vcmask 589312
  %4125 = vst.msk [vmem:[#allocation4] sm:$0xff] %vm4124, %v3978
  %4126 = vst.msk [vmem:[#allocation4 + $0x8] sm:$0xff] %vm4124, %v3980
  %4127 = vst.msk [vmem:[#allocation4 + $0x10] sm:$0xff] %vm4124, %v3982
  %4128 = vst.msk [vmem:[#allocation4 + $0x18] sm:$0xff] %vm4124, %v3984
  %4129 = vst.msk [vmem:[#allocation4 + $0x20] sm:$0xff] %vm4124, %v3986
  %4130 = vst.msk [vmem:[#allocation4 + $0x28] sm:$0xff] %vm4124, %v3988
  %4131 = vst.msk [vmem:[#allocation4 + $0x30] sm:$0xff] %vm4124, %v3990
  %4132 = vst.msk [vmem:[#allocation4 + $0x38] sm:$0xff] %vm4124, %v3992
  %4133 = vst.msk [vmem:[#allocation4 + $0x40] sm:$0xff] %vm4124, %v3994
  %4134 = vst.msk [vmem:[#allocation4 + $0x48] sm:$0xff] %vm4124, %v3996
  %4135 = vst.msk [vmem:[#allocation4 + $0x50] sm:$0xff] %vm4124, %v3998
  %4136 = vst.msk [vmem:[#allocation4 + $0x58] sm:$0xff] %vm4124, %v4000
  %4137 = vst.msk [vmem:[#allocation4 + $0x60] sm:$0xff] %vm4124, %v4002
  %4138 = vst.msk [vmem:[#allocation4 + $0x68] sm:$0xff] %vm4124, %v4004
  %4139 = vst.msk [vmem:[#allocation4 + $0x70] sm:$0xff] %vm4124, %v4006
  %4140 = vst.msk [vmem:[#allocation4 + $0x78] sm:$0xff] %vm4124, %v4008
  %4141 = vst.msk [vmem:[#allocation4 + $0x80] sm:$0xff] %vm4124, %v4010
  %4142 = vst.msk [vmem:[#allocation4 + $0x88] sm:$0xff] %vm4124, %v4012
  %4143 = vst.msk [vmem:[#allocation4 + $0x90] sm:$0xff] %vm4124, %v4014
  %4144 = vst.msk [vmem:[#allocation4 + $0x98] sm:$0xff] %vm4124, %v4016
  %4145 = vst.msk [vmem:[#allocation4 + $0xa0] sm:$0xff] %vm4124, %v4018
  %4146 = vst.msk [vmem:[#allocation4 + $0xa8] sm:$0xff] %vm4124, %v4020
  %4147 = vst.msk [vmem:[#allocation4 + $0xb0] sm:$0xff] %vm4124, %v4022
  %4148 = vst.msk [vmem:[#allocation4 + $0xb8] sm:$0xff] %vm4124, %v4024
  %4149 = vst.msk [vmem:[#allocation4 + $0xc0] sm:$0xff] %vm4124, %v4026
  %4150 = vst.msk [vmem:[#allocation4 + $0xc8] sm:$0xff] %vm4124, %v4028
  %4151 = vst.msk [vmem:[#allocation4 + $0xd0] sm:$0xff] %vm4124, %v4030
  %4152 = vst.msk [vmem:[#allocation4 + $0xd8] sm:$0xff] %vm4124, %v4032
  %4153 = vst.msk [vmem:[#allocation4 + $0xe0] sm:$0xff] %vm4124, %v4034
  %4154 = vst.msk [vmem:[#allocation4 + $0xe8] sm:$0xff] %vm4124, %v4036
  %4155 = vst.msk [vmem:[#allocation4 + $0xf0] sm:$0xff] %vm4124, %v4038
  %4156 = vst.msk [vmem:[#allocation4 + $0xf8] sm:$0xff] %vm4124, %v4040
  %4157 = vst.msk [vmem:[#allocation4 + $0x100] sm:$0xff] %vm4124, %v4042
  %4158 = vst.msk [vmem:[#allocation4 + $0x108] sm:$0xff] %vm4124, %v4044
  %4159 = vst.msk [vmem:[#allocation4 + $0x110] sm:$0xff] %vm4124, %v4046
  %4160 = vst.msk [vmem:[#allocation4 + $0x118] sm:$0xff] %vm4124, %v4048
  %4161 = vst.msk [vmem:[#allocation4 + $0x120] sm:$0xff] %vm4124, %v4050
  %4162 = vst.msk [vmem:[#allocation4 + $0x128] sm:$0xff] %vm4124, %v4052
  %4163 = vst.msk [vmem:[#allocation4 + $0x130] sm:$0xff] %vm4124, %v4054
  %4164 = vst.msk [vmem:[#allocation4 + $0x138] sm:$0xff] %vm4124, %v4056
  %4165 = vst.msk [vmem:[#allocation4 + $0x140] sm:$0xff] %vm4124, %v4058
  %4166 = vst.msk [vmem:[#allocation4 + $0x148] sm:$0xff] %vm4124, %v4060
  %4167 = vst.msk [vmem:[#allocation4 + $0x150] sm:$0xff] %vm4124, %v4062
  %4168 = vst.msk [vmem:[#allocation4 + $0x158] sm:$0xff] %vm4124, %v4064
  %4169 = vst.msk [vmem:[#allocation4 + $0x160] sm:$0xff] %vm4124, %v4066
  %4170 = vst.msk [vmem:[#allocation4 + $0x168] sm:$0xff] %vm4124, %v4068
  %4171 = vst.msk [vmem:[#allocation4 + $0x170] sm:$0xff] %vm4124, %v4070
  %4172 = vst.msk [vmem:[#allocation4 + $0x178] sm:$0xff] %vm4124, %v4072
  %4173 = vst.msk [vmem:[#allocation4 + $0x180] sm:$0xff] %vm4124, %v4074
  %v4174 = vld [vmem:[#allocation4] sm:$0xff]
  %v4175 = vld [vmem:[#allocation4 + $0x8] sm:$0xff]
  %v4176 = vld [vmem:[#allocation4 + $0x10] sm:$0xff]
  %v4177 = vld [vmem:[#allocation4 + $0x18] sm:$0xff]
  %v4178 = vld [vmem:[#allocation4 + $0x20] sm:$0xff]
  %v4179 = vld [vmem:[#allocation4 + $0x28] sm:$0xff]
  %v4180 = vld [vmem:[#allocation4 + $0x30] sm:$0xff]
  %v4181 = vld [vmem:[#allocation4 + $0x38] sm:$0xff]
  %v4182 = vld [vmem:[#allocation4 + $0x40] sm:$0xff]
  %v4183 = vld [vmem:[#allocation4 + $0x48] sm:$0xff]
  %v4184 = vld [vmem:[#allocation4 + $0x50] sm:$0xff]
  %v4185 = vld [vmem:[#allocation4 + $0x58] sm:$0xff]
  %v4186 = vld [vmem:[#allocation4 + $0x60] sm:$0xff]
  %v4187 = vld [vmem:[#allocation4 + $0x68] sm:$0xff]
  %v4188 = vld [vmem:[#allocation4 + $0x70] sm:$0xff]
  %v4189 = vld [vmem:[#allocation4 + $0x78] sm:$0xff]
  %v4190 = vld [vmem:[#allocation4 + $0x80] sm:$0xff]
  %v4191 = vld [vmem:[#allocation4 + $0x88] sm:$0xff]
  %v4192 = vld [vmem:[#allocation4 + $0x90] sm:$0xff]
  %v4193 = vld [vmem:[#allocation4 + $0x98] sm:$0xff]
  %v4194 = vld [vmem:[#allocation4 + $0xa0] sm:$0xff]
  %v4195 = vld [vmem:[#allocation4 + $0xa8] sm:$0xff]
  %v4196 = vld [vmem:[#allocation4 + $0xb0] sm:$0xff]
  %v4197 = vld [vmem:[#allocation4 + $0xb8] sm:$0xff]
  %v4198 = vld [vmem:[#allocation4 + $0xc0] sm:$0xff]
  %v4199 = vld [vmem:[#allocation4 + $0xc8] sm:$0xff]
  %v4200 = vld [vmem:[#allocation4 + $0xd0] sm:$0xff]
  %v4201 = vld [vmem:[#allocation4 + $0xd8] sm:$0xff]
  %v4202 = vld [vmem:[#allocation4 + $0xe0] sm:$0xff]
  %v4203 = vld [vmem:[#allocation4 + $0xe8] sm:$0xff]
  %v4204 = vld [vmem:[#allocation4 + $0xf0] sm:$0xff]
  %v4205 = vld [vmem:[#allocation4 + $0xf8] sm:$0xff]
  %v4206 = vld [vmem:[#allocation4 + $0x100] sm:$0xff]
  %v4207 = vld [vmem:[#allocation4 + $0x108] sm:$0xff]
  %v4208 = vld [vmem:[#allocation4 + $0x110] sm:$0xff]
  %v4209 = vld [vmem:[#allocation4 + $0x118] sm:$0xff]
  %v4210 = vld [vmem:[#allocation4 + $0x120] sm:$0xff]
  %v4211 = vld [vmem:[#allocation4 + $0x128] sm:$0xff]
  %v4212 = vld [vmem:[#allocation4 + $0x130] sm:$0xff]
  %v4213 = vld [vmem:[#allocation4 + $0x138] sm:$0xff]
  %v4214 = vld [vmem:[#allocation4 + $0x140] sm:$0xff]
  %v4215 = vld [vmem:[#allocation4 + $0x148] sm:$0xff]
  %v4216 = vld [vmem:[#allocation4 + $0x150] sm:$0xff]
  %v4217 = vld [vmem:[#allocation4 + $0x158] sm:$0xff]
  %v4218 = vld [vmem:[#allocation4 + $0x160] sm:$0xff]
  %v4219 = vld [vmem:[#allocation4 + $0x168] sm:$0xff]
  %v4220 = vld [vmem:[#allocation4 + $0x170] sm:$0xff]
  %v4221 = vld [vmem:[#allocation4 + $0x178] sm:$0xff]
  %v4222 = vld [vmem:[#allocation4 + $0x180] sm:$0xff]
  %v4223 = vpack.c.bf16 %v4175, %v4174
  %v4224 = vpack.c.bf16 %v4177, %v4176
  %v4225 = vpack.c.bf16 %v4179, %v4178
  %v4226 = vpack.c.bf16 %v4181, %v4180
  %v4227 = vpack.c.bf16 %v4183, %v4182
  %v4228 = vpack.c.bf16 %v4185, %v4184
  %v4229 = vpack.c.bf16 %v4187, %v4186
  %v4230 = vpack.c.bf16 %v4189, %v4188
  %v4231 = vpack.c.bf16 %v4191, %v4190
  %v4232 = vpack.c.bf16 %v4193, %v4192
  %v4233 = vpack.c.bf16 %v4195, %v4194
  %v4234 = vpack.c.bf16 %v4197, %v4196
  %v4235 = vpack.c.bf16 %v4199, %v4198
  %v4236 = vpack.c.bf16 %v4201, %v4200
  %v4237 = vpack.c.bf16 %v4203, %v4202
  %v4238 = vpack.c.bf16 %v4205, %v4204
  %v4239 = vpack.c.bf16 %v4207, %v4206
  %v4240 = vpack.c.bf16 %v4209, %v4208
  %v4241 = vpack.c.bf16 %v4211, %v4210
  %v4242 = vpack.c.bf16 %v4213, %v4212
  %v4243 = vpack.c.bf16 %v4215, %v4214
  %v4244 = vpack.c.bf16 %v4217, %v4216
  %v4245 = vpack.c.bf16 %v4219, %v4218
  %v4246 = vpack.c.bf16 %v4221, %v4220
  %v4247 = vpack.c.bf16 %v4222, %v4222
  %v4248 = vld [vmem:[%s3] sm:$0xf]
  %v4249 = vld [vmem:[%s3 + $0x4] sm:$0xf]
  %v4250 = vld [vmem:[%s3 + $0x8] sm:$0xf]
  %v4251 = vld [vmem:[%s3 + $0xc] sm:$0xf]
  %v4252 = vld [vmem:[%s3 + $0x10] sm:$0xf]
  %v4253 = vld [vmem:[%s3 + $0x14] sm:$0xf]
  %v4254 = vld [vmem:[%s3 + $0x18] sm:$0xf]
  %v4255 = vld [vmem:[%s3 + $0x1c] sm:$0xf]
  %v4256 = vld [vmem:[%s3 + $0x20] sm:$0xf]
  %v4257 = vld [vmem:[%s4] sm:$0x1]
  %v4259 = vlaneseq
  %v4260 = vshrl.u32 %v4259, 7
  %v4261 = vsub.s32 0, %v4260
  %v4262 = vrot.slane %v4257, %v4261
  %v4273 = vunpack.c.l.b16 %v4248
  %v4274 = vunpack.c.l.b16 %v4249
  %v4275 = vunpack.c.l.b16 %v4250
  %v4276 = vunpack.c.l.b16 %v4251
  %v4277 = vunpack.c.l.b16 %v4252
  %v4278 = vunpack.c.l.b16 %v4253
  %v4279 = vunpack.c.l.b16 %v4254
  %v4280 = vunpack.c.l.b16 %v4255
  %v4281 = vunpack.c.l.b16 %v4256
  %v4282 = vpack.c.b16 %v4274, %v4273
  %v4283 = vpack.c.b16 %v4276, %v4275
  %v4284 = vpack.c.b16 %v4278, %v4277
  %v4285 = vpack.c.b16 %v4280, %v4279
  %v4286 = vpack.c.b16 %v4281, %v4281
  %vm4291 = vcmask 588800
  %v4293 = vsel %vm4291, %v4223, 0
  %v4296 = vsel %vm4291, %v4224, 0
  %v4299 = vsel %vm4291, %v4225, 0
  %v4302 = vsel %vm4291, %v4226, 0
  %v4305 = vsel %vm4291, %v4227, 0
  %v4308 = vsel %vm4291, %v4228, 0
  %v4311 = vsel %vm4291, %v4229, 0
  %v4314 = vsel %vm4291, %v4230, 0
  %v4317 = vsel %vm4291, %v4231, 0
  %v4320 = vsel %vm4291, %v4232, 0
  %v4323 = vsel %vm4291, %v4233, 0
  %v4326 = vsel %vm4291, %v4234, 0
  %v4329 = vsel %vm4291, %v4235, 0
  %v4332 = vsel %vm4291, %v4236, 0
  %v4335 = vsel %vm4291, %v4237, 0
  %v4338 = vsel %vm4291, %v4238, 0
  %v4341 = vsel %vm4291, %v4239, 0
  %v4344 = vsel %vm4291, %v4240, 0
  %v4347 = vsel %vm4291, %v4241, 0
  %v4350 = vsel %vm4291, %v4242, 0
  %v4353 = vsel %vm4291, %v4243, 0
  %v4356 = vsel %vm4291, %v4244, 0
  %v4359 = vsel %vm4291, %v4245, 0
  %v4362 = vsel %vm4291, %v4246, 0
  %v4365 = vsel %vm4291, %v4247, 0
  %v4368 = vsel %vm644, %v4286, 0
  %4370 = vmatprep.subr.bf16.mxu0 0
  %4371 = vmatpush1.bf16.msra.mxu0 0
  %4372 = vmatprep.subr.bf16.mxu0 0
  %4373 = vmatpush1.bf16.msra.mxu0 0
  %4374 = vmatprep.subr.bf16.mxu0 0
  %4375 = vmatpush1.bf16.msra.mxu0 0
  %4376 = vmatprep.subr.bf16.mxu0 0
  %4377 = vmatpush1.bf16.msra.mxu0 %v4368
  %4378 = vmatprep.subr.bf16.mxu0 0
  %4379 = vmatpush1.bf16.msra.mxu0 %v4285
  %4380 = vmatprep.subr.bf16.mxu0 0
  %4381 = vmatpush1.bf16.msra.mxu0 %v4284
  %4382 = vmatprep.subr.bf16.mxu0 0
  %4383 = vmatpush1.bf16.msra.mxu0 %v4283
  %4384 = vmatprep.subr.bf16.mxu0 0
  %4385 = vmatpush1.bf16.msra.mxu0 %v4282
  %4386 = vmatprep.subr.bf16.mxu0 0
  %4387 = vmatpush2.bf16.msra.mxu0 0
  %4388 = vmatprep.subr.bf16.mxu0 0
  %4389 = vmatpush2.bf16.msra.mxu0 0
  %4390 = vmatprep.subr.bf16.mxu0 0
  %4391 = vmatpush2.bf16.msra.mxu0 0
  %4392 = vmatprep.subr.bf16.mxu0 0
  %4393 = vmatpush2.bf16.msra.mxu0 0
  %4394 = vmatprep.subr.bf16.mxu0 0
  %4395 = vmatpush2.bf16.msra.mxu0 0
  %4396 = vmatprep.subr.bf16.mxu0 0
  %4397 = vmatpush2.bf16.msra.mxu0 0
  %4398 = vmatprep.subr.bf16.mxu0 0
  %4399 = vmatpush2.bf16.msra.mxu0 0
  %4400 = vmatprep.subr.bf16.mxu0 0
  %4401 = vmatpush2.bf16.msra.mxu0 0
  %4402 = vmatprep.mubr.bf16.mxu0 0
  %4403 = vmatmul.mubr.bf16.gmra.mxu0 %v4293
  %v4404 = vpop.f32.mrf.mxu0
  %v4405 = vadd.f32 %v4262, %v4404
  %v4406 = vpop.f32.mrf.mxu0
  %v4407 = vpop.f32.mrf.mxu0
  %v4408 = vadd.f32 %v4262, %v4407
  %v4409 = vpop.f32.mrf.mxu0
  %4410 = vmatprep.mubr.bf16.mxu0 0
  %4411 = vmatmul.mubr.bf16.gmra.mxu0 %v4296
  %v4412 = vpop.f32.mrf.mxu0
  %v4413 = vadd.f32 %v4262, %v4412
  %v4414 = vpop.f32.mrf.mxu0
  %v4415 = vpop.f32.mrf.mxu0
  %v4416 = vadd.f32 %v4262, %v4415
  %v4417 = vpop.f32.mrf.mxu0
  %4418 = vmatprep.mubr.bf16.mxu0 0
  %4419 = vmatmul.mubr.bf16.gmra.mxu0 %v4299
  %v4420 = vpop.f32.mrf.mxu0
  %v4421 = vadd.f32 %v4262, %v4420
  %v4422 = vpop.f32.mrf.mxu0
  %v4423 = vpop.f32.mrf.mxu0
  %v4424 = vadd.f32 %v4262, %v4423
  %v4425 = vpop.f32.mrf.mxu0
  %4426 = vmatprep.mubr.bf16.mxu0 0
  %4427 = vmatmul.mubr.bf16.gmra.mxu0 %v4302
  %v4428 = vpop.f32.mrf.mxu0
  %v4429 = vadd.f32 %v4262, %v4428
  %v4430 = vpop.f32.mrf.mxu0
  %v4431 = vpop.f32.mrf.mxu0
  %v4432 = vadd.f32 %v4262, %v4431
  %v4433 = vpop.f32.mrf.mxu0
  %4434 = vmatprep.mubr.bf16.mxu0 0
  %4435 = vmatmul.mubr.bf16.gmra.mxu0 %v4305
  %v4436 = vpop.f32.mrf.mxu0
  %v4437 = vadd.f32 %v4262, %v4436
  %v4438 = vpop.f32.mrf.mxu0
  %v4439 = vpop.f32.mrf.mxu0
  %v4440 = vadd.f32 %v4262, %v4439
  %v4441 = vpop.f32.mrf.mxu0
  %4442 = vmatprep.mubr.bf16.mxu0 0
  %4443 = vmatmul.mubr.bf16.gmra.mxu0 %v4308
  %v4444 = vpop.f32.mrf.mxu0
  %v4445 = vadd.f32 %v4262, %v4444
  %v4446 = vpop.f32.mrf.mxu0
  %v4447 = vpop.f32.mrf.mxu0
  %v4448 = vadd.f32 %v4262, %v4447
  %v4449 = vpop.f32.mrf.mxu0
  %4450 = vmatprep.mubr.bf16.mxu0 0
  %4451 = vmatmul.mubr.bf16.gmra.mxu0 %v4311
  %v4452 = vpop.f32.mrf.mxu0
  %v4453 = vadd.f32 %v4262, %v4452
  %v4454 = vpop.f32.mrf.mxu0
  %v4455 = vpop.f32.mrf.mxu0
  %v4456 = vadd.f32 %v4262, %v4455
  %v4457 = vpop.f32.mrf.mxu0
  %4458 = vmatprep.mubr.bf16.mxu0 0
  %4459 = vmatmul.mubr.bf16.gmra.mxu0 %v4314
  %v4460 = vpop.f32.mrf.mxu0
  %v4461 = vadd.f32 %v4262, %v4460
  %v4462 = vpop.f32.mrf.mxu0
  %v4463 = vpop.f32.mrf.mxu0
  %v4464 = vadd.f32 %v4262, %v4463
  %v4465 = vpop.f32.mrf.mxu0
  %4466 = vmatprep.mubr.bf16.mxu0 0
  %4467 = vmatmul.mubr.bf16.gmra.mxu0 %v4317
  %v4468 = vpop.f32.mrf.mxu0
  %v4469 = vadd.f32 %v4262, %v4468
  %v4470 = vpop.f32.mrf.mxu0
  %v4471 = vpop.f32.mrf.mxu0
  %v4472 = vadd.f32 %v4262, %v4471
  %v4473 = vpop.f32.mrf.mxu0
  %4474 = vmatprep.mubr.bf16.mxu0 0
  %4475 = vmatmul.mubr.bf16.gmra.mxu0 %v4320
  %v4476 = vpop.f32.mrf.mxu0
  %v4477 = vadd.f32 %v4262, %v4476
  %v4478 = vpop.f32.mrf.mxu0
  %v4479 = vpop.f32.mrf.mxu0
  %v4480 = vadd.f32 %v4262, %v4479
  %v4481 = vpop.f32.mrf.mxu0
  %4482 = vmatprep.mubr.bf16.mxu0 0
  %4483 = vmatmul.mubr.bf16.gmra.mxu0 %v4323
  %v4484 = vpop.f32.mrf.mxu0
  %v4485 = vadd.f32 %v4262, %v4484
  %v4486 = vpop.f32.mrf.mxu0
  %v4487 = vpop.f32.mrf.mxu0
  %v4488 = vadd.f32 %v4262, %v4487
  %v4489 = vpop.f32.mrf.mxu0
  %4490 = vmatprep.mubr.bf16.mxu0 0
  %4491 = vmatmul.mubr.bf16.gmra.mxu0 %v4326
  %v4492 = vpop.f32.mrf.mxu0
  %v4493 = vadd.f32 %v4262, %v4492
  %v4494 = vpop.f32.mrf.mxu0
  %v4495 = vpop.f32.mrf.mxu0
  %v4496 = vadd.f32 %v4262, %v4495
  %v4497 = vpop.f32.mrf.mxu0
  %4498 = vmatprep.mubr.bf16.mxu0 0
  %4499 = vmatmul.mubr.bf16.gmra.mxu0 %v4329
  %v4500 = vpop.f32.mrf.mxu0
  %v4501 = vadd.f32 %v4262, %v4500
  %v4502 = vpop.f32.mrf.mxu0
  %v4503 = vpop.f32.mrf.mxu0
  %v4504 = vadd.f32 %v4262, %v4503
  %v4505 = vpop.f32.mrf.mxu0
  %4506 = vmatprep.mubr.bf16.mxu0 0
  %4507 = vmatmul.mubr.bf16.gmra.mxu0 %v4332
  %v4508 = vpop.f32.mrf.mxu0
  %v4509 = vadd.f32 %v4262, %v4508
  %v4510 = vpop.f32.mrf.mxu0
  %v4511 = vpop.f32.mrf.mxu0
  %v4512 = vadd.f32 %v4262, %v4511
  %v4513 = vpop.f32.mrf.mxu0
  %4514 = vmatprep.mubr.bf16.mxu0 0
  %4515 = vmatmul.mubr.bf16.gmra.mxu0 %v4335
  %v4516 = vpop.f32.mrf.mxu0
  %v4517 = vadd.f32 %v4262, %v4516
  %v4518 = vpop.f32.mrf.mxu0
  %v4519 = vpop.f32.mrf.mxu0
  %v4520 = vadd.f32 %v4262, %v4519
  %v4521 = vpop.f32.mrf.mxu0
  %4522 = vmatprep.mubr.bf16.mxu0 0
  %4523 = vmatmul.mubr.bf16.gmra.mxu0 %v4338
  %v4524 = vpop.f32.mrf.mxu0
  %v4525 = vadd.f32 %v4262, %v4524
  %v4526 = vpop.f32.mrf.mxu0
  %v4527 = vpop.f32.mrf.mxu0
  %v4528 = vadd.f32 %v4262, %v4527
  %v4529 = vpop.f32.mrf.mxu0
  %4530 = vmatprep.mubr.bf16.mxu0 0
  %4531 = vmatmul.mubr.bf16.gmra.mxu0 %v4341
  %v4532 = vpop.f32.mrf.mxu0
  %v4533 = vadd.f32 %v4262, %v4532
  %v4534 = vpop.f32.mrf.mxu0
  %v4535 = vpop.f32.mrf.mxu0
  %v4536 = vadd.f32 %v4262, %v4535
  %v4537 = vpop.f32.mrf.mxu0
  %4538 = vmatprep.mubr.bf16.mxu0 0
  %4539 = vmatmul.mubr.bf16.gmra.mxu0 %v4344
  %v4540 = vpop.f32.mrf.mxu0
  %v4541 = vadd.f32 %v4262, %v4540
  %v4542 = vpop.f32.mrf.mxu0
  %v4543 = vpop.f32.mrf.mxu0
  %v4544 = vadd.f32 %v4262, %v4543
  %v4545 = vpop.f32.mrf.mxu0
  %4546 = vmatprep.mubr.bf16.mxu0 0
  %4547 = vmatmul.mubr.bf16.gmra.mxu0 %v4347
  %v4548 = vpop.f32.mrf.mxu0
  %v4549 = vadd.f32 %v4262, %v4548
  %v4550 = vpop.f32.mrf.mxu0
  %v4551 = vpop.f32.mrf.mxu0
  %v4552 = vadd.f32 %v4262, %v4551
  %v4553 = vpop.f32.mrf.mxu0
  %4554 = vmatprep.mubr.bf16.mxu0 0
  %4555 = vmatmul.mubr.bf16.gmra.mxu0 %v4350
  %v4556 = vpop.f32.mrf.mxu0
  %v4557 = vadd.f32 %v4262, %v4556
  %v4558 = vpop.f32.mrf.mxu0
  %v4559 = vpop.f32.mrf.mxu0
  %v4560 = vadd.f32 %v4262, %v4559
  %v4561 = vpop.f32.mrf.mxu0
  %4562 = vmatprep.mubr.bf16.mxu0 0
  %4563 = vmatmul.mubr.bf16.gmra.mxu0 %v4353
  %v4564 = vpop.f32.mrf.mxu0
  %v4565 = vadd.f32 %v4262, %v4564
  %v4566 = vpop.f32.mrf.mxu0
  %v4567 = vpop.f32.mrf.mxu0
  %v4568 = vadd.f32 %v4262, %v4567
  %v4569 = vpop.f32.mrf.mxu0
  %4570 = vmatprep.mubr.bf16.mxu0 0
  %4571 = vmatmul.mubr.bf16.gmra.mxu0 %v4356
  %v4572 = vpop.f32.mrf.mxu0
  %v4573 = vadd.f32 %v4262, %v4572
  %v4574 = vpop.f32.mrf.mxu0
  %v4575 = vpop.f32.mrf.mxu0
  %v4576 = vadd.f32 %v4262, %v4575
  %v4577 = vpop.f32.mrf.mxu0
  %4578 = vmatprep.mubr.bf16.mxu0 0
  %4579 = vmatmul.mubr.bf16.gmra.mxu0 %v4359
  %v4580 = vpop.f32.mrf.mxu0
  %v4581 = vadd.f32 %v4262, %v4580
  %v4582 = vpop.f32.mrf.mxu0
  %v4583 = vpop.f32.mrf.mxu0
  %v4584 = vadd.f32 %v4262, %v4583
  %v4585 = vpop.f32.mrf.mxu0
  %4586 = vmatprep.mubr.bf16.mxu0 0
  %4587 = vmatmul.mubr.bf16.gmra.mxu0 %v4362
  %v4588 = vpop.f32.mrf.mxu0
  %v4589 = vadd.f32 %v4262, %v4588
  %v4590 = vpop.f32.mrf.mxu0
  %v4591 = vpop.f32.mrf.mxu0
  %v4592 = vadd.f32 %v4262, %v4591
  %v4593 = vpop.f32.mrf.mxu0
  %4594 = vmatprep.mubr.bf16.mxu0 0
  %4595 = vmatmul.mubr.bf16.gmra.mxu0 %v4365
  %v4596 = vpop.f32.mrf.mxu0
  %v4597 = vadd.f32 %v4262, %v4596
  %v4598 = vpop.f32.mrf.mxu0
  %v4599 = vpop.f32.mrf.mxu0
  %v4600 = vpop.f32.mrf.mxu0
  %4601 = vdwg.mxu0
  %v4602 = vmax.f32 %v4405, 0.0
  %v4603 = vmax.f32 %v4408, 0.0
  %v4604 = vmax.f32 %v4413, 0.0
  %v4605 = vmax.f32 %v4416, 0.0
  %v4606 = vmax.f32 %v4421, 0.0
  %v4607 = vmax.f32 %v4424, 0.0
  %v4608 = vmax.f32 %v4429, 0.0
  %v4609 = vmax.f32 %v4432, 0.0
  %v4610 = vmax.f32 %v4437, 0.0
  %v4611 = vmax.f32 %v4440, 0.0
  %v4612 = vmax.f32 %v4445, 0.0
  %v4613 = vmax.f32 %v4448, 0.0
  %v4614 = vmax.f32 %v4453, 0.0
  %v4615 = vmax.f32 %v4456, 0.0
  %v4616 = vmax.f32 %v4461, 0.0
  %v4617 = vmax.f32 %v4464, 0.0
  %v4618 = vmax.f32 %v4469, 0.0
  %v4619 = vmax.f32 %v4472, 0.0
  %v4620 = vmax.f32 %v4477, 0.0
  %v4621 = vmax.f32 %v4480, 0.0
  %v4622 = vmax.f32 %v4485, 0.0
  %v4623 = vmax.f32 %v4488, 0.0
  %v4624 = vmax.f32 %v4493, 0.0
  %v4625 = vmax.f32 %v4496, 0.0
  %v4626 = vmax.f32 %v4501, 0.0
  %v4627 = vmax.f32 %v4504, 0.0
  %v4628 = vmax.f32 %v4509, 0.0
  %v4629 = vmax.f32 %v4512, 0.0
  %v4630 = vmax.f32 %v4517, 0.0
  %v4631 = vmax.f32 %v4520, 0.0
  %v4632 = vmax.f32 %v4525, 0.0
  %v4633 = vmax.f32 %v4528, 0.0
  %v4634 = vmax.f32 %v4533, 0.0
  %v4635 = vmax.f32 %v4536, 0.0
  %v4636 = vmax.f32 %v4541, 0.0
  %v4637 = vmax.f32 %v4544, 0.0
  %v4638 = vmax.f32 %v4549, 0.0
  %v4639 = vmax.f32 %v4552, 0.0
  %v4640 = vmax.f32 %v4557, 0.0
  %v4641 = vmax.f32 %v4560, 0.0
  %v4642 = vmax.f32 %v4565, 0.0
  %v4643 = vmax.f32 %v4568, 0.0
  %v4644 = vmax.f32 %v4573, 0.0
  %v4645 = vmax.f32 %v4576, 0.0
  %v4646 = vmax.f32 %v4581, 0.0
  %v4647 = vmax.f32 %v4584, 0.0
  %v4648 = vmax.f32 %v4589, 0.0
  %v4649 = vmax.f32 %v4592, 0.0
  %v4650 = vmax.f32 %v4597, 0.0
  %vm4651 = vcmask 130048
  %4652 = vst.msk [vmem:[#allocation3] sm:$0xff] %vm4651, 0.0
  %4653 = vst.msk [vmem:[#allocation3 + $0x8] sm:$0xff] %vm4651, 0.0
  %4654 = vst.msk [vmem:[#allocation3 + $0x10] sm:$0xff] %vm4651, 0.0
  %4655 = vst.msk [vmem:[#allocation3 + $0x18] sm:$0xff] %vm4651, 0.0
  %4656 = vst.msk [vmem:[#allocation3 + $0x20] sm:$0xff] %vm4651, 0.0
  %4657 = vst.msk [vmem:[#allocation3 + $0x28] sm:$0xff] %vm4651, 0.0
  %4658 = vst.msk [vmem:[#allocation3 + $0x30] sm:$0xff] %vm4651, 0.0
  %4659 = vst.msk [vmem:[#allocation3 + $0x38] sm:$0xff] %vm4651, 0.0
  %4660 = vst.msk [vmem:[#allocation3 + $0x40] sm:$0xff] %vm4651, 0.0
  %4661 = vst.msk [vmem:[#allocation3 + $0x48] sm:$0xff] %vm4651, 0.0
  %s4662 = scalar_lea.vmem [#allocation3], 640
  %4663 = vst.msk [vmem:[%s4662] sm:$0xff] %vm4651, 0.0
  %4664 = vst.msk [vmem:[%s4662 + $0x8] sm:$0xff] %vm4651, 0.0
  %4665 = vst.msk [vmem:[%s4662 + $0x10] sm:$0xff] %vm4651, 0.0
  %4666 = vst.msk [vmem:[%s4662 + $0x18] sm:$0xff] %vm4651, 0.0
  %4667 = vst.msk [vmem:[%s4662 + $0x20] sm:$0xff] %vm4651, 0.0
  %4668 = vst.msk [vmem:[%s4662 + $0x28] sm:$0xff] %vm4651, 0.0
  %4669 = vst.msk [vmem:[%s4662 + $0x30] sm:$0xff] %vm4651, 0.0
  %4670 = vst.msk [vmem:[%s4662 + $0x38] sm:$0xff] %vm4651, 0.0
  %4671 = vst.msk [vmem:[%s4662 + $0x40] sm:$0xff] %vm4651, 0.0
  %4672 = vst.msk [vmem:[%s4662 + $0x48] sm:$0xff] %vm4651, 0.0
  %4673 = vst.msk [vmem:[%s4662 + $0x50] sm:$0xff] %vm4651, 0.0
  %4674 = vst.msk [vmem:[%s4662 + $0x58] sm:$0xff] %vm4651, 0.0
  %4675 = vst.msk [vmem:[%s4662 + $0x60] sm:$0xff] %vm4651, 0.0
  %4676 = vst.msk [vmem:[%s4662 + $0x68] sm:$0xff] %vm4651, 0.0
  %4677 = vst.msk [vmem:[%s4662 + $0x70] sm:$0xff] %vm4651, 0.0
  %4678 = vst.msk [vmem:[%s4662 + $0x78] sm:$0xff] %vm4651, 0.0
  %4679 = vst.msk [vmem:[%s4662 + $0x80] sm:$0xff] %vm4651, 0.0
  %4680 = vst.msk [vmem:[%s4662 + $0x88] sm:$0xff] %vm4651, 0.0
  %4681 = vst.msk [vmem:[%s4662 + $0x90] sm:$0xff] %vm4651, 0.0
  %4682 = vst.msk [vmem:[%s4662 + $0x98] sm:$0xff] %vm4651, 0.0
  %s4683 = scalar_lea.vmem [#allocation3], 80
  %4684 = vst.msk [vmem:[%s4683] sm:$0xff] %vm4651, 0.0
  %4685 = vst.msk [vmem:[%s4683 + $0x50] sm:$0xff] %vm4651, 0.0
  %4686 = vst.msk [vmem:[%s4683 + $0xa0] sm:$0xff] %vm4651, 0.0
  %4687 = vst.msk [vmem:[%s4683 + $0xf0] sm:$0xff] %vm4651, 0.0
  %4688 = vst.msk [vmem:[%s4683 + $0x140] sm:$0xff] %vm4651, 0.0
  %4689 = vst.msk [vmem:[%s4683 + $0x190] sm:$0xff] %vm4651, 0.0
  %4690 = vst.msk [vmem:[%s4683 + $0x1e0] sm:$0xff] %vm4651, 0.0
  %s4691 = scalar_lea.vmem [#allocation3], 144
  %4692 = vst.msk [vmem:[%s4691] sm:$0xff] %vm4651, 0.0
  %4693 = vst.msk [vmem:[%s4691 + $0x8] sm:$0xff] %vm4651, 0.0
  %4694 = vst.msk [vmem:[%s4691 + $0x50] sm:$0xff] %vm4651, 0.0
  %4695 = vst.msk [vmem:[%s4691 + $0x58] sm:$0xff] %vm4651, 0.0
  %4696 = vst.msk [vmem:[%s4691 + $0xa0] sm:$0xff] %vm4651, 0.0
  %4697 = vst.msk [vmem:[%s4691 + $0xa8] sm:$0xff] %vm4651, 0.0
  %4698 = vst.msk [vmem:[%s4691 + $0xf0] sm:$0xff] %vm4651, 0.0
  %4699 = vst.msk [vmem:[%s4691 + $0xf8] sm:$0xff] %vm4651, 0.0
  %4700 = vst.msk [vmem:[%s4691 + $0x140] sm:$0xff] %vm4651, 0.0
  %4701 = vst.msk [vmem:[%s4691 + $0x148] sm:$0xff] %vm4651, 0.0
  %4702 = vst.msk [vmem:[%s4691 + $0x190] sm:$0xff] %vm4651, 0.0
  %4703 = vst.msk [vmem:[%s4691 + $0x198] sm:$0xff] %vm4651, 0.0
  %4704 = vst.msk [vmem:[%s4691 + $0x1e0] sm:$0xff] %vm4651, 0.0
  %4705 = vst.msk [vmem:[%s4691 + $0x1e8] sm:$0xff] %vm4651, 0.0
  %s4706 = scalar_lea.vmem [#allocation3], 88
  %4707 = vst.msk [vmem:[%s4706] sm:$0xff] %vm4651, %v4602
  %4708 = vst.msk [vmem:[%s4706 + $0x8] sm:$0xff] %vm4651, %v4603
  %4709 = vst.msk [vmem:[%s4706 + $0x10] sm:$0xff] %vm4651, %v4604
  %4710 = vst.msk [vmem:[%s4706 + $0x18] sm:$0xff] %vm4651, %v4605
  %4711 = vst.msk [vmem:[%s4706 + $0x20] sm:$0xff] %vm4651, %v4606
  %4712 = vst.msk [vmem:[%s4706 + $0x28] sm:$0xff] %vm4651, %v4607
  %4713 = vst.msk [vmem:[%s4706 + $0x30] sm:$0xff] %vm4651, %v4608
  %4714 = vst.msk [vmem:[%s4706 + $0x50] sm:$0xff] %vm4651, %v4609
  %4715 = vst.msk [vmem:[%s4706 + $0x58] sm:$0xff] %vm4651, %v4610
  %4716 = vst.msk [vmem:[%s4706 + $0x60] sm:$0xff] %vm4651, %v4611
  %4717 = vst.msk [vmem:[%s4706 + $0x68] sm:$0xff] %vm4651, %v4612
  %4718 = vst.msk [vmem:[%s4706 + $0x70] sm:$0xff] %vm4651, %v4613
  %4719 = vst.msk [vmem:[%s4706 + $0x78] sm:$0xff] %vm4651, %v4614
  %4720 = vst.msk [vmem:[%s4706 + $0x80] sm:$0xff] %vm4651, %v4615
  %4721 = vst.msk [vmem:[%s4706 + $0xa0] sm:$0xff] %vm4651, %v4616
  %4722 = vst.msk [vmem:[%s4706 + $0xa8] sm:$0xff] %vm4651, %v4617
  %4723 = vst.msk [vmem:[%s4706 + $0xb0] sm:$0xff] %vm4651, %v4618
  %4724 = vst.msk [vmem:[%s4706 + $0xb8] sm:$0xff] %vm4651, %v4619
  %4725 = vst.msk [vmem:[%s4706 + $0xc0] sm:$0xff] %vm4651, %v4620
  %4726 = vst.msk [vmem:[%s4706 + $0xc8] sm:$0xff] %vm4651, %v4621
  %4727 = vst.msk [vmem:[%s4706 + $0xd0] sm:$0xff] %vm4651, %v4622
  %4728 = vst.msk [vmem:[%s4706 + $0xf0] sm:$0xff] %vm4651, %v4623
  %4729 = vst.msk [vmem:[%s4706 + $0xf8] sm:$0xff] %vm4651, %v4624
  %4730 = vst.msk [vmem:[%s4706 + $0x100] sm:$0xff] %vm4651, %v4625
  %4731 = vst.msk [vmem:[%s4706 + $0x108] sm:$0xff] %vm4651, %v4626
  %4732 = vst.msk [vmem:[%s4706 + $0x110] sm:$0xff] %vm4651, %v4627
  %4733 = vst.msk [vmem:[%s4706 + $0x118] sm:$0xff] %vm4651, %v4628
  %4734 = vst.msk [vmem:[%s4706 + $0x120] sm:$0xff] %vm4651, %v4629
  %4735 = vst.msk [vmem:[%s4706 + $0x140] sm:$0xff] %vm4651, %v4630
  %4736 = vst.msk [vmem:[%s4706 + $0x148] sm:$0xff] %vm4651, %v4631
  %4737 = vst.msk [vmem:[%s4706 + $0x150] sm:$0xff] %vm4651, %v4632
  %4738 = vst.msk [vmem:[%s4706 + $0x158] sm:$0xff] %vm4651, %v4633
  %4739 = vst.msk [vmem:[%s4706 + $0x160] sm:$0xff] %vm4651, %v4634
  %4740 = vst.msk [vmem:[%s4706 + $0x168] sm:$0xff] %vm4651, %v4635
  %4741 = vst.msk [vmem:[%s4706 + $0x170] sm:$0xff] %vm4651, %v4636
  %4742 = vst.msk [vmem:[%s4706 + $0x190] sm:$0xff] %vm4651, %v4637
  %4743 = vst.msk [vmem:[%s4706 + $0x198] sm:$0xff] %vm4651, %v4638
  %4744 = vst.msk [vmem:[%s4706 + $0x1a0] sm:$0xff] %vm4651, %v4639
  %4745 = vst.msk [vmem:[%s4706 + $0x1a8] sm:$0xff] %vm4651, %v4640
  %4746 = vst.msk [vmem:[%s4706 + $0x1b0] sm:$0xff] %vm4651, %v4641
  %4747 = vst.msk [vmem:[%s4706 + $0x1b8] sm:$0xff] %vm4651, %v4642
  %4748 = vst.msk [vmem:[%s4706 + $0x1c0] sm:$0xff] %vm4651, %v4643
  %4749 = vst.msk [vmem:[%s4706 + $0x1e0] sm:$0xff] %vm4651, %v4644
  %4750 = vst.msk [vmem:[%s4706 + $0x1e8] sm:$0xff] %vm4651, %v4645
  %4751 = vst.msk [vmem:[%s4706 + $0x1f0] sm:$0xff] %vm4651, %v4646
  %4752 = vst.msk [vmem:[%s4706 + $0x1f8] sm:$0xff] %vm4651, %v4647
  %4753 = vst.msk [vmem:[%s4706 + $0x200] sm:$0xff] %vm4651, %v4648
  %4754 = vst.msk [vmem:[%s4706 + $0x208] sm:$0xff] %vm4651, %v4649
  %4755 = vst.msk [vmem:[%s4706 + $0x210] sm:$0xff] %vm4651, %v4650
  %v4756 = vld [vmem:[#allocation3] sm:$0xff]
  %v4757 = vld [vmem:[#allocation3 + $0x8] sm:$0xff]
  %v4758 = vld [vmem:[#allocation3 + $0x10] sm:$0xff]
  %v4759 = vld [vmem:[#allocation3 + $0x18] sm:$0xff]
  %v4760 = vld [vmem:[#allocation3 + $0x20] sm:$0xff]
  %v4761 = vld [vmem:[#allocation3 + $0x28] sm:$0xff]
  %v4762 = vld [vmem:[#allocation3 + $0x30] sm:$0xff]
  %v4763 = vld [vmem:[#allocation3 + $0x38] sm:$0xff]
  %v4764 = vld [vmem:[#allocation3 + $0x40] sm:$0xff]
  %v4765 = vld [vmem:[#allocation3 + $0xa0] sm:$0xff]
  %v4766 = vld [vmem:[#allocation3 + $0xa8] sm:$0xff]
  %v4767 = vld [vmem:[#allocation3 + $0xb0] sm:$0xff]
  %v4768 = vld [vmem:[#allocation3 + $0xb8] sm:$0xff]
  %v4769 = vld [vmem:[#allocation3 + $0xc0] sm:$0xff]
  %v4770 = vld [vmem:[#allocation3 + $0xc8] sm:$0xff]
  %v4771 = vld [vmem:[#allocation3 + $0xd0] sm:$0xff]
  %v4772 = vld [vmem:[#allocation3 + $0xd8] sm:$0xff]
  %v4773 = vld [vmem:[#allocation3 + $0xe0] sm:$0xff]
  %v4774 = vld [vmem:[#allocation3 + $0x140] sm:$0xff]
  %v4775 = vld [vmem:[#allocation3 + $0x148] sm:$0xff]
  %v4776 = vld [vmem:[#allocation3 + $0x150] sm:$0xff]
  %v4777 = vld [vmem:[#allocation3 + $0x158] sm:$0xff]
  %v4778 = vld [vmem:[#allocation3 + $0x160] sm:$0xff]
  %v4779 = vld [vmem:[#allocation3 + $0x168] sm:$0xff]
  %v4780 = vld [vmem:[#allocation3 + $0x170] sm:$0xff]
  %v4781 = vld [vmem:[#allocation3 + $0x178] sm:$0xff]
  %v4782 = vld [vmem:[#allocation3 + $0x180] sm:$0xff]
  %v4783 = vld [vmem:[#allocation3 + $0x1e0] sm:$0xff]
  %v4784 = vld [vmem:[#allocation3 + $0x1e8] sm:$0xff]
  %v4785 = vld [vmem:[#allocation3 + $0x1f0] sm:$0xff]
  %v4786 = vld [vmem:[#allocation3 + $0x1f8] sm:$0xff]
  %v4787 = vld [vmem:[#allocation3 + $0x200] sm:$0xff]
  %v4788 = vld [vmem:[#allocation3 + $0x208] sm:$0xff]
  %v4789 = vld [vmem:[#allocation3 + $0x210] sm:$0xff]
  %v4790 = vld [vmem:[#allocation3 + $0x218] sm:$0xff]
  %v4791 = vld [vmem:[#allocation3 + $0x220] sm:$0xff]
  %4792 = vst.msk [vmem:[#allocation5] sm:$0xff] %vm4651, %v4756
  %4793 = vst.msk [vmem:[#allocation5 + $0x10] sm:$0xff] %vm4651, %v4758
  %4794 = vst.msk [vmem:[#allocation5 + $0x20] sm:$0xff] %vm4651, %v4760
  %4795 = vst.msk [vmem:[#allocation5 + $0x30] sm:$0xff] %vm4651, %v4762
  %4796 = vst.msk [vmem:[#allocation5 + $0x40] sm:$0xff] %vm4651, %v4765
  %4797 = vst.msk [vmem:[#allocation5 + $0x50] sm:$0xff] %vm4651, %v4767
  %4798 = vst.msk [vmem:[#allocation5 + $0x60] sm:$0xff] %vm4651, %v4769
  %4799 = vst.msk [vmem:[#allocation5 + $0x70] sm:$0xff] %vm4651, %v4771
  %4800 = vst.msk [vmem:[#allocation5 + $0x80] sm:$0xff] %vm4651, %v4774
  %4801 = vst.msk [vmem:[#allocation5 + $0x90] sm:$0xff] %vm4651, %v4776
  %4802 = vst.msk [vmem:[#allocation5 + $0xa0] sm:$0xff] %vm4651, %v4778
  %4803 = vst.msk [vmem:[#allocation5 + $0xb0] sm:$0xff] %vm4651, %v4780
  %4804 = vst.msk [vmem:[#allocation5 + $0xc0] sm:$0xff] %vm4651, %v4783
  %4805 = vst.msk [vmem:[#allocation5 + $0xd0] sm:$0xff] %vm4651, %v4785
  %4806 = vst.msk [vmem:[#allocation5 + $0xe0] sm:$0xff] %vm4651, %v4787
  %4807 = vst.msk [vmem:[#allocation5 + $0xf0] sm:$0xff] %vm4651, %v4789
  %4824 = vrot.lane.b32.xlu0 %v4757, 16
  %v4825 = vpop.permute.xlu0 %4824
  %4826 = vrot.lane.b32.xlu0 %v4759, 16
  %v4827 = vpop.permute.xlu0 %4826
  %4828 = vrot.lane.b32.xlu0 %v4761, 16
  %v4829 = vpop.permute.xlu0 %4828
  %4830 = vrot.lane.b32.xlu0 %v4763, 16
  %v4831 = vpop.permute.xlu0 %4830
  %4832 = vrot.lane.b32.xlu0 %v4766, 16
  %v4833 = vpop.permute.xlu0 %4832
  %4834 = vrot.lane.b32.xlu0 %v4768, 16
  %v4835 = vpop.permute.xlu0 %4834
  %4836 = vrot.lane.b32.xlu0 %v4770, 16
  %v4837 = vpop.permute.xlu0 %4836
  %4838 = vrot.lane.b32.xlu0 %v4772, 16
  %v4839 = vpop.permute.xlu0 %4838
  %4840 = vrot.lane.b32.xlu0 %v4775, 16
  %v4841 = vpop.permute.xlu0 %4840
  %4842 = vrot.lane.b32.xlu0 %v4777, 16
  %v4843 = vpop.permute.xlu0 %4842
  %4844 = vrot.lane.b32.xlu0 %v4779, 16
  %v4845 = vpop.permute.xlu0 %4844
  %4846 = vrot.lane.b32.xlu0 %v4781, 16
  %v4847 = vpop.permute.xlu0 %4846
  %4848 = vrot.lane.b32.xlu0 %v4784, 16
  %v4849 = vpop.permute.xlu0 %4848
  %4850 = vrot.lane.b32.xlu0 %v4786, 16
  %v4851 = vpop.permute.xlu0 %4850
  %4852 = vrot.lane.b32.xlu0 %v4788, 16
  %v4853 = vpop.permute.xlu0 %4852
  %4854 = vrot.lane.b32.xlu0 %v4790, 16
  %v4855 = vpop.permute.xlu0 %4854
  %vm4872 = vcmask 261248
  %4873 = vst.msk [vmem:[#allocation5] sm:$0xff] %vm4872, %v4825
  %4874 = vst.msk [vmem:[#allocation5 + $0x10] sm:$0xff] %vm4872, %v4827
  %4875 = vst.msk [vmem:[#allocation5 + $0x20] sm:$0xff] %vm4872, %v4829
  %4876 = vst.msk [vmem:[#allocation5 + $0x30] sm:$0xff] %vm4872, %v4831
  %4877 = vst.msk [vmem:[#allocation5 + $0x40] sm:$0xff] %vm4872, %v4833
  %4878 = vst.msk [vmem:[#allocation5 + $0x50] sm:$0xff] %vm4872, %v4835
  %4879 = vst.msk [vmem:[#allocation5 + $0x60] sm:$0xff] %vm4872, %v4837
  %4880 = vst.msk [vmem:[#allocation5 + $0x70] sm:$0xff] %vm4872, %v4839
  %4881 = vst.msk [vmem:[#allocation5 + $0x80] sm:$0xff] %vm4872, %v4841
  %4882 = vst.msk [vmem:[#allocation5 + $0x90] sm:$0xff] %vm4872, %v4843
  %4883 = vst.msk [vmem:[#allocation5 + $0xa0] sm:$0xff] %vm4872, %v4845
  %4884 = vst.msk [vmem:[#allocation5 + $0xb0] sm:$0xff] %vm4872, %v4847
  %4885 = vst.msk [vmem:[#allocation5 + $0xc0] sm:$0xff] %vm4872, %v4849
  %4886 = vst.msk [vmem:[#allocation5 + $0xd0] sm:$0xff] %vm4872, %v4851
  %4887 = vst.msk [vmem:[#allocation5 + $0xe0] sm:$0xff] %vm4872, %v4853
  %4888 = vst.msk [vmem:[#allocation5 + $0xf0] sm:$0xff] %vm4872, %v4855
  %4905 = vrot.lane.b32.xlu0 %v4758, 32
  %v4906 = vpop.permute.xlu0 %4905
  %4907 = vrot.lane.b32.xlu0 %v4760, 32
  %v4908 = vpop.permute.xlu0 %4907
  %4909 = vrot.lane.b32.xlu0 %v4762, 32
  %v4910 = vpop.permute.xlu0 %4909
  %4911 = vrot.lane.b32.xlu0 %v4764, 32
  %v4912 = vpop.permute.xlu0 %4911
  %4913 = vrot.lane.b32.xlu0 %v4767, 32
  %v4914 = vpop.permute.xlu0 %4913
  %4915 = vrot.lane.b32.xlu0 %v4769, 32
  %v4916 = vpop.permute.xlu0 %4915
  %4917 = vrot.lane.b32.xlu0 %v4771, 32
  %v4918 = vpop.permute.xlu0 %4917
  %4919 = vrot.lane.b32.xlu0 %v4773, 32
  %v4920 = vpop.permute.xlu0 %4919
  %4921 = vrot.lane.b32.xlu0 %v4776, 32
  %v4922 = vpop.permute.xlu0 %4921
  %4923 = vrot.lane.b32.xlu0 %v4778, 32
  %v4924 = vpop.permute.xlu0 %4923
  %4925 = vrot.lane.b32.xlu0 %v4780, 32
  %v4926 = vpop.permute.xlu0 %4925
  %4927 = vrot.lane.b32.xlu0 %v4782, 32
  %v4928 = vpop.permute.xlu0 %4927
  %4929 = vrot.lane.b32.xlu0 %v4785, 32
  %v4930 = vpop.permute.xlu0 %4929
  %4931 = vrot.lane.b32.xlu0 %v4787, 32
  %v4932 = vpop.permute.xlu0 %4931
  %4933 = vrot.lane.b32.xlu0 %v4789, 32
  %v4934 = vpop.permute.xlu0 %4933
  %4935 = vrot.lane.b32.xlu0 %v4791, 32
  %v4936 = vpop.permute.xlu0 %4935
  %vm4953 = vcmask 392448
  %4954 = vst.msk [vmem:[#allocation5] sm:$0xff] %vm4953, %v4906
  %4955 = vst.msk [vmem:[#allocation5 + $0x10] sm:$0xff] %vm4953, %v4908
  %4956 = vst.msk [vmem:[#allocation5 + $0x20] sm:$0xff] %vm4953, %v4910
  %4957 = vst.msk [vmem:[#allocation5 + $0x30] sm:$0xff] %vm4953, %v4912
  %4958 = vst.msk [vmem:[#allocation5 + $0x40] sm:$0xff] %vm4953, %v4914
  %4959 = vst.msk [vmem:[#allocation5 + $0x50] sm:$0xff] %vm4953, %v4916
  %4960 = vst.msk [vmem:[#allocation5 + $0x60] sm:$0xff] %vm4953, %v4918
  %4961 = vst.msk [vmem:[#allocation5 + $0x70] sm:$0xff] %vm4953, %v4920
  %4962 = vst.msk [vmem:[#allocation5 + $0x80] sm:$0xff] %vm4953, %v4922
  %4963 = vst.msk [vmem:[#allocation5 + $0x90] sm:$0xff] %vm4953, %v4924
  %4964 = vst.msk [vmem:[#allocation5 + $0xa0] sm:$0xff] %vm4953, %v4926
  %4965 = vst.msk [vmem:[#allocation5 + $0xb0] sm:$0xff] %vm4953, %v4928
  %4966 = vst.msk [vmem:[#allocation5 + $0xc0] sm:$0xff] %vm4953, %v4930
  %4967 = vst.msk [vmem:[#allocation5 + $0xd0] sm:$0xff] %vm4953, %v4932
  %4968 = vst.msk [vmem:[#allocation5 + $0xe0] sm:$0xff] %vm4953, %v4934
  %4969 = vst.msk [vmem:[#allocation5 + $0xf0] sm:$0xff] %vm4953, %v4936
  %v4970 = vld [vmem:[%s4683] sm:$0xff]
  %v4971 = vld [vmem:[%s4683 + $0x8] sm:$0xff]
  %v4972 = vld [vmem:[%s4683 + $0x10] sm:$0xff]
  %v4973 = vld [vmem:[%s4683 + $0x18] sm:$0xff]
  %v4974 = vld [vmem:[%s4683 + $0x20] sm:$0xff]
  %v4975 = vld [vmem:[%s4683 + $0x28] sm:$0xff]
  %v4976 = vld [vmem:[%s4683 + $0x30] sm:$0xff]
  %v4977 = vld [vmem:[%s4683 + $0x38] sm:$0xff]
  %v4978 = vld [vmem:[%s4683 + $0x40] sm:$0xff]
  %v4979 = vld [vmem:[%s4683 + $0xa0] sm:$0xff]
  %v4980 = vld [vmem:[%s4683 + $0xa8] sm:$0xff]
  %v4981 = vld [vmem:[%s4683 + $0xb0] sm:$0xff]
  %v4982 = vld [vmem:[%s4683 + $0xb8] sm:$0xff]
  %v4983 = vld [vmem:[%s4683 + $0xc0] sm:$0xff]
  %v4984 = vld [vmem:[%s4683 + $0xc8] sm:$0xff]
  %v4985 = vld [vmem:[%s4683 + $0xd0] sm:$0xff]
  %v4986 = vld [vmem:[%s4683 + $0xd8] sm:$0xff]
  %v4987 = vld [vmem:[%s4683 + $0xe0] sm:$0xff]
  %v4988 = vld [vmem:[%s4683 + $0x140] sm:$0xff]
  %v4989 = vld [vmem:[%s4683 + $0x148] sm:$0xff]
  %v4990 = vld [vmem:[%s4683 + $0x150] sm:$0xff]
  %v4991 = vld [vmem:[%s4683 + $0x158] sm:$0xff]
  %v4992 = vld [vmem:[%s4683 + $0x160] sm:$0xff]
  %v4993 = vld [vmem:[%s4683 + $0x168] sm:$0xff]
  %v4994 = vld [vmem:[%s4683 + $0x170] sm:$0xff]
  %v4995 = vld [vmem:[%s4683 + $0x178] sm:$0xff]
  %v4996 = vld [vmem:[%s4683 + $0x180] sm:$0xff]
  %v4997 = vld [vmem:[%s4683 + $0x1e0] sm:$0xff]
  %v4998 = vld [vmem:[%s4683 + $0x1e8] sm:$0xff]
  %v4999 = vld [vmem:[%s4683 + $0x1f0] sm:$0xff]
  %v5000 = vld [vmem:[%s4683 + $0x1f8] sm:$0xff]
  %v5001 = vld [vmem:[%s4683 + $0x200] sm:$0xff]
  %v5002 = vld [vmem:[%s4683 + $0x208] sm:$0xff]
  %v5003 = vld [vmem:[%s4683 + $0x210] sm:$0xff]
  %v5004 = vld [vmem:[%s4683 + $0x218] sm:$0xff]
  %v5005 = vld [vmem:[%s4683 + $0x220] sm:$0xff]
  %5022 = vrot.lane.b32.xlu0 %v4970, 48
  %v5023 = vpop.permute.xlu0 %5022
  %5024 = vrot.lane.b32.xlu0 %v4972, 48
  %v5025 = vpop.permute.xlu0 %5024
  %5026 = vrot.lane.b32.xlu0 %v4974, 48
  %v5027 = vpop.permute.xlu0 %5026
  %5028 = vrot.lane.b32.xlu0 %v4976, 48
  %v5029 = vpop.permute.xlu0 %5028
  %5030 = vrot.lane.b32.xlu0 %v4979, 48
  %v5031 = vpop.permute.xlu0 %5030
  %5032 = vrot.lane.b32.xlu0 %v4981, 48
  %v5033 = vpop.permute.xlu0 %5032
  %5034 = vrot.lane.b32.xlu0 %v4983, 48
  %v5035 = vpop.permute.xlu0 %5034
  %5036 = vrot.lane.b32.xlu0 %v4985, 48
  %v5037 = vpop.permute.xlu0 %5036
  %5038 = vrot.lane.b32.xlu0 %v4988, 48
  %v5039 = vpop.permute.xlu0 %5038
  %5040 = vrot.lane.b32.xlu0 %v4990, 48
  %v5041 = vpop.permute.xlu0 %5040
  %5042 = vrot.lane.b32.xlu0 %v4992, 48
  %v5043 = vpop.permute.xlu0 %5042
  %5044 = vrot.lane.b32.xlu0 %v4994, 48
  %v5045 = vpop.permute.xlu0 %5044
  %5046 = vrot.lane.b32.xlu0 %v4997, 48
  %v5047 = vpop.permute.xlu0 %5046
  %5048 = vrot.lane.b32.xlu0 %v4999, 48
  %v5049 = vpop.permute.xlu0 %5048
  %5050 = vrot.lane.b32.xlu0 %v5001, 48
  %v5051 = vpop.permute.xlu0 %5050
  %5052 = vrot.lane.b32.xlu0 %v5003, 48
  %v5053 = vpop.permute.xlu0 %5052
  %vm5070 = vcmask 523648
  %5071 = vst.msk [vmem:[#allocation5] sm:$0xff] %vm5070, %v5023
  %5072 = vst.msk [vmem:[#allocation5 + $0x10] sm:$0xff] %vm5070, %v5025
  %5073 = vst.msk [vmem:[#allocation5 + $0x20] sm:$0xff] %vm5070, %v5027
  %5074 = vst.msk [vmem:[#allocation5 + $0x30] sm:$0xff] %vm5070, %v5029
  %5075 = vst.msk [vmem:[#allocation5 + $0x40] sm:$0xff] %vm5070, %v5031
  %5076 = vst.msk [vmem:[#allocation5 + $0x50] sm:$0xff] %vm5070, %v5033
  %5077 = vst.msk [vmem:[#allocation5 + $0x60] sm:$0xff] %vm5070, %v5035
  %5078 = vst.msk [vmem:[#allocation5 + $0x70] sm:$0xff] %vm5070, %v5037
  %5079 = vst.msk [vmem:[#allocation5 + $0x80] sm:$0xff] %vm5070, %v5039
  %5080 = vst.msk [vmem:[#allocation5 + $0x90] sm:$0xff] %vm5070, %v5041
  %5081 = vst.msk [vmem:[#allocation5 + $0xa0] sm:$0xff] %vm5070, %v5043
  %5082 = vst.msk [vmem:[#allocation5 + $0xb0] sm:$0xff] %vm5070, %v5045
  %5083 = vst.msk [vmem:[#allocation5 + $0xc0] sm:$0xff] %vm5070, %v5047
  %5084 = vst.msk [vmem:[#allocation5 + $0xd0] sm:$0xff] %vm5070, %v5049
  %5085 = vst.msk [vmem:[#allocation5 + $0xe0] sm:$0xff] %vm5070, %v5051
  %5086 = vst.msk [vmem:[#allocation5 + $0xf0] sm:$0xff] %vm5070, %v5053
  %5103 = vrot.lane.b32.xlu0 %v4971, 64
  %v5104 = vpop.permute.xlu0 %5103
  %5105 = vrot.lane.b32.xlu0 %v4973, 64
  %v5106 = vpop.permute.xlu0 %5105
  %5107 = vrot.lane.b32.xlu0 %v4975, 64
  %v5108 = vpop.permute.xlu0 %5107
  %5109 = vrot.lane.b32.xlu0 %v4977, 64
  %v5110 = vpop.permute.xlu0 %5109
  %5111 = vrot.lane.b32.xlu0 %v4980, 64
  %v5112 = vpop.permute.xlu0 %5111
  %5113 = vrot.lane.b32.xlu0 %v4982, 64
  %v5114 = vpop.permute.xlu0 %5113
  %5115 = vrot.lane.b32.xlu0 %v4984, 64
  %v5116 = vpop.permute.xlu0 %5115
  %5117 = vrot.lane.b32.xlu0 %v4986, 64
  %v5118 = vpop.permute.xlu0 %5117
  %5119 = vrot.lane.b32.xlu0 %v4989, 64
  %v5120 = vpop.permute.xlu0 %5119
  %5121 = vrot.lane.b32.xlu0 %v4991, 64
  %v5122 = vpop.permute.xlu0 %5121
  %5123 = vrot.lane.b32.xlu0 %v4993, 64
  %v5124 = vpop.permute.xlu0 %5123
  %5125 = vrot.lane.b32.xlu0 %v4995, 64
  %v5126 = vpop.permute.xlu0 %5125
  %5127 = vrot.lane.b32.xlu0 %v4998, 64
  %v5128 = vpop.permute.xlu0 %5127
  %5129 = vrot.lane.b32.xlu0 %v5000, 64
  %v5130 = vpop.permute.xlu0 %5129
  %5131 = vrot.lane.b32.xlu0 %v5002, 64
  %v5132 = vpop.permute.xlu0 %5131
  %5133 = vrot.lane.b32.xlu0 %v5004, 64
  %v5134 = vpop.permute.xlu0 %5133
  %vm5151 = vcmask 654848
  %5152 = vst.msk [vmem:[#allocation5] sm:$0xff] %vm5151, %v5104
  %5153 = vst.msk [vmem:[#allocation5 + $0x10] sm:$0xff] %vm5151, %v5106
  %5154 = vst.msk [vmem:[#allocation5 + $0x20] sm:$0xff] %vm5151, %v5108
  %5155 = vst.msk [vmem:[#allocation5 + $0x30] sm:$0xff] %vm5151, %v5110
  %5156 = vst.msk [vmem:[#allocation5 + $0x40] sm:$0xff] %vm5151, %v5112
  %5157 = vst.msk [vmem:[#allocation5 + $0x50] sm:$0xff] %vm5151, %v5114
  %5158 = vst.msk [vmem:[#allocation5 + $0x60] sm:$0xff] %vm5151, %v5116
  %5159 = vst.msk [vmem:[#allocation5 + $0x70] sm:$0xff] %vm5151, %v5118
  %5160 = vst.msk [vmem:[#allocation5 + $0x80] sm:$0xff] %vm5151, %v5120
  %5161 = vst.msk [vmem:[#allocation5 + $0x90] sm:$0xff] %vm5151, %v5122
  %5162 = vst.msk [vmem:[#allocation5 + $0xa0] sm:$0xff] %vm5151, %v5124
  %5163 = vst.msk [vmem:[#allocation5 + $0xb0] sm:$0xff] %vm5151, %v5126
  %5164 = vst.msk [vmem:[#allocation5 + $0xc0] sm:$0xff] %vm5151, %v5128
  %5165 = vst.msk [vmem:[#allocation5 + $0xd0] sm:$0xff] %vm5151, %v5130
  %5166 = vst.msk [vmem:[#allocation5 + $0xe0] sm:$0xff] %vm5151, %v5132
  %5167 = vst.msk [vmem:[#allocation5 + $0xf0] sm:$0xff] %vm5151, %v5134
  %5172 = vrot.lane.b32.xlu0 %v4972, 80
  %v5173 = vpop.permute.xlu0 %5172
  %5174 = vrot.lane.b32.xlu0 %v4974, 80
  %v5175 = vpop.permute.xlu0 %5174
  %5176 = vrot.lane.b32.xlu0 %v4976, 80
  %v5177 = vpop.permute.xlu0 %5176
  %5178 = vrot.lane.b32.xlu0 %v4978, 80
  %v5179 = vpop.permute.xlu0 %5178
  %5180 = vrot.lane.b32.xlu0 %v4981, 80
  %v5181 = vpop.permute.xlu0 %5180
  %5182 = vrot.lane.b32.xlu0 %v4983, 80
  %v5183 = vpop.permute.xlu0 %5182
  %5184 = vrot.lane.b32.xlu0 %v4985, 80
  %v5185 = vpop.permute.xlu0 %5184
  %5186 = vrot.lane.b32.xlu0 %v4987, 80
  %v5187 = vpop.permute.xlu0 %5186
  %5188 = vrot.lane.b32.xlu0 %v4990, 80
  %v5189 = vpop.permute.xlu0 %5188
  %5190 = vrot.lane.b32.xlu0 %v4992, 80
  %v5191 = vpop.permute.xlu0 %5190
  %5192 = vrot.lane.b32.xlu0 %v4994, 80
  %v5193 = vpop.permute.xlu0 %5192
  %5194 = vrot.lane.b32.xlu0 %v4996, 80
  %v5195 = vpop.permute.xlu0 %5194
  %5196 = vrot.lane.b32.xlu0 %v4999, 80
  %v5197 = vpop.permute.xlu0 %5196
  %5198 = vrot.lane.b32.xlu0 %v5001, 80
  %v5199 = vpop.permute.xlu0 %5198
  %5200 = vrot.lane.b32.xlu0 %v5003, 80
  %v5201 = vpop.permute.xlu0 %5200
  %5202 = vrot.lane.b32.xlu0 %v5005, 80
  %v5203 = vpop.permute.xlu0 %5202
  %vm5220 = vcmask 786048
  %5221 = vst.msk [vmem:[#allocation5] sm:$0xff] %vm5220, %v5173
  %5222 = vst.msk [vmem:[#allocation5 + $0x10] sm:$0xff] %vm5220, %v5175
  %5223 = vst.msk [vmem:[#allocation5 + $0x20] sm:$0xff] %vm5220, %v5177
  %5224 = vst.msk [vmem:[#allocation5 + $0x30] sm:$0xff] %vm5220, %v5179
  %5225 = vst.msk [vmem:[#allocation5 + $0x40] sm:$0xff] %vm5220, %v5181
  %5226 = vst.msk [vmem:[#allocation5 + $0x50] sm:$0xff] %vm5220, %v5183
  %5227 = vst.msk [vmem:[#allocation5 + $0x60] sm:$0xff] %vm5220, %v5185
  %5228 = vst.msk [vmem:[#allocation5 + $0x70] sm:$0xff] %vm5220, %v5187
  %5229 = vst.msk [vmem:[#allocation5 + $0x80] sm:$0xff] %vm5220, %v5189
  %5230 = vst.msk [vmem:[#allocation5 + $0x90] sm:$0xff] %vm5220, %v5191
  %5231 = vst.msk [vmem:[#allocation5 + $0xa0] sm:$0xff] %vm5220, %v5193
  %5232 = vst.msk [vmem:[#allocation5 + $0xb0] sm:$0xff] %vm5220, %v5195
  %5233 = vst.msk [vmem:[#allocation5 + $0xc0] sm:$0xff] %vm5220, %v5197
  %5234 = vst.msk [vmem:[#allocation5 + $0xd0] sm:$0xff] %vm5220, %v5199
  %5235 = vst.msk [vmem:[#allocation5 + $0xe0] sm:$0xff] %vm5220, %v5201
  %5236 = vst.msk [vmem:[#allocation5 + $0xf0] sm:$0xff] %vm5220, %v5203
  %s5237 = scalar_lea.vmem [#allocation3], 160
  %v5238 = vld [vmem:[%s5237] sm:$0xff]
  %v5239 = vld [vmem:[%s5237 + $0x8] sm:$0xff]
  %v5240 = vld [vmem:[%s5237 + $0x10] sm:$0xff]
  %v5241 = vld [vmem:[%s5237 + $0x18] sm:$0xff]
  %v5242 = vld [vmem:[%s5237 + $0x20] sm:$0xff]
  %v5243 = vld [vmem:[%s5237 + $0x28] sm:$0xff]
  %v5244 = vld [vmem:[%s5237 + $0x30] sm:$0xff]
  %v5245 = vld [vmem:[%s5237 + $0x38] sm:$0xff]
  %v5246 = vld [vmem:[%s5237 + $0x40] sm:$0xff]
  %v5247 = vld [vmem:[%s5237 + $0xa0] sm:$0xff]
  %v5248 = vld [vmem:[%s5237 + $0xa8] sm:$0xff]
  %v5249 = vld [vmem:[%s5237 + $0xb0] sm:$0xff]
  %v5250 = vld [vmem:[%s5237 + $0xb8] sm:$0xff]
  %v5251 = vld [vmem:[%s5237 + $0xc0] sm:$0xff]
  %v5252 = vld [vmem:[%s5237 + $0xc8] sm:$0xff]
  %v5253 = vld [vmem:[%s5237 + $0xd0] sm:$0xff]
  %v5254 = vld [vmem:[%s5237 + $0xd8] sm:$0xff]
  %v5255 = vld [vmem:[%s5237 + $0xe0] sm:$0xff]
  %v5256 = vld [vmem:[%s5237 + $0x140] sm:$0xff]
  %v5257 = vld [vmem:[%s5237 + $0x148] sm:$0xff]
  %v5258 = vld [vmem:[%s5237 + $0x150] sm:$0xff]
  %v5259 = vld [vmem:[%s5237 + $0x158] sm:$0xff]
  %v5260 = vld [vmem:[%s5237 + $0x160] sm:$0xff]
  %v5261 = vld [vmem:[%s5237 + $0x168] sm:$0xff]
  %v5262 = vld [vmem:[%s5237 + $0x170] sm:$0xff]
  %v5263 = vld [vmem:[%s5237 + $0x178] sm:$0xff]
  %v5264 = vld [vmem:[%s5237 + $0x180] sm:$0xff]
  %v5265 = vld [vmem:[%s5237 + $0x1e0] sm:$0xff]
  %v5266 = vld [vmem:[%s5237 + $0x1e8] sm:$0xff]
  %v5267 = vld [vmem:[%s5237 + $0x1f0] sm:$0xff]
  %v5268 = vld [vmem:[%s5237 + $0x1f8] sm:$0xff]
  %v5269 = vld [vmem:[%s5237 + $0x200] sm:$0xff]
  %v5270 = vld [vmem:[%s5237 + $0x208] sm:$0xff]
  %v5271 = vld [vmem:[%s5237 + $0x210] sm:$0xff]
  %v5272 = vld [vmem:[%s5237 + $0x218] sm:$0xff]
  %v5273 = vld [vmem:[%s5237 + $0x220] sm:$0xff]
  %5290 = vrot.lane.b32.xlu0 %v5238, 96
  %v5291 = vpop.permute.xlu0 %5290
  %5292 = vrot.lane.b32.xlu0 %v5240, 96
  %v5293 = vpop.permute.xlu0 %5292
  %5294 = vrot.lane.b32.xlu0 %v5242, 96
  %v5295 = vpop.permute.xlu0 %5294
  %5296 = vrot.lane.b32.xlu0 %v5244, 96
  %v5297 = vpop.permute.xlu0 %5296
  %5298 = vrot.lane.b32.xlu0 %v5247, 96
  %v5299 = vpop.permute.xlu0 %5298
  %5300 = vrot.lane.b32.xlu0 %v5249, 96
  %v5301 = vpop.permute.xlu0 %5300
  %5302 = vrot.lane.b32.xlu0 %v5251, 96
  %v5303 = vpop.permute.xlu0 %5302
  %5304 = vrot.lane.b32.xlu0 %v5253, 96
  %v5305 = vpop.permute.xlu0 %5304
  %5306 = vrot.lane.b32.xlu0 %v5256, 96
  %v5307 = vpop.permute.xlu0 %5306
  %5308 = vrot.lane.b32.xlu0 %v5258, 96
  %v5309 = vpop.permute.xlu0 %5308
  %5310 = vrot.lane.b32.xlu0 %v5260, 96
  %v5311 = vpop.permute.xlu0 %5310
  %5312 = vrot.lane.b32.xlu0 %v5262, 96
  %v5313 = vpop.permute.xlu0 %5312
  %5314 = vrot.lane.b32.xlu0 %v5265, 96
  %v5315 = vpop.permute.xlu0 %5314
  %5316 = vrot.lane.b32.xlu0 %v5267, 96
  %v5317 = vpop.permute.xlu0 %5316
  %5318 = vrot.lane.b32.xlu0 %v5269, 96
  %v5319 = vpop.permute.xlu0 %5318
  %5320 = vrot.lane.b32.xlu0 %v5271, 96
  %v5321 = vpop.permute.xlu0 %5320
  %vm5338 = vcmask 917248
  %5339 = vst.msk [vmem:[#allocation5] sm:$0xff] %vm5338, %v5291
  %5340 = vst.msk [vmem:[#allocation5 + $0x10] sm:$0xff] %vm5338, %v5293
  %5341 = vst.msk [vmem:[#allocation5 + $0x20] sm:$0xff] %vm5338, %v5295
  %5342 = vst.msk [vmem:[#allocation5 + $0x30] sm:$0xff] %vm5338, %v5297
  %5343 = vst.msk [vmem:[#allocation5 + $0x40] sm:$0xff] %vm5338, %v5299
  %5344 = vst.msk [vmem:[#allocation5 + $0x50] sm:$0xff] %vm5338, %v5301
  %5345 = vst.msk [vmem:[#allocation5 + $0x60] sm:$0xff] %vm5338, %v5303
  %5346 = vst.msk [vmem:[#allocation5 + $0x70] sm:$0xff] %vm5338, %v5305
  %5347 = vst.msk [vmem:[#allocation5 + $0x80] sm:$0xff] %vm5338, %v5307
  %5348 = vst.msk [vmem:[#allocation5 + $0x90] sm:$0xff] %vm5338, %v5309
  %5349 = vst.msk [vmem:[#allocation5 + $0xa0] sm:$0xff] %vm5338, %v5311
  %5350 = vst.msk [vmem:[#allocation5 + $0xb0] sm:$0xff] %vm5338, %v5313
  %5351 = vst.msk [vmem:[#allocation5 + $0xc0] sm:$0xff] %vm5338, %v5315
  %5352 = vst.msk [vmem:[#allocation5 + $0xd0] sm:$0xff] %vm5338, %v5317
  %5353 = vst.msk [vmem:[#allocation5 + $0xe0] sm:$0xff] %vm5338, %v5319
  %5354 = vst.msk [vmem:[#allocation5 + $0xf0] sm:$0xff] %vm5338, %v5321
  %5371 = vrot.lane.b32.xlu0 %v5239, 112
  %v5372 = vpop.permute.xlu0 %5371
  %5373 = vrot.lane.b32.xlu0 %v5241, 112
  %v5374 = vpop.permute.xlu0 %5373
  %5375 = vrot.lane.b32.xlu0 %v5243, 112
  %v5376 = vpop.permute.xlu0 %5375
  %5377 = vrot.lane.b32.xlu0 %v5245, 112
  %v5378 = vpop.permute.xlu0 %5377
  %5379 = vrot.lane.b32.xlu0 %v5248, 112
  %v5380 = vpop.permute.xlu0 %5379
  %5381 = vrot.lane.b32.xlu0 %v5250, 112
  %v5382 = vpop.permute.xlu0 %5381
  %5383 = vrot.lane.b32.xlu0 %v5252, 112
  %v5384 = vpop.permute.xlu0 %5383
  %5385 = vrot.lane.b32.xlu0 %v5254, 112
  %v5386 = vpop.permute.xlu0 %5385
  %5387 = vrot.lane.b32.xlu0 %v5257, 112
  %v5388 = vpop.permute.xlu0 %5387
  %5389 = vrot.lane.b32.xlu0 %v5259, 112
  %v5390 = vpop.permute.xlu0 %5389
  %5391 = vrot.lane.b32.xlu0 %v5261, 112
  %v5392 = vpop.permute.xlu0 %5391
  %5393 = vrot.lane.b32.xlu0 %v5263, 112
  %v5394 = vpop.permute.xlu0 %5393
  %5395 = vrot.lane.b32.xlu0 %v5266, 112
  %v5396 = vpop.permute.xlu0 %5395
  %5397 = vrot.lane.b32.xlu0 %v5268, 112
  %v5398 = vpop.permute.xlu0 %5397
  %5399 = vrot.lane.b32.xlu0 %v5270, 112
  %v5400 = vpop.permute.xlu0 %5399
  %5401 = vrot.lane.b32.xlu0 %v5272, 112
  %v5402 = vpop.permute.xlu0 %5401
  %vm5419 = vcmask 1048448
  %5420 = vst.msk [vmem:[#allocation5] sm:$0xff] %vm5419, %v5372
  %5421 = vst.msk [vmem:[#allocation5 + $0x10] sm:$0xff] %vm5419, %v5374
  %5422 = vst.msk [vmem:[#allocation5 + $0x20] sm:$0xff] %vm5419, %v5376
  %5423 = vst.msk [vmem:[#allocation5 + $0x30] sm:$0xff] %vm5419, %v5378
  %5424 = vst.msk [vmem:[#allocation5 + $0x40] sm:$0xff] %vm5419, %v5380
  %5425 = vst.msk [vmem:[#allocation5 + $0x50] sm:$0xff] %vm5419, %v5382
  %5426 = vst.msk [vmem:[#allocation5 + $0x60] sm:$0xff] %vm5419, %v5384
  %5427 = vst.msk [vmem:[#allocation5 + $0x70] sm:$0xff] %vm5419, %v5386
  %5428 = vst.msk [vmem:[#allocation5 + $0x80] sm:$0xff] %vm5419, %v5388
  %5429 = vst.msk [vmem:[#allocation5 + $0x90] sm:$0xff] %vm5419, %v5390
  %5430 = vst.msk [vmem:[#allocation5 + $0xa0] sm:$0xff] %vm5419, %v5392
  %5431 = vst.msk [vmem:[#allocation5 + $0xb0] sm:$0xff] %vm5419, %v5394
  %5432 = vst.msk [vmem:[#allocation5 + $0xc0] sm:$0xff] %vm5419, %v5396
  %5433 = vst.msk [vmem:[#allocation5 + $0xd0] sm:$0xff] %vm5419, %v5398
  %5434 = vst.msk [vmem:[#allocation5 + $0xe0] sm:$0xff] %vm5419, %v5400
  %5435 = vst.msk [vmem:[#allocation5 + $0xf0] sm:$0xff] %vm5419, %v5402
  %5436 = vst.msk [vmem:[#allocation5 + $0x8] sm:$0xff] %vm4651, %v5240
  %5437 = vst.msk [vmem:[#allocation5 + $0x18] sm:$0xff] %vm4651, %v5242
  %5438 = vst.msk [vmem:[#allocation5 + $0x28] sm:$0xff] %vm4651, %v5244
  %5439 = vst.msk [vmem:[#allocation5 + $0x38] sm:$0xff] %vm4651, %v5246
  %5440 = vst.msk [vmem:[#allocation5 + $0x48] sm:$0xff] %vm4651, %v5249
  %5441 = vst.msk [vmem:[#allocation5 + $0x58] sm:$0xff] %vm4651, %v5251
  %5442 = vst.msk [vmem:[#allocation5 + $0x68] sm:$0xff] %vm4651, %v5253
  %5443 = vst.msk [vmem:[#allocation5 + $0x78] sm:$0xff] %vm4651, %v5255
  %5444 = vst.msk [vmem:[#allocation5 + $0x88] sm:$0xff] %vm4651, %v5258
  %5445 = vst.msk [vmem:[#allocation5 + $0x98] sm:$0xff] %vm4651, %v5260
  %5446 = vst.msk [vmem:[#allocation5 + $0xa8] sm:$0xff] %vm4651, %v5262
  %5447 = vst.msk [vmem:[#allocation5 + $0xb8] sm:$0xff] %vm4651, %v5264
  %5448 = vst.msk [vmem:[#allocation5 + $0xc8] sm:$0xff] %vm4651, %v5267
  %5449 = vst.msk [vmem:[#allocation5 + $0xd8] sm:$0xff] %vm4651, %v5269
  %5450 = vst.msk [vmem:[#allocation5 + $0xe8] sm:$0xff] %vm4651, %v5271
  %5451 = vst.msk [vmem:[#allocation5 + $0xf8] sm:$0xff] %vm4651, %v5273
  %v5452 = vld [vmem:[#allocation5] sm:$0xff]
  %v5453 = vld [vmem:[#allocation5 + $0x8] sm:$0xff]
  %v5454 = vld [vmem:[#allocation5 + $0x10] sm:$0xff]
  %v5455 = vld [vmem:[#allocation5 + $0x18] sm:$0xff]
  %v5456 = vld [vmem:[#allocation5 + $0x20] sm:$0xff]
  %v5457 = vld [vmem:[#allocation5 + $0x28] sm:$0xff]
  %v5458 = vld [vmem:[#allocation5 + $0x30] sm:$0xff]
  %v5459 = vld [vmem:[#allocation5 + $0x38] sm:$0xff]
  %v5460 = vld [vmem:[#allocation5 + $0x40] sm:$0xff]
  %v5461 = vld [vmem:[#allocation5 + $0x48] sm:$0xff]
  %v5462 = vld [vmem:[#allocation5 + $0x50] sm:$0xff]
  %v5463 = vld [vmem:[#allocation5 + $0x58] sm:$0xff]
  %v5464 = vld [vmem:[#allocation5 + $0x60] sm:$0xff]
  %v5465 = vld [vmem:[#allocation5 + $0x68] sm:$0xff]
  %v5466 = vld [vmem:[#allocation5 + $0x70] sm:$0xff]
  %v5467 = vld [vmem:[#allocation5 + $0x78] sm:$0xff]
  %v5468 = vld [vmem:[#allocation5 + $0x80] sm:$0xff]
  %v5469 = vld [vmem:[#allocation5 + $0x88] sm:$0xff]
  %v5470 = vld [vmem:[#allocation5 + $0x90] sm:$0xff]
  %v5471 = vld [vmem:[#allocation5 + $0x98] sm:$0xff]
  %v5472 = vld [vmem:[#allocation5 + $0xa0] sm:$0xff]
  %v5473 = vld [vmem:[#allocation5 + $0xa8] sm:$0xff]
  %v5474 = vld [vmem:[#allocation5 + $0xb0] sm:$0xff]
  %v5475 = vld [vmem:[#allocation5 + $0xb8] sm:$0xff]
  %v5476 = vld [vmem:[#allocation5 + $0xc0] sm:$0xff]
  %v5477 = vld [vmem:[#allocation5 + $0xc8] sm:$0xff]
  %v5478 = vld [vmem:[#allocation5 + $0xd0] sm:$0xff]
  %v5479 = vld [vmem:[#allocation5 + $0xd8] sm:$0xff]
  %v5480 = vld [vmem:[#allocation5 + $0xe0] sm:$0xff]
  %v5481 = vld [vmem:[#allocation5 + $0xe8] sm:$0xff]
  %v5482 = vld [vmem:[#allocation5 + $0xf0] sm:$0xff]
  %v5483 = vld [vmem:[#allocation5 + $0xf8] sm:$0xff]
  %v5484 = vpack.c.bf16 %v5454, %v5452
  %v5485 = vpack.c.bf16 %v5455, %v5453
  %v5486 = vpack.c.bf16 %v5458, %v5456
  %v5487 = vpack.c.bf16 %v5459, %v5457
  %v5488 = vpack.c.bf16 %v5462, %v5460
  %v5489 = vpack.c.bf16 %v5463, %v5461
  %v5490 = vpack.c.bf16 %v5466, %v5464
  %v5491 = vpack.c.bf16 %v5467, %v5465
  %v5492 = vpack.c.bf16 %v5470, %v5468
  %v5493 = vpack.c.bf16 %v5471, %v5469
  %v5494 = vpack.c.bf16 %v5474, %v5472
  %v5495 = vpack.c.bf16 %v5475, %v5473
  %v5496 = vpack.c.bf16 %v5478, %v5476
  %v5497 = vpack.c.bf16 %v5479, %v5477
  %v5498 = vpack.c.bf16 %v5482, %v5480
  %v5499 = vpack.c.bf16 %v5483, %v5481
  %v5500 = vld [vmem:[%s5] sm:$0xf]
  %v5501 = vld [vmem:[%s5 + $0x4] sm:$0xf]
  %v5502 = vld [vmem:[%s5 + $0x8] sm:$0xf]
  %v5503 = vld [vmem:[%s5 + $0xc] sm:$0xf]
  %v5504 = vld [vmem:[%s5 + $0x10] sm:$0xf]
  %v5505 = vld [vmem:[%s5 + $0x14] sm:$0xf]
  %v5506 = vld [vmem:[%s5 + $0x18] sm:$0xf]
  %v5507 = vld [vmem:[%s5 + $0x1c] sm:$0xf]
  %v5508 = vld [vmem:[%s5 + $0x20] sm:$0xf]
  %v5509 = vld [vmem:[%s5 + $0x24] sm:$0xf]
  %v5510 = vld [vmem:[%s5 + $0x28] sm:$0xf]
  %v5511 = vld [vmem:[%s5 + $0x2c] sm:$0xf]
  %v5512 = vld [vmem:[%s5 + $0x30] sm:$0xf]
  %v5513 = vld [vmem:[%s5 + $0x34] sm:$0xf]
  %v5514 = vld [vmem:[%s5 + $0x38] sm:$0xf]
  %v5515 = vld [vmem:[%s5 + $0x3c] sm:$0xf]
  %v5516 = vld [vmem:[%s5 + $0x40] sm:$0xf]
  %v5517 = vld [vmem:[%s5 + $0x44] sm:$0xf]
  %v5518 = vld [vmem:[%s6] sm:$0x1]
  %v5520 = vlaneseq
  %v5521 = vshrl.u32 %v5520, 7
  %v5522 = vsub.s32 0, %v5521
  %v5523 = vrot.slane %v5518, %v5522
  %v5543 = vunpack.c.l.b16 %v5500
  %v5544 = vunpack.c.l.b16 %v5501
  %v5545 = vunpack.c.l.b16 %v5502
  %v5546 = vunpack.c.l.b16 %v5503
  %v5547 = vunpack.c.l.b16 %v5504
  %v5548 = vunpack.c.l.b16 %v5505
  %v5549 = vunpack.c.l.b16 %v5506
  %v5550 = vunpack.c.l.b16 %v5507
  %v5551 = vunpack.c.l.b16 %v5508
  %v5552 = vunpack.c.l.b16 %v5509
  %v5553 = vunpack.c.l.b16 %v5510
  %v5554 = vunpack.c.l.b16 %v5511
  %v5555 = vunpack.c.l.b16 %v5512
  %v5556 = vunpack.c.l.b16 %v5513
  %v5557 = vunpack.c.l.b16 %v5514
  %v5558 = vunpack.c.l.b16 %v5515
  %v5559 = vunpack.c.l.b16 %v5516
  %v5560 = vunpack.c.l.b16 %v5517
  %v5561 = vpack.c.b16 %v5544, %v5543
  %v5562 = vpack.c.b16 %v5546, %v5545
  %v5563 = vpack.c.b16 %v5548, %v5547
  %v5564 = vpack.c.b16 %v5550, %v5549
  %v5565 = vpack.c.b16 %v5552, %v5551
  %v5566 = vpack.c.b16 %v5554, %v5553
  %v5567 = vpack.c.b16 %v5556, %v5555
  %v5568 = vpack.c.b16 %v5558, %v5557
  %v5569 = vpack.c.b16 %v5560, %v5559
  %v5580 = vsel %vm4651, %v5485, 0
  %v5583 = vsel %vm4651, %v5487, 0
  %v5586 = vsel %vm4651, %v5489, 0
  %v5589 = vsel %vm4651, %v5491, 0
  %v5592 = vsel %vm4651, %v5493, 0
  %v5595 = vsel %vm4651, %v5495, 0
  %v5598 = vsel %vm4651, %v5497, 0
  %v5601 = vsel %vm4651, %v5499, 0
  %5603 = vmatprep.subr.bf16.mxu0 0
  %5604 = vmatpush1.bf16.msra.mxu0 %v5568
  %5605 = vmatprep.subr.bf16.mxu0 0
  %5606 = vmatpush1.bf16.msra.mxu0 %v5567
  %5607 = vmatprep.subr.bf16.mxu0 0
  %5608 = vmatpush1.bf16.msra.mxu0 %v5566
  %5609 = vmatprep.subr.bf16.mxu0 0
  %5610 = vmatpush1.bf16.msra.mxu0 %v5565
  %5611 = vmatprep.subr.bf16.mxu0 0
  %5612 = vmatpush1.bf16.msra.mxu0 %v5564
  %5613 = vmatprep.subr.bf16.mxu0 0
  %5614 = vmatpush1.bf16.msra.mxu0 %v5563
  %5615 = vmatprep.subr.bf16.mxu0 0
  %5616 = vmatpush1.bf16.msra.mxu0 %v5562
  %5617 = vmatprep.subr.bf16.mxu0 0
  %5618 = vmatpush1.bf16.msra.mxu0 %v5561
  %5619 = vmatprep.subr.bf16.mxu0 0
  %5620 = vmatpush2.bf16.msra.mxu0 0
  %5621 = vmatprep.subr.bf16.mxu0 0
  %5622 = vmatpush2.bf16.msra.mxu0 0
  %5623 = vmatprep.subr.bf16.mxu0 0
  %5624 = vmatpush2.bf16.msra.mxu0 0
  %5625 = vmatprep.subr.bf16.mxu0 0
  %5626 = vmatpush2.bf16.msra.mxu0 0
  %5627 = vmatprep.subr.bf16.mxu0 0
  %5628 = vmatpush2.bf16.msra.mxu0 0
  %5629 = vmatprep.subr.bf16.mxu0 0
  %5630 = vmatpush2.bf16.msra.mxu0 0
  %5631 = vmatprep.subr.bf16.mxu0 0
  %5632 = vmatpush2.bf16.msra.mxu0 0
  %5633 = vmatprep.subr.bf16.mxu0 0
  %5634 = vmatpush2.bf16.msra.mxu0 %v5569
  %5635 = vmatprep.mubr.bf16.mxu0 %v5580
  %5636 = vmatmul.mubr.bf16.gmra.mxu0 %v5484
  %v5637 = vpop.f32.mrf.mxu0
  %v5638 = vadd.f32 %v5523, %v5637
  %v5639 = vpop.f32.mrf.mxu0
  %v5640 = vpop.f32.mrf.mxu0
  %v5641 = vadd.f32 %v5523, %v5640
  %v5642 = vpop.f32.mrf.mxu0
  %5643 = vmatprep.mubr.bf16.mxu0 %v5583
  %5644 = vmatmul.mubr.bf16.gmra.mxu0 %v5486
  %v5645 = vpop.f32.mrf.mxu0
  %v5646 = vadd.f32 %v5523, %v5645
  %v5647 = vpop.f32.mrf.mxu0
  %v5648 = vpop.f32.mrf.mxu0
  %v5649 = vadd.f32 %v5523, %v5648
  %v5650 = vpop.f32.mrf.mxu0
  %5651 = vmatprep.mubr.bf16.mxu0 %v5586
  %5652 = vmatmul.mubr.bf16.gmra.mxu0 %v5488
  %v5653 = vpop.f32.mrf.mxu0
  %v5654 = vadd.f32 %v5523, %v5653
  %v5655 = vpop.f32.mrf.mxu0
  %v5656 = vpop.f32.mrf.mxu0
  %v5657 = vadd.f32 %v5523, %v5656
  %v5658 = vpop.f32.mrf.mxu0
  %5659 = vmatprep.mubr.bf16.mxu0 %v5589
  %5660 = vmatmul.mubr.bf16.gmra.mxu0 %v5490
  %v5661 = vpop.f32.mrf.mxu0
  %v5662 = vadd.f32 %v5523, %v5661
  %v5663 = vpop.f32.mrf.mxu0
  %v5664 = vpop.f32.mrf.mxu0
  %v5665 = vadd.f32 %v5523, %v5664
  %v5666 = vpop.f32.mrf.mxu0
  %5667 = vmatprep.mubr.bf16.mxu0 %v5592
  %5668 = vmatmul.mubr.bf16.gmra.mxu0 %v5492
  %v5669 = vpop.f32.mrf.mxu0
  %v5670 = vadd.f32 %v5523, %v5669
  %v5671 = vpop.f32.mrf.mxu0
  %v5672 = vpop.f32.mrf.mxu0
  %v5673 = vadd.f32 %v5523, %v5672
  %v5674 = vpop.f32.mrf.mxu0
  %5675 = vmatprep.mubr.bf16.mxu0 %v5595
  %5676 = vmatmul.mubr.bf16.gmra.mxu0 %v5494
  %v5677 = vpop.f32.mrf.mxu0
  %v5678 = vadd.f32 %v5523, %v5677
  %v5679 = vpop.f32.mrf.mxu0
  %v5680 = vpop.f32.mrf.mxu0
  %v5681 = vadd.f32 %v5523, %v5680
  %v5682 = vpop.f32.mrf.mxu0
  %5683 = vmatprep.mubr.bf16.mxu0 %v5598
  %5684 = vmatmul.mubr.bf16.gmra.mxu0 %v5496
  %v5685 = vpop.f32.mrf.mxu0
  %v5686 = vadd.f32 %v5523, %v5685
  %v5687 = vpop.f32.mrf.mxu0
  %v5688 = vpop.f32.mrf.mxu0
  %v5689 = vadd.f32 %v5523, %v5688
  %v5690 = vpop.f32.mrf.mxu0
  %5691 = vmatprep.mubr.bf16.mxu0 %v5601
  %5692 = vmatmul.mubr.bf16.gmra.mxu0 %v5498
  %v5693 = vpop.f32.mrf.mxu0
  %v5694 = vadd.f32 %v5523, %v5693
  %v5695 = vpop.f32.mrf.mxu0
  %v5696 = vpop.f32.mrf.mxu0
  %v5697 = vadd.f32 %v5523, %v5696
  %v5698 = vpop.f32.mrf.mxu0
  %5699 = vdwg.mxu0
  %v5700 = vmax.f32 %v5638, 0.0
  %v5701 = vmax.f32 %v5641, 0.0
  %v5702 = vmax.f32 %v5646, 0.0
  %v5703 = vmax.f32 %v5649, 0.0
  %v5704 = vmax.f32 %v5654, 0.0
  %v5705 = vmax.f32 %v5657, 0.0
  %v5706 = vmax.f32 %v5662, 0.0
  %v5707 = vmax.f32 %v5665, 0.0
  %v5708 = vmax.f32 %v5670, 0.0
  %v5709 = vmax.f32 %v5673, 0.0
  %v5710 = vmax.f32 %v5678, 0.0
  %v5711 = vmax.f32 %v5681, 0.0
  %v5712 = vmax.f32 %v5686, 0.0
  %v5713 = vmax.f32 %v5689, 0.0
  %v5714 = vmax.f32 %v5694, 0.0
  %v5715 = vmax.f32 %v5697, 0.0
  %vm5716 = vcmask 261120
  %5717 = vst.msk [vmem:[#allocation6] sm:$0xff] %vm5716, %v5700
  %5719 = vrot.lane.b32.xlu0 %v5701, 32
  %v5720 = vpop.permute.xlu0 %5719
  %vm5722 = vcmask 523520
  %5723 = vst.msk [vmem:[#allocation6] sm:$0xff] %vm5722, %v5720
  %5725 = vrot.lane.b32.xlu0 %v5702, 64
  %v5726 = vpop.permute.xlu0 %5725
  %vm5728 = vcmask 785920
  %5729 = vst.msk [vmem:[#allocation6] sm:$0xff] %vm5728, %v5726
  %5731 = vrot.lane.b32.xlu0 %v5703, 96
  %v5732 = vpop.permute.xlu0 %5731
  %vm5734 = vcmask 1048320
  %5735 = vst.msk [vmem:[#allocation6] sm:$0xff] %vm5734, %v5732
  %5736 = vst.msk [vmem:[#allocation6 + $0x8] sm:$0xff] %vm5716, %v5704
  %5738 = vrot.lane.b32.xlu0 %v5705, 32
  %v5739 = vpop.permute.xlu0 %5738
  %5741 = vst.msk [vmem:[#allocation6 + $0x8] sm:$0xff] %vm5722, %v5739
  %5743 = vrot.lane.b32.xlu0 %v5706, 64
  %v5744 = vpop.permute.xlu0 %5743
  %5746 = vst.msk [vmem:[#allocation6 + $0x8] sm:$0xff] %vm5728, %v5744
  %5748 = vrot.lane.b32.xlu0 %v5707, 96
  %v5749 = vpop.permute.xlu0 %5748
  %5751 = vst.msk [vmem:[#allocation6 + $0x8] sm:$0xff] %vm5734, %v5749
  %5752 = vst.msk [vmem:[#allocation6 + $0x10] sm:$0xff] %vm5716, %v5708
  %5754 = vrot.lane.b32.xlu0 %v5709, 32
  %v5755 = vpop.permute.xlu0 %5754
  %5757 = vst.msk [vmem:[#allocation6 + $0x10] sm:$0xff] %vm5722, %v5755
  %5759 = vrot.lane.b32.xlu0 %v5710, 64
  %v5760 = vpop.permute.xlu0 %5759
  %5762 = vst.msk [vmem:[#allocation6 + $0x10] sm:$0xff] %vm5728, %v5760
  %5764 = vrot.lane.b32.xlu0 %v5711, 96
  %v5765 = vpop.permute.xlu0 %5764
  %5767 = vst.msk [vmem:[#allocation6 + $0x10] sm:$0xff] %vm5734, %v5765
  %5768 = vst.msk [vmem:[#allocation6 + $0x18] sm:$0xff] %vm5716, %v5712
  %5770 = vrot.lane.b32.xlu0 %v5713, 32
  %v5771 = vpop.permute.xlu0 %5770
  %5773 = vst.msk [vmem:[#allocation6 + $0x18] sm:$0xff] %vm5722, %v5771
  %5775 = vrot.lane.b32.xlu0 %v5714, 64
  %v5776 = vpop.permute.xlu0 %5775
  %5778 = vst.msk [vmem:[#allocation6 + $0x18] sm:$0xff] %vm5728, %v5776
  %5780 = vrot.lane.b32.xlu0 %v5715, 96
  %v5781 = vpop.permute.xlu0 %5780
  %5783 = vst.msk [vmem:[#allocation6 + $0x18] sm:$0xff] %vm5734, %v5781
  %v5784 = vld [vmem:[#allocation6] sm:$0xff]
  %v5785 = vld [vmem:[#allocation6 + $0x8] sm:$0xff]
  %v5786 = vld [vmem:[#allocation6 + $0x10] sm:$0xff]
  %v5787 = vld [vmem:[#allocation6 + $0x18] sm:$0xff]
  %v5788 = vpack.c.bf16 %v5784, %v5784
  %v5789 = vpack.c.bf16 %v5785, %v5785
  %v5790 = vpack.c.bf16 %v5786, %v5786
  %v5791 = vpack.c.bf16 %v5787, %v5787
  %v5792 = vld [vmem:[%s7] sm:$0xf]
  %v5793 = vld [vmem:[%s7 + $0x4] sm:$0xf]
  %v5794 = vld [vmem:[%s7 + $0x8] sm:$0xf]
  %v5795 = vld [vmem:[%s7 + $0xc] sm:$0xf]
  %v5796 = vld [vmem:[%s7 + $0x10] sm:$0xf]
  %v5797 = vld [vmem:[%s7 + $0x14] sm:$0xf]
  %v5798 = vld [vmem:[%s7 + $0x18] sm:$0xf]
  %v5799 = vld [vmem:[%s7 + $0x1c] sm:$0xf]
  %v5800 = vld [vmem:[%s7 + $0x20] sm:$0xf]
  %v5801 = vld [vmem:[%s7 + $0x24] sm:$0xf]
  %v5802 = vld [vmem:[%s7 + $0x28] sm:$0xf]
  %v5803 = vld [vmem:[%s7 + $0x2c] sm:$0xf]
  %v5804 = vld [vmem:[%s7 + $0x30] sm:$0xf]
  %v5805 = vld [vmem:[%s7 + $0x34] sm:$0xf]
  %v5806 = vld [vmem:[%s7 + $0x38] sm:$0xf]
  %v5807 = vld [vmem:[%s7 + $0x3c] sm:$0xf]
  %v5808 = vld [vmem:[%s7 + $0x40] sm:$0xf]
  %v5809 = vld [vmem:[%s7 + $0x44] sm:$0xf]
  %v5810 = vld [vmem:[%s7 + $0x48] sm:$0xf]
  %v5811 = vld [vmem:[%s7 + $0x4c] sm:$0xf]
  %v5812 = vld [vmem:[%s7 + $0x50] sm:$0xf]
  %v5813 = vld [vmem:[%s7 + $0x54] sm:$0xf]
  %v5814 = vld [vmem:[%s7 + $0x58] sm:$0xf]
  %v5815 = vld [vmem:[%s7 + $0x5c] sm:$0xf]
  %v5816 = vld [vmem:[%s7 + $0x60] sm:$0xf]
  %v5817 = vld [vmem:[%s7 + $0x64] sm:$0xf]
  %v5818 = vld [vmem:[%s7 + $0x68] sm:$0xf]
  %v5819 = vld [vmem:[%s7 + $0x6c] sm:$0xf]
  %v5820 = vld [vmem:[%s7 + $0x70] sm:$0xf]
  %v5821 = vld [vmem:[%s7 + $0x74] sm:$0xf]
  %v5822 = vld [vmem:[%s7 + $0x78] sm:$0xf]
  %v5823 = vld [vmem:[%s7 + $0x7c] sm:$0xf]
  %v5824 = vld [vmem:[%s7 + $0x80] sm:$0xf]
  %v5825 = vld [vmem:[%s7 + $0x84] sm:$0xf]
  %v5826 = vld [vmem:[%s7 + $0x88] sm:$0xf]
  %v5827 = vld [vmem:[%s7 + $0x8c] sm:$0xf]
  %v5828 = vld [vmem:[%s7 + $0x90] sm:$0xf]
  %v5829 = vld [vmem:[%s7 + $0x94] sm:$0xf]
  %v5830 = vld [vmem:[%s7 + $0x98] sm:$0xf]
  %v5831 = vld [vmem:[%s7 + $0x9c] sm:$0xf]
  %v5832 = vld [vmem:[%s7 + $0xa0] sm:$0xf]
  %v5833 = vld [vmem:[%s7 + $0xa4] sm:$0xf]
  %v5834 = vld [vmem:[%s7 + $0xa8] sm:$0xf]
  %v5835 = vld [vmem:[%s7 + $0xac] sm:$0xf]
  %v5836 = vld [vmem:[%s7 + $0xb0] sm:$0xf]
  %v5837 = vld [vmem:[%s7 + $0xb4] sm:$0xf]
  %v5838 = vld [vmem:[%s7 + $0xb8] sm:$0xf]
  %v5839 = vld [vmem:[%s7 + $0xbc] sm:$0xf]
  %v5840 = vld [vmem:[%s7 + $0xc0] sm:$0xf]
  %v5841 = vld [vmem:[%s7 + $0xc4] sm:$0xf]
  %v5842 = vld [vmem:[%s7 + $0xc8] sm:$0xf]
  %v5843 = vld [vmem:[%s7 + $0xcc] sm:$0xf]
  %v5844 = vld [vmem:[%s7 + $0xd0] sm:$0xf]
  %v5845 = vld [vmem:[%s7 + $0xd4] sm:$0xf]
  %v5846 = vld [vmem:[%s7 + $0xd8] sm:$0xf]
  %v5847 = vld [vmem:[%s7 + $0xdc] sm:$0xf]
  %v5848 = vld [vmem:[%s7 + $0xe0] sm:$0xf]
  %v5849 = vld [vmem:[%s7 + $0xe4] sm:$0xf]
  %v5850 = vld [vmem:[%s7 + $0xe8] sm:$0xf]
  %v5851 = vld [vmem:[%s7 + $0xec] sm:$0xf]
  %v5852 = vld [vmem:[%s7 + $0xf0] sm:$0xf]
  %v5853 = vld [vmem:[%s7 + $0xf4] sm:$0xf]
  %v5854 = vld [vmem:[%s7 + $0xf8] sm:$0xf]
  %v5855 = vld [vmem:[%s7 + $0xfc] sm:$0xf]
  %v5856 = vld [vmem:[%s8] sm:$0x1]
  %v5858 = vlaneseq
  %v5859 = vshrl.u32 %v5858, 7
  %v5860 = vsub.s32 0, %v5859
  %v5861 = vrot.slane %v5856, %v5860
  %v5927 = vunpack.c.l.b16 %v5792
  %v5928 = vunpack.c.l.b16 %v5793
  %v5929 = vunpack.c.l.b16 %v5794
  %v5930 = vunpack.c.l.b16 %v5795
  %v5931 = vunpack.c.l.b16 %v5796
  %v5932 = vunpack.c.l.b16 %v5797
  %v5933 = vunpack.c.l.b16 %v5798
  %v5934 = vunpack.c.l.b16 %v5799
  %v5935 = vunpack.c.l.b16 %v5800
  %v5936 = vunpack.c.l.b16 %v5801
  %v5937 = vunpack.c.l.b16 %v5802
  %v5938 = vunpack.c.l.b16 %v5803
  %v5939 = vunpack.c.l.b16 %v5804
  %v5940 = vunpack.c.l.b16 %v5805
  %v5941 = vunpack.c.l.b16 %v5806
  %v5942 = vunpack.c.l.b16 %v5807
  %v5943 = vunpack.c.l.b16 %v5808
  %v5944 = vunpack.c.l.b16 %v5809
  %v5945 = vunpack.c.l.b16 %v5810
  %v5946 = vunpack.c.l.b16 %v5811
  %v5947 = vunpack.c.l.b16 %v5812
  %v5948 = vunpack.c.l.b16 %v5813
  %v5949 = vunpack.c.l.b16 %v5814
  %v5950 = vunpack.c.l.b16 %v5815
  %v5951 = vunpack.c.l.b16 %v5816
  %v5952 = vunpack.c.l.b16 %v5817
  %v5953 = vunpack.c.l.b16 %v5818
  %v5954 = vunpack.c.l.b16 %v5819
  %v5955 = vunpack.c.l.b16 %v5820
  %v5956 = vunpack.c.l.b16 %v5821
  %v5957 = vunpack.c.l.b16 %v5822
  %v5958 = vunpack.c.l.b16 %v5823
  %v5959 = vunpack.c.l.b16 %v5824
  %v5960 = vunpack.c.l.b16 %v5825
  %v5961 = vunpack.c.l.b16 %v5826
  %v5962 = vunpack.c.l.b16 %v5827
  %v5963 = vunpack.c.l.b16 %v5828
  %v5964 = vunpack.c.l.b16 %v5829
  %v5965 = vunpack.c.l.b16 %v5830
  %v5966 = vunpack.c.l.b16 %v5831
  %v5967 = vunpack.c.l.b16 %v5832
  %v5968 = vunpack.c.l.b16 %v5833
  %v5969 = vunpack.c.l.b16 %v5834
  %v5970 = vunpack.c.l.b16 %v5835
  %v5971 = vunpack.c.l.b16 %v5836
  %v5972 = vunpack.c.l.b16 %v5837
  %v5973 = vunpack.c.l.b16 %v5838
  %v5974 = vunpack.c.l.b16 %v5839
  %v5975 = vunpack.c.l.b16 %v5840
  %v5976 = vunpack.c.l.b16 %v5841
  %v5977 = vunpack.c.l.b16 %v5842
  %v5978 = vunpack.c.l.b16 %v5843
  %v5979 = vunpack.c.l.b16 %v5844
  %v5980 = vunpack.c.l.b16 %v5845
  %v5981 = vunpack.c.l.b16 %v5846
  %v5982 = vunpack.c.l.b16 %v5847
  %v5983 = vunpack.c.l.b16 %v5848
  %v5984 = vunpack.c.l.b16 %v5849
  %v5985 = vunpack.c.l.b16 %v5850
  %v5986 = vunpack.c.l.b16 %v5851
  %v5987 = vunpack.c.l.b16 %v5852
  %v5988 = vunpack.c.l.b16 %v5853
  %v5989 = vunpack.c.l.b16 %v5854
  %v5990 = vunpack.c.l.b16 %v5855
  %v5991 = vpack.c.b16 %v5928, %v5927
  %v5992 = vpack.c.b16 %v5930, %v5929
  %v5993 = vpack.c.b16 %v5932, %v5931
  %v5994 = vpack.c.b16 %v5934, %v5933
  %v5995 = vpack.c.b16 %v5936, %v5935
  %v5996 = vpack.c.b16 %v5938, %v5937
  %v5997 = vpack.c.b16 %v5940, %v5939
  %v5998 = vpack.c.b16 %v5942, %v5941
  %v5999 = vpack.c.b16 %v5944, %v5943
  %v6000 = vpack.c.b16 %v5946, %v5945
  %v6001 = vpack.c.b16 %v5948, %v5947
  %v6002 = vpack.c.b16 %v5950, %v5949
  %v6003 = vpack.c.b16 %v5952, %v5951
  %v6004 = vpack.c.b16 %v5954, %v5953
  %v6005 = vpack.c.b16 %v5956, %v5955
  %v6006 = vpack.c.b16 %v5958, %v5957
  %v6007 = vpack.c.b16 %v5960, %v5959
  %v6008 = vpack.c.b16 %v5962, %v5961
  %v6009 = vpack.c.b16 %v5964, %v5963
  %v6010 = vpack.c.b16 %v5966, %v5965
  %v6011 = vpack.c.b16 %v5968, %v5967
  %v6012 = vpack.c.b16 %v5970, %v5969
  %v6013 = vpack.c.b16 %v5972, %v5971
  %v6014 = vpack.c.b16 %v5974, %v5973
  %v6015 = vpack.c.b16 %v5976, %v5975
  %v6016 = vpack.c.b16 %v5978, %v5977
  %v6017 = vpack.c.b16 %v5980, %v5979
  %v6018 = vpack.c.b16 %v5982, %v5981
  %v6019 = vpack.c.b16 %v5984, %v5983
  %v6020 = vpack.c.b16 %v5986, %v5985
  %v6021 = vpack.c.b16 %v5988, %v5987
  %v6022 = vpack.c.b16 %v5990, %v5989
  %6055 = vmatprep.subr.bf16.mxu0 0
  %6056 = vmatpush1.bf16.msra.mxu0 %v5998
  %6057 = vmatprep.subr.bf16.mxu0 0
  %6058 = vmatpush1.bf16.msra.mxu0 %v5997
  %6059 = vmatprep.subr.bf16.mxu0 0
  %6060 = vmatpush1.bf16.msra.mxu0 %v5996
  %6061 = vmatprep.subr.bf16.mxu0 0
  %6062 = vmatpush1.bf16.msra.mxu0 %v5995
  %6063 = vmatprep.subr.bf16.mxu0 0
  %6064 = vmatpush1.bf16.msra.mxu0 %v5994
  %6065 = vmatprep.subr.bf16.mxu0 0
  %6066 = vmatpush1.bf16.msra.mxu0 %v5993
  %6067 = vmatprep.subr.bf16.mxu0 0
  %6068 = vmatpush1.bf16.msra.mxu0 %v5992
  %6069 = vmatprep.subr.bf16.mxu0 0
  %6070 = vmatpush1.bf16.msra.mxu0 %v5991
  %6071 = vmatprep.subr.bf16.mxu0 0
  %6072 = vmatpush2.bf16.msra.mxu0 %v6006
  %6073 = vmatprep.subr.bf16.mxu0 0
  %6074 = vmatpush2.bf16.msra.mxu0 %v6005
  %6075 = vmatprep.subr.bf16.mxu0 0
  %6076 = vmatpush2.bf16.msra.mxu0 %v6004
  %6077 = vmatprep.subr.bf16.mxu0 0
  %6078 = vmatpush2.bf16.msra.mxu0 %v6003
  %6079 = vmatprep.subr.bf16.mxu0 0
  %6080 = vmatpush2.bf16.msra.mxu0 %v6002
  %6081 = vmatprep.subr.bf16.mxu0 0
  %6082 = vmatpush2.bf16.msra.mxu0 %v6001
  %6083 = vmatprep.subr.bf16.mxu0 0
  %6084 = vmatpush2.bf16.msra.mxu0 %v6000
  %6085 = vmatprep.subr.bf16.mxu0 0
  %6086 = vmatpush2.bf16.msra.mxu0 %v5999
  %6087 = vmatprep.mubr.bf16.mxu0 %v5789
  %6088 = vmatmul.mubr.bf16.gmra.mxu0 %v5788
  %v6089 = vpop.f32.mrf.mxu0
  %v6090 = vadd.f32 %v5861, %v6089
  %v6091 = vpop.f32.mrf.mxu0
  %v6092 = vpop.f32.mrf.mxu0
  %v6093 = vpop.f32.mrf.mxu0
  %6094 = vdwg.mxu0
  %6095 = vmatprep.subr.bf16.mxu0 0
  %6096 = vmatpush1.bf16.msra.mxu0 %v6014
  %6097 = vmatprep.subr.bf16.mxu0 0
  %6098 = vmatpush1.bf16.msra.mxu0 %v6013
  %6099 = vmatprep.subr.bf16.mxu0 0
  %6100 = vmatpush1.bf16.msra.mxu0 %v6012
  %6101 = vmatprep.subr.bf16.mxu0 0
  %6102 = vmatpush1.bf16.msra.mxu0 %v6011
  %6103 = vmatprep.subr.bf16.mxu0 0
  %6104 = vmatpush1.bf16.msra.mxu0 %v6010
  %6105 = vmatprep.subr.bf16.mxu0 0
  %6106 = vmatpush1.bf16.msra.mxu0 %v6009
  %6107 = vmatprep.subr.bf16.mxu0 0
  %6108 = vmatpush1.bf16.msra.mxu0 %v6008
  %6109 = vmatprep.subr.bf16.mxu0 0
  %6110 = vmatpush1.bf16.msra.mxu0 %v6007
  %6111 = vmatprep.subr.bf16.mxu0 0
  %6112 = vmatpush2.bf16.msra.mxu0 %v6022
  %6113 = vmatprep.subr.bf16.mxu0 0
  %6114 = vmatpush2.bf16.msra.mxu0 %v6021
  %6115 = vmatprep.subr.bf16.mxu0 0
  %6116 = vmatpush2.bf16.msra.mxu0 %v6020
  %6117 = vmatprep.subr.bf16.mxu0 0
  %6118 = vmatpush2.bf16.msra.mxu0 %v6019
  %6119 = vmatprep.subr.bf16.mxu0 0
  %6120 = vmatpush2.bf16.msra.mxu0 %v6018
  %6121 = vmatprep.subr.bf16.mxu0 0
  %6122 = vmatpush2.bf16.msra.mxu0 %v6017
  %6123 = vmatprep.subr.bf16.mxu0 0
  %6124 = vmatpush2.bf16.msra.mxu0 %v6016
  %6125 = vmatprep.subr.bf16.mxu0 0
  %6126 = vmatpush2.bf16.msra.mxu0 %v6015
  %6127 = vmatprep.mubr.bf16.mxu0 %v5791
  %6128 = vmatmul.mubr.bf16.gmra.mxu0 %v5790
  %v6129 = vpop.f32.mrf.mxu0
  %v6130 = vadd.f32 %v6090, %v6129
  %v6131 = vpop.f32.mrf.mxu0
  %v6132 = vpop.f32.mrf.mxu0
  %v6133 = vpop.f32.mrf.mxu0
  %6134 = vdwg.mxu0
  %v6135 = vmax.f32 %v6130, 0.0
  %6136 = vst [vmem:[%s9] sm:$0xff] %v6135
  // Predicated region
  $region38: #{fashion_mnist_net.1} parent=0 // pred_check
    _
  $region39: #{fashion_mnist_net.1} parent=0 // pred_check_branch
    %6138 = sbr.rel (0) target = $region41
  $region40: #{fashion_mnist_net.1} parent=0 // pred_region
    _
  $region41: #{fashion_mnist_net.1} parent=0 // pred_fallthru
    _
  // Predicated region
  $region42: #{fashion_mnist_net.1} parent=0 // pred_check
    _
  $region43: #{fashion_mnist_net.1} parent=0 // pred_check_branch
    %6140 = sbr.rel (0) target = $region45
  $region44: #{fashion_mnist_net.1} parent=0 // pred_region
    _
  $region45: #{fashion_mnist_net.1} parent=0 // pred_fallthru
    _

</llo_original>
